<compile_context>
chip_gen: v7x
topology: tpu7x:2x2x1
jax: 0.10.0
libtpu: 0.0.40
codegen_flags: <defaults>
</compile_context>

<pallas_src>
import jax
import jax.numpy as jnp
from jax.experimental import pallas as pl
from jax.experimental.pallas import tpu as pltpu

EPS = 1e-5


def relu_conv1x1_bn_kernel(x_ref, w_ref, gamma_ref, beta_ref, o_ref):
    # x_ref:     (Cin, M)  bf16  -- full ReLU input, channels on sublanes
    # w_ref:     (tn, Cin) bf16  -- row stripe of the 1x1-conv weight
    # gamma_ref: (tn, 1)   f32
    # beta_ref:  (tn, 1)   f32
    # o_ref:     (tn, M)   f32
    xr = jnp.maximum(x_ref[...], 0.0)  # ReLU (commutes with the bf16 cast)
    # 1x1 conv == matmul over channels: (tn, Cin) @ (Cin, M) -> (tn, M), f32 acc on MXU
    y = jnp.dot(w_ref[...], xr, preferred_element_type=jnp.float32)

    # Train-mode BatchNorm: per-output-channel batch stats over M = N*H*W.
    # Lane-axis reductions go to the XLU; var = E[y^2] - E[y]^2 avoids a
    # materialized (y - mean) temporary (biased variance, as in torch training).
    inv_m = 1.0 / y.shape[1]
    mean = jnp.sum(y, axis=1, keepdims=True) * inv_m            # (tn, 1)
    mean_sq = jnp.sum(y * y, axis=1, keepdims=True) * inv_m     # (tn, 1)
    var = jnp.maximum(mean_sq - mean * mean, 0.0)

    # Fold the BN affine into a single FMA pass over the (tn, M) tile.
    scale = gamma_ref[...] * jax.lax.rsqrt(var + EPS)           # (tn, 1)
    shift = beta_ref[...] - mean * scale                        # (tn, 1)
    o_ref[...] = y * scale + shift


def relu_conv1x1_bn(x_nchw, w_oihw, gamma, beta, *, tn=512):
    """x_nchw: (N, Cin, H, W) f32; w_oihw: (Cout, Cin, 1, 1); gamma/beta: (Cout,)."""
    N, Cin, H, W = x_nchw.shape
    Cout = w_oihw.shape[0]
    M = N * H * W

    # (Cout, M) orientation: for N == 1 both reshapes are zero-copy (no transpose).
    if N == 1:
        x_mat = x_nchw.reshape(Cin, M)
    else:
        x_mat = jnp.transpose(x_nchw, (1, 0, 2, 3)).reshape(Cin, M)
    x_mat = x_mat.astype(jnp.bfloat16)   # bf16 feeds the MXU at full rate, halves DMA bytes
    w_mat = w_oihw.reshape(Cout, Cin).astype(jnp.bfloat16)
    g = gamma.reshape(Cout, 1).astype(jnp.float32)
    b = beta.reshape(Cout, 1).astype(jnp.float32)

    tn = min(tn, Cout)
    assert Cout % tn == 0
    grid = (Cout // tn,)

    cost = pl.CostEstimate(
        flops=2 * M * Cin * Cout,
        transcendentals=Cout,  # one rsqrt per output channel
        bytes_accessed=(Cin * M * 2) + (Cout * Cin * 2) + (Cout * M * 4) + (2 * Cout * 4),
    )

    y_mat = pl.pallas_call(
        relu_conv1x1_bn_kernel,
        out_shape=jax.ShapeDtypeStruct((Cout, M), jnp.float32),
        grid_spec=pltpu.PrefetchScalarGridSpec(
            num_scalar_prefetch=0,
            grid=grid,
            in_specs=[
                pl.BlockSpec((Cin, M), lambda j: (0, 0)),    # full activations (resident)
                pl.BlockSpec((tn, Cin), lambda j: (j, 0)),   # weight row stripe
                pl.BlockSpec((tn, 1), lambda j: (j, 0)),     # gamma stripe
                pl.BlockSpec((tn, 1), lambda j: (j, 0)),     # beta stripe
            ],
            out_specs=pl.BlockSpec((tn, M), lambda j: (j, 0)),
        ),
        compiler_params=pltpu.CompilerParams(
            dimension_semantics=("parallel",)),  # 2 stripes -> both TCs on v7x
        cost_estimate=cost,
    )(x_mat, w_mat, g, b)

    if N == 1:
        return y_mat.reshape(1, Cout, H, W)  # zero-copy
    return jnp.transpose(y_mat.reshape(Cout, N, H, W), (1, 0, 2, 3))


if __name__ == "__main__":
    # Shapes fixed by the module: Conv2d(256 -> 1024, 1x1), input (1, 256, 28, 28)
    N, Cin, H, W, Cout = 1, 256, 28, 28, 1024

    key = jax.random.PRNGKey(0)
    kx, kw, kg, kb = jax.random.split(key, 4)
    x = jax.random.normal(kx, (N, Cin, H, W), dtype=jnp.float32)
    conv_w = jax.random.normal(kw, (Cout, Cin, 1, 1), dtype=jnp.float32) * 0.05
    gamma = 1.0 + 0.1 * jax.random.normal(kg, (Cout,), dtype=jnp.float32)
    beta = 0.1 * jax.random.normal(kb, (Cout,), dtype=jnp.float32)

    out = relu_conv1x1_bn(x, conv_w, gamma, beta)
    out = jax.block_until_ready(out)
    assert out.shape == (N, Cout, H, W)
    assert bool(jnp.all(jnp.isfinite(out)))
    print("KERNEL_OK")
</pallas_src>

<mosaic_0001>
module attributes {stable_mosaic.version = 11 : i64} {
  func.func @relu_conv1x1_bn_kernel(%arg0: i32, %arg1: memref<256x784xbf16, #tpu.memory_space<vmem>>, %arg2: memref<512x256xbf16, #tpu.memory_space<vmem>>, %arg3: memref<512x1xf32, #tpu.memory_space<vmem>>, %arg4: memref<512x1xf32, #tpu.memory_space<vmem>>, %arg5: memref<512x784xf32, #tpu.memory_space<vmem>>) attributes {dimension_semantics = [#tpu.dimension_semantics<parallel>], iteration_bounds = array<i64: 2>, scalar_prefetch = 0 : i64, scratch_operands = 0 : i64, tpu.core_type = #tpu.core_type<tc>, window_params = [{pipeline_mode = #tpu.pipeline_mode<synchronous>, transform_indices = @transform_0, window_bounds = array<i64: 256, 784>}, {transform_indices = @transform_1, window_bounds = array<i64: 512, 256>}, {transform_indices = @transform_2, window_bounds = array<i64: 512, 1>}, {transform_indices = @transform_3, window_bounds = array<i64: 512, 1>}, {transform_indices = @transform_4, window_bounds = array<i64: 512, 784>}]} {
    %c0 = arith.constant 0 : index
    %c0_0 = arith.constant 0 : index
    %0 = vector.load %arg1[%c0, %c0_0] : memref<256x784xbf16, #tpu.memory_space<vmem>>, vector<256x784xbf16>
    %cst = arith.constant 0.000000e+00 : bf16
    %1 = vector.broadcast %cst : bf16 to vector<256x784xbf16>
    %2 = arith.maximumf %0, %1 : vector<256x784xbf16>
    %c0_1 = arith.constant 0 : index
    %c0_2 = arith.constant 0 : index
    %3 = vector.load %arg2[%c0_1, %c0_2] : memref<512x256xbf16, #tpu.memory_space<vmem>>, vector<512x256xbf16>
    %cst_3 = arith.constant dense<0.000000e+00> : vector<512x784xf32>
    %4 = tpu.matmul %3, %2, %cst_3 {dimension_numbers = #tpu.dot_dimension_numbers<[1], [0], [0], [1], [0, 0, 1, 1], [], []>} : vector<512x256xbf16>, vector<256x784xbf16>, vector<512x784xf32> -> vector<512x784xf32>
    %cst_4 = arith.constant dense<0.000000e+00> : vector<512xf32>
    %5 = vector.multi_reduction <add>, %4, %cst_4 [1] : vector<512x784xf32> to vector<512xf32>
    %6 = vector.shape_cast %5 : vector<512xf32> to vector<512x1xf32>
    %cst_5 = arith.constant 0.00127551018 : f32
    %7 = vector.broadcast %cst_5 : f32 to vector<512x1xf32>
    %8 = arith.mulf %6, %7 : vector<512x1xf32>
    %9 = arith.mulf %4, %4 : vector<512x784xf32>
    %cst_6 = arith.constant dense<0.000000e+00> : vector<512xf32>
    %10 = vector.multi_reduction <add>, %9, %cst_6 [1] : vector<512x784xf32> to vector<512xf32>
    %11 = vector.shape_cast %10 : vector<512xf32> to vector<512x1xf32>
    %cst_7 = arith.constant 0.00127551018 : f32
    %12 = vector.broadcast %cst_7 : f32 to vector<512x1xf32>
    %13 = arith.mulf %11, %12 : vector<512x1xf32>
    %14 = arith.mulf %8, %8 : vector<512x1xf32>
    %15 = arith.subf %13, %14 : vector<512x1xf32>
    %cst_8 = arith.constant 0.000000e+00 : f32
    %16 = vector.broadcast %cst_8 : f32 to vector<512x1xf32>
    %17 = arith.maximumf %15, %16 : vector<512x1xf32>
    %c0_9 = arith.constant 0 : index
    %c0_10 = arith.constant 0 : index
    %18 = vector.load %arg3[%c0_9, %c0_10] : memref<512x1xf32, #tpu.memory_space<vmem>>, vector<512x1xf32>
    %cst_11 = arith.constant 9.99999974E-6 : f32
    %19 = vector.broadcast %cst_11 : f32 to vector<512x1xf32>
    %20 = arith.addf %17, %19 : vector<512x1xf32>
    %21 = math.rsqrt %20 : vector<512x1xf32>
    %22 = arith.mulf %18, %21 : vector<512x1xf32>
    %c0_12 = arith.constant 0 : index
    %c0_13 = arith.constant 0 : index
    %23 = vector.load %arg4[%c0_12, %c0_13] : memref<512x1xf32, #tpu.memory_space<vmem>>, vector<512x1xf32>
    %24 = arith.mulf %8, %22 : vector<512x1xf32>
    %25 = arith.subf %23, %24 : vector<512x1xf32>
    %26 = vector.broadcast %22 : vector<512x1xf32> to vector<512x784xf32>
    %27 = arith.mulf %4, %26 : vector<512x784xf32>
    %28 = vector.broadcast %25 : vector<512x1xf32> to vector<512x784xf32>
    %29 = arith.addf %27, %28 : vector<512x784xf32>
    %c0_14 = arith.constant 0 : index
    %c0_15 = arith.constant 0 : index
    %30 = vector.load %arg5[%c0_14, %c0_15] : memref<512x784xf32, #tpu.memory_space<vmem>>, vector<512x784xf32>
    tpu.vector_store %arg5[%c0_14, %c0_15], %29 {strides = array<i32>} : memref<512x784xf32, #tpu.memory_space<vmem>>, vector<512x784xf32>,
    return
  }
  func.func @transform_0(%arg0: i32) -> (i32, i32) {
    %c0_i32 = arith.constant 0 : i32
    %c0_i32_0 = arith.constant 0 : i32
    %c0_i32_1 = arith.constant 0 : i32
    return %c0_i32, %c0_i32_0 : i32, i32
  }
  func.func @transform_1(%arg0: i32) -> (i32, i32) {
    %c0_i32 = arith.constant 0 : i32
    %c0_i32_0 = arith.constant 0 : i32
    return %arg0, %c0_i32 : i32, i32
  }
  func.func @transform_2(%arg0: i32) -> (i32, i32) {
    %c0_i32 = arith.constant 0 : i32
    %c0_i32_0 = arith.constant 0 : i32
    return %arg0, %c0_i32 : i32, i32
  }
  func.func @transform_3(%arg0: i32) -> (i32, i32) {
    %c0_i32 = arith.constant 0 : i32
    %c0_i32_0 = arith.constant 0 : i32
    return %arg0, %c0_i32 : i32, i32
  }
  func.func @transform_4(%arg0: i32) -> (i32, i32) {
    %c0_i32 = arith.constant 0 : i32
    %c0_i32_0 = arith.constant 0 : i32
    return %arg0, %c0_i32 : i32, i32
  }
}

</mosaic_0001>

<llo_original>
// kernel: tpu_custom_call.1
$region0: #{tpu_custom_call.1}
  #allocation0 [shape = 'u32[]', space=smem, size = 0x4, offset = 0x4, fixed_abs, tag = 'smem constant byte address 0x4 - core index']
  #allocation1 [shape = 'u32[144,128]{1,0:T(1,128)}', space=vmem, size = 0x12000, scoped, tag = 'internal scratch']
  %s0 = inlined_call_operand.vmem [shape: bf16[256,784], index: 0, kind: input, shape index: {}]
  %s1 = inlined_call_operand.hbm [shape: bf16[1024,256], index: 1, kind: input, shape index: {}]
  %s2 = inlined_call_operand.vmem [shape: f32[1024,1], index: 2, kind: input, shape index: {}]
  %s3 = inlined_call_operand.vmem [shape: f32[1024,1], index: 3, kind: input, shape index: {}]
  %s4 = inlined_call_operand.vmem [shape: f32[1024,784], index: 4, kind: output, shape index: {}]
  %s5 = sld [smem:[#allocation0]]
  $region53: #{tpu_custom_call.1} parent=0
    _
  %s7 = ssub.s32 1, %s5
  %s8 = scalar_select 0, %s7, %s5
  $region1: #{tpu_custom_call.1} parent=0
    #allocation2 [shape = 'u8[524288]{0}', space=vmem, size = 0x80000, scoped, tag = 'input window, operand 1']
    #allocation3 [shape = 's32[2]{0}', space=sflag, size = 0x8, scoped, tag = 'scoped memory for tpu_custom_call.1']
    %9 = vsyncpa [#allocation3], 0
    %s10 = scalar_lea.sflag [#allocation3], 1
    %11 = vsyncpa %s10, 0
    loop: start=0, step=1, limit=4
    $region2: #{tpu_custom_call.1} parent=1 // loop_pre_header
      _
    $region3: #{tpu_custom_call.1} parent=1 // loop_header
      %s13 = sphi 0, %s17
      %p14 = scmp.ge.s32.totalorder %s13, 4
      %s21 = sphi 0, %s21
      %s23 = sphi 0, %s21
      %s24 = sphi 0, %s23
      %s38 = sphi 0, %s24
      %s44 = sphi 0, %s46
      %s47 = sphi 0, %s44
      %s48 = sphi 0, %s47
      %s64 = sphi 0, %s48
      %s70 = sphi 0, %s72
      %s73 = sphi 0, %s70
      %s74 = sphi 0, %s73
      %s90 = sphi 0, %s74
      %s96 = sphi 0, %s98
      %s99 = sphi 0, %s96
      %s100 = sphi 0, %s99
      %s116 = sphi 0, %s100
      %s122 = sphi 0, %s124
      %s125 = sphi 0, %s122
      %s126 = sphi 0, %s125
      %s142 = sphi 0, %s126
    $region4: #{tpu_custom_call.1} parent=1 // loop_header_branch
      %16 = sbr.rel (%p14) target = $region8
    $region5: #{tpu_custom_call.1} parent=1 // loop_body
      %s18 = ssub.s32 %s13, 1
      %s19 = ssub.s32 %s13, 2
      %s20 = sadd.s32 %s13, 1
      %s22 = sadd.s32 %s21, 1
      %p25 = scmp.eq.s32.totalorder %s13, 1
      %p26 = scmp.ne.s32.totalorder %s21, %s23
      %p27 = scmp.eq.s32.totalorder %s13, 0
      %p28 = por %p26, %p27
      %p29 = scmp.ne.s32.totalorder %s21, %s23
      %p30 = scmp.eq.s32.totalorder %s18, 1
      %p31 = por %p29, %p30
      %p32 = scmp.ne.s32.totalorder %s23, %s24
      %p33 = scmp.eq.s32.totalorder %s18, 0
      %p34 = por %p32, %p33
      %p35 = scmp.ne.s32.totalorder %s23, %s24
      %p36 = scmp.eq.s32.totalorder %s19, 1
      %p37 = por %p35, %p36
      %p39 = scmp.ne.s32.totalorder %s24, %s38
      %p40 = scmp.eq.s32.totalorder %s19, 0
      %p41 = por %p39, %p40
      %s42 = ssub.s32 %s13, %s20
      %p43 = scmp.eq.s32.totalorder %s42, 0
      %s45 = sadd.s32 %s44, 1
      %s46 = scalar_select %p43, %s44, %s45
      %p49 = pneg %p43
      %p50 = scmp.eq.s32.totalorder %s13, 1
      %p51 = por %p49, %p50
      %p52 = scmp.ne.s32.totalorder %s44, %s47
      %p53 = scmp.eq.s32.totalorder %s13, 0
      %p54 = por %p52, %p53
      %p55 = scmp.ne.s32.totalorder %s44, %s47
      %p56 = scmp.eq.s32.totalorder %s18, 1
      %p57 = por %p55, %p56
      %p58 = scmp.ne.s32.totalorder %s47, %s48
      %p59 = scmp.eq.s32.totalorder %s18, 0
      %p60 = por %p58, %p59
      %p61 = scmp.ne.s32.totalorder %s47, %s48
      %p62 = scmp.eq.s32.totalorder %s19, 1
      %p63 = por %p61, %p62
      %p65 = scmp.ne.s32.totalorder %s48, %s64
      %p66 = scmp.eq.s32.totalorder %s19, 0
      %p67 = por %p65, %p66
      %s68 = ssub.s32 %s13, %s20
      %p69 = scmp.eq.s32.totalorder %s68, 0
      %s71 = sadd.s32 %s70, 1
      %s72 = scalar_select %p69, %s70, %s71
      %p75 = pneg %p69
      %p76 = scmp.eq.s32.totalorder %s13, 1
      %p77 = por %p75, %p76
      %p78 = scmp.ne.s32.totalorder %s70, %s73
      %p79 = scmp.eq.s32.totalorder %s13, 0
      %p80 = por %p78, %p79
      %p81 = scmp.ne.s32.totalorder %s70, %s73
      %p82 = scmp.eq.s32.totalorder %s18, 1
      %p83 = por %p81, %p82
      %p84 = scmp.ne.s32.totalorder %s73, %s74
      %p85 = scmp.eq.s32.totalorder %s18, 0
      %p86 = por %p84, %p85
      %p87 = scmp.ne.s32.totalorder %s73, %s74
      %p88 = scmp.eq.s32.totalorder %s19, 1
      %p89 = por %p87, %p88
      %p91 = scmp.ne.s32.totalorder %s74, %s90
      %p92 = scmp.eq.s32.totalorder %s19, 0
      %p93 = por %p91, %p92
      %s94 = ssub.s32 %s13, %s20
      %p95 = scmp.eq.s32.totalorder %s94, 0
      %s97 = sadd.s32 %s96, 1
      %s98 = scalar_select %p95, %s96, %s97
      %p101 = pneg %p95
      %p102 = scmp.eq.s32.totalorder %s13, 1
      %p103 = por %p101, %p102
      %p104 = scmp.ne.s32.totalorder %s96, %s99
      %p105 = scmp.eq.s32.totalorder %s13, 0
      %p106 = por %p104, %p105
      %p107 = scmp.ne.s32.totalorder %s96, %s99
      %p108 = scmp.eq.s32.totalorder %s18, 1
      %p109 = por %p107, %p108
      %p110 = scmp.ne.s32.totalorder %s99, %s100
      %p111 = scmp.eq.s32.totalorder %s18, 0
      %p112 = por %p110, %p111
      %p113 = scmp.ne.s32.totalorder %s99, %s100
      %p114 = scmp.eq.s32.totalorder %s19, 1
      %p115 = por %p113, %p114
      %p117 = scmp.ne.s32.totalorder %s100, %s116
      %p118 = scmp.eq.s32.totalorder %s19, 0
      %p119 = por %p117, %p118
      %s120 = ssub.s32 %s13, %s20
      %p121 = scmp.eq.s32.totalorder %s120, 0
      %s123 = sadd.s32 %s122, 1
      %s124 = scalar_select %p121, %s122, %s123
      %p127 = pneg %p121
      %p128 = scmp.eq.s32.totalorder %s13, 1
      %p129 = por %p127, %p128
      %p130 = scmp.ne.s32.totalorder %s122, %s125
      %p131 = scmp.eq.s32.totalorder %s13, 0
      %p132 = por %p130, %p131
      %p133 = scmp.ne.s32.totalorder %s122, %s125
      %p134 = scmp.eq.s32.totalorder %s18, 1
      %p135 = por %p133, %p134
      %p136 = scmp.ne.s32.totalorder %s125, %s126
      %p137 = scmp.eq.s32.totalorder %s18, 0
      %p138 = por %p136, %p137
      %p139 = scmp.ne.s32.totalorder %s125, %s126
      %p140 = scmp.eq.s32.totalorder %s19, 1
      %p141 = por %p139, %p140
      %p143 = scmp.ne.s32.totalorder %s126, %s142
      %p144 = scmp.eq.s32.totalorder %s19, 0
      %p145 = por %p143, %p144
      %p146 = scmp.le.s32.totalorder 1, %s13
      %p147 = scmp.lt.s32.totalorder %s13, 3
      %p148 = pnand %p146, %p147
      %p149 = pneg %p148
      // Predicated region
      $region9: #{tpu_custom_call.1} parent=5 // pred_check
        _
      $region10: #{tpu_custom_call.1} parent=5 // pred_check_branch
        %151 = sbr.rel (%p148) target = $region12
      $region11: #{tpu_custom_call.1} parent=5 // pred_region
        %s152 = ssub.s32 %s13, 1
        // Predicated region
        $region13: #{tpu_custom_call.1} parent=11 // pred_check
          %p153 = pneg %p34
        $region14: #{tpu_custom_call.1} parent=11 // pred_check_branch
          %155 = sbr.rel (%p153) target = $region16
        $region15: #{tpu_custom_call.1} parent=11 // pred_region
          _
        $region16: #{tpu_custom_call.1} parent=11 // pred_fallthru
          _
      $region12: #{tpu_custom_call.1} parent=5 // pred_fallthru
        _
      %p156 = scmp.lt.s32.totalorder %s13, 2
      // Predicated region
      $region17: #{tpu_custom_call.1} parent=5 // pred_check
        %p157 = pneg %p156
      $region18: #{tpu_custom_call.1} parent=5 // pred_check_branch
        %159 = sbr.rel (%p157) target = $region20
      $region19: #{tpu_custom_call.1} parent=5 // pred_region
        // Predicated region
        $region21: #{tpu_custom_call.1} parent=19 // pred_check
          %p160 = pneg %p54
        $region22: #{tpu_custom_call.1} parent=19 // pred_check_branch
          %162 = sbr.rel (%p160) target = $region24
        $region23: #{tpu_custom_call.1} parent=19 // pred_region
          %s163 = sand.u32 %s44, 1
          %s164 = scalar_lea.sflag [#allocation3], %s163
          %s165 = sand.u32 %s44, 1
          %s166 = smul.addr %s165, 512
          %s167 = scalar_lea.vmem [#allocation2], %s166
          %s168 = smul.u32 64, %s13
          %s170 = ssub.s32 8192, 8192
          %171 = vsyncadd %s164, %s170
          %s172 = smul.addr %s168, 2
          %s173 = smul.addr %s172, 64
          %s174 = scalar_lea.hbm %s1, %s173
          %s175 = sshll.u32 %s167, 4
          %s176 = int_to_ptr.vmem [resolvable:$true] %s175
          %181 = dma.hbm_to_vmem [thread:$0]  %s174, 8192, %s176, %s164, 128, 128, 8
        $region24: #{tpu_custom_call.1} parent=19 // pred_fallthru
          _
        // Predicated region
        $region25: #{tpu_custom_call.1} parent=19 // pred_check
          %p182 = pneg %p80
        $region26: #{tpu_custom_call.1} parent=19 // pred_check_branch
          %184 = sbr.rel (%p182) target = $region28
        $region27: #{tpu_custom_call.1} parent=19 // pred_region
          %s185 = smul.u32 64, %s13
          %p186 = scmp.lt.s32.totalorder %s185, 127
          %s187 = scalar_select %p186, %s185, 127
          %s188 = smul.addr %s187, 8
          %s189 = scalar_lea.vmem %s2, %s188
          %s190 = smul.u32 64, %s13
        $region28: #{tpu_custom_call.1} parent=19 // pred_fallthru
          _
        // Predicated region
        $region29: #{tpu_custom_call.1} parent=19 // pred_check
          %p191 = pneg %p106
        $region30: #{tpu_custom_call.1} parent=19 // pred_check_branch
          %193 = sbr.rel (%p191) target = $region32
        $region31: #{tpu_custom_call.1} parent=19 // pred_region
          %s194 = smul.u32 64, %s13
          %p195 = scmp.lt.s32.totalorder %s194, 127
          %s196 = scalar_select %p195, %s194, 127
          %s197 = smul.addr %s196, 8
          %s198 = scalar_lea.vmem %s3, %s197
          %s199 = smul.u32 64, %s13
        $region32: #{tpu_custom_call.1} parent=19 // pred_fallthru
          _
      $region20: #{tpu_custom_call.1} parent=5 // pred_fallthru
        _
      %p200 = scmp.le.s32.totalorder 1, %s13
      %p201 = scmp.lt.s32.totalorder %s13, 3
      %p202 = pnand %p200, %p201
      %p203 = pneg %p202
      // Predicated region
      $region33: #{tpu_custom_call.1} parent=5 // pred_check
        _
      $region34: #{tpu_custom_call.1} parent=5 // pred_check_branch
        %205 = sbr.rel (%p202) target = $region36
      $region35: #{tpu_custom_call.1} parent=5 // pred_region
        %s206 = ssub.s32 %s13, 1
        %s207 = sand.u32 %s47, 1
        %s208 = scalar_lea.sflag [#allocation3], %s207
        %s209 = sand.u32 %s47, 1
        %s210 = smul.addr %s209, 512
        %s211 = scalar_lea.vmem [#allocation2], %s210
        // Predicated region
        $region37: #{tpu_custom_call.1} parent=35 // pred_check
          %p212 = pneg %p60
        $region38: #{tpu_custom_call.1} parent=35 // pred_check_branch
          %214 = sbr.rel (%p212) target = $region40
        $region39: #{tpu_custom_call.1} parent=35 // pred_region
          %215 = dma.done %s208, 8192
        $region40: #{tpu_custom_call.1} parent=35 // pred_fallthru
          _
        %p216 = pneg %p34
        %p217 = pneg %p31
        %s218 = sand.u32 %s47, 1
        %s219 = scalar_lea.sflag [#allocation3], %s218
        %s220 = sand.u32 %s47, 1
        %s221 = smul.addr %s220, 512
        %s222 = scalar_lea.vmem [#allocation2], %s221
        %p223 = pneg %p60
        %p224 = pneg %p57
        %s225 = smul.u32 64, %s18
        %p226 = scmp.lt.s32.totalorder %s225, 127
        %s227 = scalar_select %p226, %s225, 127
        %s228 = smul.addr %s227, 8
        %s229 = scalar_lea.vmem %s2, %s228
        %p230 = pneg %p86
        %p231 = pneg %p83
        %s232 = smul.u32 64, %s18
        %p233 = scmp.lt.s32.totalorder %s232, 127
        %s234 = scalar_select %p233, %s232, 127
        %s235 = smul.addr %s234, 8
        %s236 = scalar_lea.vmem %s3, %s235
        %p237 = pneg %p112
        %p238 = pneg %p109
        %p239 = pneg %p138
        %p240 = pneg %p135
        %s241 = smul.u32 64, %s18
        %p242 = scmp.lt.s32.totalorder %s241, 127
        %s243 = scalar_select %p242, %s241, 127
        %s244 = smul.addr %s243, 7
        %s245 = smul.addr %s244, 8
        %s246 = scalar_lea.vmem %s4, %s245
        %s247 = smul.u32 64, %s18
        %s248 = smul.u32 64, %s18
        %p249 = scmp.lt.s32.totalorder %s248, 127
        %s250 = scalar_select %p249, %s248, 127
        %s251 = smul.addr %s250, 8
        %s252 = scalar_lea.vmem %s2, %s251
        %s253 = smul.u32 64, %s18
        %s254 = smul.u32 64, %s18
        %p255 = scmp.lt.s32.totalorder %s254, 127
        %s256 = scalar_select %p255, %s254, 127
        %s257 = smul.addr %s256, 8
        %s258 = scalar_lea.vmem %s3, %s257
        %s259 = smul.u32 64, %s18
        %s260 = smul.u32 64, %s18
        %p261 = scmp.lt.s32.totalorder %s260, 127
        %s262 = scalar_select %p261, %s260, 127
        %s263 = smul.addr %s262, 7
        %s264 = smul.addr %s263, 8
        %s265 = scalar_lea.vmem %s4, %s264
        %s266 = smul.u32 64, %s18
        %v268 = vld [vmem:[%s0] sm:$0xff]
        %v269 = vld [vmem:[%s0 + $0x8] sm:$0xff]
        %v270 = vld [vmem:[%s0 + $0x10] sm:$0xff]
        %v271 = vld [vmem:[%s0 + $0x18] sm:$0xf]
        %v272 = vld [vmem:[%s0 + $0x1c] sm:$0xff]
        %v273 = vld [vmem:[%s0 + $0x24] sm:$0xff]
        %v274 = vld [vmem:[%s0 + $0x2c] sm:$0xff]
        %v275 = vld [vmem:[%s0 + $0x34] sm:$0xf]
        %v276 = vld [vmem:[%s0 + $0x38] sm:$0xff]
        %v277 = vld [vmem:[%s0 + $0x40] sm:$0xff]
        %v278 = vld [vmem:[%s0 + $0x48] sm:$0xff]
        %v279 = vld [vmem:[%s0 + $0x50] sm:$0xf]
        %v280 = vld [vmem:[%s0 + $0x54] sm:$0xff]
        %v281 = vld [vmem:[%s0 + $0x5c] sm:$0xff]
        %v282 = vld [vmem:[%s0 + $0x64] sm:$0xff]
        %v283 = vld [vmem:[%s0 + $0x6c] sm:$0xf]
        %v284 = vld [vmem:[%s0 + $0x70] sm:$0xff]
        %v285 = vld [vmem:[%s0 + $0x78] sm:$0xff]
        %v286 = vld [vmem:[%s0 + $0x80] sm:$0xff]
        %v287 = vld [vmem:[%s0 + $0x88] sm:$0xf]
        %v288 = vld [vmem:[%s0 + $0x8c] sm:$0xff]
        %v289 = vld [vmem:[%s0 + $0x94] sm:$0xff]
        %v290 = vld [vmem:[%s0 + $0x9c] sm:$0xff]
        %v291 = vld [vmem:[%s0 + $0xa4] sm:$0xf]
        %v292 = vld [vmem:[%s0 + $0xa8] sm:$0xff]
        %v293 = vld [vmem:[%s0 + $0xb0] sm:$0xff]
        %v294 = vld [vmem:[%s0 + $0xb8] sm:$0xff]
        %v295 = vld [vmem:[%s0 + $0xc0] sm:$0xf]
        %v296 = vld [vmem:[%s0 + $0xc4] sm:$0xff]
        %v297 = vld [vmem:[%s0 + $0xcc] sm:$0xff]
        %v298 = vld [vmem:[%s0 + $0xd4] sm:$0xff]
        %v299 = vld [vmem:[%s0 + $0xdc] sm:$0xf]
        %v300 = vld [vmem:[%s0 + $0xe0] sm:$0xff]
        %v301 = vld [vmem:[%s0 + $0xe8] sm:$0xff]
        %v302 = vld [vmem:[%s0 + $0xf0] sm:$0xff]
        %v303 = vld [vmem:[%s0 + $0xf8] sm:$0xf]
        %v304 = vld [vmem:[%s0 + $0xfc] sm:$0xff]
        %v305 = vld [vmem:[%s0 + $0x104] sm:$0xff]
        %v306 = vld [vmem:[%s0 + $0x10c] sm:$0xff]
        %v307 = vld [vmem:[%s0 + $0x114] sm:$0xf]
        %v308 = vld [vmem:[%s0 + $0x118] sm:$0xff]
        %v309 = vld [vmem:[%s0 + $0x120] sm:$0xff]
        %v310 = vld [vmem:[%s0 + $0x128] sm:$0xff]
        %v311 = vld [vmem:[%s0 + $0x130] sm:$0xf]
        %v312 = vld [vmem:[%s0 + $0x134] sm:$0xff]
        %v313 = vld [vmem:[%s0 + $0x13c] sm:$0xff]
        %v314 = vld [vmem:[%s0 + $0x144] sm:$0xff]
        %v315 = vld [vmem:[%s0 + $0x14c] sm:$0xf]
        %v316 = vld [vmem:[%s0 + $0x150] sm:$0xff]
        %v317 = vld [vmem:[%s0 + $0x158] sm:$0xff]
        %v318 = vld [vmem:[%s0 + $0x160] sm:$0xff]
        %v319 = vld [vmem:[%s0 + $0x168] sm:$0xf]
        %v320 = vld [vmem:[%s0 + $0x16c] sm:$0xff]
        %v321 = vld [vmem:[%s0 + $0x174] sm:$0xff]
        %v322 = vld [vmem:[%s0 + $0x17c] sm:$0xff]
        %v323 = vld [vmem:[%s0 + $0x184] sm:$0xf]
        %v324 = vld [vmem:[%s0 + $0x188] sm:$0xff]
        %v325 = vld [vmem:[%s0 + $0x190] sm:$0xff]
        %v326 = vld [vmem:[%s0 + $0x198] sm:$0xff]
        %v327 = vld [vmem:[%s0 + $0x1a0] sm:$0xf]
        %v328 = vld [vmem:[%s0 + $0x1a4] sm:$0xff]
        %v329 = vld [vmem:[%s0 + $0x1ac] sm:$0xff]
        %v330 = vld [vmem:[%s0 + $0x1b4] sm:$0xff]
        %v331 = vld [vmem:[%s0 + $0x1bc] sm:$0xf]
        %v332 = vld [vmem:[%s0 + $0x1c0] sm:$0xff]
        %v333 = vld [vmem:[%s0 + $0x1c8] sm:$0xff]
        %v334 = vld [vmem:[%s0 + $0x1d0] sm:$0xff]
        %v335 = vld [vmem:[%s0 + $0x1d8] sm:$0xf]
        %v336 = vld [vmem:[%s0 + $0x1dc] sm:$0xff]
        %v337 = vld [vmem:[%s0 + $0x1e4] sm:$0xff]
        %v338 = vld [vmem:[%s0 + $0x1ec] sm:$0xff]
        %v339 = vld [vmem:[%s0 + $0x1f4] sm:$0xf]
        %v340 = vld [vmem:[%s0 + $0x1f8] sm:$0xff]
        %v341 = vld [vmem:[%s0 + $0x200] sm:$0xff]
        %v342 = vld [vmem:[%s0 + $0x208] sm:$0xff]
        %v343 = vld [vmem:[%s0 + $0x210] sm:$0xf]
        %v344 = vld [vmem:[%s0 + $0x214] sm:$0xff]
        %v345 = vld [vmem:[%s0 + $0x21c] sm:$0xff]
        %v346 = vld [vmem:[%s0 + $0x224] sm:$0xff]
        %v347 = vld [vmem:[%s0 + $0x22c] sm:$0xf]
        %v348 = vld [vmem:[%s0 + $0x230] sm:$0xff]
        %v349 = vld [vmem:[%s0 + $0x238] sm:$0xff]
        %v350 = vld [vmem:[%s0 + $0x240] sm:$0xff]
        %v351 = vld [vmem:[%s0 + $0x248] sm:$0xf]
        %v352 = vld [vmem:[%s0 + $0x24c] sm:$0xff]
        %v353 = vld [vmem:[%s0 + $0x254] sm:$0xff]
        %v354 = vld [vmem:[%s0 + $0x25c] sm:$0xff]
        %v355 = vld [vmem:[%s0 + $0x264] sm:$0xf]
        %v356 = vld [vmem:[%s0 + $0x268] sm:$0xff]
        %v357 = vld [vmem:[%s0 + $0x270] sm:$0xff]
        %v358 = vld [vmem:[%s0 + $0x278] sm:$0xff]
        %v359 = vld [vmem:[%s0 + $0x280] sm:$0xf]
        %v360 = vld [vmem:[%s0 + $0x284] sm:$0xff]
        %v361 = vld [vmem:[%s0 + $0x28c] sm:$0xff]
        %v362 = vld [vmem:[%s0 + $0x294] sm:$0xff]
        %v363 = vld [vmem:[%s0 + $0x29c] sm:$0xf]
        %v364 = vld [vmem:[%s0 + $0x2a0] sm:$0xff]
        %v365 = vld [vmem:[%s0 + $0x2a8] sm:$0xff]
        %v366 = vld [vmem:[%s0 + $0x2b0] sm:$0xff]
        %v367 = vld [vmem:[%s0 + $0x2b8] sm:$0xf]
        %v368 = vld [vmem:[%s0 + $0x2bc] sm:$0xff]
        %v369 = vld [vmem:[%s0 + $0x2c4] sm:$0xff]
        %v370 = vld [vmem:[%s0 + $0x2cc] sm:$0xff]
        %v371 = vld [vmem:[%s0 + $0x2d4] sm:$0xf]
        %v372 = vld [vmem:[%s0 + $0x2d8] sm:$0xff]
        %v373 = vld [vmem:[%s0 + $0x2e0] sm:$0xff]
        %v374 = vld [vmem:[%s0 + $0x2e8] sm:$0xff]
        %v375 = vld [vmem:[%s0 + $0x2f0] sm:$0xf]
        %v376 = vld [vmem:[%s0 + $0x2f4] sm:$0xff]
        %v377 = vld [vmem:[%s0 + $0x2fc] sm:$0xff]
        %v378 = vld [vmem:[%s0 + $0x304] sm:$0xff]
        %v379 = vld [vmem:[%s0 + $0x30c] sm:$0xf]
        %v380 = vld [vmem:[%s0 + $0x310] sm:$0xff]
        %v381 = vld [vmem:[%s0 + $0x318] sm:$0xff]
        %v382 = vld [vmem:[%s0 + $0x320] sm:$0xff]
        %v383 = vld [vmem:[%s0 + $0x328] sm:$0xf]
        %v384 = vld [vmem:[%s0 + $0x32c] sm:$0xff]
        %v385 = vld [vmem:[%s0 + $0x334] sm:$0xff]
        %v386 = vld [vmem:[%s0 + $0x33c] sm:$0xff]
        %v387 = vld [vmem:[%s0 + $0x344] sm:$0xf]
        %v388 = vld [vmem:[%s0 + $0x348] sm:$0xff]
        %v389 = vld [vmem:[%s0 + $0x350] sm:$0xff]
        %v390 = vld [vmem:[%s0 + $0x358] sm:$0xff]
        %v391 = vld [vmem:[%s0 + $0x360] sm:$0xf]
        %v392 = vld [vmem:[%s0 + $0x364] sm:$0xff]
        %v393 = vld [vmem:[%s0 + $0x36c] sm:$0xff]
        %v394 = vld [vmem:[%s0 + $0x374] sm:$0xff]
        %v395 = vld [vmem:[%s0 + $0x37c] sm:$0xf]
        %v396 = vmax.bf16 %v268, 0
        %v397 = vmax.bf16 %v269, 0
        %v398 = vmax.bf16 %v270, 0
        %v399 = vmax.bf16 %v271, 0
        %v400 = vmax.bf16 %v272, 0
        %v401 = vmax.bf16 %v273, 0
        %v402 = vmax.bf16 %v274, 0
        %v403 = vmax.bf16 %v275, 0
        %v404 = vmax.bf16 %v276, 0
        %v405 = vmax.bf16 %v277, 0
        %v406 = vmax.bf16 %v278, 0
        %v407 = vmax.bf16 %v279, 0
        %v408 = vmax.bf16 %v280, 0
        %v409 = vmax.bf16 %v281, 0
        %v410 = vmax.bf16 %v282, 0
        %v411 = vmax.bf16 %v283, 0
        %v412 = vmax.bf16 %v284, 0
        %v413 = vmax.bf16 %v285, 0
        %v414 = vmax.bf16 %v286, 0
        %v415 = vmax.bf16 %v287, 0
        %v416 = vmax.bf16 %v288, 0
        %v417 = vmax.bf16 %v289, 0
        %v418 = vmax.bf16 %v290, 0
        %v419 = vmax.bf16 %v291, 0
        %v420 = vmax.bf16 %v292, 0
        %v421 = vmax.bf16 %v293, 0
        %v422 = vmax.bf16 %v294, 0
        %v423 = vmax.bf16 %v295, 0
        %v424 = vmax.bf16 %v296, 0
        %v425 = vmax.bf16 %v297, 0
        %v426 = vmax.bf16 %v298, 0
        %v427 = vmax.bf16 %v299, 0
        %v428 = vmax.bf16 %v300, 0
        %v429 = vmax.bf16 %v301, 0
        %v430 = vmax.bf16 %v302, 0
        %v431 = vmax.bf16 %v303, 0
        %v432 = vmax.bf16 %v304, 0
        %v433 = vmax.bf16 %v305, 0
        %v434 = vmax.bf16 %v306, 0
        %v435 = vmax.bf16 %v307, 0
        %v436 = vmax.bf16 %v308, 0
        %v437 = vmax.bf16 %v309, 0
        %v438 = vmax.bf16 %v310, 0
        %v439 = vmax.bf16 %v311, 0
        %v440 = vmax.bf16 %v312, 0
        %v441 = vmax.bf16 %v313, 0
        %v442 = vmax.bf16 %v314, 0
        %v443 = vmax.bf16 %v315, 0
        %v444 = vmax.bf16 %v316, 0
        %v445 = vmax.bf16 %v317, 0
        %v446 = vmax.bf16 %v318, 0
        %v447 = vmax.bf16 %v319, 0
        %v448 = vmax.bf16 %v320, 0
        %v449 = vmax.bf16 %v321, 0
        %v450 = vmax.bf16 %v322, 0
        %v451 = vmax.bf16 %v323, 0
        %v452 = vmax.bf16 %v324, 0
        %v453 = vmax.bf16 %v325, 0
        %v454 = vmax.bf16 %v326, 0
        %v455 = vmax.bf16 %v327, 0
        %v456 = vmax.bf16 %v328, 0
        %v457 = vmax.bf16 %v329, 0
        %v458 = vmax.bf16 %v330, 0
        %v459 = vmax.bf16 %v331, 0
        %v460 = vmax.bf16 %v332, 0
        %v461 = vmax.bf16 %v333, 0
        %v462 = vmax.bf16 %v334, 0
        %v463 = vmax.bf16 %v335, 0
        %v464 = vmax.bf16 %v336, 0
        %v465 = vmax.bf16 %v337, 0
        %v466 = vmax.bf16 %v338, 0
        %v467 = vmax.bf16 %v339, 0
        %v468 = vmax.bf16 %v340, 0
        %v469 = vmax.bf16 %v341, 0
        %v470 = vmax.bf16 %v342, 0
        %v471 = vmax.bf16 %v343, 0
        %v472 = vmax.bf16 %v344, 0
        %v473 = vmax.bf16 %v345, 0
        %v474 = vmax.bf16 %v346, 0
        %v475 = vmax.bf16 %v347, 0
        %v476 = vmax.bf16 %v348, 0
        %v477 = vmax.bf16 %v349, 0
        %v478 = vmax.bf16 %v350, 0
        %v479 = vmax.bf16 %v351, 0
        %v480 = vmax.bf16 %v352, 0
        %v481 = vmax.bf16 %v353, 0
        %v482 = vmax.bf16 %v354, 0
        %v483 = vmax.bf16 %v355, 0
        %v484 = vmax.bf16 %v356, 0
        %v485 = vmax.bf16 %v357, 0
        %v486 = vmax.bf16 %v358, 0
        %v487 = vmax.bf16 %v359, 0
        %v488 = vmax.bf16 %v360, 0
        %v489 = vmax.bf16 %v361, 0
        %v490 = vmax.bf16 %v362, 0
        %v491 = vmax.bf16 %v363, 0
        %v492 = vmax.bf16 %v364, 0
        %v493 = vmax.bf16 %v365, 0
        %v494 = vmax.bf16 %v366, 0
        %v495 = vmax.bf16 %v367, 0
        %v496 = vmax.bf16 %v368, 0
        %v497 = vmax.bf16 %v369, 0
        %v498 = vmax.bf16 %v370, 0
        %v499 = vmax.bf16 %v371, 0
        %v500 = vmax.bf16 %v372, 0
        %v501 = vmax.bf16 %v373, 0
        %v502 = vmax.bf16 %v374, 0
        %v503 = vmax.bf16 %v375, 0
        %v504 = vmax.bf16 %v376, 0
        %v505 = vmax.bf16 %v377, 0
        %v506 = vmax.bf16 %v378, 0
        %v507 = vmax.bf16 %v379, 0
        %v508 = vmax.bf16 %v380, 0
        %v509 = vmax.bf16 %v381, 0
        %v510 = vmax.bf16 %v382, 0
        %v511 = vmax.bf16 %v383, 0
        %v512 = vmax.bf16 %v384, 0
        %v513 = vmax.bf16 %v385, 0
        %v514 = vmax.bf16 %v386, 0
        %v515 = vmax.bf16 %v387, 0
        %v516 = vmax.bf16 %v388, 0
        %v517 = vmax.bf16 %v389, 0
        %v518 = vmax.bf16 %v390, 0
        %v519 = vmax.bf16 %v391, 0
        %v520 = vmax.bf16 %v392, 0
        %v521 = vmax.bf16 %v393, 0
        %v522 = vmax.bf16 %v394, 0
        %v523 = vmax.bf16 %v395, 0
        %v524 = vld [vmem:[%s211] sm:$0xff]
        %v525 = vld [vmem:[%s211 + $0x8] sm:$0xff]
        %v526 = vld [vmem:[%s211 + $0x10] sm:$0xff]
        %v527 = vld [vmem:[%s211 + $0x18] sm:$0xff]
        %v528 = vld [vmem:[%s211 + $0x20] sm:$0xff]
        %v529 = vld [vmem:[%s211 + $0x28] sm:$0xff]
        %v530 = vld [vmem:[%s211 + $0x30] sm:$0xff]
        %v531 = vld [vmem:[%s211 + $0x38] sm:$0xff]
        %v532 = vld [vmem:[%s211 + $0x40] sm:$0xff]
        %v533 = vld [vmem:[%s211 + $0x48] sm:$0xff]
        %v534 = vld [vmem:[%s211 + $0x50] sm:$0xff]
        %v535 = vld [vmem:[%s211 + $0x58] sm:$0xff]
        %v536 = vld [vmem:[%s211 + $0x60] sm:$0xff]
        %v537 = vld [vmem:[%s211 + $0x68] sm:$0xff]
        %v538 = vld [vmem:[%s211 + $0x70] sm:$0xff]
        %v539 = vld [vmem:[%s211 + $0x78] sm:$0xff]
        %v540 = vld [vmem:[%s211 + $0x80] sm:$0xff]
        %v541 = vld [vmem:[%s211 + $0x88] sm:$0xff]
        %v542 = vld [vmem:[%s211 + $0x90] sm:$0xff]
        %v543 = vld [vmem:[%s211 + $0x98] sm:$0xff]
        %v544 = vld [vmem:[%s211 + $0xa0] sm:$0xff]
        %v545 = vld [vmem:[%s211 + $0xa8] sm:$0xff]
        %v546 = vld [vmem:[%s211 + $0xb0] sm:$0xff]
        %v547 = vld [vmem:[%s211 + $0xb8] sm:$0xff]
        %v548 = vld [vmem:[%s211 + $0xc0] sm:$0xff]
        %v549 = vld [vmem:[%s211 + $0xc8] sm:$0xff]
        %v550 = vld [vmem:[%s211 + $0xd0] sm:$0xff]
        %v551 = vld [vmem:[%s211 + $0xd8] sm:$0xff]
        %v552 = vld [vmem:[%s211 + $0xe0] sm:$0xff]
        %v553 = vld [vmem:[%s211 + $0xe8] sm:$0xff]
        %v554 = vld [vmem:[%s211 + $0xf0] sm:$0xff]
        %v555 = vld [vmem:[%s211 + $0xf8] sm:$0xff]
        %v556 = vld [vmem:[%s211 + $0x100] sm:$0xff]
        %v557 = vld [vmem:[%s211 + $0x108] sm:$0xff]
        %v558 = vld [vmem:[%s211 + $0x110] sm:$0xff]
        %v559 = vld [vmem:[%s211 + $0x118] sm:$0xff]
        %v560 = vld [vmem:[%s211 + $0x120] sm:$0xff]
        %v561 = vld [vmem:[%s211 + $0x128] sm:$0xff]
        %v562 = vld [vmem:[%s211 + $0x130] sm:$0xff]
        %v563 = vld [vmem:[%s211 + $0x138] sm:$0xff]
        %v564 = vld [vmem:[%s211 + $0x140] sm:$0xff]
        %v565 = vld [vmem:[%s211 + $0x148] sm:$0xff]
        %v566 = vld [vmem:[%s211 + $0x150] sm:$0xff]
        %v567 = vld [vmem:[%s211 + $0x158] sm:$0xff]
        %v568 = vld [vmem:[%s211 + $0x160] sm:$0xff]
        %v569 = vld [vmem:[%s211 + $0x168] sm:$0xff]
        %v570 = vld [vmem:[%s211 + $0x170] sm:$0xff]
        %v571 = vld [vmem:[%s211 + $0x178] sm:$0xff]
        %v572 = vld [vmem:[%s211 + $0x180] sm:$0xff]
        %v573 = vld [vmem:[%s211 + $0x188] sm:$0xff]
        %v574 = vld [vmem:[%s211 + $0x190] sm:$0xff]
        %v575 = vld [vmem:[%s211 + $0x198] sm:$0xff]
        %v576 = vld [vmem:[%s211 + $0x1a0] sm:$0xff]
        %v577 = vld [vmem:[%s211 + $0x1a8] sm:$0xff]
        %v578 = vld [vmem:[%s211 + $0x1b0] sm:$0xff]
        %v579 = vld [vmem:[%s211 + $0x1b8] sm:$0xff]
        %v580 = vld [vmem:[%s211 + $0x1c0] sm:$0xff]
        %v581 = vld [vmem:[%s211 + $0x1c8] sm:$0xff]
        %v582 = vld [vmem:[%s211 + $0x1d0] sm:$0xff]
        %v583 = vld [vmem:[%s211 + $0x1d8] sm:$0xff]
        %v584 = vld [vmem:[%s211 + $0x1e0] sm:$0xff]
        %v585 = vld [vmem:[%s211 + $0x1e8] sm:$0xff]
        %v586 = vld [vmem:[%s211 + $0x1f0] sm:$0xff]
        %v587 = vld [vmem:[%s211 + $0x1f8] sm:$0xff]
        %v652 = vunpack.c.l.b16 %v524
        %v653 = vunpack.c.h.b16 %v524
        %v654 = vunpack.c.l.b16 %v525
        %v655 = vunpack.c.h.b16 %v525
        %v656 = vunpack.c.l.b16 %v526
        %v657 = vunpack.c.h.b16 %v526
        %v658 = vunpack.c.l.b16 %v527
        %v659 = vunpack.c.h.b16 %v527
        %v660 = vunpack.c.l.b16 %v528
        %v661 = vunpack.c.h.b16 %v528
        %v662 = vunpack.c.l.b16 %v529
        %v663 = vunpack.c.h.b16 %v529
        %v664 = vunpack.c.l.b16 %v530
        %v665 = vunpack.c.h.b16 %v530
        %v666 = vunpack.c.l.b16 %v531
        %v667 = vunpack.c.h.b16 %v531
        %v668 = vunpack.c.l.b16 %v532
        %v669 = vunpack.c.h.b16 %v532
        %v670 = vunpack.c.l.b16 %v533
        %v671 = vunpack.c.h.b16 %v533
        %v672 = vunpack.c.l.b16 %v534
        %v673 = vunpack.c.h.b16 %v534
        %v674 = vunpack.c.l.b16 %v535
        %v675 = vunpack.c.h.b16 %v535
        %v676 = vunpack.c.l.b16 %v536
        %v677 = vunpack.c.h.b16 %v536
        %v678 = vunpack.c.l.b16 %v537
        %v679 = vunpack.c.h.b16 %v537
        %v680 = vunpack.c.l.b16 %v538
        %v681 = vunpack.c.h.b16 %v538
        %v682 = vunpack.c.l.b16 %v539
        %v683 = vunpack.c.h.b16 %v539
        %v684 = vunpack.c.l.b16 %v540
        %v685 = vunpack.c.h.b16 %v540
        %v686 = vunpack.c.l.b16 %v541
        %v687 = vunpack.c.h.b16 %v541
        %v688 = vunpack.c.l.b16 %v542
        %v689 = vunpack.c.h.b16 %v542
        %v690 = vunpack.c.l.b16 %v543
        %v691 = vunpack.c.h.b16 %v543
        %v692 = vunpack.c.l.b16 %v544
        %v693 = vunpack.c.h.b16 %v544
        %v694 = vunpack.c.l.b16 %v545
        %v695 = vunpack.c.h.b16 %v545
        %v696 = vunpack.c.l.b16 %v546
        %v697 = vunpack.c.h.b16 %v546
        %v698 = vunpack.c.l.b16 %v547
        %v699 = vunpack.c.h.b16 %v547
        %v700 = vunpack.c.l.b16 %v548
        %v701 = vunpack.c.h.b16 %v548
        %v702 = vunpack.c.l.b16 %v549
        %v703 = vunpack.c.h.b16 %v549
        %v704 = vunpack.c.l.b16 %v550
        %v705 = vunpack.c.h.b16 %v550
        %v706 = vunpack.c.l.b16 %v551
        %v707 = vunpack.c.h.b16 %v551
        %v708 = vunpack.c.l.b16 %v552
        %v709 = vunpack.c.h.b16 %v552
        %v710 = vunpack.c.l.b16 %v553
        %v711 = vunpack.c.h.b16 %v553
        %v712 = vunpack.c.l.b16 %v554
        %v713 = vunpack.c.h.b16 %v554
        %v714 = vunpack.c.l.b16 %v555
        %v715 = vunpack.c.h.b16 %v555
        %v716 = vunpack.c.l.b16 %v556
        %v717 = vunpack.c.h.b16 %v556
        %v718 = vunpack.c.l.b16 %v557
        %v719 = vunpack.c.h.b16 %v557
        %v720 = vunpack.c.l.b16 %v558
        %v721 = vunpack.c.h.b16 %v558
        %v722 = vunpack.c.l.b16 %v559
        %v723 = vunpack.c.h.b16 %v559
        %v724 = vunpack.c.l.b16 %v560
        %v725 = vunpack.c.h.b16 %v560
        %v726 = vunpack.c.l.b16 %v561
        %v727 = vunpack.c.h.b16 %v561
        %v728 = vunpack.c.l.b16 %v562
        %v729 = vunpack.c.h.b16 %v562
        %v730 = vunpack.c.l.b16 %v563
        %v731 = vunpack.c.h.b16 %v563
        %v732 = vunpack.c.l.b16 %v564
        %v733 = vunpack.c.h.b16 %v564
        %v734 = vunpack.c.l.b16 %v565
        %v735 = vunpack.c.h.b16 %v565
        %v736 = vunpack.c.l.b16 %v566
        %v737 = vunpack.c.h.b16 %v566
        %v738 = vunpack.c.l.b16 %v567
        %v739 = vunpack.c.h.b16 %v567
        %v740 = vunpack.c.l.b16 %v568
        %v741 = vunpack.c.h.b16 %v568
        %v742 = vunpack.c.l.b16 %v569
        %v743 = vunpack.c.h.b16 %v569
        %v744 = vunpack.c.l.b16 %v570
        %v745 = vunpack.c.h.b16 %v570
        %v746 = vunpack.c.l.b16 %v571
        %v747 = vunpack.c.h.b16 %v571
        %v748 = vunpack.c.l.b16 %v572
        %v749 = vunpack.c.h.b16 %v572
        %v750 = vunpack.c.l.b16 %v573
        %v751 = vunpack.c.h.b16 %v573
        %v752 = vunpack.c.l.b16 %v574
        %v753 = vunpack.c.h.b16 %v574
        %v754 = vunpack.c.l.b16 %v575
        %v755 = vunpack.c.h.b16 %v575
        %v756 = vunpack.c.l.b16 %v576
        %v757 = vunpack.c.h.b16 %v576
        %v758 = vunpack.c.l.b16 %v577
        %v759 = vunpack.c.h.b16 %v577
        %v760 = vunpack.c.l.b16 %v578
        %v761 = vunpack.c.h.b16 %v578
        %v762 = vunpack.c.l.b16 %v579
        %v763 = vunpack.c.h.b16 %v579
        %v764 = vunpack.c.l.b16 %v580
        %v765 = vunpack.c.h.b16 %v580
        %v766 = vunpack.c.l.b16 %v581
        %v767 = vunpack.c.h.b16 %v581
        %v768 = vunpack.c.l.b16 %v582
        %v769 = vunpack.c.h.b16 %v582
        %v770 = vunpack.c.l.b16 %v583
        %v771 = vunpack.c.h.b16 %v583
        %v772 = vunpack.c.l.b16 %v584
        %v773 = vunpack.c.h.b16 %v584
        %v774 = vunpack.c.l.b16 %v585
        %v775 = vunpack.c.h.b16 %v585
        %v776 = vunpack.c.l.b16 %v586
        %v777 = vunpack.c.h.b16 %v586
        %v778 = vunpack.c.l.b16 %v587
        %v779 = vunpack.c.h.b16 %v587
        %v780 = vpack.c.b16 %v654, %v652
        %v781 = vpack.c.b16 %v655, %v653
        %v782 = vpack.c.b16 %v658, %v656
        %v783 = vpack.c.b16 %v659, %v657
        %v784 = vpack.c.b16 %v662, %v660
        %v785 = vpack.c.b16 %v663, %v661
        %v786 = vpack.c.b16 %v666, %v664
        %v787 = vpack.c.b16 %v667, %v665
        %v788 = vpack.c.b16 %v670, %v668
        %v789 = vpack.c.b16 %v671, %v669
        %v790 = vpack.c.b16 %v674, %v672
        %v791 = vpack.c.b16 %v675, %v673
        %v792 = vpack.c.b16 %v678, %v676
        %v793 = vpack.c.b16 %v679, %v677
        %v794 = vpack.c.b16 %v682, %v680
        %v795 = vpack.c.b16 %v683, %v681
        %v796 = vpack.c.b16 %v686, %v684
        %v797 = vpack.c.b16 %v687, %v685
        %v798 = vpack.c.b16 %v690, %v688
        %v799 = vpack.c.b16 %v691, %v689
        %v800 = vpack.c.b16 %v694, %v692
        %v801 = vpack.c.b16 %v695, %v693
        %v802 = vpack.c.b16 %v698, %v696
        %v803 = vpack.c.b16 %v699, %v697
        %v804 = vpack.c.b16 %v702, %v700
        %v805 = vpack.c.b16 %v703, %v701
        %v806 = vpack.c.b16 %v706, %v704
        %v807 = vpack.c.b16 %v707, %v705
        %v808 = vpack.c.b16 %v710, %v708
        %v809 = vpack.c.b16 %v711, %v709
        %v810 = vpack.c.b16 %v714, %v712
        %v811 = vpack.c.b16 %v715, %v713
        %v812 = vpack.c.b16 %v718, %v716
        %v813 = vpack.c.b16 %v719, %v717
        %v814 = vpack.c.b16 %v722, %v720
        %v815 = vpack.c.b16 %v723, %v721
        %v816 = vpack.c.b16 %v726, %v724
        %v817 = vpack.c.b16 %v727, %v725
        %v818 = vpack.c.b16 %v730, %v728
        %v819 = vpack.c.b16 %v731, %v729
        %v820 = vpack.c.b16 %v734, %v732
        %v821 = vpack.c.b16 %v735, %v733
        %v822 = vpack.c.b16 %v738, %v736
        %v823 = vpack.c.b16 %v739, %v737
        %v824 = vpack.c.b16 %v742, %v740
        %v825 = vpack.c.b16 %v743, %v741
        %v826 = vpack.c.b16 %v746, %v744
        %v827 = vpack.c.b16 %v747, %v745
        %v828 = vpack.c.b16 %v750, %v748
        %v829 = vpack.c.b16 %v751, %v749
        %v830 = vpack.c.b16 %v754, %v752
        %v831 = vpack.c.b16 %v755, %v753
        %v832 = vpack.c.b16 %v758, %v756
        %v833 = vpack.c.b16 %v759, %v757
        %v834 = vpack.c.b16 %v762, %v760
        %v835 = vpack.c.b16 %v763, %v761
        %v836 = vpack.c.b16 %v766, %v764
        %v837 = vpack.c.b16 %v767, %v765
        %v838 = vpack.c.b16 %v770, %v768
        %v839 = vpack.c.b16 %v771, %v769
        %v840 = vpack.c.b16 %v774, %v772
        %v841 = vpack.c.b16 %v775, %v773
        %v842 = vpack.c.b16 %v778, %v776
        %v843 = vpack.c.b16 %v779, %v777
        %v1036 = vunpack.c.l.b16 %v396
        %v1037 = vunpack.c.h.b16 %v396
        %v1038 = vunpack.c.l.b16 %v397
        %v1039 = vunpack.c.h.b16 %v397
        %v1040 = vunpack.c.l.b16 %v398
        %v1041 = vunpack.c.h.b16 %v398
        %v1042 = vunpack.c.l.b16 %v399
        %v1043 = vunpack.c.l.b16 %v400
        %v1044 = vunpack.c.h.b16 %v400
        %v1045 = vunpack.c.l.b16 %v401
        %v1046 = vunpack.c.h.b16 %v401
        %v1047 = vunpack.c.l.b16 %v402
        %v1048 = vunpack.c.h.b16 %v402
        %v1049 = vunpack.c.l.b16 %v403
        %v1050 = vunpack.c.l.b16 %v404
        %v1051 = vunpack.c.h.b16 %v404
        %v1052 = vunpack.c.l.b16 %v405
        %v1053 = vunpack.c.h.b16 %v405
        %v1054 = vunpack.c.l.b16 %v406
        %v1055 = vunpack.c.h.b16 %v406
        %v1056 = vunpack.c.l.b16 %v407
        %v1057 = vunpack.c.l.b16 %v408
        %v1058 = vunpack.c.h.b16 %v408
        %v1059 = vunpack.c.l.b16 %v409
        %v1060 = vunpack.c.h.b16 %v409
        %v1061 = vunpack.c.l.b16 %v410
        %v1062 = vunpack.c.h.b16 %v410
        %v1063 = vunpack.c.l.b16 %v411
        %v1064 = vunpack.c.l.b16 %v412
        %v1065 = vunpack.c.h.b16 %v412
        %v1066 = vunpack.c.l.b16 %v413
        %v1067 = vunpack.c.h.b16 %v413
        %v1068 = vunpack.c.l.b16 %v414
        %v1069 = vunpack.c.h.b16 %v414
        %v1070 = vunpack.c.l.b16 %v415
        %v1071 = vunpack.c.l.b16 %v416
        %v1072 = vunpack.c.h.b16 %v416
        %v1073 = vunpack.c.l.b16 %v417
        %v1074 = vunpack.c.h.b16 %v417
        %v1075 = vunpack.c.l.b16 %v418
        %v1076 = vunpack.c.h.b16 %v418
        %v1077 = vunpack.c.l.b16 %v419
        %v1078 = vunpack.c.l.b16 %v420
        %v1079 = vunpack.c.h.b16 %v420
        %v1080 = vunpack.c.l.b16 %v421
        %v1081 = vunpack.c.h.b16 %v421
        %v1082 = vunpack.c.l.b16 %v422
        %v1083 = vunpack.c.h.b16 %v422
        %v1084 = vunpack.c.l.b16 %v423
        %v1085 = vunpack.c.l.b16 %v424
        %v1086 = vunpack.c.h.b16 %v424
        %v1087 = vunpack.c.l.b16 %v425
        %v1088 = vunpack.c.h.b16 %v425
        %v1089 = vunpack.c.l.b16 %v426
        %v1090 = vunpack.c.h.b16 %v426
        %v1091 = vunpack.c.l.b16 %v427
        %v1092 = vunpack.c.l.b16 %v428
        %v1093 = vunpack.c.h.b16 %v428
        %v1094 = vunpack.c.l.b16 %v429
        %v1095 = vunpack.c.h.b16 %v429
        %v1096 = vunpack.c.l.b16 %v430
        %v1097 = vunpack.c.h.b16 %v430
        %v1098 = vunpack.c.l.b16 %v431
        %v1099 = vunpack.c.l.b16 %v432
        %v1100 = vunpack.c.h.b16 %v432
        %v1101 = vunpack.c.l.b16 %v433
        %v1102 = vunpack.c.h.b16 %v433
        %v1103 = vunpack.c.l.b16 %v434
        %v1104 = vunpack.c.h.b16 %v434
        %v1105 = vunpack.c.l.b16 %v435
        %v1106 = vunpack.c.l.b16 %v436
        %v1107 = vunpack.c.h.b16 %v436
        %v1108 = vunpack.c.l.b16 %v437
        %v1109 = vunpack.c.h.b16 %v437
        %v1110 = vunpack.c.l.b16 %v438
        %v1111 = vunpack.c.h.b16 %v438
        %v1112 = vunpack.c.l.b16 %v439
        %v1113 = vunpack.c.l.b16 %v440
        %v1114 = vunpack.c.h.b16 %v440
        %v1115 = vunpack.c.l.b16 %v441
        %v1116 = vunpack.c.h.b16 %v441
        %v1117 = vunpack.c.l.b16 %v442
        %v1118 = vunpack.c.h.b16 %v442
        %v1119 = vunpack.c.l.b16 %v443
        %v1120 = vunpack.c.l.b16 %v444
        %v1121 = vunpack.c.h.b16 %v444
        %v1122 = vunpack.c.l.b16 %v445
        %v1123 = vunpack.c.h.b16 %v445
        %v1124 = vunpack.c.l.b16 %v446
        %v1125 = vunpack.c.h.b16 %v446
        %v1126 = vunpack.c.l.b16 %v447
        %v1127 = vunpack.c.l.b16 %v448
        %v1128 = vunpack.c.h.b16 %v448
        %v1129 = vunpack.c.l.b16 %v449
        %v1130 = vunpack.c.h.b16 %v449
        %v1131 = vunpack.c.l.b16 %v450
        %v1132 = vunpack.c.h.b16 %v450
        %v1133 = vunpack.c.l.b16 %v451
        %v1134 = vunpack.c.l.b16 %v452
        %v1135 = vunpack.c.h.b16 %v452
        %v1136 = vunpack.c.l.b16 %v453
        %v1137 = vunpack.c.h.b16 %v453
        %v1138 = vunpack.c.l.b16 %v454
        %v1139 = vunpack.c.h.b16 %v454
        %v1140 = vunpack.c.l.b16 %v455
        %v1141 = vunpack.c.l.b16 %v456
        %v1142 = vunpack.c.h.b16 %v456
        %v1143 = vunpack.c.l.b16 %v457
        %v1144 = vunpack.c.h.b16 %v457
        %v1145 = vunpack.c.l.b16 %v458
        %v1146 = vunpack.c.h.b16 %v458
        %v1147 = vunpack.c.l.b16 %v459
        %v1148 = vunpack.c.l.b16 %v460
        %v1149 = vunpack.c.h.b16 %v460
        %v1150 = vunpack.c.l.b16 %v461
        %v1151 = vunpack.c.h.b16 %v461
        %v1152 = vunpack.c.l.b16 %v462
        %v1153 = vunpack.c.h.b16 %v462
        %v1154 = vunpack.c.l.b16 %v463
        %v1155 = vunpack.c.l.b16 %v464
        %v1156 = vunpack.c.h.b16 %v464
        %v1157 = vunpack.c.l.b16 %v465
        %v1158 = vunpack.c.h.b16 %v465
        %v1159 = vunpack.c.l.b16 %v466
        %v1160 = vunpack.c.h.b16 %v466
        %v1161 = vunpack.c.l.b16 %v467
        %v1162 = vunpack.c.l.b16 %v468
        %v1163 = vunpack.c.h.b16 %v468
        %v1164 = vunpack.c.l.b16 %v469
        %v1165 = vunpack.c.h.b16 %v469
        %v1166 = vunpack.c.l.b16 %v470
        %v1167 = vunpack.c.h.b16 %v470
        %v1168 = vunpack.c.l.b16 %v471
        %v1169 = vunpack.c.l.b16 %v472
        %v1170 = vunpack.c.h.b16 %v472
        %v1171 = vunpack.c.l.b16 %v473
        %v1172 = vunpack.c.h.b16 %v473
        %v1173 = vunpack.c.l.b16 %v474
        %v1174 = vunpack.c.h.b16 %v474
        %v1175 = vunpack.c.l.b16 %v475
        %v1176 = vunpack.c.l.b16 %v476
        %v1177 = vunpack.c.h.b16 %v476
        %v1178 = vunpack.c.l.b16 %v477
        %v1179 = vunpack.c.h.b16 %v477
        %v1180 = vunpack.c.l.b16 %v478
        %v1181 = vunpack.c.h.b16 %v478
        %v1182 = vunpack.c.l.b16 %v479
        %v1183 = vunpack.c.l.b16 %v480
        %v1184 = vunpack.c.h.b16 %v480
        %v1185 = vunpack.c.l.b16 %v481
        %v1186 = vunpack.c.h.b16 %v481
        %v1187 = vunpack.c.l.b16 %v482
        %v1188 = vunpack.c.h.b16 %v482
        %v1189 = vunpack.c.l.b16 %v483
        %v1190 = vunpack.c.l.b16 %v484
        %v1191 = vunpack.c.h.b16 %v484
        %v1192 = vunpack.c.l.b16 %v485
        %v1193 = vunpack.c.h.b16 %v485
        %v1194 = vunpack.c.l.b16 %v486
        %v1195 = vunpack.c.h.b16 %v486
        %v1196 = vunpack.c.l.b16 %v487
        %v1197 = vunpack.c.l.b16 %v488
        %v1198 = vunpack.c.h.b16 %v488
        %v1199 = vunpack.c.l.b16 %v489
        %v1200 = vunpack.c.h.b16 %v489
        %v1201 = vunpack.c.l.b16 %v490
        %v1202 = vunpack.c.h.b16 %v490
        %v1203 = vunpack.c.l.b16 %v491
        %v1204 = vunpack.c.l.b16 %v492
        %v1205 = vunpack.c.h.b16 %v492
        %v1206 = vunpack.c.l.b16 %v493
        %v1207 = vunpack.c.h.b16 %v493
        %v1208 = vunpack.c.l.b16 %v494
        %v1209 = vunpack.c.h.b16 %v494
        %v1210 = vunpack.c.l.b16 %v495
        %v1211 = vunpack.c.l.b16 %v496
        %v1212 = vunpack.c.h.b16 %v496
        %v1213 = vunpack.c.l.b16 %v497
        %v1214 = vunpack.c.h.b16 %v497
        %v1215 = vunpack.c.l.b16 %v498
        %v1216 = vunpack.c.h.b16 %v498
        %v1217 = vunpack.c.l.b16 %v499
        %v1218 = vunpack.c.l.b16 %v500
        %v1219 = vunpack.c.h.b16 %v500
        %v1220 = vunpack.c.l.b16 %v501
        %v1221 = vunpack.c.h.b16 %v501
        %v1222 = vunpack.c.l.b16 %v502
        %v1223 = vunpack.c.h.b16 %v502
        %v1224 = vunpack.c.l.b16 %v503
        %v1225 = vunpack.c.l.b16 %v504
        %v1226 = vunpack.c.h.b16 %v504
        %v1227 = vunpack.c.l.b16 %v505
        %v1228 = vunpack.c.h.b16 %v505
        %v1229 = vunpack.c.l.b16 %v506
        %v1230 = vunpack.c.h.b16 %v506
        %v1231 = vunpack.c.l.b16 %v507
        %v1232 = vunpack.c.l.b16 %v508
        %v1233 = vunpack.c.h.b16 %v508
        %v1234 = vunpack.c.l.b16 %v509
        %v1235 = vunpack.c.h.b16 %v509
        %v1236 = vunpack.c.l.b16 %v510
        %v1237 = vunpack.c.h.b16 %v510
        %v1238 = vunpack.c.l.b16 %v511
        %v1239 = vunpack.c.l.b16 %v512
        %v1240 = vunpack.c.h.b16 %v512
        %v1241 = vunpack.c.l.b16 %v513
        %v1242 = vunpack.c.h.b16 %v513
        %v1243 = vunpack.c.l.b16 %v514
        %v1244 = vunpack.c.h.b16 %v514
        %v1245 = vunpack.c.l.b16 %v515
        %v1246 = vunpack.c.l.b16 %v516
        %v1247 = vunpack.c.h.b16 %v516
        %v1248 = vunpack.c.l.b16 %v517
        %v1249 = vunpack.c.h.b16 %v517
        %v1250 = vunpack.c.l.b16 %v518
        %v1251 = vunpack.c.h.b16 %v518
        %v1252 = vunpack.c.l.b16 %v519
        %v1253 = vunpack.c.l.b16 %v520
        %v1254 = vunpack.c.h.b16 %v520
        %v1255 = vunpack.c.l.b16 %v521
        %v1256 = vunpack.c.h.b16 %v521
        %v1257 = vunpack.c.l.b16 %v522
        %v1258 = vunpack.c.h.b16 %v522
        %v1259 = vunpack.c.l.b16 %v523
        %v1260 = vpack.c.b16 %v1043, %v1036
        %v1261 = vpack.c.b16 %v1044, %v1037
        %v1262 = vpack.c.b16 %v1045, %v1038
        %v1263 = vpack.c.b16 %v1046, %v1039
        %v1264 = vpack.c.b16 %v1047, %v1040
        %v1265 = vpack.c.b16 %v1048, %v1041
        %v1266 = vpack.c.b16 %v1049, %v1042
        %v1267 = vpack.c.b16 %v1057, %v1050
        %v1268 = vpack.c.b16 %v1058, %v1051
        %v1269 = vpack.c.b16 %v1059, %v1052
        %v1270 = vpack.c.b16 %v1060, %v1053
        %v1271 = vpack.c.b16 %v1061, %v1054
        %v1272 = vpack.c.b16 %v1062, %v1055
        %v1273 = vpack.c.b16 %v1063, %v1056
        %v1274 = vpack.c.b16 %v1071, %v1064
        %v1275 = vpack.c.b16 %v1072, %v1065
        %v1276 = vpack.c.b16 %v1073, %v1066
        %v1277 = vpack.c.b16 %v1074, %v1067
        %v1278 = vpack.c.b16 %v1075, %v1068
        %v1279 = vpack.c.b16 %v1076, %v1069
        %v1280 = vpack.c.b16 %v1077, %v1070
        %v1281 = vpack.c.b16 %v1085, %v1078
        %v1282 = vpack.c.b16 %v1086, %v1079
        %v1283 = vpack.c.b16 %v1087, %v1080
        %v1284 = vpack.c.b16 %v1088, %v1081
        %v1285 = vpack.c.b16 %v1089, %v1082
        %v1286 = vpack.c.b16 %v1090, %v1083
        %v1287 = vpack.c.b16 %v1091, %v1084
        %v1288 = vpack.c.b16 %v1099, %v1092
        %v1289 = vpack.c.b16 %v1100, %v1093
        %v1290 = vpack.c.b16 %v1101, %v1094
        %v1291 = vpack.c.b16 %v1102, %v1095
        %v1292 = vpack.c.b16 %v1103, %v1096
        %v1293 = vpack.c.b16 %v1104, %v1097
        %v1294 = vpack.c.b16 %v1105, %v1098
        %v1295 = vpack.c.b16 %v1113, %v1106
        %v1296 = vpack.c.b16 %v1114, %v1107
        %v1297 = vpack.c.b16 %v1115, %v1108
        %v1298 = vpack.c.b16 %v1116, %v1109
        %v1299 = vpack.c.b16 %v1117, %v1110
        %v1300 = vpack.c.b16 %v1118, %v1111
        %v1301 = vpack.c.b16 %v1119, %v1112
        %v1302 = vpack.c.b16 %v1127, %v1120
        %v1303 = vpack.c.b16 %v1128, %v1121
        %v1304 = vpack.c.b16 %v1129, %v1122
        %v1305 = vpack.c.b16 %v1130, %v1123
        %v1306 = vpack.c.b16 %v1131, %v1124
        %v1307 = vpack.c.b16 %v1132, %v1125
        %v1308 = vpack.c.b16 %v1133, %v1126
        %v1309 = vpack.c.b16 %v1141, %v1134
        %v1310 = vpack.c.b16 %v1142, %v1135
        %v1311 = vpack.c.b16 %v1143, %v1136
        %v1312 = vpack.c.b16 %v1144, %v1137
        %v1313 = vpack.c.b16 %v1145, %v1138
        %v1314 = vpack.c.b16 %v1146, %v1139
        %v1315 = vpack.c.b16 %v1147, %v1140
        %v1316 = vpack.c.b16 %v1155, %v1148
        %v1317 = vpack.c.b16 %v1156, %v1149
        %v1318 = vpack.c.b16 %v1157, %v1150
        %v1319 = vpack.c.b16 %v1158, %v1151
        %v1320 = vpack.c.b16 %v1159, %v1152
        %v1321 = vpack.c.b16 %v1160, %v1153
        %v1322 = vpack.c.b16 %v1161, %v1154
        %v1323 = vpack.c.b16 %v1169, %v1162
        %v1324 = vpack.c.b16 %v1170, %v1163
        %v1325 = vpack.c.b16 %v1171, %v1164
        %v1326 = vpack.c.b16 %v1172, %v1165
        %v1327 = vpack.c.b16 %v1173, %v1166
        %v1328 = vpack.c.b16 %v1174, %v1167
        %v1329 = vpack.c.b16 %v1175, %v1168
        %v1330 = vpack.c.b16 %v1183, %v1176
        %v1331 = vpack.c.b16 %v1184, %v1177
        %v1332 = vpack.c.b16 %v1185, %v1178
        %v1333 = vpack.c.b16 %v1186, %v1179
        %v1334 = vpack.c.b16 %v1187, %v1180
        %v1335 = vpack.c.b16 %v1188, %v1181
        %v1336 = vpack.c.b16 %v1189, %v1182
        %v1337 = vpack.c.b16 %v1197, %v1190
        %v1338 = vpack.c.b16 %v1198, %v1191
        %v1339 = vpack.c.b16 %v1199, %v1192
        %v1340 = vpack.c.b16 %v1200, %v1193
        %v1341 = vpack.c.b16 %v1201, %v1194
        %v1342 = vpack.c.b16 %v1202, %v1195
        %v1343 = vpack.c.b16 %v1203, %v1196
        %v1344 = vpack.c.b16 %v1211, %v1204
        %v1345 = vpack.c.b16 %v1212, %v1205
        %v1346 = vpack.c.b16 %v1213, %v1206
        %v1347 = vpack.c.b16 %v1214, %v1207
        %v1348 = vpack.c.b16 %v1215, %v1208
        %v1349 = vpack.c.b16 %v1216, %v1209
        %v1350 = vpack.c.b16 %v1217, %v1210
        %v1351 = vpack.c.b16 %v1225, %v1218
        %v1352 = vpack.c.b16 %v1226, %v1219
        %v1353 = vpack.c.b16 %v1227, %v1220
        %v1354 = vpack.c.b16 %v1228, %v1221
        %v1355 = vpack.c.b16 %v1229, %v1222
        %v1356 = vpack.c.b16 %v1230, %v1223
        %v1357 = vpack.c.b16 %v1231, %v1224
        %v1358 = vpack.c.b16 %v1239, %v1232
        %v1359 = vpack.c.b16 %v1240, %v1233
        %v1360 = vpack.c.b16 %v1241, %v1234
        %v1361 = vpack.c.b16 %v1242, %v1235
        %v1362 = vpack.c.b16 %v1243, %v1236
        %v1363 = vpack.c.b16 %v1244, %v1237
        %v1364 = vpack.c.b16 %v1245, %v1238
        %v1365 = vpack.c.b16 %v1253, %v1246
        %v1366 = vpack.c.b16 %v1254, %v1247
        %v1367 = vpack.c.b16 %v1255, %v1248
        %v1368 = vpack.c.b16 %v1256, %v1249
        %v1369 = vpack.c.b16 %v1257, %v1250
        %v1370 = vpack.c.b16 %v1258, %v1251
        %v1371 = vpack.c.b16 %v1259, %v1252
        %1484 = vmatprep.subr.bf16.mxu0 %v1261
        %1485 = vmatpush1.bf16.msra.mxu0 %v1260
        %1486 = vmatprep.subr.bf16.mxu0 %v1268
        %1487 = vmatpush1.bf16.msra.mxu0 %v1267
        %1488 = vmatprep.subr.bf16.mxu0 %v1275
        %1489 = vmatpush1.bf16.msra.mxu0 %v1274
        %1490 = vmatprep.subr.bf16.mxu0 %v1282
        %1491 = vmatpush1.bf16.msra.mxu0 %v1281
        %1492 = vmatprep.subr.bf16.mxu0 %v1289
        %1493 = vmatpush1.bf16.msra.mxu0 %v1288
        %1494 = vmatprep.subr.bf16.mxu0 %v1296
        %1495 = vmatpush1.bf16.msra.mxu0 %v1295
        %1496 = vmatprep.subr.bf16.mxu0 %v1303
        %1497 = vmatpush1.bf16.msra.mxu0 %v1302
        %1498 = vmatprep.subr.bf16.mxu0 %v1310
        %1499 = vmatpush1.bf16.msra.mxu0 %v1309
        %1500 = vmatprep.subr.bf16.mxu0 %v1317
        %1501 = vmatpush1.bf16.msra.mxu0 %v1316
        %1502 = vmatprep.subr.bf16.mxu0 %v1324
        %1503 = vmatpush1.bf16.msra.mxu0 %v1323
        %1504 = vmatprep.subr.bf16.mxu0 %v1331
        %1505 = vmatpush1.bf16.msra.mxu0 %v1330
        %1506 = vmatprep.subr.bf16.mxu0 %v1338
        %1507 = vmatpush1.bf16.msra.mxu0 %v1337
        %1508 = vmatprep.subr.bf16.mxu0 %v1345
        %1509 = vmatpush1.bf16.msra.mxu0 %v1344
        %1510 = vmatprep.subr.bf16.mxu0 %v1352
        %1511 = vmatpush1.bf16.msra.mxu0 %v1351
        %1512 = vmatprep.subr.bf16.mxu0 %v1359
        %1513 = vmatpush1.bf16.msra.mxu0 %v1358
        %1514 = vmatprep.subr.bf16.mxu0 %v1366
        %1515 = vmatpush1.bf16.msra.mxu0 %v1365
        %1516 = vmatprep.mubr.bf16.mxu0 %v781
        %1517 = vmatmul.mubr.bf16.gmra.mrb[0].mxu0 %v780
        %v1518 = vpop.f32.mrb[0].mxu0
        %v1519 = vadd.f32 0.0, %v1518
        %v1520 = vpop.f32.mrb[0].mxu0
        %v1521 = vadd.f32 0.0, %v1520
        %v1522 = vpop.f32.mrb[0].mxu0
        %v1523 = vadd.f32 0.0, %v1522
        %v1524 = vpop.f32.mrb[0].mxu0
        %v1525 = vadd.f32 0.0, %v1524
        %1526 = vmatprep.mubr.bf16.mxu0 %v783
        %1527 = vmatmul.mubr.bf16.gmra.mrb[0].mxu0 %v782
        %v1528 = vpop.f32.mrb[0].mxu0
        %v1529 = vadd.f32 0.0, %v1528
        %v1530 = vpop.f32.mrb[0].mxu0
        %v1531 = vadd.f32 0.0, %v1530
        %v1532 = vpop.f32.mrb[0].mxu0
        %v1533 = vadd.f32 0.0, %v1532
        %v1534 = vpop.f32.mrb[0].mxu0
        %v1535 = vadd.f32 0.0, %v1534
        %1536 = vmatprep.mubr.bf16.mxu0 %v785
        %1537 = vmatmul.mubr.bf16.gmra.mrb[0].mxu0 %v784
        %v1538 = vpop.f32.mrb[0].mxu0
        %v1539 = vadd.f32 0.0, %v1538
        %v1540 = vpop.f32.mrb[0].mxu0
        %v1541 = vadd.f32 0.0, %v1540
        %v1542 = vpop.f32.mrb[0].mxu0
        %v1543 = vadd.f32 0.0, %v1542
        %v1544 = vpop.f32.mrb[0].mxu0
        %v1545 = vadd.f32 0.0, %v1544
        %1546 = vmatprep.mubr.bf16.mxu0 %v787
        %1547 = vmatmul.mubr.bf16.gmra.mrb[0].mxu0 %v786
        %v1548 = vpop.f32.mrb[0].mxu0
        %v1549 = vadd.f32 0.0, %v1548
        %v1550 = vpop.f32.mrb[0].mxu0
        %v1551 = vadd.f32 0.0, %v1550
        %v1552 = vpop.f32.mrb[0].mxu0
        %v1553 = vadd.f32 0.0, %v1552
        %v1554 = vpop.f32.mrb[0].mxu0
        %v1555 = vadd.f32 0.0, %v1554
        %1556 = vmatprep.mubr.bf16.mxu0 %v789
        %1557 = vmatmul.mubr.bf16.gmra.mrb[0].mxu0 %v788
        %v1558 = vpop.f32.mrb[0].mxu0
        %v1559 = vadd.f32 0.0, %v1558
        %v1560 = vpop.f32.mrb[0].mxu0
        %v1561 = vadd.f32 0.0, %v1560
        %v1562 = vpop.f32.mrb[0].mxu0
        %v1563 = vadd.f32 0.0, %v1562
        %v1564 = vpop.f32.mrb[0].mxu0
        %v1565 = vadd.f32 0.0, %v1564
        %1566 = vmatprep.mubr.bf16.mxu0 %v791
        %1567 = vmatmul.mubr.bf16.gmra.mrb[0].mxu0 %v790
        %v1568 = vpop.f32.mrb[0].mxu0
        %v1569 = vadd.f32 0.0, %v1568
        %v1570 = vpop.f32.mrb[0].mxu0
        %v1571 = vadd.f32 0.0, %v1570
        %v1572 = vpop.f32.mrb[0].mxu0
        %v1573 = vadd.f32 0.0, %v1572
        %v1574 = vpop.f32.mrb[0].mxu0
        %v1575 = vadd.f32 0.0, %v1574
        %1576 = vmatprep.mubr.bf16.mxu0 %v793
        %1577 = vmatmul.mubr.bf16.gmra.mrb[0].mxu0 %v792
        %v1578 = vpop.f32.mrb[0].mxu0
        %v1579 = vadd.f32 0.0, %v1578
        %v1580 = vpop.f32.mrb[0].mxu0
        %v1581 = vadd.f32 0.0, %v1580
        %v1582 = vpop.f32.mrb[0].mxu0
        %v1583 = vadd.f32 0.0, %v1582
        %v1584 = vpop.f32.mrb[0].mxu0
        %v1585 = vadd.f32 0.0, %v1584
        %1586 = vmatprep.mubr.bf16.mxu0 %v795
        %1587 = vmatmul.mubr.bf16.gmra.mrb[0].mxu0 %v794
        %v1588 = vpop.f32.mrb[0].mxu0
        %v1589 = vadd.f32 0.0, %v1588
        %v1590 = vpop.f32.mrb[0].mxu0
        %v1591 = vadd.f32 0.0, %v1590
        %v1592 = vpop.f32.mrb[0].mxu0
        %v1593 = vadd.f32 0.0, %v1592
        %v1594 = vpop.f32.mrb[0].mxu0
        %v1595 = vadd.f32 0.0, %v1594
        %1596 = vmatprep.mubr.bf16.mxu0 %v797
        %1597 = vmatmul.mubr.bf16.gmra.mrb[0].mxu0 %v796
        %v1598 = vpop.f32.mrb[0].mxu0
        %v1599 = vadd.f32 0.0, %v1598
        %v1600 = vpop.f32.mrb[0].mxu0
        %v1601 = vadd.f32 0.0, %v1600
        %v1602 = vpop.f32.mrb[0].mxu0
        %v1603 = vadd.f32 0.0, %v1602
        %v1604 = vpop.f32.mrb[0].mxu0
        %v1605 = vadd.f32 0.0, %v1604
        %1606 = vmatprep.mubr.bf16.mxu0 %v799
        %1607 = vmatmul.mubr.bf16.gmra.mrb[0].mxu0 %v798
        %v1608 = vpop.f32.mrb[0].mxu0
        %v1609 = vadd.f32 0.0, %v1608
        %v1610 = vpop.f32.mrb[0].mxu0
        %v1611 = vadd.f32 0.0, %v1610
        %v1612 = vpop.f32.mrb[0].mxu0
        %v1613 = vadd.f32 0.0, %v1612
        %v1614 = vpop.f32.mrb[0].mxu0
        %v1615 = vadd.f32 0.0, %v1614
        %1616 = vmatprep.mubr.bf16.mxu0 %v801
        %1617 = vmatmul.mubr.bf16.gmra.mrb[0].mxu0 %v800
        %v1618 = vpop.f32.mrb[0].mxu0
        %v1619 = vadd.f32 0.0, %v1618
        %v1620 = vpop.f32.mrb[0].mxu0
        %v1621 = vadd.f32 0.0, %v1620
        %v1622 = vpop.f32.mrb[0].mxu0
        %v1623 = vadd.f32 0.0, %v1622
        %v1624 = vpop.f32.mrb[0].mxu0
        %v1625 = vadd.f32 0.0, %v1624
        %1626 = vmatprep.mubr.bf16.mxu0 %v803
        %1627 = vmatmul.mubr.bf16.gmra.mrb[0].mxu0 %v802
        %v1628 = vpop.f32.mrb[0].mxu0
        %v1629 = vadd.f32 0.0, %v1628
        %v1630 = vpop.f32.mrb[0].mxu0
        %v1631 = vadd.f32 0.0, %v1630
        %v1632 = vpop.f32.mrb[0].mxu0
        %v1633 = vadd.f32 0.0, %v1632
        %v1634 = vpop.f32.mrb[0].mxu0
        %v1635 = vadd.f32 0.0, %v1634
        %1636 = vmatprep.mubr.bf16.mxu0 %v805
        %1637 = vmatmul.mubr.bf16.gmra.mrb[0].mxu0 %v804
        %v1638 = vpop.f32.mrb[0].mxu0
        %v1639 = vadd.f32 0.0, %v1638
        %v1640 = vpop.f32.mrb[0].mxu0
        %v1641 = vadd.f32 0.0, %v1640
        %v1642 = vpop.f32.mrb[0].mxu0
        %v1643 = vadd.f32 0.0, %v1642
        %v1644 = vpop.f32.mrb[0].mxu0
        %v1645 = vadd.f32 0.0, %v1644
        %1646 = vmatprep.mubr.bf16.mxu0 %v807
        %1647 = vmatmul.mubr.bf16.gmra.mrb[0].mxu0 %v806
        %v1648 = vpop.f32.mrb[0].mxu0
        %v1649 = vadd.f32 0.0, %v1648
        %v1650 = vpop.f32.mrb[0].mxu0
        %v1651 = vadd.f32 0.0, %v1650
        %v1652 = vpop.f32.mrb[0].mxu0
        %v1653 = vadd.f32 0.0, %v1652
        %v1654 = vpop.f32.mrb[0].mxu0
        %v1655 = vadd.f32 0.0, %v1654
        %1656 = vmatprep.mubr.bf16.mxu0 %v809
        %1657 = vmatmul.mubr.bf16.gmra.mrb[0].mxu0 %v808
        %v1658 = vpop.f32.mrb[0].mxu0
        %v1659 = vadd.f32 0.0, %v1658
        %v1660 = vpop.f32.mrb[0].mxu0
        %v1661 = vadd.f32 0.0, %v1660
        %v1662 = vpop.f32.mrb[0].mxu0
        %v1663 = vadd.f32 0.0, %v1662
        %v1664 = vpop.f32.mrb[0].mxu0
        %v1665 = vadd.f32 0.0, %v1664
        %1666 = vmatprep.mubr.bf16.mxu0 %v811
        %1667 = vmatmul.mubr.bf16.gmra.mrb[0].mxu0 %v810
        %v1668 = vpop.f32.mrb[0].mxu0
        %v1669 = vadd.f32 0.0, %v1668
        %v1670 = vpop.f32.mrb[0].mxu0
        %v1671 = vadd.f32 0.0, %v1670
        %v1672 = vpop.f32.mrb[0].mxu0
        %v1673 = vadd.f32 0.0, %v1672
        %v1674 = vpop.f32.mrb[0].mxu0
        %v1675 = vadd.f32 0.0, %v1674
        %1676 = vmatprep.mubr.bf16.mxu0 %v813
        %1677 = vmatmul.mubr.bf16.gmra.mrb[0].mxu0 %v812
        %v1678 = vpop.f32.mrb[0].mxu0
        %v1679 = vadd.f32 0.0, %v1678
        %v1680 = vpop.f32.mrb[0].mxu0
        %v1681 = vadd.f32 0.0, %v1680
        %v1682 = vpop.f32.mrb[0].mxu0
        %v1683 = vadd.f32 0.0, %v1682
        %v1684 = vpop.f32.mrb[0].mxu0
        %v1685 = vadd.f32 0.0, %v1684
        %1686 = vmatprep.mubr.bf16.mxu0 %v815
        %1687 = vmatmul.mubr.bf16.gmra.mrb[0].mxu0 %v814
        %v1688 = vpop.f32.mrb[0].mxu0
        %v1689 = vadd.f32 0.0, %v1688
        %v1690 = vpop.f32.mrb[0].mxu0
        %v1691 = vadd.f32 0.0, %v1690
        %v1692 = vpop.f32.mrb[0].mxu0
        %v1693 = vadd.f32 0.0, %v1692
        %v1694 = vpop.f32.mrb[0].mxu0
        %v1695 = vadd.f32 0.0, %v1694
        %1696 = vmatprep.mubr.bf16.mxu0 %v817
        %1697 = vmatmul.mubr.bf16.gmra.mrb[0].mxu0 %v816
        %v1698 = vpop.f32.mrb[0].mxu0
        %v1699 = vadd.f32 0.0, %v1698
        %v1700 = vpop.f32.mrb[0].mxu0
        %v1701 = vadd.f32 0.0, %v1700
        %v1702 = vpop.f32.mrb[0].mxu0
        %v1703 = vadd.f32 0.0, %v1702
        %v1704 = vpop.f32.mrb[0].mxu0
        %v1705 = vadd.f32 0.0, %v1704
        %1706 = vmatprep.mubr.bf16.mxu0 %v819
        %1707 = vmatmul.mubr.bf16.gmra.mrb[0].mxu0 %v818
        %v1708 = vpop.f32.mrb[0].mxu0
        %v1709 = vadd.f32 0.0, %v1708
        %v1710 = vpop.f32.mrb[0].mxu0
        %v1711 = vadd.f32 0.0, %v1710
        %v1712 = vpop.f32.mrb[0].mxu0
        %v1713 = vadd.f32 0.0, %v1712
        %v1714 = vpop.f32.mrb[0].mxu0
        %v1715 = vadd.f32 0.0, %v1714
        %1716 = vmatprep.mubr.bf16.mxu0 %v821
        %1717 = vmatmul.mubr.bf16.gmra.mrb[0].mxu0 %v820
        %v1718 = vpop.f32.mrb[0].mxu0
        %v1719 = vadd.f32 0.0, %v1718
        %v1720 = vpop.f32.mrb[0].mxu0
        %v1721 = vadd.f32 0.0, %v1720
        %v1722 = vpop.f32.mrb[0].mxu0
        %v1723 = vadd.f32 0.0, %v1722
        %v1724 = vpop.f32.mrb[0].mxu0
        %v1725 = vadd.f32 0.0, %v1724
        %1726 = vmatprep.mubr.bf16.mxu0 %v823
        %1727 = vmatmul.mubr.bf16.gmra.mrb[0].mxu0 %v822
        %v1728 = vpop.f32.mrb[0].mxu0
        %v1729 = vadd.f32 0.0, %v1728
        %v1730 = vpop.f32.mrb[0].mxu0
        %v1731 = vadd.f32 0.0, %v1730
        %v1732 = vpop.f32.mrb[0].mxu0
        %v1733 = vadd.f32 0.0, %v1732
        %v1734 = vpop.f32.mrb[0].mxu0
        %v1735 = vadd.f32 0.0, %v1734
        %1736 = vmatprep.mubr.bf16.mxu0 %v825
        %1737 = vmatmul.mubr.bf16.gmra.mrb[0].mxu0 %v824
        %v1738 = vpop.f32.mrb[0].mxu0
        %v1739 = vadd.f32 0.0, %v1738
        %v1740 = vpop.f32.mrb[0].mxu0
        %v1741 = vadd.f32 0.0, %v1740
        %v1742 = vpop.f32.mrb[0].mxu0
        %v1743 = vadd.f32 0.0, %v1742
        %v1744 = vpop.f32.mrb[0].mxu0
        %v1745 = vadd.f32 0.0, %v1744
        %1746 = vmatprep.mubr.bf16.mxu0 %v827
        %1747 = vmatmul.mubr.bf16.gmra.mrb[0].mxu0 %v826
        %v1748 = vpop.f32.mrb[0].mxu0
        %v1749 = vadd.f32 0.0, %v1748
        %v1750 = vpop.f32.mrb[0].mxu0
        %v1751 = vadd.f32 0.0, %v1750
        %v1752 = vpop.f32.mrb[0].mxu0
        %v1753 = vadd.f32 0.0, %v1752
        %v1754 = vpop.f32.mrb[0].mxu0
        %v1755 = vadd.f32 0.0, %v1754
        %1756 = vmatprep.mubr.bf16.mxu0 %v829
        %1757 = vmatmul.mubr.bf16.gmra.mrb[0].mxu0 %v828
        %v1758 = vpop.f32.mrb[0].mxu0
        %v1759 = vadd.f32 0.0, %v1758
        %v1760 = vpop.f32.mrb[0].mxu0
        %v1761 = vadd.f32 0.0, %v1760
        %v1762 = vpop.f32.mrb[0].mxu0
        %v1763 = vadd.f32 0.0, %v1762
        %v1764 = vpop.f32.mrb[0].mxu0
        %v1765 = vadd.f32 0.0, %v1764
        %1766 = vmatprep.mubr.bf16.mxu0 %v831
        %1767 = vmatmul.mubr.bf16.gmra.mrb[0].mxu0 %v830
        %v1768 = vpop.f32.mrb[0].mxu0
        %v1769 = vadd.f32 0.0, %v1768
        %v1770 = vpop.f32.mrb[0].mxu0
        %v1771 = vadd.f32 0.0, %v1770
        %v1772 = vpop.f32.mrb[0].mxu0
        %v1773 = vadd.f32 0.0, %v1772
        %v1774 = vpop.f32.mrb[0].mxu0
        %v1775 = vadd.f32 0.0, %v1774
        %1776 = vmatprep.mubr.bf16.mxu0 %v833
        %1777 = vmatmul.mubr.bf16.gmra.mrb[0].mxu0 %v832
        %v1778 = vpop.f32.mrb[0].mxu0
        %v1779 = vadd.f32 0.0, %v1778
        %v1780 = vpop.f32.mrb[0].mxu0
        %v1781 = vadd.f32 0.0, %v1780
        %v1782 = vpop.f32.mrb[0].mxu0
        %v1783 = vadd.f32 0.0, %v1782
        %v1784 = vpop.f32.mrb[0].mxu0
        %v1785 = vadd.f32 0.0, %v1784
        %1786 = vmatprep.mubr.bf16.mxu0 %v835
        %1787 = vmatmul.mubr.bf16.gmra.mrb[0].mxu0 %v834
        %v1788 = vpop.f32.mrb[0].mxu0
        %v1789 = vadd.f32 0.0, %v1788
        %v1790 = vpop.f32.mrb[0].mxu0
        %v1791 = vadd.f32 0.0, %v1790
        %v1792 = vpop.f32.mrb[0].mxu0
        %v1793 = vadd.f32 0.0, %v1792
        %v1794 = vpop.f32.mrb[0].mxu0
        %v1795 = vadd.f32 0.0, %v1794
        %1796 = vmatprep.mubr.bf16.mxu0 %v837
        %1797 = vmatmul.mubr.bf16.gmra.mrb[0].mxu0 %v836
        %v1798 = vpop.f32.mrb[0].mxu0
        %v1799 = vadd.f32 0.0, %v1798
        %v1800 = vpop.f32.mrb[0].mxu0
        %v1801 = vadd.f32 0.0, %v1800
        %v1802 = vpop.f32.mrb[0].mxu0
        %v1803 = vadd.f32 0.0, %v1802
        %v1804 = vpop.f32.mrb[0].mxu0
        %v1805 = vadd.f32 0.0, %v1804
        %1806 = vmatprep.mubr.bf16.mxu0 %v839
        %1807 = vmatmul.mubr.bf16.gmra.mrb[0].mxu0 %v838
        %v1808 = vpop.f32.mrb[0].mxu0
        %v1809 = vadd.f32 0.0, %v1808
        %v1810 = vpop.f32.mrb[0].mxu0
        %v1811 = vadd.f32 0.0, %v1810
        %v1812 = vpop.f32.mrb[0].mxu0
        %v1813 = vadd.f32 0.0, %v1812
        %v1814 = vpop.f32.mrb[0].mxu0
        %v1815 = vadd.f32 0.0, %v1814
        %1816 = vmatprep.mubr.bf16.mxu0 %v841
        %1817 = vmatmul.mubr.bf16.gmra.mrb[0].mxu0 %v840
        %v1818 = vpop.f32.mrb[0].mxu0
        %v1819 = vadd.f32 0.0, %v1818
        %v1820 = vpop.f32.mrb[0].mxu0
        %v1821 = vadd.f32 0.0, %v1820
        %v1822 = vpop.f32.mrb[0].mxu0
        %v1823 = vadd.f32 0.0, %v1822
        %v1824 = vpop.f32.mrb[0].mxu0
        %v1825 = vadd.f32 0.0, %v1824
        %1826 = vmatprep.mubr.bf16.mxu0 %v843
        %1827 = vmatmul.mubr.bf16.gmra.mrb[0].mxu0 %v842
        %v1828 = vpop.f32.mrb[0].mxu0
        %v1829 = vadd.f32 0.0, %v1828
        %v1830 = vpop.f32.mrb[0].mxu0
        %v1831 = vadd.f32 0.0, %v1830
        %v1832 = vpop.f32.mrb[0].mxu0
        %v1833 = vadd.f32 0.0, %v1832
        %v1834 = vpop.f32.mrb[0].mxu0
        %v1835 = vadd.f32 0.0, %v1834
        %1836 = vdwg.mxu0
        %1837 = vmatprep.subr.bf16.mxu0 %v1263
        %1838 = vmatpush1.bf16.msra.mxu0 %v1262
        %1839 = vmatprep.subr.bf16.mxu0 %v1270
        %1840 = vmatpush1.bf16.msra.mxu0 %v1269
        %1841 = vmatprep.subr.bf16.mxu0 %v1277
        %1842 = vmatpush1.bf16.msra.mxu0 %v1276
        %1843 = vmatprep.subr.bf16.mxu0 %v1284
        %1844 = vmatpush1.bf16.msra.mxu0 %v1283
        %1845 = vmatprep.subr.bf16.mxu0 %v1291
        %1846 = vmatpush1.bf16.msra.mxu0 %v1290
        %1847 = vmatprep.subr.bf16.mxu0 %v1298
        %1848 = vmatpush1.bf16.msra.mxu0 %v1297
        %1849 = vmatprep.subr.bf16.mxu0 %v1305
        %1850 = vmatpush1.bf16.msra.mxu0 %v1304
        %1851 = vmatprep.subr.bf16.mxu0 %v1312
        %1852 = vmatpush1.bf16.msra.mxu0 %v1311
        %1853 = vmatprep.subr.bf16.mxu0 %v1319
        %1854 = vmatpush1.bf16.msra.mxu0 %v1318
        %1855 = vmatprep.subr.bf16.mxu0 %v1326
        %1856 = vmatpush1.bf16.msra.mxu0 %v1325
        %1857 = vmatprep.subr.bf16.mxu0 %v1333
        %1858 = vmatpush1.bf16.msra.mxu0 %v1332
        %1859 = vmatprep.subr.bf16.mxu0 %v1340
        %1860 = vmatpush1.bf16.msra.mxu0 %v1339
        %1861 = vmatprep.subr.bf16.mxu0 %v1347
        %1862 = vmatpush1.bf16.msra.mxu0 %v1346
        %1863 = vmatprep.subr.bf16.mxu0 %v1354
        %1864 = vmatpush1.bf16.msra.mxu0 %v1353
        %1865 = vmatprep.subr.bf16.mxu0 %v1361
        %1866 = vmatpush1.bf16.msra.mxu0 %v1360
        %1867 = vmatprep.subr.bf16.mxu0 %v1368
        %1868 = vmatpush1.bf16.msra.mxu0 %v1367
        %1869 = vmatprep.mubr.bf16.mxu0 %v781
        %1870 = vmatmul.mubr.bf16.gmra.mrb[0].mxu0 %v780
        %v1871 = vpop.f32.mrb[0].mxu0
        %v1872 = vadd.f32 0.0, %v1871
        %v1873 = vpop.f32.mrb[0].mxu0
        %v1874 = vadd.f32 0.0, %v1873
        %v1875 = vpop.f32.mrb[0].mxu0
        %v1876 = vadd.f32 0.0, %v1875
        %v1877 = vpop.f32.mrb[0].mxu0
        %v1878 = vadd.f32 0.0, %v1877
        %1879 = vmatprep.mubr.bf16.mxu0 %v783
        %1880 = vmatmul.mubr.bf16.gmra.mrb[0].mxu0 %v782
        %v1881 = vpop.f32.mrb[0].mxu0
        %v1882 = vadd.f32 0.0, %v1881
        %v1883 = vpop.f32.mrb[0].mxu0
        %v1884 = vadd.f32 0.0, %v1883
        %v1885 = vpop.f32.mrb[0].mxu0
        %v1886 = vadd.f32 0.0, %v1885
        %v1887 = vpop.f32.mrb[0].mxu0
        %v1888 = vadd.f32 0.0, %v1887
        %1889 = vmatprep.mubr.bf16.mxu0 %v785
        %1890 = vmatmul.mubr.bf16.gmra.mrb[0].mxu0 %v784
        %v1891 = vpop.f32.mrb[0].mxu0
        %v1892 = vadd.f32 0.0, %v1891
        %v1893 = vpop.f32.mrb[0].mxu0
        %v1894 = vadd.f32 0.0, %v1893
        %v1895 = vpop.f32.mrb[0].mxu0
        %v1896 = vadd.f32 0.0, %v1895
        %v1897 = vpop.f32.mrb[0].mxu0
        %v1898 = vadd.f32 0.0, %v1897
        %1899 = vmatprep.mubr.bf16.mxu0 %v787
        %1900 = vmatmul.mubr.bf16.gmra.mrb[0].mxu0 %v786
        %v1901 = vpop.f32.mrb[0].mxu0
        %v1902 = vadd.f32 0.0, %v1901
        %v1903 = vpop.f32.mrb[0].mxu0
        %v1904 = vadd.f32 0.0, %v1903
        %v1905 = vpop.f32.mrb[0].mxu0
        %v1906 = vadd.f32 0.0, %v1905
        %v1907 = vpop.f32.mrb[0].mxu0
        %v1908 = vadd.f32 0.0, %v1907
        %1909 = vmatprep.mubr.bf16.mxu0 %v789
        %1910 = vmatmul.mubr.bf16.gmra.mrb[0].mxu0 %v788
        %v1911 = vpop.f32.mrb[0].mxu0
        %v1912 = vadd.f32 0.0, %v1911
        %v1913 = vpop.f32.mrb[0].mxu0
        %v1914 = vadd.f32 0.0, %v1913
        %v1915 = vpop.f32.mrb[0].mxu0
        %v1916 = vadd.f32 0.0, %v1915
        %v1917 = vpop.f32.mrb[0].mxu0
        %v1918 = vadd.f32 0.0, %v1917
        %1919 = vmatprep.mubr.bf16.mxu0 %v791
        %1920 = vmatmul.mubr.bf16.gmra.mrb[0].mxu0 %v790
        %v1921 = vpop.f32.mrb[0].mxu0
        %v1922 = vadd.f32 0.0, %v1921
        %v1923 = vpop.f32.mrb[0].mxu0
        %v1924 = vadd.f32 0.0, %v1923
        %v1925 = vpop.f32.mrb[0].mxu0
        %v1926 = vadd.f32 0.0, %v1925
        %v1927 = vpop.f32.mrb[0].mxu0
        %v1928 = vadd.f32 0.0, %v1927
        %1929 = vmatprep.mubr.bf16.mxu0 %v793
        %1930 = vmatmul.mubr.bf16.gmra.mrb[0].mxu0 %v792
        %v1931 = vpop.f32.mrb[0].mxu0
        %v1932 = vadd.f32 0.0, %v1931
        %v1933 = vpop.f32.mrb[0].mxu0
        %v1934 = vadd.f32 0.0, %v1933
        %v1935 = vpop.f32.mrb[0].mxu0
        %v1936 = vadd.f32 0.0, %v1935
        %v1937 = vpop.f32.mrb[0].mxu0
        %v1938 = vadd.f32 0.0, %v1937
        %1939 = vmatprep.mubr.bf16.mxu0 %v795
        %1940 = vmatmul.mubr.bf16.gmra.mrb[0].mxu0 %v794
        %v1941 = vpop.f32.mrb[0].mxu0
        %v1942 = vadd.f32 0.0, %v1941
        %v1943 = vpop.f32.mrb[0].mxu0
        %v1944 = vadd.f32 0.0, %v1943
        %v1945 = vpop.f32.mrb[0].mxu0
        %v1946 = vadd.f32 0.0, %v1945
        %v1947 = vpop.f32.mrb[0].mxu0
        %v1948 = vadd.f32 0.0, %v1947
        %1949 = vmatprep.mubr.bf16.mxu0 %v797
        %1950 = vmatmul.mubr.bf16.gmra.mrb[0].mxu0 %v796
        %v1951 = vpop.f32.mrb[0].mxu0
        %v1952 = vadd.f32 0.0, %v1951
        %v1953 = vpop.f32.mrb[0].mxu0
        %v1954 = vadd.f32 0.0, %v1953
        %v1955 = vpop.f32.mrb[0].mxu0
        %v1956 = vadd.f32 0.0, %v1955
        %v1957 = vpop.f32.mrb[0].mxu0
        %v1958 = vadd.f32 0.0, %v1957
        %1959 = vmatprep.mubr.bf16.mxu0 %v799
        %1960 = vmatmul.mubr.bf16.gmra.mrb[0].mxu0 %v798
        %v1961 = vpop.f32.mrb[0].mxu0
        %v1962 = vadd.f32 0.0, %v1961
        %v1963 = vpop.f32.mrb[0].mxu0
        %v1964 = vadd.f32 0.0, %v1963
        %v1965 = vpop.f32.mrb[0].mxu0
        %v1966 = vadd.f32 0.0, %v1965
        %v1967 = vpop.f32.mrb[0].mxu0
        %v1968 = vadd.f32 0.0, %v1967
        %1969 = vmatprep.mubr.bf16.mxu0 %v801
        %1970 = vmatmul.mubr.bf16.gmra.mrb[0].mxu0 %v800
        %v1971 = vpop.f32.mrb[0].mxu0
        %v1972 = vadd.f32 0.0, %v1971
        %v1973 = vpop.f32.mrb[0].mxu0
        %v1974 = vadd.f32 0.0, %v1973
        %v1975 = vpop.f32.mrb[0].mxu0
        %v1976 = vadd.f32 0.0, %v1975
        %v1977 = vpop.f32.mrb[0].mxu0
        %v1978 = vadd.f32 0.0, %v1977
        %1979 = vmatprep.mubr.bf16.mxu0 %v803
        %1980 = vmatmul.mubr.bf16.gmra.mrb[0].mxu0 %v802
        %v1981 = vpop.f32.mrb[0].mxu0
        %v1982 = vadd.f32 0.0, %v1981
        %v1983 = vpop.f32.mrb[0].mxu0
        %v1984 = vadd.f32 0.0, %v1983
        %v1985 = vpop.f32.mrb[0].mxu0
        %v1986 = vadd.f32 0.0, %v1985
        %v1987 = vpop.f32.mrb[0].mxu0
        %v1988 = vadd.f32 0.0, %v1987
        %1989 = vmatprep.mubr.bf16.mxu0 %v805
        %1990 = vmatmul.mubr.bf16.gmra.mrb[0].mxu0 %v804
        %v1991 = vpop.f32.mrb[0].mxu0
        %v1992 = vadd.f32 0.0, %v1991
        %v1993 = vpop.f32.mrb[0].mxu0
        %v1994 = vadd.f32 0.0, %v1993
        %v1995 = vpop.f32.mrb[0].mxu0
        %v1996 = vadd.f32 0.0, %v1995
        %v1997 = vpop.f32.mrb[0].mxu0
        %v1998 = vadd.f32 0.0, %v1997
        %1999 = vmatprep.mubr.bf16.mxu0 %v807
        %2000 = vmatmul.mubr.bf16.gmra.mrb[0].mxu0 %v806
        %v2001 = vpop.f32.mrb[0].mxu0
        %v2002 = vadd.f32 0.0, %v2001
        %v2003 = vpop.f32.mrb[0].mxu0
        %v2004 = vadd.f32 0.0, %v2003
        %v2005 = vpop.f32.mrb[0].mxu0
        %v2006 = vadd.f32 0.0, %v2005
        %v2007 = vpop.f32.mrb[0].mxu0
        %v2008 = vadd.f32 0.0, %v2007
        %2009 = vmatprep.mubr.bf16.mxu0 %v809
        %2010 = vmatmul.mubr.bf16.gmra.mrb[0].mxu0 %v808
        %v2011 = vpop.f32.mrb[0].mxu0
        %v2012 = vadd.f32 0.0, %v2011
        %v2013 = vpop.f32.mrb[0].mxu0
        %v2014 = vadd.f32 0.0, %v2013
        %v2015 = vpop.f32.mrb[0].mxu0
        %v2016 = vadd.f32 0.0, %v2015
        %v2017 = vpop.f32.mrb[0].mxu0
        %v2018 = vadd.f32 0.0, %v2017
        %2019 = vmatprep.mubr.bf16.mxu0 %v811
        %2020 = vmatmul.mubr.bf16.gmra.mrb[0].mxu0 %v810
        %v2021 = vpop.f32.mrb[0].mxu0
        %v2022 = vadd.f32 0.0, %v2021
        %v2023 = vpop.f32.mrb[0].mxu0
        %v2024 = vadd.f32 0.0, %v2023
        %v2025 = vpop.f32.mrb[0].mxu0
        %v2026 = vadd.f32 0.0, %v2025
        %v2027 = vpop.f32.mrb[0].mxu0
        %v2028 = vadd.f32 0.0, %v2027
        %2029 = vmatprep.mubr.bf16.mxu0 %v813
        %2030 = vmatmul.mubr.bf16.gmra.mrb[0].mxu0 %v812
        %v2031 = vpop.f32.mrb[0].mxu0
        %v2032 = vadd.f32 0.0, %v2031
        %v2033 = vpop.f32.mrb[0].mxu0
        %v2034 = vadd.f32 0.0, %v2033
        %v2035 = vpop.f32.mrb[0].mxu0
        %v2036 = vadd.f32 0.0, %v2035
        %v2037 = vpop.f32.mrb[0].mxu0
        %v2038 = vadd.f32 0.0, %v2037
        %2039 = vmatprep.mubr.bf16.mxu0 %v815
        %2040 = vmatmul.mubr.bf16.gmra.mrb[0].mxu0 %v814
        %v2041 = vpop.f32.mrb[0].mxu0
        %v2042 = vadd.f32 0.0, %v2041
        %v2043 = vpop.f32.mrb[0].mxu0
        %v2044 = vadd.f32 0.0, %v2043
        %v2045 = vpop.f32.mrb[0].mxu0
        %v2046 = vadd.f32 0.0, %v2045
        %v2047 = vpop.f32.mrb[0].mxu0
        %v2048 = vadd.f32 0.0, %v2047
        %2049 = vmatprep.mubr.bf16.mxu0 %v817
        %2050 = vmatmul.mubr.bf16.gmra.mrb[0].mxu0 %v816
        %v2051 = vpop.f32.mrb[0].mxu0
        %v2052 = vadd.f32 0.0, %v2051
        %v2053 = vpop.f32.mrb[0].mxu0
        %v2054 = vadd.f32 0.0, %v2053
        %v2055 = vpop.f32.mrb[0].mxu0
        %v2056 = vadd.f32 0.0, %v2055
        %v2057 = vpop.f32.mrb[0].mxu0
        %v2058 = vadd.f32 0.0, %v2057
        %2059 = vmatprep.mubr.bf16.mxu0 %v819
        %2060 = vmatmul.mubr.bf16.gmra.mrb[0].mxu0 %v818
        %v2061 = vpop.f32.mrb[0].mxu0
        %v2062 = vadd.f32 0.0, %v2061
        %v2063 = vpop.f32.mrb[0].mxu0
        %v2064 = vadd.f32 0.0, %v2063
        %v2065 = vpop.f32.mrb[0].mxu0
        %v2066 = vadd.f32 0.0, %v2065
        %v2067 = vpop.f32.mrb[0].mxu0
        %v2068 = vadd.f32 0.0, %v2067
        %2069 = vmatprep.mubr.bf16.mxu0 %v821
        %2070 = vmatmul.mubr.bf16.gmra.mrb[0].mxu0 %v820
        %v2071 = vpop.f32.mrb[0].mxu0
        %v2072 = vadd.f32 0.0, %v2071
        %v2073 = vpop.f32.mrb[0].mxu0
        %v2074 = vadd.f32 0.0, %v2073
        %v2075 = vpop.f32.mrb[0].mxu0
        %v2076 = vadd.f32 0.0, %v2075
        %v2077 = vpop.f32.mrb[0].mxu0
        %v2078 = vadd.f32 0.0, %v2077
        %2079 = vmatprep.mubr.bf16.mxu0 %v823
        %2080 = vmatmul.mubr.bf16.gmra.mrb[0].mxu0 %v822
        %v2081 = vpop.f32.mrb[0].mxu0
        %v2082 = vadd.f32 0.0, %v2081
        %v2083 = vpop.f32.mrb[0].mxu0
        %v2084 = vadd.f32 0.0, %v2083
        %v2085 = vpop.f32.mrb[0].mxu0
        %v2086 = vadd.f32 0.0, %v2085
        %v2087 = vpop.f32.mrb[0].mxu0
        %v2088 = vadd.f32 0.0, %v2087
        %2089 = vmatprep.mubr.bf16.mxu0 %v825
        %2090 = vmatmul.mubr.bf16.gmra.mrb[0].mxu0 %v824
        %v2091 = vpop.f32.mrb[0].mxu0
        %v2092 = vadd.f32 0.0, %v2091
        %v2093 = vpop.f32.mrb[0].mxu0
        %v2094 = vadd.f32 0.0, %v2093
        %v2095 = vpop.f32.mrb[0].mxu0
        %v2096 = vadd.f32 0.0, %v2095
        %v2097 = vpop.f32.mrb[0].mxu0
        %v2098 = vadd.f32 0.0, %v2097
        %2099 = vmatprep.mubr.bf16.mxu0 %v827
        %2100 = vmatmul.mubr.bf16.gmra.mrb[0].mxu0 %v826
        %v2101 = vpop.f32.mrb[0].mxu0
        %v2102 = vadd.f32 0.0, %v2101
        %v2103 = vpop.f32.mrb[0].mxu0
        %v2104 = vadd.f32 0.0, %v2103
        %v2105 = vpop.f32.mrb[0].mxu0
        %v2106 = vadd.f32 0.0, %v2105
        %v2107 = vpop.f32.mrb[0].mxu0
        %v2108 = vadd.f32 0.0, %v2107
        %2109 = vmatprep.mubr.bf16.mxu0 %v829
        %2110 = vmatmul.mubr.bf16.gmra.mrb[0].mxu0 %v828
        %v2111 = vpop.f32.mrb[0].mxu0
        %v2112 = vadd.f32 0.0, %v2111
        %v2113 = vpop.f32.mrb[0].mxu0
        %v2114 = vadd.f32 0.0, %v2113
        %v2115 = vpop.f32.mrb[0].mxu0
        %v2116 = vadd.f32 0.0, %v2115
        %v2117 = vpop.f32.mrb[0].mxu0
        %v2118 = vadd.f32 0.0, %v2117
        %2119 = vmatprep.mubr.bf16.mxu0 %v831
        %2120 = vmatmul.mubr.bf16.gmra.mrb[0].mxu0 %v830
        %v2121 = vpop.f32.mrb[0].mxu0
        %v2122 = vadd.f32 0.0, %v2121
        %v2123 = vpop.f32.mrb[0].mxu0
        %v2124 = vadd.f32 0.0, %v2123
        %v2125 = vpop.f32.mrb[0].mxu0
        %v2126 = vadd.f32 0.0, %v2125
        %v2127 = vpop.f32.mrb[0].mxu0
        %v2128 = vadd.f32 0.0, %v2127
        %2129 = vmatprep.mubr.bf16.mxu0 %v833
        %2130 = vmatmul.mubr.bf16.gmra.mrb[0].mxu0 %v832
        %v2131 = vpop.f32.mrb[0].mxu0
        %v2132 = vadd.f32 0.0, %v2131
        %v2133 = vpop.f32.mrb[0].mxu0
        %v2134 = vadd.f32 0.0, %v2133
        %v2135 = vpop.f32.mrb[0].mxu0
        %v2136 = vadd.f32 0.0, %v2135
        %v2137 = vpop.f32.mrb[0].mxu0
        %v2138 = vadd.f32 0.0, %v2137
        %2139 = vmatprep.mubr.bf16.mxu0 %v835
        %2140 = vmatmul.mubr.bf16.gmra.mrb[0].mxu0 %v834
        %v2141 = vpop.f32.mrb[0].mxu0
        %v2142 = vadd.f32 0.0, %v2141
        %v2143 = vpop.f32.mrb[0].mxu0
        %v2144 = vadd.f32 0.0, %v2143
        %v2145 = vpop.f32.mrb[0].mxu0
        %v2146 = vadd.f32 0.0, %v2145
        %v2147 = vpop.f32.mrb[0].mxu0
        %v2148 = vadd.f32 0.0, %v2147
        %2149 = vmatprep.mubr.bf16.mxu0 %v837
        %2150 = vmatmul.mubr.bf16.gmra.mrb[0].mxu0 %v836
        %v2151 = vpop.f32.mrb[0].mxu0
        %v2152 = vadd.f32 0.0, %v2151
        %v2153 = vpop.f32.mrb[0].mxu0
        %v2154 = vadd.f32 0.0, %v2153
        %v2155 = vpop.f32.mrb[0].mxu0
        %v2156 = vadd.f32 0.0, %v2155
        %v2157 = vpop.f32.mrb[0].mxu0
        %v2158 = vadd.f32 0.0, %v2157
        %2159 = vmatprep.mubr.bf16.mxu0 %v839
        %2160 = vmatmul.mubr.bf16.gmra.mrb[0].mxu0 %v838
        %v2161 = vpop.f32.mrb[0].mxu0
        %v2162 = vadd.f32 0.0, %v2161
        %v2163 = vpop.f32.mrb[0].mxu0
        %v2164 = vadd.f32 0.0, %v2163
        %v2165 = vpop.f32.mrb[0].mxu0
        %v2166 = vadd.f32 0.0, %v2165
        %v2167 = vpop.f32.mrb[0].mxu0
        %v2168 = vadd.f32 0.0, %v2167
        %2169 = vmatprep.mubr.bf16.mxu0 %v841
        %2170 = vmatmul.mubr.bf16.gmra.mrb[0].mxu0 %v840
        %v2171 = vpop.f32.mrb[0].mxu0
        %v2172 = vadd.f32 0.0, %v2171
        %v2173 = vpop.f32.mrb[0].mxu0
        %v2174 = vadd.f32 0.0, %v2173
        %v2175 = vpop.f32.mrb[0].mxu0
        %v2176 = vadd.f32 0.0, %v2175
        %v2177 = vpop.f32.mrb[0].mxu0
        %v2178 = vadd.f32 0.0, %v2177
        %2179 = vmatprep.mubr.bf16.mxu0 %v843
        %2180 = vmatmul.mubr.bf16.gmra.mrb[0].mxu0 %v842
        %v2181 = vpop.f32.mrb[0].mxu0
        %v2182 = vadd.f32 0.0, %v2181
        %v2183 = vpop.f32.mrb[0].mxu0
        %v2184 = vadd.f32 0.0, %v2183
        %v2185 = vpop.f32.mrb[0].mxu0
        %v2186 = vadd.f32 0.0, %v2185
        %v2187 = vpop.f32.mrb[0].mxu0
        %v2188 = vadd.f32 0.0, %v2187
        %2189 = vdwg.mxu0
        %2190 = vmatprep.subr.bf16.mxu0 %v1265
        %2191 = vmatpush1.bf16.msra.mxu0 %v1264
        %2192 = vmatprep.subr.bf16.mxu0 %v1272
        %2193 = vmatpush1.bf16.msra.mxu0 %v1271
        %2194 = vmatprep.subr.bf16.mxu0 %v1279
        %2195 = vmatpush1.bf16.msra.mxu0 %v1278
        %2196 = vmatprep.subr.bf16.mxu0 %v1286
        %2197 = vmatpush1.bf16.msra.mxu0 %v1285
        %2198 = vmatprep.subr.bf16.mxu0 %v1293
        %2199 = vmatpush1.bf16.msra.mxu0 %v1292
        %2200 = vmatprep.subr.bf16.mxu0 %v1300
        %2201 = vmatpush1.bf16.msra.mxu0 %v1299
        %2202 = vmatprep.subr.bf16.mxu0 %v1307
        %2203 = vmatpush1.bf16.msra.mxu0 %v1306
        %2204 = vmatprep.subr.bf16.mxu0 %v1314
        %2205 = vmatpush1.bf16.msra.mxu0 %v1313
        %2206 = vmatprep.subr.bf16.mxu0 %v1321
        %2207 = vmatpush1.bf16.msra.mxu0 %v1320
        %2208 = vmatprep.subr.bf16.mxu0 %v1328
        %2209 = vmatpush1.bf16.msra.mxu0 %v1327
        %2210 = vmatprep.subr.bf16.mxu0 %v1335
        %2211 = vmatpush1.bf16.msra.mxu0 %v1334
        %2212 = vmatprep.subr.bf16.mxu0 %v1342
        %2213 = vmatpush1.bf16.msra.mxu0 %v1341
        %2214 = vmatprep.subr.bf16.mxu0 %v1349
        %2215 = vmatpush1.bf16.msra.mxu0 %v1348
        %2216 = vmatprep.subr.bf16.mxu0 %v1356
        %2217 = vmatpush1.bf16.msra.mxu0 %v1355
        %2218 = vmatprep.subr.bf16.mxu0 %v1363
        %2219 = vmatpush1.bf16.msra.mxu0 %v1362
        %2220 = vmatprep.subr.bf16.mxu0 %v1370
        %2221 = vmatpush1.bf16.msra.mxu0 %v1369
        %2222 = vmatprep.mubr.bf16.mxu0 %v781
        %2223 = vmatmul.mubr.bf16.gmra.mrb[0].mxu0 %v780
        %v2224 = vpop.f32.mrb[0].mxu0
        %v2225 = vadd.f32 0.0, %v2224
        %v2226 = vpop.f32.mrb[0].mxu0
        %v2227 = vadd.f32 0.0, %v2226
        %v2228 = vpop.f32.mrb[0].mxu0
        %v2229 = vadd.f32 0.0, %v2228
        %v2230 = vpop.f32.mrb[0].mxu0
        %v2231 = vadd.f32 0.0, %v2230
        %2232 = vmatprep.mubr.bf16.mxu0 %v783
        %2233 = vmatmul.mubr.bf16.gmra.mrb[0].mxu0 %v782
        %v2234 = vpop.f32.mrb[0].mxu0
        %v2235 = vadd.f32 0.0, %v2234
        %v2236 = vpop.f32.mrb[0].mxu0
        %v2237 = vadd.f32 0.0, %v2236
        %v2238 = vpop.f32.mrb[0].mxu0
        %v2239 = vadd.f32 0.0, %v2238
        %v2240 = vpop.f32.mrb[0].mxu0
        %v2241 = vadd.f32 0.0, %v2240
        %2242 = vmatprep.mubr.bf16.mxu0 %v785
        %2243 = vmatmul.mubr.bf16.gmra.mrb[0].mxu0 %v784
        %v2244 = vpop.f32.mrb[0].mxu0
        %v2245 = vadd.f32 0.0, %v2244
        %v2246 = vpop.f32.mrb[0].mxu0
        %v2247 = vadd.f32 0.0, %v2246
        %v2248 = vpop.f32.mrb[0].mxu0
        %v2249 = vadd.f32 0.0, %v2248
        %v2250 = vpop.f32.mrb[0].mxu0
        %v2251 = vadd.f32 0.0, %v2250
        %2252 = vmatprep.mubr.bf16.mxu0 %v787
        %2253 = vmatmul.mubr.bf16.gmra.mrb[0].mxu0 %v786
        %v2254 = vpop.f32.mrb[0].mxu0
        %v2255 = vadd.f32 0.0, %v2254
        %v2256 = vpop.f32.mrb[0].mxu0
        %v2257 = vadd.f32 0.0, %v2256
        %v2258 = vpop.f32.mrb[0].mxu0
        %v2259 = vadd.f32 0.0, %v2258
        %v2260 = vpop.f32.mrb[0].mxu0
        %v2261 = vadd.f32 0.0, %v2260
        %2262 = vmatprep.mubr.bf16.mxu0 %v789
        %2263 = vmatmul.mubr.bf16.gmra.mrb[0].mxu0 %v788
        %v2264 = vpop.f32.mrb[0].mxu0
        %v2265 = vadd.f32 0.0, %v2264
        %v2266 = vpop.f32.mrb[0].mxu0
        %v2267 = vadd.f32 0.0, %v2266
        %v2268 = vpop.f32.mrb[0].mxu0
        %v2269 = vadd.f32 0.0, %v2268
        %v2270 = vpop.f32.mrb[0].mxu0
        %v2271 = vadd.f32 0.0, %v2270
        %2272 = vmatprep.mubr.bf16.mxu0 %v791
        %2273 = vmatmul.mubr.bf16.gmra.mrb[0].mxu0 %v790
        %v2274 = vpop.f32.mrb[0].mxu0
        %v2275 = vadd.f32 0.0, %v2274
        %v2276 = vpop.f32.mrb[0].mxu0
        %v2277 = vadd.f32 0.0, %v2276
        %v2278 = vpop.f32.mrb[0].mxu0
        %v2279 = vadd.f32 0.0, %v2278
        %v2280 = vpop.f32.mrb[0].mxu0
        %v2281 = vadd.f32 0.0, %v2280
        %2282 = vmatprep.mubr.bf16.mxu0 %v793
        %2283 = vmatmul.mubr.bf16.gmra.mrb[0].mxu0 %v792
        %v2284 = vpop.f32.mrb[0].mxu0
        %v2285 = vadd.f32 0.0, %v2284
        %v2286 = vpop.f32.mrb[0].mxu0
        %v2287 = vadd.f32 0.0, %v2286
        %v2288 = vpop.f32.mrb[0].mxu0
        %v2289 = vadd.f32 0.0, %v2288
        %v2290 = vpop.f32.mrb[0].mxu0
        %v2291 = vadd.f32 0.0, %v2290
        %2292 = vmatprep.mubr.bf16.mxu0 %v795
        %2293 = vmatmul.mubr.bf16.gmra.mrb[0].mxu0 %v794
        %v2294 = vpop.f32.mrb[0].mxu0
        %v2295 = vadd.f32 0.0, %v2294
        %v2296 = vpop.f32.mrb[0].mxu0
        %v2297 = vadd.f32 0.0, %v2296
        %v2298 = vpop.f32.mrb[0].mxu0
        %v2299 = vadd.f32 0.0, %v2298
        %v2300 = vpop.f32.mrb[0].mxu0
        %v2301 = vadd.f32 0.0, %v2300
        %2302 = vmatprep.mubr.bf16.mxu0 %v797
        %2303 = vmatmul.mubr.bf16.gmra.mrb[0].mxu0 %v796
        %v2304 = vpop.f32.mrb[0].mxu0
        %v2305 = vadd.f32 0.0, %v2304
        %v2306 = vpop.f32.mrb[0].mxu0
        %v2307 = vadd.f32 0.0, %v2306
        %v2308 = vpop.f32.mrb[0].mxu0
        %v2309 = vadd.f32 0.0, %v2308
        %v2310 = vpop.f32.mrb[0].mxu0
        %v2311 = vadd.f32 0.0, %v2310
        %2312 = vmatprep.mubr.bf16.mxu0 %v799
        %2313 = vmatmul.mubr.bf16.gmra.mrb[0].mxu0 %v798
        %v2314 = vpop.f32.mrb[0].mxu0
        %v2315 = vadd.f32 0.0, %v2314
        %v2316 = vpop.f32.mrb[0].mxu0
        %v2317 = vadd.f32 0.0, %v2316
        %v2318 = vpop.f32.mrb[0].mxu0
        %v2319 = vadd.f32 0.0, %v2318
        %v2320 = vpop.f32.mrb[0].mxu0
        %v2321 = vadd.f32 0.0, %v2320
        %2322 = vmatprep.mubr.bf16.mxu0 %v801
        %2323 = vmatmul.mubr.bf16.gmra.mrb[0].mxu0 %v800
        %v2324 = vpop.f32.mrb[0].mxu0
        %v2325 = vadd.f32 0.0, %v2324
        %v2326 = vpop.f32.mrb[0].mxu0
        %v2327 = vadd.f32 0.0, %v2326
        %v2328 = vpop.f32.mrb[0].mxu0
        %v2329 = vadd.f32 0.0, %v2328
        %v2330 = vpop.f32.mrb[0].mxu0
        %v2331 = vadd.f32 0.0, %v2330
        %2332 = vmatprep.mubr.bf16.mxu0 %v803
        %2333 = vmatmul.mubr.bf16.gmra.mrb[0].mxu0 %v802
        %v2334 = vpop.f32.mrb[0].mxu0
        %v2335 = vadd.f32 0.0, %v2334
        %v2336 = vpop.f32.mrb[0].mxu0
        %v2337 = vadd.f32 0.0, %v2336
        %v2338 = vpop.f32.mrb[0].mxu0
        %v2339 = vadd.f32 0.0, %v2338
        %v2340 = vpop.f32.mrb[0].mxu0
        %v2341 = vadd.f32 0.0, %v2340
        %2342 = vmatprep.mubr.bf16.mxu0 %v805
        %2343 = vmatmul.mubr.bf16.gmra.mrb[0].mxu0 %v804
        %v2344 = vpop.f32.mrb[0].mxu0
        %v2345 = vadd.f32 0.0, %v2344
        %v2346 = vpop.f32.mrb[0].mxu0
        %v2347 = vadd.f32 0.0, %v2346
        %v2348 = vpop.f32.mrb[0].mxu0
        %v2349 = vadd.f32 0.0, %v2348
        %v2350 = vpop.f32.mrb[0].mxu0
        %v2351 = vadd.f32 0.0, %v2350
        %2352 = vmatprep.mubr.bf16.mxu0 %v807
        %2353 = vmatmul.mubr.bf16.gmra.mrb[0].mxu0 %v806
        %v2354 = vpop.f32.mrb[0].mxu0
        %v2355 = vadd.f32 0.0, %v2354
        %v2356 = vpop.f32.mrb[0].mxu0
        %v2357 = vadd.f32 0.0, %v2356
        %v2358 = vpop.f32.mrb[0].mxu0
        %v2359 = vadd.f32 0.0, %v2358
        %v2360 = vpop.f32.mrb[0].mxu0
        %v2361 = vadd.f32 0.0, %v2360
        %2362 = vmatprep.mubr.bf16.mxu0 %v809
        %2363 = vmatmul.mubr.bf16.gmra.mrb[0].mxu0 %v808
        %v2364 = vpop.f32.mrb[0].mxu0
        %v2365 = vadd.f32 0.0, %v2364
        %v2366 = vpop.f32.mrb[0].mxu0
        %v2367 = vadd.f32 0.0, %v2366
        %v2368 = vpop.f32.mrb[0].mxu0
        %v2369 = vadd.f32 0.0, %v2368
        %v2370 = vpop.f32.mrb[0].mxu0
        %v2371 = vadd.f32 0.0, %v2370
        %2372 = vmatprep.mubr.bf16.mxu0 %v811
        %2373 = vmatmul.mubr.bf16.gmra.mrb[0].mxu0 %v810
        %v2374 = vpop.f32.mrb[0].mxu0
        %v2375 = vadd.f32 0.0, %v2374
        %v2376 = vpop.f32.mrb[0].mxu0
        %v2377 = vadd.f32 0.0, %v2376
        %v2378 = vpop.f32.mrb[0].mxu0
        %v2379 = vadd.f32 0.0, %v2378
        %v2380 = vpop.f32.mrb[0].mxu0
        %v2381 = vadd.f32 0.0, %v2380
        %2382 = vmatprep.mubr.bf16.mxu0 %v813
        %2383 = vmatmul.mubr.bf16.gmra.mrb[0].mxu0 %v812
        %v2384 = vpop.f32.mrb[0].mxu0
        %v2385 = vadd.f32 0.0, %v2384
        %v2386 = vpop.f32.mrb[0].mxu0
        %v2387 = vadd.f32 0.0, %v2386
        %v2388 = vpop.f32.mrb[0].mxu0
        %v2389 = vadd.f32 0.0, %v2388
        %v2390 = vpop.f32.mrb[0].mxu0
        %v2391 = vadd.f32 0.0, %v2390
        %2392 = vmatprep.mubr.bf16.mxu0 %v815
        %2393 = vmatmul.mubr.bf16.gmra.mrb[0].mxu0 %v814
        %v2394 = vpop.f32.mrb[0].mxu0
        %v2395 = vadd.f32 0.0, %v2394
        %v2396 = vpop.f32.mrb[0].mxu0
        %v2397 = vadd.f32 0.0, %v2396
        %v2398 = vpop.f32.mrb[0].mxu0
        %v2399 = vadd.f32 0.0, %v2398
        %v2400 = vpop.f32.mrb[0].mxu0
        %v2401 = vadd.f32 0.0, %v2400
        %2402 = vmatprep.mubr.bf16.mxu0 %v817
        %2403 = vmatmul.mubr.bf16.gmra.mrb[0].mxu0 %v816
        %v2404 = vpop.f32.mrb[0].mxu0
        %v2405 = vadd.f32 0.0, %v2404
        %v2406 = vpop.f32.mrb[0].mxu0
        %v2407 = vadd.f32 0.0, %v2406
        %v2408 = vpop.f32.mrb[0].mxu0
        %v2409 = vadd.f32 0.0, %v2408
        %v2410 = vpop.f32.mrb[0].mxu0
        %v2411 = vadd.f32 0.0, %v2410
        %2412 = vmatprep.mubr.bf16.mxu0 %v819
        %2413 = vmatmul.mubr.bf16.gmra.mrb[0].mxu0 %v818
        %v2414 = vpop.f32.mrb[0].mxu0
        %v2415 = vadd.f32 0.0, %v2414
        %v2416 = vpop.f32.mrb[0].mxu0
        %v2417 = vadd.f32 0.0, %v2416
        %v2418 = vpop.f32.mrb[0].mxu0
        %v2419 = vadd.f32 0.0, %v2418
        %v2420 = vpop.f32.mrb[0].mxu0
        %v2421 = vadd.f32 0.0, %v2420
        %2422 = vmatprep.mubr.bf16.mxu0 %v821
        %2423 = vmatmul.mubr.bf16.gmra.mrb[0].mxu0 %v820
        %v2424 = vpop.f32.mrb[0].mxu0
        %v2425 = vadd.f32 0.0, %v2424
        %v2426 = vpop.f32.mrb[0].mxu0
        %v2427 = vadd.f32 0.0, %v2426
        %v2428 = vpop.f32.mrb[0].mxu0
        %v2429 = vadd.f32 0.0, %v2428
        %v2430 = vpop.f32.mrb[0].mxu0
        %v2431 = vadd.f32 0.0, %v2430
        %2432 = vmatprep.mubr.bf16.mxu0 %v823
        %2433 = vmatmul.mubr.bf16.gmra.mrb[0].mxu0 %v822
        %v2434 = vpop.f32.mrb[0].mxu0
        %v2435 = vadd.f32 0.0, %v2434
        %v2436 = vpop.f32.mrb[0].mxu0
        %v2437 = vadd.f32 0.0, %v2436
        %v2438 = vpop.f32.mrb[0].mxu0
        %v2439 = vadd.f32 0.0, %v2438
        %v2440 = vpop.f32.mrb[0].mxu0
        %v2441 = vadd.f32 0.0, %v2440
        %2442 = vmatprep.mubr.bf16.mxu0 %v825
        %2443 = vmatmul.mubr.bf16.gmra.mrb[0].mxu0 %v824
        %v2444 = vpop.f32.mrb[0].mxu0
        %v2445 = vadd.f32 0.0, %v2444
        %v2446 = vpop.f32.mrb[0].mxu0
        %v2447 = vadd.f32 0.0, %v2446
        %v2448 = vpop.f32.mrb[0].mxu0
        %v2449 = vadd.f32 0.0, %v2448
        %v2450 = vpop.f32.mrb[0].mxu0
        %v2451 = vadd.f32 0.0, %v2450
        %2452 = vmatprep.mubr.bf16.mxu0 %v827
        %2453 = vmatmul.mubr.bf16.gmra.mrb[0].mxu0 %v826
        %v2454 = vpop.f32.mrb[0].mxu0
        %v2455 = vadd.f32 0.0, %v2454
        %v2456 = vpop.f32.mrb[0].mxu0
        %v2457 = vadd.f32 0.0, %v2456
        %v2458 = vpop.f32.mrb[0].mxu0
        %v2459 = vadd.f32 0.0, %v2458
        %v2460 = vpop.f32.mrb[0].mxu0
        %v2461 = vadd.f32 0.0, %v2460
        %2462 = vmatprep.mubr.bf16.mxu0 %v829
        %2463 = vmatmul.mubr.bf16.gmra.mrb[0].mxu0 %v828
        %v2464 = vpop.f32.mrb[0].mxu0
        %v2465 = vadd.f32 0.0, %v2464
        %v2466 = vpop.f32.mrb[0].mxu0
        %v2467 = vadd.f32 0.0, %v2466
        %v2468 = vpop.f32.mrb[0].mxu0
        %v2469 = vadd.f32 0.0, %v2468
        %v2470 = vpop.f32.mrb[0].mxu0
        %v2471 = vadd.f32 0.0, %v2470
        %2472 = vmatprep.mubr.bf16.mxu0 %v831
        %2473 = vmatmul.mubr.bf16.gmra.mrb[0].mxu0 %v830
        %v2474 = vpop.f32.mrb[0].mxu0
        %v2475 = vadd.f32 0.0, %v2474
        %v2476 = vpop.f32.mrb[0].mxu0
        %v2477 = vadd.f32 0.0, %v2476
        %v2478 = vpop.f32.mrb[0].mxu0
        %v2479 = vadd.f32 0.0, %v2478
        %v2480 = vpop.f32.mrb[0].mxu0
        %v2481 = vadd.f32 0.0, %v2480
        %2482 = vmatprep.mubr.bf16.mxu0 %v833
        %2483 = vmatmul.mubr.bf16.gmra.mrb[0].mxu0 %v832
        %v2484 = vpop.f32.mrb[0].mxu0
        %v2485 = vadd.f32 0.0, %v2484
        %v2486 = vpop.f32.mrb[0].mxu0
        %v2487 = vadd.f32 0.0, %v2486
        %v2488 = vpop.f32.mrb[0].mxu0
        %v2489 = vadd.f32 0.0, %v2488
        %v2490 = vpop.f32.mrb[0].mxu0
        %v2491 = vadd.f32 0.0, %v2490
        %2492 = vmatprep.mubr.bf16.mxu0 %v835
        %2493 = vmatmul.mubr.bf16.gmra.mrb[0].mxu0 %v834
        %v2494 = vpop.f32.mrb[0].mxu0
        %v2495 = vadd.f32 0.0, %v2494
        %v2496 = vpop.f32.mrb[0].mxu0
        %v2497 = vadd.f32 0.0, %v2496
        %v2498 = vpop.f32.mrb[0].mxu0
        %v2499 = vadd.f32 0.0, %v2498
        %v2500 = vpop.f32.mrb[0].mxu0
        %v2501 = vadd.f32 0.0, %v2500
        %2502 = vmatprep.mubr.bf16.mxu0 %v837
        %2503 = vmatmul.mubr.bf16.gmra.mrb[0].mxu0 %v836
        %v2504 = vpop.f32.mrb[0].mxu0
        %v2505 = vadd.f32 0.0, %v2504
        %v2506 = vpop.f32.mrb[0].mxu0
        %v2507 = vadd.f32 0.0, %v2506
        %v2508 = vpop.f32.mrb[0].mxu0
        %v2509 = vadd.f32 0.0, %v2508
        %v2510 = vpop.f32.mrb[0].mxu0
        %v2511 = vadd.f32 0.0, %v2510
        %2512 = vmatprep.mubr.bf16.mxu0 %v839
        %2513 = vmatmul.mubr.bf16.gmra.mrb[0].mxu0 %v838
        %v2514 = vpop.f32.mrb[0].mxu0
        %v2515 = vadd.f32 0.0, %v2514
        %v2516 = vpop.f32.mrb[0].mxu0
        %v2517 = vadd.f32 0.0, %v2516
        %v2518 = vpop.f32.mrb[0].mxu0
        %v2519 = vadd.f32 0.0, %v2518
        %v2520 = vpop.f32.mrb[0].mxu0
        %v2521 = vadd.f32 0.0, %v2520
        %2522 = vmatprep.mubr.bf16.mxu0 %v841
        %2523 = vmatmul.mubr.bf16.gmra.mrb[0].mxu0 %v840
        %v2524 = vpop.f32.mrb[0].mxu0
        %v2525 = vadd.f32 0.0, %v2524
        %v2526 = vpop.f32.mrb[0].mxu0
        %v2527 = vadd.f32 0.0, %v2526
        %v2528 = vpop.f32.mrb[0].mxu0
        %v2529 = vadd.f32 0.0, %v2528
        %v2530 = vpop.f32.mrb[0].mxu0
        %v2531 = vadd.f32 0.0, %v2530
        %2532 = vmatprep.mubr.bf16.mxu0 %v843
        %2533 = vmatmul.mubr.bf16.gmra.mrb[0].mxu0 %v842
        %v2534 = vpop.f32.mrb[0].mxu0
        %v2535 = vadd.f32 0.0, %v2534
        %v2536 = vpop.f32.mrb[0].mxu0
        %v2537 = vadd.f32 0.0, %v2536
        %v2538 = vpop.f32.mrb[0].mxu0
        %v2539 = vadd.f32 0.0, %v2538
        %v2540 = vpop.f32.mrb[0].mxu0
        %v2541 = vadd.f32 0.0, %v2540
        %2542 = vdwg.mxu0
        %2543 = vmatprep.subr.bf16.mxu0 0
        %2544 = vmatpush1.bf16.msra.mxu0 %v1266
        %2545 = vmatprep.subr.bf16.mxu0 0
        %2546 = vmatpush1.bf16.msra.mxu0 %v1273
        %2547 = vmatprep.subr.bf16.mxu0 0
        %2548 = vmatpush1.bf16.msra.mxu0 %v1280
        %2549 = vmatprep.subr.bf16.mxu0 0
        %2550 = vmatpush1.bf16.msra.mxu0 %v1287
        %2551 = vmatprep.subr.bf16.mxu0 0
        %2552 = vmatpush1.bf16.msra.mxu0 %v1294
        %2553 = vmatprep.subr.bf16.mxu0 0
        %2554 = vmatpush1.bf16.msra.mxu0 %v1301
        %2555 = vmatprep.subr.bf16.mxu0 0
        %2556 = vmatpush1.bf16.msra.mxu0 %v1308
        %2557 = vmatprep.subr.bf16.mxu0 0
        %2558 = vmatpush1.bf16.msra.mxu0 %v1315
        %2559 = vmatprep.subr.bf16.mxu0 0
        %2560 = vmatpush1.bf16.msra.mxu0 %v1322
        %2561 = vmatprep.subr.bf16.mxu0 0
        %2562 = vmatpush1.bf16.msra.mxu0 %v1329
        %2563 = vmatprep.subr.bf16.mxu0 0
        %2564 = vmatpush1.bf16.msra.mxu0 %v1336
        %2565 = vmatprep.subr.bf16.mxu0 0
        %2566 = vmatpush1.bf16.msra.mxu0 %v1343
        %2567 = vmatprep.subr.bf16.mxu0 0
        %2568 = vmatpush1.bf16.msra.mxu0 %v1350
        %2569 = vmatprep.subr.bf16.mxu0 0
        %2570 = vmatpush1.bf16.msra.mxu0 %v1357
        %2571 = vmatprep.subr.bf16.mxu0 0
        %2572 = vmatpush1.bf16.msra.mxu0 %v1364
        %2573 = vmatprep.subr.bf16.mxu0 0
        %2574 = vmatpush1.bf16.msra.mxu0 %v1371
        %2575 = vmatprep.mubr.bf16.mxu0 %v781
        %2576 = vmatmul.mubr.bf16.gmra.mrb[0].mxu0 %v780
        %v2577 = vpop.f32.mrb[0].mxu0
        %v2578 = vadd.f32 0.0, %v2577
        %v2579 = vpop.f32.mrb[0].mxu0
        %v2580 = vpop.f32.mrb[0].mxu0
        %v2581 = vadd.f32 0.0, %v2580
        %v2582 = vpop.f32.mrb[0].mxu0
        %2583 = vmatprep.mubr.bf16.mxu0 %v783
        %2584 = vmatmul.mubr.bf16.gmra.mrb[0].mxu0 %v782
        %v2585 = vpop.f32.mrb[0].mxu0
        %v2586 = vadd.f32 0.0, %v2585
        %v2587 = vpop.f32.mrb[0].mxu0
        %v2588 = vpop.f32.mrb[0].mxu0
        %v2589 = vadd.f32 0.0, %v2588
        %v2590 = vpop.f32.mrb[0].mxu0
        %2591 = vmatprep.mubr.bf16.mxu0 %v785
        %2592 = vmatmul.mubr.bf16.gmra.mrb[0].mxu0 %v784
        %v2593 = vpop.f32.mrb[0].mxu0
        %v2594 = vadd.f32 0.0, %v2593
        %v2595 = vpop.f32.mrb[0].mxu0
        %v2596 = vpop.f32.mrb[0].mxu0
        %v2597 = vadd.f32 0.0, %v2596
        %v2598 = vpop.f32.mrb[0].mxu0
        %2599 = vmatprep.mubr.bf16.mxu0 %v787
        %2600 = vmatmul.mubr.bf16.gmra.mrb[0].mxu0 %v786
        %v2601 = vpop.f32.mrb[0].mxu0
        %v2602 = vadd.f32 0.0, %v2601
        %v2603 = vpop.f32.mrb[0].mxu0
        %v2604 = vpop.f32.mrb[0].mxu0
        %v2605 = vadd.f32 0.0, %v2604
        %v2606 = vpop.f32.mrb[0].mxu0
        %2607 = vmatprep.mubr.bf16.mxu0 %v789
        %2608 = vmatmul.mubr.bf16.gmra.mrb[0].mxu0 %v788
        %v2609 = vpop.f32.mrb[0].mxu0
        %v2610 = vadd.f32 0.0, %v2609
        %v2611 = vpop.f32.mrb[0].mxu0
        %v2612 = vpop.f32.mrb[0].mxu0
        %v2613 = vadd.f32 0.0, %v2612
        %v2614 = vpop.f32.mrb[0].mxu0
        %2615 = vmatprep.mubr.bf16.mxu0 %v791
        %2616 = vmatmul.mubr.bf16.gmra.mrb[0].mxu0 %v790
        %v2617 = vpop.f32.mrb[0].mxu0
        %v2618 = vadd.f32 0.0, %v2617
        %v2619 = vpop.f32.mrb[0].mxu0
        %v2620 = vpop.f32.mrb[0].mxu0
        %v2621 = vadd.f32 0.0, %v2620
        %v2622 = vpop.f32.mrb[0].mxu0
        %2623 = vmatprep.mubr.bf16.mxu0 %v793
        %2624 = vmatmul.mubr.bf16.gmra.mrb[0].mxu0 %v792
        %v2625 = vpop.f32.mrb[0].mxu0
        %v2626 = vadd.f32 0.0, %v2625
        %v2627 = vpop.f32.mrb[0].mxu0
        %v2628 = vpop.f32.mrb[0].mxu0
        %v2629 = vadd.f32 0.0, %v2628
        %v2630 = vpop.f32.mrb[0].mxu0
        %2631 = vmatprep.mubr.bf16.mxu0 %v795
        %2632 = vmatmul.mubr.bf16.gmra.mrb[0].mxu0 %v794
        %v2633 = vpop.f32.mrb[0].mxu0
        %v2634 = vadd.f32 0.0, %v2633
        %v2635 = vpop.f32.mrb[0].mxu0
        %v2636 = vpop.f32.mrb[0].mxu0
        %v2637 = vadd.f32 0.0, %v2636
        %v2638 = vpop.f32.mrb[0].mxu0
        %2639 = vmatprep.mubr.bf16.mxu0 %v797
        %2640 = vmatmul.mubr.bf16.gmra.mrb[0].mxu0 %v796
        %v2641 = vpop.f32.mrb[0].mxu0
        %v2642 = vadd.f32 0.0, %v2641
        %v2643 = vpop.f32.mrb[0].mxu0
        %v2644 = vpop.f32.mrb[0].mxu0
        %v2645 = vadd.f32 0.0, %v2644
        %v2646 = vpop.f32.mrb[0].mxu0
        %2647 = vmatprep.mubr.bf16.mxu0 %v799
        %2648 = vmatmul.mubr.bf16.gmra.mrb[0].mxu0 %v798
        %v2649 = vpop.f32.mrb[0].mxu0
        %v2650 = vadd.f32 0.0, %v2649
        %v2651 = vpop.f32.mrb[0].mxu0
        %v2652 = vpop.f32.mrb[0].mxu0
        %v2653 = vadd.f32 0.0, %v2652
        %v2654 = vpop.f32.mrb[0].mxu0
        %2655 = vmatprep.mubr.bf16.mxu0 %v801
        %2656 = vmatmul.mubr.bf16.gmra.mrb[0].mxu0 %v800
        %v2657 = vpop.f32.mrb[0].mxu0
        %v2658 = vadd.f32 0.0, %v2657
        %v2659 = vpop.f32.mrb[0].mxu0
        %v2660 = vpop.f32.mrb[0].mxu0
        %v2661 = vadd.f32 0.0, %v2660
        %v2662 = vpop.f32.mrb[0].mxu0
        %2663 = vmatprep.mubr.bf16.mxu0 %v803
        %2664 = vmatmul.mubr.bf16.gmra.mrb[0].mxu0 %v802
        %v2665 = vpop.f32.mrb[0].mxu0
        %v2666 = vadd.f32 0.0, %v2665
        %v2667 = vpop.f32.mrb[0].mxu0
        %v2668 = vpop.f32.mrb[0].mxu0
        %v2669 = vadd.f32 0.0, %v2668
        %v2670 = vpop.f32.mrb[0].mxu0
        %2671 = vmatprep.mubr.bf16.mxu0 %v805
        %2672 = vmatmul.mubr.bf16.gmra.mrb[0].mxu0 %v804
        %v2673 = vpop.f32.mrb[0].mxu0
        %v2674 = vadd.f32 0.0, %v2673
        %v2675 = vpop.f32.mrb[0].mxu0
        %v2676 = vpop.f32.mrb[0].mxu0
        %v2677 = vadd.f32 0.0, %v2676
        %v2678 = vpop.f32.mrb[0].mxu0
        %2679 = vmatprep.mubr.bf16.mxu0 %v807
        %2680 = vmatmul.mubr.bf16.gmra.mrb[0].mxu0 %v806
        %v2681 = vpop.f32.mrb[0].mxu0
        %v2682 = vadd.f32 0.0, %v2681
        %v2683 = vpop.f32.mrb[0].mxu0
        %v2684 = vpop.f32.mrb[0].mxu0
        %v2685 = vadd.f32 0.0, %v2684
        %v2686 = vpop.f32.mrb[0].mxu0
        %2687 = vmatprep.mubr.bf16.mxu0 %v809
        %2688 = vmatmul.mubr.bf16.gmra.mrb[0].mxu0 %v808
        %v2689 = vpop.f32.mrb[0].mxu0
        %v2690 = vadd.f32 0.0, %v2689
        %v2691 = vpop.f32.mrb[0].mxu0
        %v2692 = vpop.f32.mrb[0].mxu0
        %v2693 = vadd.f32 0.0, %v2692
        %v2694 = vpop.f32.mrb[0].mxu0
        %2695 = vmatprep.mubr.bf16.mxu0 %v811
        %2696 = vmatmul.mubr.bf16.gmra.mrb[0].mxu0 %v810
        %v2697 = vpop.f32.mrb[0].mxu0
        %v2698 = vadd.f32 0.0, %v2697
        %v2699 = vpop.f32.mrb[0].mxu0
        %v2700 = vpop.f32.mrb[0].mxu0
        %v2701 = vadd.f32 0.0, %v2700
        %v2702 = vpop.f32.mrb[0].mxu0
        %2703 = vmatprep.mubr.bf16.mxu0 %v813
        %2704 = vmatmul.mubr.bf16.gmra.mrb[0].mxu0 %v812
        %v2705 = vpop.f32.mrb[0].mxu0
        %v2706 = vadd.f32 0.0, %v2705
        %v2707 = vpop.f32.mrb[0].mxu0
        %v2708 = vpop.f32.mrb[0].mxu0
        %v2709 = vadd.f32 0.0, %v2708
        %v2710 = vpop.f32.mrb[0].mxu0
        %2711 = vmatprep.mubr.bf16.mxu0 %v815
        %2712 = vmatmul.mubr.bf16.gmra.mrb[0].mxu0 %v814
        %v2713 = vpop.f32.mrb[0].mxu0
        %v2714 = vadd.f32 0.0, %v2713
        %v2715 = vpop.f32.mrb[0].mxu0
        %v2716 = vpop.f32.mrb[0].mxu0
        %v2717 = vadd.f32 0.0, %v2716
        %v2718 = vpop.f32.mrb[0].mxu0
        %2719 = vmatprep.mubr.bf16.mxu0 %v817
        %2720 = vmatmul.mubr.bf16.gmra.mrb[0].mxu0 %v816
        %v2721 = vpop.f32.mrb[0].mxu0
        %v2722 = vadd.f32 0.0, %v2721
        %v2723 = vpop.f32.mrb[0].mxu0
        %v2724 = vpop.f32.mrb[0].mxu0
        %v2725 = vadd.f32 0.0, %v2724
        %v2726 = vpop.f32.mrb[0].mxu0
        %2727 = vmatprep.mubr.bf16.mxu0 %v819
        %2728 = vmatmul.mubr.bf16.gmra.mrb[0].mxu0 %v818
        %v2729 = vpop.f32.mrb[0].mxu0
        %v2730 = vadd.f32 0.0, %v2729
        %v2731 = vpop.f32.mrb[0].mxu0
        %v2732 = vpop.f32.mrb[0].mxu0
        %v2733 = vadd.f32 0.0, %v2732
        %v2734 = vpop.f32.mrb[0].mxu0
        %2735 = vmatprep.mubr.bf16.mxu0 %v821
        %2736 = vmatmul.mubr.bf16.gmra.mrb[0].mxu0 %v820
        %v2737 = vpop.f32.mrb[0].mxu0
        %v2738 = vadd.f32 0.0, %v2737
        %v2739 = vpop.f32.mrb[0].mxu0
        %v2740 = vpop.f32.mrb[0].mxu0
        %v2741 = vadd.f32 0.0, %v2740
        %v2742 = vpop.f32.mrb[0].mxu0
        %2743 = vmatprep.mubr.bf16.mxu0 %v823
        %2744 = vmatmul.mubr.bf16.gmra.mrb[0].mxu0 %v822
        %v2745 = vpop.f32.mrb[0].mxu0
        %v2746 = vadd.f32 0.0, %v2745
        %v2747 = vpop.f32.mrb[0].mxu0
        %v2748 = vpop.f32.mrb[0].mxu0
        %v2749 = vadd.f32 0.0, %v2748
        %v2750 = vpop.f32.mrb[0].mxu0
        %2751 = vmatprep.mubr.bf16.mxu0 %v825
        %2752 = vmatmul.mubr.bf16.gmra.mrb[0].mxu0 %v824
        %v2753 = vpop.f32.mrb[0].mxu0
        %v2754 = vadd.f32 0.0, %v2753
        %v2755 = vpop.f32.mrb[0].mxu0
        %v2756 = vpop.f32.mrb[0].mxu0
        %v2757 = vadd.f32 0.0, %v2756
        %v2758 = vpop.f32.mrb[0].mxu0
        %2759 = vmatprep.mubr.bf16.mxu0 %v827
        %2760 = vmatmul.mubr.bf16.gmra.mrb[0].mxu0 %v826
        %v2761 = vpop.f32.mrb[0].mxu0
        %v2762 = vadd.f32 0.0, %v2761
        %v2763 = vpop.f32.mrb[0].mxu0
        %v2764 = vpop.f32.mrb[0].mxu0
        %v2765 = vadd.f32 0.0, %v2764
        %v2766 = vpop.f32.mrb[0].mxu0
        %2767 = vmatprep.mubr.bf16.mxu0 %v829
        %2768 = vmatmul.mubr.bf16.gmra.mrb[0].mxu0 %v828
        %v2769 = vpop.f32.mrb[0].mxu0
        %v2770 = vadd.f32 0.0, %v2769
        %v2771 = vpop.f32.mrb[0].mxu0
        %v2772 = vpop.f32.mrb[0].mxu0
        %v2773 = vadd.f32 0.0, %v2772
        %v2774 = vpop.f32.mrb[0].mxu0
        %2775 = vmatprep.mubr.bf16.mxu0 %v831
        %2776 = vmatmul.mubr.bf16.gmra.mrb[0].mxu0 %v830
        %v2777 = vpop.f32.mrb[0].mxu0
        %v2778 = vadd.f32 0.0, %v2777
        %v2779 = vpop.f32.mrb[0].mxu0
        %v2780 = vpop.f32.mrb[0].mxu0
        %v2781 = vadd.f32 0.0, %v2780
        %v2782 = vpop.f32.mrb[0].mxu0
        %2783 = vmatprep.mubr.bf16.mxu0 %v833
        %2784 = vmatmul.mubr.bf16.gmra.mrb[0].mxu0 %v832
        %v2785 = vpop.f32.mrb[0].mxu0
        %v2786 = vadd.f32 0.0, %v2785
        %v2787 = vpop.f32.mrb[0].mxu0
        %v2788 = vpop.f32.mrb[0].mxu0
        %v2789 = vadd.f32 0.0, %v2788
        %v2790 = vpop.f32.mrb[0].mxu0
        %2791 = vmatprep.mubr.bf16.mxu0 %v835
        %2792 = vmatmul.mubr.bf16.gmra.mrb[0].mxu0 %v834
        %v2793 = vpop.f32.mrb[0].mxu0
        %v2794 = vadd.f32 0.0, %v2793
        %v2795 = vpop.f32.mrb[0].mxu0
        %v2796 = vpop.f32.mrb[0].mxu0
        %v2797 = vadd.f32 0.0, %v2796
        %v2798 = vpop.f32.mrb[0].mxu0
        %2799 = vmatprep.mubr.bf16.mxu0 %v837
        %2800 = vmatmul.mubr.bf16.gmra.mrb[0].mxu0 %v836
        %v2801 = vpop.f32.mrb[0].mxu0
        %v2802 = vadd.f32 0.0, %v2801
        %v2803 = vpop.f32.mrb[0].mxu0
        %v2804 = vpop.f32.mrb[0].mxu0
        %v2805 = vadd.f32 0.0, %v2804
        %v2806 = vpop.f32.mrb[0].mxu0
        %2807 = vmatprep.mubr.bf16.mxu0 %v839
        %2808 = vmatmul.mubr.bf16.gmra.mrb[0].mxu0 %v838
        %v2809 = vpop.f32.mrb[0].mxu0
        %v2810 = vadd.f32 0.0, %v2809
        %v2811 = vpop.f32.mrb[0].mxu0
        %v2812 = vpop.f32.mrb[0].mxu0
        %v2813 = vadd.f32 0.0, %v2812
        %v2814 = vpop.f32.mrb[0].mxu0
        %2815 = vmatprep.mubr.bf16.mxu0 %v841
        %2816 = vmatmul.mubr.bf16.gmra.mrb[0].mxu0 %v840
        %v2817 = vpop.f32.mrb[0].mxu0
        %v2818 = vadd.f32 0.0, %v2817
        %v2819 = vpop.f32.mrb[0].mxu0
        %v2820 = vpop.f32.mrb[0].mxu0
        %v2821 = vadd.f32 0.0, %v2820
        %v2822 = vpop.f32.mrb[0].mxu0
        %2823 = vmatprep.mubr.bf16.mxu0 %v843
        %2824 = vmatmul.mubr.bf16.gmra.mrb[0].mxu0 %v842
        %v2825 = vpop.f32.mrb[0].mxu0
        %v2826 = vadd.f32 0.0, %v2825
        %v2827 = vpop.f32.mrb[0].mxu0
        %v2828 = vpop.f32.mrb[0].mxu0
        %v2829 = vadd.f32 0.0, %v2828
        %v2830 = vpop.f32.mrb[0].mxu0
        %2831 = vdwg.mxu0
        %v2832 = vadd.f32 %v1519, %v1521
        %v2833 = vadd.f32 %v2832, %v1872
        %v2834 = vadd.f32 %v2833, %v1874
        %v2835 = vadd.f32 %v2834, %v2225
        %v2836 = vadd.f32 %v2835, %v2227
        %vm2837 = vcmask 130048
        %v2838 = vsel %vm2837, %v2578, 0.0
        %v2839 = vadd.f32 %v2836, %v2838
        %2840 = vadd.xlane.f32.xlu0 %v2839
        %v2841 = vpop.xlane.xlu0 %2840
        %v2842 = vadd.f32 %v1523, %v1525
        %v2843 = vadd.f32 %v2842, %v1876
        %v2844 = vadd.f32 %v2843, %v1878
        %v2845 = vadd.f32 %v2844, %v2229
        %v2846 = vadd.f32 %v2845, %v2231
        %v2847 = vsel %vm2837, %v2581, 0.0
        %v2848 = vadd.f32 %v2846, %v2847
        %2849 = vadd.xlane.f32.xlu0 %v2848
        %v2850 = vpop.xlane.xlu0 %2849
        %v2851 = vadd.f32 %v1529, %v1531
        %v2852 = vadd.f32 %v2851, %v1882
        %v2853 = vadd.f32 %v2852, %v1884
        %v2854 = vadd.f32 %v2853, %v2235
        %v2855 = vadd.f32 %v2854, %v2237
        %v2856 = vsel %vm2837, %v2586, 0.0
        %v2857 = vadd.f32 %v2855, %v2856
        %2858 = vadd.xlane.f32.xlu0 %v2857
        %v2859 = vpop.xlane.xlu0 %2858
        %v2860 = vadd.f32 %v1533, %v1535
        %v2861 = vadd.f32 %v2860, %v1886
        %v2862 = vadd.f32 %v2861, %v1888
        %v2863 = vadd.f32 %v2862, %v2239
        %v2864 = vadd.f32 %v2863, %v2241
        %v2865 = vsel %vm2837, %v2589, 0.0
        %v2866 = vadd.f32 %v2864, %v2865
        %2867 = vadd.xlane.f32.xlu0 %v2866
        %v2868 = vpop.xlane.xlu0 %2867
        %v2869 = vadd.f32 %v1539, %v1541
        %v2870 = vadd.f32 %v2869, %v1892
        %v2871 = vadd.f32 %v2870, %v1894
        %v2872 = vadd.f32 %v2871, %v2245
        %v2873 = vadd.f32 %v2872, %v2247
        %v2874 = vsel %vm2837, %v2594, 0.0
        %v2875 = vadd.f32 %v2873, %v2874
        %2876 = vadd.xlane.f32.xlu0 %v2875
        %v2877 = vpop.xlane.xlu0 %2876
        %v2878 = vadd.f32 %v1543, %v1545
        %v2879 = vadd.f32 %v2878, %v1896
        %v2880 = vadd.f32 %v2879, %v1898
        %v2881 = vadd.f32 %v2880, %v2249
        %v2882 = vadd.f32 %v2881, %v2251
        %v2883 = vsel %vm2837, %v2597, 0.0
        %v2884 = vadd.f32 %v2882, %v2883
        %2885 = vadd.xlane.f32.xlu0 %v2884
        %v2886 = vpop.xlane.xlu0 %2885
        %v2887 = vadd.f32 %v1549, %v1551
        %v2888 = vadd.f32 %v2887, %v1902
        %v2889 = vadd.f32 %v2888, %v1904
        %v2890 = vadd.f32 %v2889, %v2255
        %v2891 = vadd.f32 %v2890, %v2257
        %v2892 = vsel %vm2837, %v2602, 0.0
        %v2893 = vadd.f32 %v2891, %v2892
        %2894 = vadd.xlane.f32.xlu0 %v2893
        %v2895 = vpop.xlane.xlu0 %2894
        %v2896 = vadd.f32 %v1553, %v1555
        %v2897 = vadd.f32 %v2896, %v1906
        %v2898 = vadd.f32 %v2897, %v1908
        %v2899 = vadd.f32 %v2898, %v2259
        %v2900 = vadd.f32 %v2899, %v2261
        %v2901 = vsel %vm2837, %v2605, 0.0
        %v2902 = vadd.f32 %v2900, %v2901
        %2903 = vadd.xlane.f32.xlu0 %v2902
        %v2904 = vpop.xlane.xlu0 %2903
        %v2905 = vadd.f32 %v1559, %v1561
        %v2906 = vadd.f32 %v2905, %v1912
        %v2907 = vadd.f32 %v2906, %v1914
        %v2908 = vadd.f32 %v2907, %v2265
        %v2909 = vadd.f32 %v2908, %v2267
        %v2910 = vsel %vm2837, %v2610, 0.0
        %v2911 = vadd.f32 %v2909, %v2910
        %2912 = vadd.xlane.f32.xlu0 %v2911
        %v2913 = vpop.xlane.xlu0 %2912
        %v2914 = vadd.f32 %v1563, %v1565
        %v2915 = vadd.f32 %v2914, %v1916
        %v2916 = vadd.f32 %v2915, %v1918
        %v2917 = vadd.f32 %v2916, %v2269
        %v2918 = vadd.f32 %v2917, %v2271
        %v2919 = vsel %vm2837, %v2613, 0.0
        %v2920 = vadd.f32 %v2918, %v2919
        %2921 = vadd.xlane.f32.xlu0 %v2920
        %v2922 = vpop.xlane.xlu0 %2921
        %v2923 = vadd.f32 %v1569, %v1571
        %v2924 = vadd.f32 %v2923, %v1922
        %v2925 = vadd.f32 %v2924, %v1924
        %v2926 = vadd.f32 %v2925, %v2275
        %v2927 = vadd.f32 %v2926, %v2277
        %v2928 = vsel %vm2837, %v2618, 0.0
        %v2929 = vadd.f32 %v2927, %v2928
        %2930 = vadd.xlane.f32.xlu0 %v2929
        %v2931 = vpop.xlane.xlu0 %2930
        %v2932 = vadd.f32 %v1573, %v1575
        %v2933 = vadd.f32 %v2932, %v1926
        %v2934 = vadd.f32 %v2933, %v1928
        %v2935 = vadd.f32 %v2934, %v2279
        %v2936 = vadd.f32 %v2935, %v2281
        %v2937 = vsel %vm2837, %v2621, 0.0
        %v2938 = vadd.f32 %v2936, %v2937
        %2939 = vadd.xlane.f32.xlu0 %v2938
        %v2940 = vpop.xlane.xlu0 %2939
        %v2941 = vadd.f32 %v1579, %v1581
        %v2942 = vadd.f32 %v2941, %v1932
        %v2943 = vadd.f32 %v2942, %v1934
        %v2944 = vadd.f32 %v2943, %v2285
        %v2945 = vadd.f32 %v2944, %v2287
        %v2946 = vsel %vm2837, %v2626, 0.0
        %v2947 = vadd.f32 %v2945, %v2946
        %2948 = vadd.xlane.f32.xlu0 %v2947
        %v2949 = vpop.xlane.xlu0 %2948
        %v2950 = vadd.f32 %v1583, %v1585
        %v2951 = vadd.f32 %v2950, %v1936
        %v2952 = vadd.f32 %v2951, %v1938
        %v2953 = vadd.f32 %v2952, %v2289
        %v2954 = vadd.f32 %v2953, %v2291
        %v2955 = vsel %vm2837, %v2629, 0.0
        %v2956 = vadd.f32 %v2954, %v2955
        %2957 = vadd.xlane.f32.xlu0 %v2956
        %v2958 = vpop.xlane.xlu0 %2957
        %v2959 = vadd.f32 %v1589, %v1591
        %v2960 = vadd.f32 %v2959, %v1942
        %v2961 = vadd.f32 %v2960, %v1944
        %v2962 = vadd.f32 %v2961, %v2295
        %v2963 = vadd.f32 %v2962, %v2297
        %v2964 = vsel %vm2837, %v2634, 0.0
        %v2965 = vadd.f32 %v2963, %v2964
        %2966 = vadd.xlane.f32.xlu0 %v2965
        %v2967 = vpop.xlane.xlu0 %2966
        %v2968 = vadd.f32 %v1593, %v1595
        %v2969 = vadd.f32 %v2968, %v1946
        %v2970 = vadd.f32 %v2969, %v1948
        %v2971 = vadd.f32 %v2970, %v2299
        %v2972 = vadd.f32 %v2971, %v2301
        %v2973 = vsel %vm2837, %v2637, 0.0
        %v2974 = vadd.f32 %v2972, %v2973
        %2975 = vadd.xlane.f32.xlu0 %v2974
        %v2976 = vpop.xlane.xlu0 %2975
        %v2977 = vadd.f32 %v1599, %v1601
        %v2978 = vadd.f32 %v2977, %v1952
        %v2979 = vadd.f32 %v2978, %v1954
        %v2980 = vadd.f32 %v2979, %v2305
        %v2981 = vadd.f32 %v2980, %v2307
        %v2982 = vsel %vm2837, %v2642, 0.0
        %v2983 = vadd.f32 %v2981, %v2982
        %2984 = vadd.xlane.f32.xlu0 %v2983
        %v2985 = vpop.xlane.xlu0 %2984
        %v2986 = vadd.f32 %v1603, %v1605
        %v2987 = vadd.f32 %v2986, %v1956
        %v2988 = vadd.f32 %v2987, %v1958
        %v2989 = vadd.f32 %v2988, %v2309
        %v2990 = vadd.f32 %v2989, %v2311
        %v2991 = vsel %vm2837, %v2645, 0.0
        %v2992 = vadd.f32 %v2990, %v2991
        %2993 = vadd.xlane.f32.xlu0 %v2992
        %v2994 = vpop.xlane.xlu0 %2993
        %v2995 = vadd.f32 %v1609, %v1611
        %v2996 = vadd.f32 %v2995, %v1962
        %v2997 = vadd.f32 %v2996, %v1964
        %v2998 = vadd.f32 %v2997, %v2315
        %v2999 = vadd.f32 %v2998, %v2317
        %v3000 = vsel %vm2837, %v2650, 0.0
        %v3001 = vadd.f32 %v2999, %v3000
        %3002 = vadd.xlane.f32.xlu0 %v3001
        %v3003 = vpop.xlane.xlu0 %3002
        %v3004 = vadd.f32 %v1613, %v1615
        %v3005 = vadd.f32 %v3004, %v1966
        %v3006 = vadd.f32 %v3005, %v1968
        %v3007 = vadd.f32 %v3006, %v2319
        %v3008 = vadd.f32 %v3007, %v2321
        %v3009 = vsel %vm2837, %v2653, 0.0
        %v3010 = vadd.f32 %v3008, %v3009
        %3011 = vadd.xlane.f32.xlu0 %v3010
        %v3012 = vpop.xlane.xlu0 %3011
        %v3013 = vadd.f32 %v1619, %v1621
        %v3014 = vadd.f32 %v3013, %v1972
        %v3015 = vadd.f32 %v3014, %v1974
        %v3016 = vadd.f32 %v3015, %v2325
        %v3017 = vadd.f32 %v3016, %v2327
        %v3018 = vsel %vm2837, %v2658, 0.0
        %v3019 = vadd.f32 %v3017, %v3018
        %3020 = vadd.xlane.f32.xlu0 %v3019
        %v3021 = vpop.xlane.xlu0 %3020
        %v3022 = vadd.f32 %v1623, %v1625
        %v3023 = vadd.f32 %v3022, %v1976
        %v3024 = vadd.f32 %v3023, %v1978
        %v3025 = vadd.f32 %v3024, %v2329
        %v3026 = vadd.f32 %v3025, %v2331
        %v3027 = vsel %vm2837, %v2661, 0.0
        %v3028 = vadd.f32 %v3026, %v3027
        %3029 = vadd.xlane.f32.xlu0 %v3028
        %v3030 = vpop.xlane.xlu0 %3029
        %v3031 = vadd.f32 %v1629, %v1631
        %v3032 = vadd.f32 %v3031, %v1982
        %v3033 = vadd.f32 %v3032, %v1984
        %v3034 = vadd.f32 %v3033, %v2335
        %v3035 = vadd.f32 %v3034, %v2337
        %v3036 = vsel %vm2837, %v2666, 0.0
        %v3037 = vadd.f32 %v3035, %v3036
        %3038 = vadd.xlane.f32.xlu0 %v3037
        %v3039 = vpop.xlane.xlu0 %3038
        %v3040 = vadd.f32 %v1633, %v1635
        %v3041 = vadd.f32 %v3040, %v1986
        %v3042 = vadd.f32 %v3041, %v1988
        %v3043 = vadd.f32 %v3042, %v2339
        %v3044 = vadd.f32 %v3043, %v2341
        %v3045 = vsel %vm2837, %v2669, 0.0
        %v3046 = vadd.f32 %v3044, %v3045
        %3047 = vadd.xlane.f32.xlu0 %v3046
        %v3048 = vpop.xlane.xlu0 %3047
        %v3049 = vadd.f32 %v1639, %v1641
        %v3050 = vadd.f32 %v3049, %v1992
        %v3051 = vadd.f32 %v3050, %v1994
        %v3052 = vadd.f32 %v3051, %v2345
        %v3053 = vadd.f32 %v3052, %v2347
        %v3054 = vsel %vm2837, %v2674, 0.0
        %v3055 = vadd.f32 %v3053, %v3054
        %3056 = vadd.xlane.f32.xlu0 %v3055
        %v3057 = vpop.xlane.xlu0 %3056
        %v3058 = vadd.f32 %v1643, %v1645
        %v3059 = vadd.f32 %v3058, %v1996
        %v3060 = vadd.f32 %v3059, %v1998
        %v3061 = vadd.f32 %v3060, %v2349
        %v3062 = vadd.f32 %v3061, %v2351
        %v3063 = vsel %vm2837, %v2677, 0.0
        %v3064 = vadd.f32 %v3062, %v3063
        %3065 = vadd.xlane.f32.xlu0 %v3064
        %v3066 = vpop.xlane.xlu0 %3065
        %v3067 = vadd.f32 %v1649, %v1651
        %v3068 = vadd.f32 %v3067, %v2002
        %v3069 = vadd.f32 %v3068, %v2004
        %v3070 = vadd.f32 %v3069, %v2355
        %v3071 = vadd.f32 %v3070, %v2357
        %v3072 = vsel %vm2837, %v2682, 0.0
        %v3073 = vadd.f32 %v3071, %v3072
        %3074 = vadd.xlane.f32.xlu0 %v3073
        %v3075 = vpop.xlane.xlu0 %3074
        %v3076 = vadd.f32 %v1653, %v1655
        %v3077 = vadd.f32 %v3076, %v2006
        %v3078 = vadd.f32 %v3077, %v2008
        %v3079 = vadd.f32 %v3078, %v2359
        %v3080 = vadd.f32 %v3079, %v2361
        %v3081 = vsel %vm2837, %v2685, 0.0
        %v3082 = vadd.f32 %v3080, %v3081
        %3083 = vadd.xlane.f32.xlu0 %v3082
        %v3084 = vpop.xlane.xlu0 %3083
        %v3085 = vadd.f32 %v1659, %v1661
        %v3086 = vadd.f32 %v3085, %v2012
        %v3087 = vadd.f32 %v3086, %v2014
        %v3088 = vadd.f32 %v3087, %v2365
        %v3089 = vadd.f32 %v3088, %v2367
        %v3090 = vsel %vm2837, %v2690, 0.0
        %v3091 = vadd.f32 %v3089, %v3090
        %3092 = vadd.xlane.f32.xlu0 %v3091
        %v3093 = vpop.xlane.xlu0 %3092
        %v3094 = vadd.f32 %v1663, %v1665
        %v3095 = vadd.f32 %v3094, %v2016
        %v3096 = vadd.f32 %v3095, %v2018
        %v3097 = vadd.f32 %v3096, %v2369
        %v3098 = vadd.f32 %v3097, %v2371
        %v3099 = vsel %vm2837, %v2693, 0.0
        %v3100 = vadd.f32 %v3098, %v3099
        %3101 = vadd.xlane.f32.xlu0 %v3100
        %v3102 = vpop.xlane.xlu0 %3101
        %v3103 = vadd.f32 %v1669, %v1671
        %v3104 = vadd.f32 %v3103, %v2022
        %v3105 = vadd.f32 %v3104, %v2024
        %v3106 = vadd.f32 %v3105, %v2375
        %v3107 = vadd.f32 %v3106, %v2377
        %v3108 = vsel %vm2837, %v2698, 0.0
        %v3109 = vadd.f32 %v3107, %v3108
        %3110 = vadd.xlane.f32.xlu0 %v3109
        %v3111 = vpop.xlane.xlu0 %3110
        %v3112 = vadd.f32 %v1673, %v1675
        %v3113 = vadd.f32 %v3112, %v2026
        %v3114 = vadd.f32 %v3113, %v2028
        %v3115 = vadd.f32 %v3114, %v2379
        %v3116 = vadd.f32 %v3115, %v2381
        %v3117 = vsel %vm2837, %v2701, 0.0
        %v3118 = vadd.f32 %v3116, %v3117
        %3119 = vadd.xlane.f32.xlu0 %v3118
        %v3120 = vpop.xlane.xlu0 %3119
        %v3121 = vadd.f32 %v1679, %v1681
        %v3122 = vadd.f32 %v3121, %v2032
        %v3123 = vadd.f32 %v3122, %v2034
        %v3124 = vadd.f32 %v3123, %v2385
        %v3125 = vadd.f32 %v3124, %v2387
        %v3126 = vsel %vm2837, %v2706, 0.0
        %v3127 = vadd.f32 %v3125, %v3126
        %3128 = vadd.xlane.f32.xlu0 %v3127
        %v3129 = vpop.xlane.xlu0 %3128
        %v3130 = vadd.f32 %v1683, %v1685
        %v3131 = vadd.f32 %v3130, %v2036
        %v3132 = vadd.f32 %v3131, %v2038
        %v3133 = vadd.f32 %v3132, %v2389
        %v3134 = vadd.f32 %v3133, %v2391
        %v3135 = vsel %vm2837, %v2709, 0.0
        %v3136 = vadd.f32 %v3134, %v3135
        %3137 = vadd.xlane.f32.xlu0 %v3136
        %v3138 = vpop.xlane.xlu0 %3137
        %v3139 = vadd.f32 %v1689, %v1691
        %v3140 = vadd.f32 %v3139, %v2042
        %v3141 = vadd.f32 %v3140, %v2044
        %v3142 = vadd.f32 %v3141, %v2395
        %v3143 = vadd.f32 %v3142, %v2397
        %v3144 = vsel %vm2837, %v2714, 0.0
        %v3145 = vadd.f32 %v3143, %v3144
        %3146 = vadd.xlane.f32.xlu0 %v3145
        %v3147 = vpop.xlane.xlu0 %3146
        %v3148 = vadd.f32 %v1693, %v1695
        %v3149 = vadd.f32 %v3148, %v2046
        %v3150 = vadd.f32 %v3149, %v2048
        %v3151 = vadd.f32 %v3150, %v2399
        %v3152 = vadd.f32 %v3151, %v2401
        %v3153 = vsel %vm2837, %v2717, 0.0
        %v3154 = vadd.f32 %v3152, %v3153
        %3155 = vadd.xlane.f32.xlu0 %v3154
        %v3156 = vpop.xlane.xlu0 %3155
        %v3157 = vadd.f32 %v1699, %v1701
        %v3158 = vadd.f32 %v3157, %v2052
        %v3159 = vadd.f32 %v3158, %v2054
        %v3160 = vadd.f32 %v3159, %v2405
        %v3161 = vadd.f32 %v3160, %v2407
        %v3162 = vsel %vm2837, %v2722, 0.0
        %v3163 = vadd.f32 %v3161, %v3162
        %3164 = vadd.xlane.f32.xlu0 %v3163
        %v3165 = vpop.xlane.xlu0 %3164
        %v3166 = vadd.f32 %v1703, %v1705
        %v3167 = vadd.f32 %v3166, %v2056
        %v3168 = vadd.f32 %v3167, %v2058
        %v3169 = vadd.f32 %v3168, %v2409
        %v3170 = vadd.f32 %v3169, %v2411
        %v3171 = vsel %vm2837, %v2725, 0.0
        %v3172 = vadd.f32 %v3170, %v3171
        %3173 = vadd.xlane.f32.xlu0 %v3172
        %v3174 = vpop.xlane.xlu0 %3173
        %v3175 = vadd.f32 %v1709, %v1711
        %v3176 = vadd.f32 %v3175, %v2062
        %v3177 = vadd.f32 %v3176, %v2064
        %v3178 = vadd.f32 %v3177, %v2415
        %v3179 = vadd.f32 %v3178, %v2417
        %v3180 = vsel %vm2837, %v2730, 0.0
        %v3181 = vadd.f32 %v3179, %v3180
        %3182 = vadd.xlane.f32.xlu0 %v3181
        %v3183 = vpop.xlane.xlu0 %3182
        %v3184 = vadd.f32 %v1713, %v1715
        %v3185 = vadd.f32 %v3184, %v2066
        %v3186 = vadd.f32 %v3185, %v2068
        %v3187 = vadd.f32 %v3186, %v2419
        %v3188 = vadd.f32 %v3187, %v2421
        %v3189 = vsel %vm2837, %v2733, 0.0
        %v3190 = vadd.f32 %v3188, %v3189
        %3191 = vadd.xlane.f32.xlu0 %v3190
        %v3192 = vpop.xlane.xlu0 %3191
        %v3193 = vadd.f32 %v1719, %v1721
        %v3194 = vadd.f32 %v3193, %v2072
        %v3195 = vadd.f32 %v3194, %v2074
        %v3196 = vadd.f32 %v3195, %v2425
        %v3197 = vadd.f32 %v3196, %v2427
        %v3198 = vsel %vm2837, %v2738, 0.0
        %v3199 = vadd.f32 %v3197, %v3198
        %3200 = vadd.xlane.f32.xlu0 %v3199
        %v3201 = vpop.xlane.xlu0 %3200
        %v3202 = vadd.f32 %v1723, %v1725
        %v3203 = vadd.f32 %v3202, %v2076
        %v3204 = vadd.f32 %v3203, %v2078
        %v3205 = vadd.f32 %v3204, %v2429
        %v3206 = vadd.f32 %v3205, %v2431
        %v3207 = vsel %vm2837, %v2741, 0.0
        %v3208 = vadd.f32 %v3206, %v3207
        %3209 = vadd.xlane.f32.xlu0 %v3208
        %v3210 = vpop.xlane.xlu0 %3209
        %v3211 = vadd.f32 %v1729, %v1731
        %v3212 = vadd.f32 %v3211, %v2082
        %v3213 = vadd.f32 %v3212, %v2084
        %v3214 = vadd.f32 %v3213, %v2435
        %v3215 = vadd.f32 %v3214, %v2437
        %v3216 = vsel %vm2837, %v2746, 0.0
        %v3217 = vadd.f32 %v3215, %v3216
        %3218 = vadd.xlane.f32.xlu0 %v3217
        %v3219 = vpop.xlane.xlu0 %3218
        %v3220 = vadd.f32 %v1733, %v1735
        %v3221 = vadd.f32 %v3220, %v2086
        %v3222 = vadd.f32 %v3221, %v2088
        %v3223 = vadd.f32 %v3222, %v2439
        %v3224 = vadd.f32 %v3223, %v2441
        %v3225 = vsel %vm2837, %v2749, 0.0
        %v3226 = vadd.f32 %v3224, %v3225
        %3227 = vadd.xlane.f32.xlu0 %v3226
        %v3228 = vpop.xlane.xlu0 %3227
        %v3229 = vadd.f32 %v1739, %v1741
        %v3230 = vadd.f32 %v3229, %v2092
        %v3231 = vadd.f32 %v3230, %v2094
        %v3232 = vadd.f32 %v3231, %v2445
        %v3233 = vadd.f32 %v3232, %v2447
        %v3234 = vsel %vm2837, %v2754, 0.0
        %v3235 = vadd.f32 %v3233, %v3234
        %3236 = vadd.xlane.f32.xlu0 %v3235
        %v3237 = vpop.xlane.xlu0 %3236
        %v3238 = vadd.f32 %v1743, %v1745
        %v3239 = vadd.f32 %v3238, %v2096
        %v3240 = vadd.f32 %v3239, %v2098
        %v3241 = vadd.f32 %v3240, %v2449
        %v3242 = vadd.f32 %v3241, %v2451
        %v3243 = vsel %vm2837, %v2757, 0.0
        %v3244 = vadd.f32 %v3242, %v3243
        %3245 = vadd.xlane.f32.xlu0 %v3244
        %v3246 = vpop.xlane.xlu0 %3245
        %v3247 = vadd.f32 %v1749, %v1751
        %v3248 = vadd.f32 %v3247, %v2102
        %v3249 = vadd.f32 %v3248, %v2104
        %v3250 = vadd.f32 %v3249, %v2455
        %v3251 = vadd.f32 %v3250, %v2457
        %v3252 = vsel %vm2837, %v2762, 0.0
        %v3253 = vadd.f32 %v3251, %v3252
        %3254 = vadd.xlane.f32.xlu0 %v3253
        %v3255 = vpop.xlane.xlu0 %3254
        %v3256 = vadd.f32 %v1753, %v1755
        %v3257 = vadd.f32 %v3256, %v2106
        %v3258 = vadd.f32 %v3257, %v2108
        %v3259 = vadd.f32 %v3258, %v2459
        %v3260 = vadd.f32 %v3259, %v2461
        %v3261 = vsel %vm2837, %v2765, 0.0
        %v3262 = vadd.f32 %v3260, %v3261
        %3263 = vadd.xlane.f32.xlu0 %v3262
        %v3264 = vpop.xlane.xlu0 %3263
        %v3265 = vadd.f32 %v1759, %v1761
        %v3266 = vadd.f32 %v3265, %v2112
        %v3267 = vadd.f32 %v3266, %v2114
        %v3268 = vadd.f32 %v3267, %v2465
        %v3269 = vadd.f32 %v3268, %v2467
        %v3270 = vsel %vm2837, %v2770, 0.0
        %v3271 = vadd.f32 %v3269, %v3270
        %3272 = vadd.xlane.f32.xlu0 %v3271
        %v3273 = vpop.xlane.xlu0 %3272
        %v3274 = vadd.f32 %v1763, %v1765
        %v3275 = vadd.f32 %v3274, %v2116
        %v3276 = vadd.f32 %v3275, %v2118
        %v3277 = vadd.f32 %v3276, %v2469
        %v3278 = vadd.f32 %v3277, %v2471
        %v3279 = vsel %vm2837, %v2773, 0.0
        %v3280 = vadd.f32 %v3278, %v3279
        %3281 = vadd.xlane.f32.xlu0 %v3280
        %v3282 = vpop.xlane.xlu0 %3281
        %v3283 = vadd.f32 %v1769, %v1771
        %v3284 = vadd.f32 %v3283, %v2122
        %v3285 = vadd.f32 %v3284, %v2124
        %v3286 = vadd.f32 %v3285, %v2475
        %v3287 = vadd.f32 %v3286, %v2477
        %v3288 = vsel %vm2837, %v2778, 0.0
        %v3289 = vadd.f32 %v3287, %v3288
        %3290 = vadd.xlane.f32.xlu0 %v3289
        %v3291 = vpop.xlane.xlu0 %3290
        %v3292 = vadd.f32 %v1773, %v1775
        %v3293 = vadd.f32 %v3292, %v2126
        %v3294 = vadd.f32 %v3293, %v2128
        %v3295 = vadd.f32 %v3294, %v2479
        %v3296 = vadd.f32 %v3295, %v2481
        %v3297 = vsel %vm2837, %v2781, 0.0
        %v3298 = vadd.f32 %v3296, %v3297
        %3299 = vadd.xlane.f32.xlu0 %v3298
        %v3300 = vpop.xlane.xlu0 %3299
        %v3301 = vadd.f32 %v1779, %v1781
        %v3302 = vadd.f32 %v3301, %v2132
        %v3303 = vadd.f32 %v3302, %v2134
        %v3304 = vadd.f32 %v3303, %v2485
        %v3305 = vadd.f32 %v3304, %v2487
        %v3306 = vsel %vm2837, %v2786, 0.0
        %v3307 = vadd.f32 %v3305, %v3306
        %3308 = vadd.xlane.f32.xlu0 %v3307
        %v3309 = vpop.xlane.xlu0 %3308
        %v3310 = vadd.f32 %v1783, %v1785
        %v3311 = vadd.f32 %v3310, %v2136
        %v3312 = vadd.f32 %v3311, %v2138
        %v3313 = vadd.f32 %v3312, %v2489
        %v3314 = vadd.f32 %v3313, %v2491
        %v3315 = vsel %vm2837, %v2789, 0.0
        %v3316 = vadd.f32 %v3314, %v3315
        %3317 = vadd.xlane.f32.xlu0 %v3316
        %v3318 = vpop.xlane.xlu0 %3317
        %v3319 = vadd.f32 %v1789, %v1791
        %v3320 = vadd.f32 %v3319, %v2142
        %v3321 = vadd.f32 %v3320, %v2144
        %v3322 = vadd.f32 %v3321, %v2495
        %v3323 = vadd.f32 %v3322, %v2497
        %v3324 = vsel %vm2837, %v2794, 0.0
        %v3325 = vadd.f32 %v3323, %v3324
        %3326 = vadd.xlane.f32.xlu0 %v3325
        %v3327 = vpop.xlane.xlu0 %3326
        %v3328 = vadd.f32 %v1793, %v1795
        %v3329 = vadd.f32 %v3328, %v2146
        %v3330 = vadd.f32 %v3329, %v2148
        %v3331 = vadd.f32 %v3330, %v2499
        %v3332 = vadd.f32 %v3331, %v2501
        %v3333 = vsel %vm2837, %v2797, 0.0
        %v3334 = vadd.f32 %v3332, %v3333
        %3335 = vadd.xlane.f32.xlu0 %v3334
        %v3336 = vpop.xlane.xlu0 %3335
        %v3337 = vadd.f32 %v1799, %v1801
        %v3338 = vadd.f32 %v3337, %v2152
        %v3339 = vadd.f32 %v3338, %v2154
        %v3340 = vadd.f32 %v3339, %v2505
        %v3341 = vadd.f32 %v3340, %v2507
        %v3342 = vsel %vm2837, %v2802, 0.0
        %v3343 = vadd.f32 %v3341, %v3342
        %3344 = vadd.xlane.f32.xlu0 %v3343
        %v3345 = vpop.xlane.xlu0 %3344
        %v3346 = vadd.f32 %v1803, %v1805
        %v3347 = vadd.f32 %v3346, %v2156
        %v3348 = vadd.f32 %v3347, %v2158
        %v3349 = vadd.f32 %v3348, %v2509
        %v3350 = vadd.f32 %v3349, %v2511
        %v3351 = vsel %vm2837, %v2805, 0.0
        %v3352 = vadd.f32 %v3350, %v3351
        %3353 = vadd.xlane.f32.xlu0 %v3352
        %v3354 = vpop.xlane.xlu0 %3353
        %v3355 = vadd.f32 %v1809, %v1811
        %v3356 = vadd.f32 %v3355, %v2162
        %v3357 = vadd.f32 %v3356, %v2164
        %v3358 = vadd.f32 %v3357, %v2515
        %v3359 = vadd.f32 %v3358, %v2517
        %v3360 = vsel %vm2837, %v2810, 0.0
        %v3361 = vadd.f32 %v3359, %v3360
        %3362 = vadd.xlane.f32.xlu0 %v3361
        %v3363 = vpop.xlane.xlu0 %3362
        %v3364 = vadd.f32 %v1813, %v1815
        %v3365 = vadd.f32 %v3364, %v2166
        %v3366 = vadd.f32 %v3365, %v2168
        %v3367 = vadd.f32 %v3366, %v2519
        %v3368 = vadd.f32 %v3367, %v2521
        %v3369 = vsel %vm2837, %v2813, 0.0
        %v3370 = vadd.f32 %v3368, %v3369
        %3371 = vadd.xlane.f32.xlu0 %v3370
        %v3372 = vpop.xlane.xlu0 %3371
        %v3373 = vadd.f32 %v1819, %v1821
        %v3374 = vadd.f32 %v3373, %v2172
        %v3375 = vadd.f32 %v3374, %v2174
        %v3376 = vadd.f32 %v3375, %v2525
        %v3377 = vadd.f32 %v3376, %v2527
        %v3378 = vsel %vm2837, %v2818, 0.0
        %v3379 = vadd.f32 %v3377, %v3378
        %3380 = vadd.xlane.f32.xlu0 %v3379
        %v3381 = vpop.xlane.xlu0 %3380
        %v3382 = vadd.f32 %v1823, %v1825
        %v3383 = vadd.f32 %v3382, %v2176
        %v3384 = vadd.f32 %v3383, %v2178
        %v3385 = vadd.f32 %v3384, %v2529
        %v3386 = vadd.f32 %v3385, %v2531
        %v3387 = vsel %vm2837, %v2821, 0.0
        %v3388 = vadd.f32 %v3386, %v3387
        %3389 = vadd.xlane.f32.xlu0 %v3388
        %v3390 = vpop.xlane.xlu0 %3389
        %v3391 = vadd.f32 %v1829, %v1831
        %v3392 = vadd.f32 %v3391, %v2182
        %v3393 = vadd.f32 %v3392, %v2184
        %v3394 = vadd.f32 %v3393, %v2535
        %v3395 = vadd.f32 %v3394, %v2537
        %v3396 = vsel %vm2837, %v2826, 0.0
        %v3397 = vadd.f32 %v3395, %v3396
        %3398 = vadd.xlane.f32.xlu0 %v3397
        %v3399 = vpop.xlane.xlu0 %3398
        %v3400 = vadd.f32 %v1833, %v1835
        %v3401 = vadd.f32 %v3400, %v2186
        %v3402 = vadd.f32 %v3401, %v2188
        %v3403 = vadd.f32 %v3402, %v2539
        %v3404 = vadd.f32 %v3403, %v2541
        %v3405 = vsel %vm2837, %v2829, 0.0
        %v3406 = vadd.f32 %v3404, %v3405
        %3407 = vadd.xlane.f32.xlu0 %v3406
        %v3408 = vpop.xlane.xlu0 %3407
        %v3409 = vmul.f32 %v2841, 0.0012755102
        %v3410 = vmul.f32 %v2850, 0.0012755102
        %v3411 = vmul.f32 %v2859, 0.0012755102
        %v3412 = vmul.f32 %v2868, 0.0012755102
        %v3413 = vmul.f32 %v2877, 0.0012755102
        %v3414 = vmul.f32 %v2886, 0.0012755102
        %v3415 = vmul.f32 %v2895, 0.0012755102
        %v3416 = vmul.f32 %v2904, 0.0012755102
        %v3417 = vmul.f32 %v2913, 0.0012755102
        %v3418 = vmul.f32 %v2922, 0.0012755102
        %v3419 = vmul.f32 %v2931, 0.0012755102
        %v3420 = vmul.f32 %v2940, 0.0012755102
        %v3421 = vmul.f32 %v2949, 0.0012755102
        %v3422 = vmul.f32 %v2958, 0.0012755102
        %v3423 = vmul.f32 %v2967, 0.0012755102
        %v3424 = vmul.f32 %v2976, 0.0012755102
        %v3425 = vmul.f32 %v2985, 0.0012755102
        %v3426 = vmul.f32 %v2994, 0.0012755102
        %v3427 = vmul.f32 %v3003, 0.0012755102
        %v3428 = vmul.f32 %v3012, 0.0012755102
        %v3429 = vmul.f32 %v3021, 0.0012755102
        %v3430 = vmul.f32 %v3030, 0.0012755102
        %v3431 = vmul.f32 %v3039, 0.0012755102
        %v3432 = vmul.f32 %v3048, 0.0012755102
        %v3433 = vmul.f32 %v3057, 0.0012755102
        %v3434 = vmul.f32 %v3066, 0.0012755102
        %v3435 = vmul.f32 %v3075, 0.0012755102
        %v3436 = vmul.f32 %v3084, 0.0012755102
        %v3437 = vmul.f32 %v3093, 0.0012755102
        %v3438 = vmul.f32 %v3102, 0.0012755102
        %v3439 = vmul.f32 %v3111, 0.0012755102
        %v3440 = vmul.f32 %v3120, 0.0012755102
        %v3441 = vmul.f32 %v3129, 0.0012755102
        %v3442 = vmul.f32 %v3138, 0.0012755102
        %v3443 = vmul.f32 %v3147, 0.0012755102
        %v3444 = vmul.f32 %v3156, 0.0012755102
        %v3445 = vmul.f32 %v3165, 0.0012755102
        %v3446 = vmul.f32 %v3174, 0.0012755102
        %v3447 = vmul.f32 %v3183, 0.0012755102
        %v3448 = vmul.f32 %v3192, 0.0012755102
        %v3449 = vmul.f32 %v3201, 0.0012755102
        %v3450 = vmul.f32 %v3210, 0.0012755102
        %v3451 = vmul.f32 %v3219, 0.0012755102
        %v3452 = vmul.f32 %v3228, 0.0012755102
        %v3453 = vmul.f32 %v3237, 0.0012755102
        %v3454 = vmul.f32 %v3246, 0.0012755102
        %v3455 = vmul.f32 %v3255, 0.0012755102
        %v3456 = vmul.f32 %v3264, 0.0012755102
        %v3457 = vmul.f32 %v3273, 0.0012755102
        %v3458 = vmul.f32 %v3282, 0.0012755102
        %v3459 = vmul.f32 %v3291, 0.0012755102
        %v3460 = vmul.f32 %v3300, 0.0012755102
        %v3461 = vmul.f32 %v3309, 0.0012755102
        %v3462 = vmul.f32 %v3318, 0.0012755102
        %v3463 = vmul.f32 %v3327, 0.0012755102
        %v3464 = vmul.f32 %v3336, 0.0012755102
        %v3465 = vmul.f32 %v3345, 0.0012755102
        %v3466 = vmul.f32 %v3354, 0.0012755102
        %v3467 = vmul.f32 %v3363, 0.0012755102
        %v3468 = vmul.f32 %v3372, 0.0012755102
        %v3469 = vmul.f32 %v3381, 0.0012755102
        %v3470 = vmul.f32 %v3390, 0.0012755102
        %v3471 = vmul.f32 %v3399, 0.0012755102
        %v3472 = vmul.f32 %v3408, 0.0012755102
        %v3473 = vmul.f32 %v1519, %v1519
        %v3474 = vmul.f32 %v1521, %v1521
        %v3475 = vmul.f32 %v1872, %v1872
        %v3476 = vmul.f32 %v1874, %v1874
        %v3477 = vmul.f32 %v2225, %v2225
        %v3478 = vmul.f32 %v2227, %v2227
        %v3479 = vmul.f32 %v2578, %v2578
        %v3480 = vmul.f32 %v1523, %v1523
        %v3481 = vmul.f32 %v1525, %v1525
        %v3482 = vmul.f32 %v1876, %v1876
        %v3483 = vmul.f32 %v1878, %v1878
        %v3484 = vmul.f32 %v2229, %v2229
        %v3485 = vmul.f32 %v2231, %v2231
        %v3486 = vmul.f32 %v2581, %v2581
        %v3487 = vmul.f32 %v1529, %v1529
        %v3488 = vmul.f32 %v1531, %v1531
        %v3489 = vmul.f32 %v1882, %v1882
        %v3490 = vmul.f32 %v1884, %v1884
        %v3491 = vmul.f32 %v2235, %v2235
        %v3492 = vmul.f32 %v2237, %v2237
        %v3493 = vmul.f32 %v2586, %v2586
        %v3494 = vmul.f32 %v1533, %v1533
        %v3495 = vmul.f32 %v1535, %v1535
        %v3496 = vmul.f32 %v1886, %v1886
        %v3497 = vmul.f32 %v1888, %v1888
        %v3498 = vmul.f32 %v2239, %v2239
        %v3499 = vmul.f32 %v2241, %v2241
        %v3500 = vmul.f32 %v2589, %v2589
        %v3501 = vmul.f32 %v1539, %v1539
        %v3502 = vmul.f32 %v1541, %v1541
        %v3503 = vmul.f32 %v1892, %v1892
        %v3504 = vmul.f32 %v1894, %v1894
        %v3505 = vmul.f32 %v2245, %v2245
        %v3506 = vmul.f32 %v2247, %v2247
        %v3507 = vmul.f32 %v2594, %v2594
        %v3508 = vmul.f32 %v1543, %v1543
        %v3509 = vmul.f32 %v1545, %v1545
        %v3510 = vmul.f32 %v1896, %v1896
        %v3511 = vmul.f32 %v1898, %v1898
        %v3512 = vmul.f32 %v2249, %v2249
        %v3513 = vmul.f32 %v2251, %v2251
        %v3514 = vmul.f32 %v2597, %v2597
        %v3515 = vmul.f32 %v1549, %v1549
        %v3516 = vmul.f32 %v1551, %v1551
        %v3517 = vmul.f32 %v1902, %v1902
        %v3518 = vmul.f32 %v1904, %v1904
        %v3519 = vmul.f32 %v2255, %v2255
        %v3520 = vmul.f32 %v2257, %v2257
        %v3521 = vmul.f32 %v2602, %v2602
        %v3522 = vmul.f32 %v1553, %v1553
        %v3523 = vmul.f32 %v1555, %v1555
        %v3524 = vmul.f32 %v1906, %v1906
        %v3525 = vmul.f32 %v1908, %v1908
        %v3526 = vmul.f32 %v2259, %v2259
        %v3527 = vmul.f32 %v2261, %v2261
        %v3528 = vmul.f32 %v2605, %v2605
        %v3529 = vmul.f32 %v1559, %v1559
        %v3530 = vmul.f32 %v1561, %v1561
        %v3531 = vmul.f32 %v1912, %v1912
        %v3532 = vmul.f32 %v1914, %v1914
        %v3533 = vmul.f32 %v2265, %v2265
        %v3534 = vmul.f32 %v2267, %v2267
        %v3535 = vmul.f32 %v2610, %v2610
        %v3536 = vmul.f32 %v1563, %v1563
        %v3537 = vmul.f32 %v1565, %v1565
        %v3538 = vmul.f32 %v1916, %v1916
        %v3539 = vmul.f32 %v1918, %v1918
        %v3540 = vmul.f32 %v2269, %v2269
        %v3541 = vmul.f32 %v2271, %v2271
        %v3542 = vmul.f32 %v2613, %v2613
        %v3543 = vmul.f32 %v1569, %v1569
        %v3544 = vmul.f32 %v1571, %v1571
        %v3545 = vmul.f32 %v1922, %v1922
        %v3546 = vmul.f32 %v1924, %v1924
        %v3547 = vmul.f32 %v2275, %v2275
        %v3548 = vmul.f32 %v2277, %v2277
        %v3549 = vmul.f32 %v2618, %v2618
        %v3550 = vmul.f32 %v1573, %v1573
        %v3551 = vmul.f32 %v1575, %v1575
        %v3552 = vmul.f32 %v1926, %v1926
        %v3553 = vmul.f32 %v1928, %v1928
        %v3554 = vmul.f32 %v2279, %v2279
        %v3555 = vmul.f32 %v2281, %v2281
        %v3556 = vmul.f32 %v2621, %v2621
        %v3557 = vmul.f32 %v1579, %v1579
        %v3558 = vmul.f32 %v1581, %v1581
        %v3559 = vmul.f32 %v1932, %v1932
        %v3560 = vmul.f32 %v1934, %v1934
        %v3561 = vmul.f32 %v2285, %v2285
        %v3562 = vmul.f32 %v2287, %v2287
        %v3563 = vmul.f32 %v2626, %v2626
        %v3564 = vmul.f32 %v1583, %v1583
        %v3565 = vmul.f32 %v1585, %v1585
        %v3566 = vmul.f32 %v1936, %v1936
        %v3567 = vmul.f32 %v1938, %v1938
        %v3568 = vmul.f32 %v2289, %v2289
        %v3569 = vmul.f32 %v2291, %v2291
        %v3570 = vmul.f32 %v2629, %v2629
        %v3571 = vmul.f32 %v1589, %v1589
        %v3572 = vmul.f32 %v1591, %v1591
        %v3573 = vmul.f32 %v1942, %v1942
        %v3574 = vmul.f32 %v1944, %v1944
        %v3575 = vmul.f32 %v2295, %v2295
        %v3576 = vmul.f32 %v2297, %v2297
        %v3577 = vmul.f32 %v2634, %v2634
        %v3578 = vmul.f32 %v1593, %v1593
        %v3579 = vmul.f32 %v1595, %v1595
        %v3580 = vmul.f32 %v1946, %v1946
        %v3581 = vmul.f32 %v1948, %v1948
        %v3582 = vmul.f32 %v2299, %v2299
        %v3583 = vmul.f32 %v2301, %v2301
        %v3584 = vmul.f32 %v2637, %v2637
        %v3585 = vmul.f32 %v1599, %v1599
        %v3586 = vmul.f32 %v1601, %v1601
        %v3587 = vmul.f32 %v1952, %v1952
        %v3588 = vmul.f32 %v1954, %v1954
        %v3589 = vmul.f32 %v2305, %v2305
        %v3590 = vmul.f32 %v2307, %v2307
        %v3591 = vmul.f32 %v2642, %v2642
        %v3592 = vmul.f32 %v1603, %v1603
        %v3593 = vmul.f32 %v1605, %v1605
        %v3594 = vmul.f32 %v1956, %v1956
        %v3595 = vmul.f32 %v1958, %v1958
        %v3596 = vmul.f32 %v2309, %v2309
        %v3597 = vmul.f32 %v2311, %v2311
        %v3598 = vmul.f32 %v2645, %v2645
        %v3599 = vmul.f32 %v1609, %v1609
        %v3600 = vmul.f32 %v1611, %v1611
        %v3601 = vmul.f32 %v1962, %v1962
        %v3602 = vmul.f32 %v1964, %v1964
        %v3603 = vmul.f32 %v2315, %v2315
        %v3604 = vmul.f32 %v2317, %v2317
        %v3605 = vmul.f32 %v2650, %v2650
        %v3606 = vmul.f32 %v1613, %v1613
        %v3607 = vmul.f32 %v1615, %v1615
        %v3608 = vmul.f32 %v1966, %v1966
        %v3609 = vmul.f32 %v1968, %v1968
        %v3610 = vmul.f32 %v2319, %v2319
        %v3611 = vmul.f32 %v2321, %v2321
        %v3612 = vmul.f32 %v2653, %v2653
        %v3613 = vmul.f32 %v1619, %v1619
        %v3614 = vmul.f32 %v1621, %v1621
        %v3615 = vmul.f32 %v1972, %v1972
        %v3616 = vmul.f32 %v1974, %v1974
        %v3617 = vmul.f32 %v2325, %v2325
        %v3618 = vmul.f32 %v2327, %v2327
        %v3619 = vmul.f32 %v2658, %v2658
        %v3620 = vmul.f32 %v1623, %v1623
        %v3621 = vmul.f32 %v1625, %v1625
        %v3622 = vmul.f32 %v1976, %v1976
        %v3623 = vmul.f32 %v1978, %v1978
        %v3624 = vmul.f32 %v2329, %v2329
        %v3625 = vmul.f32 %v2331, %v2331
        %v3626 = vmul.f32 %v2661, %v2661
        %v3627 = vmul.f32 %v1629, %v1629
        %v3628 = vmul.f32 %v1631, %v1631
        %v3629 = vmul.f32 %v1982, %v1982
        %v3630 = vmul.f32 %v1984, %v1984
        %v3631 = vmul.f32 %v2335, %v2335
        %v3632 = vmul.f32 %v2337, %v2337
        %v3633 = vmul.f32 %v2666, %v2666
        %v3634 = vmul.f32 %v1633, %v1633
        %v3635 = vmul.f32 %v1635, %v1635
        %v3636 = vmul.f32 %v1986, %v1986
        %v3637 = vmul.f32 %v1988, %v1988
        %v3638 = vmul.f32 %v2339, %v2339
        %v3639 = vmul.f32 %v2341, %v2341
        %v3640 = vmul.f32 %v2669, %v2669
        %v3641 = vmul.f32 %v1639, %v1639
        %v3642 = vmul.f32 %v1641, %v1641
        %v3643 = vmul.f32 %v1992, %v1992
        %v3644 = vmul.f32 %v1994, %v1994
        %v3645 = vmul.f32 %v2345, %v2345
        %v3646 = vmul.f32 %v2347, %v2347
        %v3647 = vmul.f32 %v2674, %v2674
        %v3648 = vmul.f32 %v1643, %v1643
        %v3649 = vmul.f32 %v1645, %v1645
        %v3650 = vmul.f32 %v1996, %v1996
        %v3651 = vmul.f32 %v1998, %v1998
        %v3652 = vmul.f32 %v2349, %v2349
        %v3653 = vmul.f32 %v2351, %v2351
        %v3654 = vmul.f32 %v2677, %v2677
        %v3655 = vmul.f32 %v1649, %v1649
        %v3656 = vmul.f32 %v1651, %v1651
        %v3657 = vmul.f32 %v2002, %v2002
        %v3658 = vmul.f32 %v2004, %v2004
        %v3659 = vmul.f32 %v2355, %v2355
        %v3660 = vmul.f32 %v2357, %v2357
        %v3661 = vmul.f32 %v2682, %v2682
        %v3662 = vmul.f32 %v1653, %v1653
        %v3663 = vmul.f32 %v1655, %v1655
        %v3664 = vmul.f32 %v2006, %v2006
        %v3665 = vmul.f32 %v2008, %v2008
        %v3666 = vmul.f32 %v2359, %v2359
        %v3667 = vmul.f32 %v2361, %v2361
        %v3668 = vmul.f32 %v2685, %v2685
        %v3669 = vmul.f32 %v1659, %v1659
        %v3670 = vmul.f32 %v1661, %v1661
        %v3671 = vmul.f32 %v2012, %v2012
        %v3672 = vmul.f32 %v2014, %v2014
        %v3673 = vmul.f32 %v2365, %v2365
        %v3674 = vmul.f32 %v2367, %v2367
        %v3675 = vmul.f32 %v2690, %v2690
        %v3676 = vmul.f32 %v1663, %v1663
        %v3677 = vmul.f32 %v1665, %v1665
        %v3678 = vmul.f32 %v2016, %v2016
        %v3679 = vmul.f32 %v2018, %v2018
        %v3680 = vmul.f32 %v2369, %v2369
        %v3681 = vmul.f32 %v2371, %v2371
        %v3682 = vmul.f32 %v2693, %v2693
        %v3683 = vmul.f32 %v1669, %v1669
        %v3684 = vmul.f32 %v1671, %v1671
        %v3685 = vmul.f32 %v2022, %v2022
        %v3686 = vmul.f32 %v2024, %v2024
        %v3687 = vmul.f32 %v2375, %v2375
        %v3688 = vmul.f32 %v2377, %v2377
        %v3689 = vmul.f32 %v2698, %v2698
        %v3690 = vmul.f32 %v1673, %v1673
        %v3691 = vmul.f32 %v1675, %v1675
        %v3692 = vmul.f32 %v2026, %v2026
        %v3693 = vmul.f32 %v2028, %v2028
        %v3694 = vmul.f32 %v2379, %v2379
        %v3695 = vmul.f32 %v2381, %v2381
        %v3696 = vmul.f32 %v2701, %v2701
        %v3697 = vmul.f32 %v1679, %v1679
        %v3698 = vmul.f32 %v1681, %v1681
        %v3699 = vmul.f32 %v2032, %v2032
        %v3700 = vmul.f32 %v2034, %v2034
        %v3701 = vmul.f32 %v2385, %v2385
        %v3702 = vmul.f32 %v2387, %v2387
        %v3703 = vmul.f32 %v2706, %v2706
        %v3704 = vmul.f32 %v1683, %v1683
        %v3705 = vmul.f32 %v1685, %v1685
        %v3706 = vmul.f32 %v2036, %v2036
        %v3707 = vmul.f32 %v2038, %v2038
        %v3708 = vmul.f32 %v2389, %v2389
        %v3709 = vmul.f32 %v2391, %v2391
        %v3710 = vmul.f32 %v2709, %v2709
        %v3711 = vmul.f32 %v1689, %v1689
        %v3712 = vmul.f32 %v1691, %v1691
        %v3713 = vmul.f32 %v2042, %v2042
        %v3714 = vmul.f32 %v2044, %v2044
        %v3715 = vmul.f32 %v2395, %v2395
        %v3716 = vmul.f32 %v2397, %v2397
        %v3717 = vmul.f32 %v2714, %v2714
        %v3718 = vmul.f32 %v1693, %v1693
        %v3719 = vmul.f32 %v1695, %v1695
        %v3720 = vmul.f32 %v2046, %v2046
        %v3721 = vmul.f32 %v2048, %v2048
        %v3722 = vmul.f32 %v2399, %v2399
        %v3723 = vmul.f32 %v2401, %v2401
        %v3724 = vmul.f32 %v2717, %v2717
        %v3725 = vmul.f32 %v1699, %v1699
        %v3726 = vmul.f32 %v1701, %v1701
        %v3727 = vmul.f32 %v2052, %v2052
        %v3728 = vmul.f32 %v2054, %v2054
        %v3729 = vmul.f32 %v2405, %v2405
        %v3730 = vmul.f32 %v2407, %v2407
        %v3731 = vmul.f32 %v2722, %v2722
        %v3732 = vmul.f32 %v1703, %v1703
        %v3733 = vmul.f32 %v1705, %v1705
        %v3734 = vmul.f32 %v2056, %v2056
        %v3735 = vmul.f32 %v2058, %v2058
        %v3736 = vmul.f32 %v2409, %v2409
        %v3737 = vmul.f32 %v2411, %v2411
        %v3738 = vmul.f32 %v2725, %v2725
        %v3739 = vmul.f32 %v1709, %v1709
        %v3740 = vmul.f32 %v1711, %v1711
        %v3741 = vmul.f32 %v2062, %v2062
        %v3742 = vmul.f32 %v2064, %v2064
        %v3743 = vmul.f32 %v2415, %v2415
        %v3744 = vmul.f32 %v2417, %v2417
        %v3745 = vmul.f32 %v2730, %v2730
        %v3746 = vmul.f32 %v1713, %v1713
        %v3747 = vmul.f32 %v1715, %v1715
        %v3748 = vmul.f32 %v2066, %v2066
        %v3749 = vmul.f32 %v2068, %v2068
        %v3750 = vmul.f32 %v2419, %v2419
        %v3751 = vmul.f32 %v2421, %v2421
        %v3752 = vmul.f32 %v2733, %v2733
        %v3753 = vmul.f32 %v1719, %v1719
        %v3754 = vmul.f32 %v1721, %v1721
        %v3755 = vmul.f32 %v2072, %v2072
        %v3756 = vmul.f32 %v2074, %v2074
        %v3757 = vmul.f32 %v2425, %v2425
        %v3758 = vmul.f32 %v2427, %v2427
        %v3759 = vmul.f32 %v2738, %v2738
        %v3760 = vmul.f32 %v1723, %v1723
        %v3761 = vmul.f32 %v1725, %v1725
        %v3762 = vmul.f32 %v2076, %v2076
        %v3763 = vmul.f32 %v2078, %v2078
        %v3764 = vmul.f32 %v2429, %v2429
        %v3765 = vmul.f32 %v2431, %v2431
        %v3766 = vmul.f32 %v2741, %v2741
        %v3767 = vmul.f32 %v1729, %v1729
        %v3768 = vmul.f32 %v1731, %v1731
        %v3769 = vmul.f32 %v2082, %v2082
        %v3770 = vmul.f32 %v2084, %v2084
        %v3771 = vmul.f32 %v2435, %v2435
        %v3772 = vmul.f32 %v2437, %v2437
        %v3773 = vmul.f32 %v2746, %v2746
        %v3774 = vmul.f32 %v1733, %v1733
        %v3775 = vmul.f32 %v1735, %v1735
        %v3776 = vmul.f32 %v2086, %v2086
        %v3777 = vmul.f32 %v2088, %v2088
        %v3778 = vmul.f32 %v2439, %v2439
        %v3779 = vmul.f32 %v2441, %v2441
        %v3780 = vmul.f32 %v2749, %v2749
        %v3781 = vmul.f32 %v1739, %v1739
        %v3782 = vmul.f32 %v1741, %v1741
        %v3783 = vmul.f32 %v2092, %v2092
        %v3784 = vmul.f32 %v2094, %v2094
        %v3785 = vmul.f32 %v2445, %v2445
        %v3786 = vmul.f32 %v2447, %v2447
        %v3787 = vmul.f32 %v2754, %v2754
        %v3788 = vmul.f32 %v1743, %v1743
        %v3789 = vmul.f32 %v1745, %v1745
        %v3790 = vmul.f32 %v2096, %v2096
        %v3791 = vmul.f32 %v2098, %v2098
        %v3792 = vmul.f32 %v2449, %v2449
        %v3793 = vmul.f32 %v2451, %v2451
        %v3794 = vmul.f32 %v2757, %v2757
        %v3795 = vmul.f32 %v1749, %v1749
        %v3796 = vmul.f32 %v1751, %v1751
        %v3797 = vmul.f32 %v2102, %v2102
        %v3798 = vmul.f32 %v2104, %v2104
        %v3799 = vmul.f32 %v2455, %v2455
        %v3800 = vmul.f32 %v2457, %v2457
        %v3801 = vmul.f32 %v2762, %v2762
        %v3802 = vmul.f32 %v1753, %v1753
        %v3803 = vmul.f32 %v1755, %v1755
        %v3804 = vmul.f32 %v2106, %v2106
        %v3805 = vmul.f32 %v2108, %v2108
        %v3806 = vmul.f32 %v2459, %v2459
        %v3807 = vmul.f32 %v2461, %v2461
        %v3808 = vmul.f32 %v2765, %v2765
        %v3809 = vmul.f32 %v1759, %v1759
        %v3810 = vmul.f32 %v1761, %v1761
        %v3811 = vmul.f32 %v2112, %v2112
        %v3812 = vmul.f32 %v2114, %v2114
        %v3813 = vmul.f32 %v2465, %v2465
        %v3814 = vmul.f32 %v2467, %v2467
        %v3815 = vmul.f32 %v2770, %v2770
        %v3816 = vmul.f32 %v1763, %v1763
        %v3817 = vmul.f32 %v1765, %v1765
        %v3818 = vmul.f32 %v2116, %v2116
        %v3819 = vmul.f32 %v2118, %v2118
        %v3820 = vmul.f32 %v2469, %v2469
        %v3821 = vmul.f32 %v2471, %v2471
        %v3822 = vmul.f32 %v2773, %v2773
        %v3823 = vmul.f32 %v1769, %v1769
        %v3824 = vmul.f32 %v1771, %v1771
        %v3825 = vmul.f32 %v2122, %v2122
        %v3826 = vmul.f32 %v2124, %v2124
        %v3827 = vmul.f32 %v2475, %v2475
        %v3828 = vmul.f32 %v2477, %v2477
        %v3829 = vmul.f32 %v2778, %v2778
        %v3830 = vmul.f32 %v1773, %v1773
        %v3831 = vmul.f32 %v1775, %v1775
        %v3832 = vmul.f32 %v2126, %v2126
        %v3833 = vmul.f32 %v2128, %v2128
        %v3834 = vmul.f32 %v2479, %v2479
        %v3835 = vmul.f32 %v2481, %v2481
        %v3836 = vmul.f32 %v2781, %v2781
        %v3837 = vmul.f32 %v1779, %v1779
        %v3838 = vmul.f32 %v1781, %v1781
        %v3839 = vmul.f32 %v2132, %v2132
        %v3840 = vmul.f32 %v2134, %v2134
        %v3841 = vmul.f32 %v2485, %v2485
        %v3842 = vmul.f32 %v2487, %v2487
        %v3843 = vmul.f32 %v2786, %v2786
        %v3844 = vmul.f32 %v1783, %v1783
        %v3845 = vmul.f32 %v1785, %v1785
        %v3846 = vmul.f32 %v2136, %v2136
        %v3847 = vmul.f32 %v2138, %v2138
        %v3848 = vmul.f32 %v2489, %v2489
        %v3849 = vmul.f32 %v2491, %v2491
        %v3850 = vmul.f32 %v2789, %v2789
        %v3851 = vmul.f32 %v1789, %v1789
        %v3852 = vmul.f32 %v1791, %v1791
        %v3853 = vmul.f32 %v2142, %v2142
        %v3854 = vmul.f32 %v2144, %v2144
        %v3855 = vmul.f32 %v2495, %v2495
        %v3856 = vmul.f32 %v2497, %v2497
        %v3857 = vmul.f32 %v2794, %v2794
        %v3858 = vmul.f32 %v1793, %v1793
        %v3859 = vmul.f32 %v1795, %v1795
        %v3860 = vmul.f32 %v2146, %v2146
        %v3861 = vmul.f32 %v2148, %v2148
        %v3862 = vmul.f32 %v2499, %v2499
        %v3863 = vmul.f32 %v2501, %v2501
        %v3864 = vmul.f32 %v2797, %v2797
        %v3865 = vmul.f32 %v1799, %v1799
        %v3866 = vmul.f32 %v1801, %v1801
        %v3867 = vmul.f32 %v2152, %v2152
        %v3868 = vmul.f32 %v2154, %v2154
        %v3869 = vmul.f32 %v2505, %v2505
        %v3870 = vmul.f32 %v2507, %v2507
        %v3871 = vmul.f32 %v2802, %v2802
        %v3872 = vmul.f32 %v1803, %v1803
        %v3873 = vmul.f32 %v1805, %v1805
        %v3874 = vmul.f32 %v2156, %v2156
        %v3875 = vmul.f32 %v2158, %v2158
        %v3876 = vmul.f32 %v2509, %v2509
        %v3877 = vmul.f32 %v2511, %v2511
        %v3878 = vmul.f32 %v2805, %v2805
        %v3879 = vmul.f32 %v1809, %v1809
        %v3880 = vmul.f32 %v1811, %v1811
        %v3881 = vmul.f32 %v2162, %v2162
        %v3882 = vmul.f32 %v2164, %v2164
        %v3883 = vmul.f32 %v2515, %v2515
        %v3884 = vmul.f32 %v2517, %v2517
        %v3885 = vmul.f32 %v2810, %v2810
        %v3886 = vmul.f32 %v1813, %v1813
        %v3887 = vmul.f32 %v1815, %v1815
        %v3888 = vmul.f32 %v2166, %v2166
        %v3889 = vmul.f32 %v2168, %v2168
        %v3890 = vmul.f32 %v2519, %v2519
        %v3891 = vmul.f32 %v2521, %v2521
        %v3892 = vmul.f32 %v2813, %v2813
        %v3893 = vmul.f32 %v1819, %v1819
        %v3894 = vmul.f32 %v1821, %v1821
        %v3895 = vmul.f32 %v2172, %v2172
        %v3896 = vmul.f32 %v2174, %v2174
        %v3897 = vmul.f32 %v2525, %v2525
        %v3898 = vmul.f32 %v2527, %v2527
        %v3899 = vmul.f32 %v2818, %v2818
        %v3900 = vmul.f32 %v1823, %v1823
        %v3901 = vmul.f32 %v1825, %v1825
        %v3902 = vmul.f32 %v2176, %v2176
        %v3903 = vmul.f32 %v2178, %v2178
        %v3904 = vmul.f32 %v2529, %v2529
        %v3905 = vmul.f32 %v2531, %v2531
        %v3906 = vmul.f32 %v2821, %v2821
        %v3907 = vmul.f32 %v1829, %v1829
        %v3908 = vmul.f32 %v1831, %v1831
        %v3909 = vmul.f32 %v2182, %v2182
        %v3910 = vmul.f32 %v2184, %v2184
        %v3911 = vmul.f32 %v2535, %v2535
        %v3912 = vmul.f32 %v2537, %v2537
        %v3913 = vmul.f32 %v2826, %v2826
        %v3914 = vmul.f32 %v1833, %v1833
        %v3915 = vmul.f32 %v1835, %v1835
        %v3916 = vmul.f32 %v2186, %v2186
        %v3917 = vmul.f32 %v2188, %v2188
        %v3918 = vmul.f32 %v2539, %v2539
        %v3919 = vmul.f32 %v2541, %v2541
        %v3920 = vmul.f32 %v2829, %v2829
        %v3921 = vadd.f32 %v3473, %v3474
        %v3922 = vadd.f32 %v3921, %v3475
        %v3923 = vadd.f32 %v3922, %v3476
        %v3924 = vadd.f32 %v3923, %v3477
        %v3925 = vadd.f32 %v3924, %v3478
        %v3926 = vsel %vm2837, %v3479, 0.0
        %v3927 = vadd.f32 %v3925, %v3926
        %3928 = vadd.xlane.f32.xlu0 %v3927
        %v3929 = vpop.xlane.xlu0 %3928
        %v3930 = vadd.f32 %v3480, %v3481
        %v3931 = vadd.f32 %v3930, %v3482
        %v3932 = vadd.f32 %v3931, %v3483
        %v3933 = vadd.f32 %v3932, %v3484
        %v3934 = vadd.f32 %v3933, %v3485
        %v3935 = vsel %vm2837, %v3486, 0.0
        %v3936 = vadd.f32 %v3934, %v3935
        %3937 = vadd.xlane.f32.xlu0 %v3936
        %v3938 = vpop.xlane.xlu0 %3937
        %v3939 = vadd.f32 %v3487, %v3488
        %v3940 = vadd.f32 %v3939, %v3489
        %v3941 = vadd.f32 %v3940, %v3490
        %v3942 = vadd.f32 %v3941, %v3491
        %v3943 = vadd.f32 %v3942, %v3492
        %v3944 = vsel %vm2837, %v3493, 0.0
        %v3945 = vadd.f32 %v3943, %v3944
        %3946 = vadd.xlane.f32.xlu0 %v3945
        %v3947 = vpop.xlane.xlu0 %3946
        %v3948 = vadd.f32 %v3494, %v3495
        %v3949 = vadd.f32 %v3948, %v3496
        %v3950 = vadd.f32 %v3949, %v3497
        %v3951 = vadd.f32 %v3950, %v3498
        %v3952 = vadd.f32 %v3951, %v3499
        %v3953 = vsel %vm2837, %v3500, 0.0
        %v3954 = vadd.f32 %v3952, %v3953
        %3955 = vadd.xlane.f32.xlu0 %v3954
        %v3956 = vpop.xlane.xlu0 %3955
        %v3957 = vadd.f32 %v3501, %v3502
        %v3958 = vadd.f32 %v3957, %v3503
        %v3959 = vadd.f32 %v3958, %v3504
        %v3960 = vadd.f32 %v3959, %v3505
        %v3961 = vadd.f32 %v3960, %v3506
        %v3962 = vsel %vm2837, %v3507, 0.0
        %v3963 = vadd.f32 %v3961, %v3962
        %3964 = vadd.xlane.f32.xlu0 %v3963
        %v3965 = vpop.xlane.xlu0 %3964
        %v3966 = vadd.f32 %v3508, %v3509
        %v3967 = vadd.f32 %v3966, %v3510
        %v3968 = vadd.f32 %v3967, %v3511
        %v3969 = vadd.f32 %v3968, %v3512
        %v3970 = vadd.f32 %v3969, %v3513
        %v3971 = vsel %vm2837, %v3514, 0.0
        %v3972 = vadd.f32 %v3970, %v3971
        %3973 = vadd.xlane.f32.xlu0 %v3972
        %v3974 = vpop.xlane.xlu0 %3973
        %v3975 = vadd.f32 %v3515, %v3516
        %v3976 = vadd.f32 %v3975, %v3517
        %v3977 = vadd.f32 %v3976, %v3518
        %v3978 = vadd.f32 %v3977, %v3519
        %v3979 = vadd.f32 %v3978, %v3520
        %v3980 = vsel %vm2837, %v3521, 0.0
        %v3981 = vadd.f32 %v3979, %v3980
        %3982 = vadd.xlane.f32.xlu0 %v3981
        %v3983 = vpop.xlane.xlu0 %3982
        %v3984 = vadd.f32 %v3522, %v3523
        %v3985 = vadd.f32 %v3984, %v3524
        %v3986 = vadd.f32 %v3985, %v3525
        %v3987 = vadd.f32 %v3986, %v3526
        %v3988 = vadd.f32 %v3987, %v3527
        %v3989 = vsel %vm2837, %v3528, 0.0
        %v3990 = vadd.f32 %v3988, %v3989
        %3991 = vadd.xlane.f32.xlu0 %v3990
        %v3992 = vpop.xlane.xlu0 %3991
        %v3993 = vadd.f32 %v3529, %v3530
        %v3994 = vadd.f32 %v3993, %v3531
        %v3995 = vadd.f32 %v3994, %v3532
        %v3996 = vadd.f32 %v3995, %v3533
        %v3997 = vadd.f32 %v3996, %v3534
        %v3998 = vsel %vm2837, %v3535, 0.0
        %v3999 = vadd.f32 %v3997, %v3998
        %4000 = vadd.xlane.f32.xlu0 %v3999
        %v4001 = vpop.xlane.xlu0 %4000
        %v4002 = vadd.f32 %v3536, %v3537
        %v4003 = vadd.f32 %v4002, %v3538
        %v4004 = vadd.f32 %v4003, %v3539
        %v4005 = vadd.f32 %v4004, %v3540
        %v4006 = vadd.f32 %v4005, %v3541
        %v4007 = vsel %vm2837, %v3542, 0.0
        %v4008 = vadd.f32 %v4006, %v4007
        %4009 = vadd.xlane.f32.xlu0 %v4008
        %v4010 = vpop.xlane.xlu0 %4009
        %v4011 = vadd.f32 %v3543, %v3544
        %v4012 = vadd.f32 %v4011, %v3545
        %v4013 = vadd.f32 %v4012, %v3546
        %v4014 = vadd.f32 %v4013, %v3547
        %v4015 = vadd.f32 %v4014, %v3548
        %v4016 = vsel %vm2837, %v3549, 0.0
        %v4017 = vadd.f32 %v4015, %v4016
        %4018 = vadd.xlane.f32.xlu0 %v4017
        %v4019 = vpop.xlane.xlu0 %4018
        %v4020 = vadd.f32 %v3550, %v3551
        %v4021 = vadd.f32 %v4020, %v3552
        %v4022 = vadd.f32 %v4021, %v3553
        %v4023 = vadd.f32 %v4022, %v3554
        %v4024 = vadd.f32 %v4023, %v3555
        %v4025 = vsel %vm2837, %v3556, 0.0
        %v4026 = vadd.f32 %v4024, %v4025
        %4027 = vadd.xlane.f32.xlu0 %v4026
        %v4028 = vpop.xlane.xlu0 %4027
        %v4029 = vadd.f32 %v3557, %v3558
        %v4030 = vadd.f32 %v4029, %v3559
        %v4031 = vadd.f32 %v4030, %v3560
        %v4032 = vadd.f32 %v4031, %v3561
        %v4033 = vadd.f32 %v4032, %v3562
        %v4034 = vsel %vm2837, %v3563, 0.0
        %v4035 = vadd.f32 %v4033, %v4034
        %4036 = vadd.xlane.f32.xlu0 %v4035
        %v4037 = vpop.xlane.xlu0 %4036
        %v4038 = vadd.f32 %v3564, %v3565
        %v4039 = vadd.f32 %v4038, %v3566
        %v4040 = vadd.f32 %v4039, %v3567
        %v4041 = vadd.f32 %v4040, %v3568
        %v4042 = vadd.f32 %v4041, %v3569
        %v4043 = vsel %vm2837, %v3570, 0.0
        %v4044 = vadd.f32 %v4042, %v4043
        %4045 = vadd.xlane.f32.xlu0 %v4044
        %v4046 = vpop.xlane.xlu0 %4045
        %v4047 = vadd.f32 %v3571, %v3572
        %v4048 = vadd.f32 %v4047, %v3573
        %v4049 = vadd.f32 %v4048, %v3574
        %v4050 = vadd.f32 %v4049, %v3575
        %v4051 = vadd.f32 %v4050, %v3576
        %v4052 = vsel %vm2837, %v3577, 0.0
        %v4053 = vadd.f32 %v4051, %v4052
        %4054 = vadd.xlane.f32.xlu0 %v4053
        %v4055 = vpop.xlane.xlu0 %4054
        %v4056 = vadd.f32 %v3578, %v3579
        %v4057 = vadd.f32 %v4056, %v3580
        %v4058 = vadd.f32 %v4057, %v3581
        %v4059 = vadd.f32 %v4058, %v3582
        %v4060 = vadd.f32 %v4059, %v3583
        %v4061 = vsel %vm2837, %v3584, 0.0
        %v4062 = vadd.f32 %v4060, %v4061
        %4063 = vadd.xlane.f32.xlu0 %v4062
        %v4064 = vpop.xlane.xlu0 %4063
        %v4065 = vadd.f32 %v3585, %v3586
        %v4066 = vadd.f32 %v4065, %v3587
        %v4067 = vadd.f32 %v4066, %v3588
        %v4068 = vadd.f32 %v4067, %v3589
        %v4069 = vadd.f32 %v4068, %v3590
        %v4070 = vsel %vm2837, %v3591, 0.0
        %v4071 = vadd.f32 %v4069, %v4070
        %4072 = vadd.xlane.f32.xlu0 %v4071
        %v4073 = vpop.xlane.xlu0 %4072
        %v4074 = vadd.f32 %v3592, %v3593
        %v4075 = vadd.f32 %v4074, %v3594
        %v4076 = vadd.f32 %v4075, %v3595
        %v4077 = vadd.f32 %v4076, %v3596
        %v4078 = vadd.f32 %v4077, %v3597
        %v4079 = vsel %vm2837, %v3598, 0.0
        %v4080 = vadd.f32 %v4078, %v4079
        %4081 = vadd.xlane.f32.xlu0 %v4080
        %v4082 = vpop.xlane.xlu0 %4081
        %v4083 = vadd.f32 %v3599, %v3600
        %v4084 = vadd.f32 %v4083, %v3601
        %v4085 = vadd.f32 %v4084, %v3602
        %v4086 = vadd.f32 %v4085, %v3603
        %v4087 = vadd.f32 %v4086, %v3604
        %v4088 = vsel %vm2837, %v3605, 0.0
        %v4089 = vadd.f32 %v4087, %v4088
        %4090 = vadd.xlane.f32.xlu0 %v4089
        %v4091 = vpop.xlane.xlu0 %4090
        %v4092 = vadd.f32 %v3606, %v3607
        %v4093 = vadd.f32 %v4092, %v3608
        %v4094 = vadd.f32 %v4093, %v3609
        %v4095 = vadd.f32 %v4094, %v3610
        %v4096 = vadd.f32 %v4095, %v3611
        %v4097 = vsel %vm2837, %v3612, 0.0
        %v4098 = vadd.f32 %v4096, %v4097
        %4099 = vadd.xlane.f32.xlu0 %v4098
        %v4100 = vpop.xlane.xlu0 %4099
        %v4101 = vadd.f32 %v3613, %v3614
        %v4102 = vadd.f32 %v4101, %v3615
        %v4103 = vadd.f32 %v4102, %v3616
        %v4104 = vadd.f32 %v4103, %v3617
        %v4105 = vadd.f32 %v4104, %v3618
        %v4106 = vsel %vm2837, %v3619, 0.0
        %v4107 = vadd.f32 %v4105, %v4106
        %4108 = vadd.xlane.f32.xlu0 %v4107
        %v4109 = vpop.xlane.xlu0 %4108
        %v4110 = vadd.f32 %v3620, %v3621
        %v4111 = vadd.f32 %v4110, %v3622
        %v4112 = vadd.f32 %v4111, %v3623
        %v4113 = vadd.f32 %v4112, %v3624
        %v4114 = vadd.f32 %v4113, %v3625
        %v4115 = vsel %vm2837, %v3626, 0.0
        %v4116 = vadd.f32 %v4114, %v4115
        %4117 = vadd.xlane.f32.xlu0 %v4116
        %v4118 = vpop.xlane.xlu0 %4117
        %v4119 = vadd.f32 %v3627, %v3628
        %v4120 = vadd.f32 %v4119, %v3629
        %v4121 = vadd.f32 %v4120, %v3630
        %v4122 = vadd.f32 %v4121, %v3631
        %v4123 = vadd.f32 %v4122, %v3632
        %v4124 = vsel %vm2837, %v3633, 0.0
        %v4125 = vadd.f32 %v4123, %v4124
        %4126 = vadd.xlane.f32.xlu0 %v4125
        %v4127 = vpop.xlane.xlu0 %4126
        %v4128 = vadd.f32 %v3634, %v3635
        %v4129 = vadd.f32 %v4128, %v3636
        %v4130 = vadd.f32 %v4129, %v3637
        %v4131 = vadd.f32 %v4130, %v3638
        %v4132 = vadd.f32 %v4131, %v3639
        %v4133 = vsel %vm2837, %v3640, 0.0
        %v4134 = vadd.f32 %v4132, %v4133
        %4135 = vadd.xlane.f32.xlu0 %v4134
        %v4136 = vpop.xlane.xlu0 %4135
        %v4137 = vadd.f32 %v3641, %v3642
        %v4138 = vadd.f32 %v4137, %v3643
        %v4139 = vadd.f32 %v4138, %v3644
        %v4140 = vadd.f32 %v4139, %v3645
        %v4141 = vadd.f32 %v4140, %v3646
        %v4142 = vsel %vm2837, %v3647, 0.0
        %v4143 = vadd.f32 %v4141, %v4142
        %4144 = vadd.xlane.f32.xlu0 %v4143
        %v4145 = vpop.xlane.xlu0 %4144
        %v4146 = vadd.f32 %v3648, %v3649
        %v4147 = vadd.f32 %v4146, %v3650
        %v4148 = vadd.f32 %v4147, %v3651
        %v4149 = vadd.f32 %v4148, %v3652
        %v4150 = vadd.f32 %v4149, %v3653
        %v4151 = vsel %vm2837, %v3654, 0.0
        %v4152 = vadd.f32 %v4150, %v4151
        %4153 = vadd.xlane.f32.xlu0 %v4152
        %v4154 = vpop.xlane.xlu0 %4153
        %v4155 = vadd.f32 %v3655, %v3656
        %v4156 = vadd.f32 %v4155, %v3657
        %v4157 = vadd.f32 %v4156, %v3658
        %v4158 = vadd.f32 %v4157, %v3659
        %v4159 = vadd.f32 %v4158, %v3660
        %v4160 = vsel %vm2837, %v3661, 0.0
        %v4161 = vadd.f32 %v4159, %v4160
        %4162 = vadd.xlane.f32.xlu0 %v4161
        %v4163 = vpop.xlane.xlu0 %4162
        %v4164 = vadd.f32 %v3662, %v3663
        %v4165 = vadd.f32 %v4164, %v3664
        %v4166 = vadd.f32 %v4165, %v3665
        %v4167 = vadd.f32 %v4166, %v3666
        %v4168 = vadd.f32 %v4167, %v3667
        %v4169 = vsel %vm2837, %v3668, 0.0
        %v4170 = vadd.f32 %v4168, %v4169
        %4171 = vadd.xlane.f32.xlu0 %v4170
        %v4172 = vpop.xlane.xlu0 %4171
        %v4173 = vadd.f32 %v3669, %v3670
        %v4174 = vadd.f32 %v4173, %v3671
        %v4175 = vadd.f32 %v4174, %v3672
        %v4176 = vadd.f32 %v4175, %v3673
        %v4177 = vadd.f32 %v4176, %v3674
        %v4178 = vsel %vm2837, %v3675, 0.0
        %v4179 = vadd.f32 %v4177, %v4178
        %4180 = vadd.xlane.f32.xlu0 %v4179
        %v4181 = vpop.xlane.xlu0 %4180
        %v4182 = vadd.f32 %v3676, %v3677
        %v4183 = vadd.f32 %v4182, %v3678
        %v4184 = vadd.f32 %v4183, %v3679
        %v4185 = vadd.f32 %v4184, %v3680
        %v4186 = vadd.f32 %v4185, %v3681
        %v4187 = vsel %vm2837, %v3682, 0.0
        %v4188 = vadd.f32 %v4186, %v4187
        %4189 = vadd.xlane.f32.xlu0 %v4188
        %v4190 = vpop.xlane.xlu0 %4189
        %v4191 = vadd.f32 %v3683, %v3684
        %v4192 = vadd.f32 %v4191, %v3685
        %v4193 = vadd.f32 %v4192, %v3686
        %v4194 = vadd.f32 %v4193, %v3687
        %v4195 = vadd.f32 %v4194, %v3688
        %v4196 = vsel %vm2837, %v3689, 0.0
        %v4197 = vadd.f32 %v4195, %v4196
        %4198 = vadd.xlane.f32.xlu0 %v4197
        %v4199 = vpop.xlane.xlu0 %4198
        %v4200 = vadd.f32 %v3690, %v3691
        %v4201 = vadd.f32 %v4200, %v3692
        %v4202 = vadd.f32 %v4201, %v3693
        %v4203 = vadd.f32 %v4202, %v3694
        %v4204 = vadd.f32 %v4203, %v3695
        %v4205 = vsel %vm2837, %v3696, 0.0
        %v4206 = vadd.f32 %v4204, %v4205
        %4207 = vadd.xlane.f32.xlu0 %v4206
        %v4208 = vpop.xlane.xlu0 %4207
        %v4209 = vadd.f32 %v3697, %v3698
        %v4210 = vadd.f32 %v4209, %v3699
        %v4211 = vadd.f32 %v4210, %v3700
        %v4212 = vadd.f32 %v4211, %v3701
        %v4213 = vadd.f32 %v4212, %v3702
        %v4214 = vsel %vm2837, %v3703, 0.0
        %v4215 = vadd.f32 %v4213, %v4214
        %4216 = vadd.xlane.f32.xlu0 %v4215
        %v4217 = vpop.xlane.xlu0 %4216
        %v4218 = vadd.f32 %v3704, %v3705
        %v4219 = vadd.f32 %v4218, %v3706
        %v4220 = vadd.f32 %v4219, %v3707
        %v4221 = vadd.f32 %v4220, %v3708
        %v4222 = vadd.f32 %v4221, %v3709
        %v4223 = vsel %vm2837, %v3710, 0.0
        %v4224 = vadd.f32 %v4222, %v4223
        %4225 = vadd.xlane.f32.xlu0 %v4224
        %v4226 = vpop.xlane.xlu0 %4225
        %v4227 = vadd.f32 %v3711, %v3712
        %v4228 = vadd.f32 %v4227, %v3713
        %v4229 = vadd.f32 %v4228, %v3714
        %v4230 = vadd.f32 %v4229, %v3715
        %v4231 = vadd.f32 %v4230, %v3716
        %v4232 = vsel %vm2837, %v3717, 0.0
        %v4233 = vadd.f32 %v4231, %v4232
        %4234 = vadd.xlane.f32.xlu0 %v4233
        %v4235 = vpop.xlane.xlu0 %4234
        %v4236 = vadd.f32 %v3718, %v3719
        %v4237 = vadd.f32 %v4236, %v3720
        %v4238 = vadd.f32 %v4237, %v3721
        %v4239 = vadd.f32 %v4238, %v3722
        %v4240 = vadd.f32 %v4239, %v3723
        %v4241 = vsel %vm2837, %v3724, 0.0
        %v4242 = vadd.f32 %v4240, %v4241
        %4243 = vadd.xlane.f32.xlu0 %v4242
        %v4244 = vpop.xlane.xlu0 %4243
        %v4245 = vadd.f32 %v3725, %v3726
        %v4246 = vadd.f32 %v4245, %v3727
        %v4247 = vadd.f32 %v4246, %v3728
        %v4248 = vadd.f32 %v4247, %v3729
        %v4249 = vadd.f32 %v4248, %v3730
        %v4250 = vsel %vm2837, %v3731, 0.0
        %v4251 = vadd.f32 %v4249, %v4250
        %4252 = vadd.xlane.f32.xlu0 %v4251
        %v4253 = vpop.xlane.xlu0 %4252
        %v4254 = vadd.f32 %v3732, %v3733
        %v4255 = vadd.f32 %v4254, %v3734
        %v4256 = vadd.f32 %v4255, %v3735
        %v4257 = vadd.f32 %v4256, %v3736
        %v4258 = vadd.f32 %v4257, %v3737
        %v4259 = vsel %vm2837, %v3738, 0.0
        %v4260 = vadd.f32 %v4258, %v4259
        %4261 = vadd.xlane.f32.xlu0 %v4260
        %v4262 = vpop.xlane.xlu0 %4261
        %v4263 = vadd.f32 %v3739, %v3740
        %v4264 = vadd.f32 %v4263, %v3741
        %v4265 = vadd.f32 %v4264, %v3742
        %v4266 = vadd.f32 %v4265, %v3743
        %v4267 = vadd.f32 %v4266, %v3744
        %v4268 = vsel %vm2837, %v3745, 0.0
        %v4269 = vadd.f32 %v4267, %v4268
        %4270 = vadd.xlane.f32.xlu0 %v4269
        %v4271 = vpop.xlane.xlu0 %4270
        %v4272 = vadd.f32 %v3746, %v3747
        %v4273 = vadd.f32 %v4272, %v3748
        %v4274 = vadd.f32 %v4273, %v3749
        %v4275 = vadd.f32 %v4274, %v3750
        %v4276 = vadd.f32 %v4275, %v3751
        %v4277 = vsel %vm2837, %v3752, 0.0
        %v4278 = vadd.f32 %v4276, %v4277
        %4279 = vadd.xlane.f32.xlu0 %v4278
        %v4280 = vpop.xlane.xlu0 %4279
        %v4281 = vadd.f32 %v3753, %v3754
        %v4282 = vadd.f32 %v4281, %v3755
        %v4283 = vadd.f32 %v4282, %v3756
        %v4284 = vadd.f32 %v4283, %v3757
        %v4285 = vadd.f32 %v4284, %v3758
        %v4286 = vsel %vm2837, %v3759, 0.0
        %v4287 = vadd.f32 %v4285, %v4286
        %4288 = vadd.xlane.f32.xlu0 %v4287
        %v4289 = vpop.xlane.xlu0 %4288
        %v4290 = vadd.f32 %v3760, %v3761
        %v4291 = vadd.f32 %v4290, %v3762
        %v4292 = vadd.f32 %v4291, %v3763
        %v4293 = vadd.f32 %v4292, %v3764
        %v4294 = vadd.f32 %v4293, %v3765
        %v4295 = vsel %vm2837, %v3766, 0.0
        %v4296 = vadd.f32 %v4294, %v4295
        %4297 = vadd.xlane.f32.xlu0 %v4296
        %v4298 = vpop.xlane.xlu0 %4297
        %v4299 = vadd.f32 %v3767, %v3768
        %v4300 = vadd.f32 %v4299, %v3769
        %v4301 = vadd.f32 %v4300, %v3770
        %v4302 = vadd.f32 %v4301, %v3771
        %v4303 = vadd.f32 %v4302, %v3772
        %v4304 = vsel %vm2837, %v3773, 0.0
        %v4305 = vadd.f32 %v4303, %v4304
        %4306 = vadd.xlane.f32.xlu0 %v4305
        %v4307 = vpop.xlane.xlu0 %4306
        %v4308 = vadd.f32 %v3774, %v3775
        %v4309 = vadd.f32 %v4308, %v3776
        %v4310 = vadd.f32 %v4309, %v3777
        %v4311 = vadd.f32 %v4310, %v3778
        %v4312 = vadd.f32 %v4311, %v3779
        %v4313 = vsel %vm2837, %v3780, 0.0
        %v4314 = vadd.f32 %v4312, %v4313
        %4315 = vadd.xlane.f32.xlu0 %v4314
        %v4316 = vpop.xlane.xlu0 %4315
        %v4317 = vadd.f32 %v3781, %v3782
        %v4318 = vadd.f32 %v4317, %v3783
        %v4319 = vadd.f32 %v4318, %v3784
        %v4320 = vadd.f32 %v4319, %v3785
        %v4321 = vadd.f32 %v4320, %v3786
        %v4322 = vsel %vm2837, %v3787, 0.0
        %v4323 = vadd.f32 %v4321, %v4322
        %4324 = vadd.xlane.f32.xlu0 %v4323
        %v4325 = vpop.xlane.xlu0 %4324
        %v4326 = vadd.f32 %v3788, %v3789
        %v4327 = vadd.f32 %v4326, %v3790
        %v4328 = vadd.f32 %v4327, %v3791
        %v4329 = vadd.f32 %v4328, %v3792
        %v4330 = vadd.f32 %v4329, %v3793
        %v4331 = vsel %vm2837, %v3794, 0.0
        %v4332 = vadd.f32 %v4330, %v4331
        %4333 = vadd.xlane.f32.xlu0 %v4332
        %v4334 = vpop.xlane.xlu0 %4333
        %v4335 = vadd.f32 %v3795, %v3796
        %v4336 = vadd.f32 %v4335, %v3797
        %v4337 = vadd.f32 %v4336, %v3798
        %v4338 = vadd.f32 %v4337, %v3799
        %v4339 = vadd.f32 %v4338, %v3800
        %v4340 = vsel %vm2837, %v3801, 0.0
        %v4341 = vadd.f32 %v4339, %v4340
        %4342 = vadd.xlane.f32.xlu0 %v4341
        %v4343 = vpop.xlane.xlu0 %4342
        %v4344 = vadd.f32 %v3802, %v3803
        %v4345 = vadd.f32 %v4344, %v3804
        %v4346 = vadd.f32 %v4345, %v3805
        %v4347 = vadd.f32 %v4346, %v3806
        %v4348 = vadd.f32 %v4347, %v3807
        %v4349 = vsel %vm2837, %v3808, 0.0
        %v4350 = vadd.f32 %v4348, %v4349
        %4351 = vadd.xlane.f32.xlu0 %v4350
        %v4352 = vpop.xlane.xlu0 %4351
        %v4353 = vadd.f32 %v3809, %v3810
        %v4354 = vadd.f32 %v4353, %v3811
        %v4355 = vadd.f32 %v4354, %v3812
        %v4356 = vadd.f32 %v4355, %v3813
        %v4357 = vadd.f32 %v4356, %v3814
        %v4358 = vsel %vm2837, %v3815, 0.0
        %v4359 = vadd.f32 %v4357, %v4358
        %4360 = vadd.xlane.f32.xlu0 %v4359
        %v4361 = vpop.xlane.xlu0 %4360
        %v4362 = vadd.f32 %v3816, %v3817
        %v4363 = vadd.f32 %v4362, %v3818
        %v4364 = vadd.f32 %v4363, %v3819
        %v4365 = vadd.f32 %v4364, %v3820
        %v4366 = vadd.f32 %v4365, %v3821
        %v4367 = vsel %vm2837, %v3822, 0.0
        %v4368 = vadd.f32 %v4366, %v4367
        %4369 = vadd.xlane.f32.xlu0 %v4368
        %v4370 = vpop.xlane.xlu0 %4369
        %v4371 = vadd.f32 %v3823, %v3824
        %v4372 = vadd.f32 %v4371, %v3825
        %v4373 = vadd.f32 %v4372, %v3826
        %v4374 = vadd.f32 %v4373, %v3827
        %v4375 = vadd.f32 %v4374, %v3828
        %v4376 = vsel %vm2837, %v3829, 0.0
        %v4377 = vadd.f32 %v4375, %v4376
        %4378 = vadd.xlane.f32.xlu0 %v4377
        %v4379 = vpop.xlane.xlu0 %4378
        %v4380 = vadd.f32 %v3830, %v3831
        %v4381 = vadd.f32 %v4380, %v3832
        %v4382 = vadd.f32 %v4381, %v3833
        %v4383 = vadd.f32 %v4382, %v3834
        %v4384 = vadd.f32 %v4383, %v3835
        %v4385 = vsel %vm2837, %v3836, 0.0
        %v4386 = vadd.f32 %v4384, %v4385
        %4387 = vadd.xlane.f32.xlu0 %v4386
        %v4388 = vpop.xlane.xlu0 %4387
        %v4389 = vadd.f32 %v3837, %v3838
        %v4390 = vadd.f32 %v4389, %v3839
        %v4391 = vadd.f32 %v4390, %v3840
        %v4392 = vadd.f32 %v4391, %v3841
        %v4393 = vadd.f32 %v4392, %v3842
        %v4394 = vsel %vm2837, %v3843, 0.0
        %v4395 = vadd.f32 %v4393, %v4394
        %4396 = vadd.xlane.f32.xlu0 %v4395
        %v4397 = vpop.xlane.xlu0 %4396
        %v4398 = vadd.f32 %v3844, %v3845
        %v4399 = vadd.f32 %v4398, %v3846
        %v4400 = vadd.f32 %v4399, %v3847
        %v4401 = vadd.f32 %v4400, %v3848
        %v4402 = vadd.f32 %v4401, %v3849
        %v4403 = vsel %vm2837, %v3850, 0.0
        %v4404 = vadd.f32 %v4402, %v4403
        %4405 = vadd.xlane.f32.xlu0 %v4404
        %v4406 = vpop.xlane.xlu0 %4405
        %v4407 = vadd.f32 %v3851, %v3852
        %v4408 = vadd.f32 %v4407, %v3853
        %v4409 = vadd.f32 %v4408, %v3854
        %v4410 = vadd.f32 %v4409, %v3855
        %v4411 = vadd.f32 %v4410, %v3856
        %v4412 = vsel %vm2837, %v3857, 0.0
        %v4413 = vadd.f32 %v4411, %v4412
        %4414 = vadd.xlane.f32.xlu0 %v4413
        %v4415 = vpop.xlane.xlu0 %4414
        %v4416 = vadd.f32 %v3858, %v3859
        %v4417 = vadd.f32 %v4416, %v3860
        %v4418 = vadd.f32 %v4417, %v3861
        %v4419 = vadd.f32 %v4418, %v3862
        %v4420 = vadd.f32 %v4419, %v3863
        %v4421 = vsel %vm2837, %v3864, 0.0
        %v4422 = vadd.f32 %v4420, %v4421
        %4423 = vadd.xlane.f32.xlu0 %v4422
        %v4424 = vpop.xlane.xlu0 %4423
        %v4425 = vadd.f32 %v3865, %v3866
        %v4426 = vadd.f32 %v4425, %v3867
        %v4427 = vadd.f32 %v4426, %v3868
        %v4428 = vadd.f32 %v4427, %v3869
        %v4429 = vadd.f32 %v4428, %v3870
        %v4430 = vsel %vm2837, %v3871, 0.0
        %v4431 = vadd.f32 %v4429, %v4430
        %4432 = vadd.xlane.f32.xlu0 %v4431
        %v4433 = vpop.xlane.xlu0 %4432
        %v4434 = vadd.f32 %v3872, %v3873
        %v4435 = vadd.f32 %v4434, %v3874
        %v4436 = vadd.f32 %v4435, %v3875
        %v4437 = vadd.f32 %v4436, %v3876
        %v4438 = vadd.f32 %v4437, %v3877
        %v4439 = vsel %vm2837, %v3878, 0.0
        %v4440 = vadd.f32 %v4438, %v4439
        %4441 = vadd.xlane.f32.xlu0 %v4440
        %v4442 = vpop.xlane.xlu0 %4441
        %v4443 = vadd.f32 %v3879, %v3880
        %v4444 = vadd.f32 %v4443, %v3881
        %v4445 = vadd.f32 %v4444, %v3882
        %v4446 = vadd.f32 %v4445, %v3883
        %v4447 = vadd.f32 %v4446, %v3884
        %v4448 = vsel %vm2837, %v3885, 0.0
        %v4449 = vadd.f32 %v4447, %v4448
        %4450 = vadd.xlane.f32.xlu0 %v4449
        %v4451 = vpop.xlane.xlu0 %4450
        %v4452 = vadd.f32 %v3886, %v3887
        %v4453 = vadd.f32 %v4452, %v3888
        %v4454 = vadd.f32 %v4453, %v3889
        %v4455 = vadd.f32 %v4454, %v3890
        %v4456 = vadd.f32 %v4455, %v3891
        %v4457 = vsel %vm2837, %v3892, 0.0
        %v4458 = vadd.f32 %v4456, %v4457
        %4459 = vadd.xlane.f32.xlu0 %v4458
        %v4460 = vpop.xlane.xlu0 %4459
        %v4461 = vadd.f32 %v3893, %v3894
        %v4462 = vadd.f32 %v4461, %v3895
        %v4463 = vadd.f32 %v4462, %v3896
        %v4464 = vadd.f32 %v4463, %v3897
        %v4465 = vadd.f32 %v4464, %v3898
        %v4466 = vsel %vm2837, %v3899, 0.0
        %v4467 = vadd.f32 %v4465, %v4466
        %4468 = vadd.xlane.f32.xlu0 %v4467
        %v4469 = vpop.xlane.xlu0 %4468
        %v4470 = vadd.f32 %v3900, %v3901
        %v4471 = vadd.f32 %v4470, %v3902
        %v4472 = vadd.f32 %v4471, %v3903
        %v4473 = vadd.f32 %v4472, %v3904
        %v4474 = vadd.f32 %v4473, %v3905
        %v4475 = vsel %vm2837, %v3906, 0.0
        %v4476 = vadd.f32 %v4474, %v4475
        %4477 = vadd.xlane.f32.xlu0 %v4476
        %v4478 = vpop.xlane.xlu0 %4477
        %v4479 = vadd.f32 %v3907, %v3908
        %v4480 = vadd.f32 %v4479, %v3909
        %v4481 = vadd.f32 %v4480, %v3910
        %v4482 = vadd.f32 %v4481, %v3911
        %v4483 = vadd.f32 %v4482, %v3912
        %v4484 = vsel %vm2837, %v3913, 0.0
        %v4485 = vadd.f32 %v4483, %v4484
        %4486 = vadd.xlane.f32.xlu0 %v4485
        %v4487 = vpop.xlane.xlu0 %4486
        %v4488 = vadd.f32 %v3914, %v3915
        %v4489 = vadd.f32 %v4488, %v3916
        %v4490 = vadd.f32 %v4489, %v3917
        %v4491 = vadd.f32 %v4490, %v3918
        %v4492 = vadd.f32 %v4491, %v3919
        %v4493 = vsel %vm2837, %v3920, 0.0
        %v4494 = vadd.f32 %v4492, %v4493
        %4495 = vadd.xlane.f32.xlu0 %v4494
        %v4496 = vpop.xlane.xlu0 %4495
        %v4497 = vmul.f32 %v3929, 0.0012755102
        %v4498 = vmul.f32 %v3938, 0.0012755102
        %v4499 = vmul.f32 %v3947, 0.0012755102
        %v4500 = vmul.f32 %v3956, 0.0012755102
        %v4501 = vmul.f32 %v3965, 0.0012755102
        %v4502 = vmul.f32 %v3974, 0.0012755102
        %v4503 = vmul.f32 %v3983, 0.0012755102
        %v4504 = vmul.f32 %v3992, 0.0012755102
        %v4505 = vmul.f32 %v4001, 0.0012755102
        %v4506 = vmul.f32 %v4010, 0.0012755102
        %v4507 = vmul.f32 %v4019, 0.0012755102
        %v4508 = vmul.f32 %v4028, 0.0012755102
        %v4509 = vmul.f32 %v4037, 0.0012755102
        %v4510 = vmul.f32 %v4046, 0.0012755102
        %v4511 = vmul.f32 %v4055, 0.0012755102
        %v4512 = vmul.f32 %v4064, 0.0012755102
        %v4513 = vmul.f32 %v4073, 0.0012755102
        %v4514 = vmul.f32 %v4082, 0.0012755102
        %v4515 = vmul.f32 %v4091, 0.0012755102
        %v4516 = vmul.f32 %v4100, 0.0012755102
        %v4517 = vmul.f32 %v4109, 0.0012755102
        %v4518 = vmul.f32 %v4118, 0.0012755102
        %v4519 = vmul.f32 %v4127, 0.0012755102
        %v4520 = vmul.f32 %v4136, 0.0012755102
        %v4521 = vmul.f32 %v4145, 0.0012755102
        %v4522 = vmul.f32 %v4154, 0.0012755102
        %v4523 = vmul.f32 %v4163, 0.0012755102
        %v4524 = vmul.f32 %v4172, 0.0012755102
        %v4525 = vmul.f32 %v4181, 0.0012755102
        %v4526 = vmul.f32 %v4190, 0.0012755102
        %v4527 = vmul.f32 %v4199, 0.0012755102
        %v4528 = vmul.f32 %v4208, 0.0012755102
        %v4529 = vmul.f32 %v4217, 0.0012755102
        %v4530 = vmul.f32 %v4226, 0.0012755102
        %v4531 = vmul.f32 %v4235, 0.0012755102
        %v4532 = vmul.f32 %v4244, 0.0012755102
        %v4533 = vmul.f32 %v4253, 0.0012755102
        %v4534 = vmul.f32 %v4262, 0.0012755102
        %v4535 = vmul.f32 %v4271, 0.0012755102
        %v4536 = vmul.f32 %v4280, 0.0012755102
        %v4537 = vmul.f32 %v4289, 0.0012755102
        %v4538 = vmul.f32 %v4298, 0.0012755102
        %v4539 = vmul.f32 %v4307, 0.0012755102
        %v4540 = vmul.f32 %v4316, 0.0012755102
        %v4541 = vmul.f32 %v4325, 0.0012755102
        %v4542 = vmul.f32 %v4334, 0.0012755102
        %v4543 = vmul.f32 %v4343, 0.0012755102
        %v4544 = vmul.f32 %v4352, 0.0012755102
        %v4545 = vmul.f32 %v4361, 0.0012755102
        %v4546 = vmul.f32 %v4370, 0.0012755102
        %v4547 = vmul.f32 %v4379, 0.0012755102
        %v4548 = vmul.f32 %v4388, 0.0012755102
        %v4549 = vmul.f32 %v4397, 0.0012755102
        %v4550 = vmul.f32 %v4406, 0.0012755102
        %v4551 = vmul.f32 %v4415, 0.0012755102
        %v4552 = vmul.f32 %v4424, 0.0012755102
        %v4553 = vmul.f32 %v4433, 0.0012755102
        %v4554 = vmul.f32 %v4442, 0.0012755102
        %v4555 = vmul.f32 %v4451, 0.0012755102
        %v4556 = vmul.f32 %v4460, 0.0012755102
        %v4557 = vmul.f32 %v4469, 0.0012755102
        %v4558 = vmul.f32 %v4478, 0.0012755102
        %v4559 = vmul.f32 %v4487, 0.0012755102
        %v4560 = vmul.f32 %v4496, 0.0012755102
        %v4561 = vmul.f32 %v3409, %v3409
        %v4562 = vmul.f32 %v3410, %v3410
        %v4563 = vmul.f32 %v3411, %v3411
        %v4564 = vmul.f32 %v3412, %v3412
        %v4565 = vmul.f32 %v3413, %v3413
        %v4566 = vmul.f32 %v3414, %v3414
        %v4567 = vmul.f32 %v3415, %v3415
        %v4568 = vmul.f32 %v3416, %v3416
        %v4569 = vmul.f32 %v3417, %v3417
        %v4570 = vmul.f32 %v3418, %v3418
        %v4571 = vmul.f32 %v3419, %v3419
        %v4572 = vmul.f32 %v3420, %v3420
        %v4573 = vmul.f32 %v3421, %v3421
        %v4574 = vmul.f32 %v3422, %v3422
        %v4575 = vmul.f32 %v3423, %v3423
        %v4576 = vmul.f32 %v3424, %v3424
        %v4577 = vmul.f32 %v3425, %v3425
        %v4578 = vmul.f32 %v3426, %v3426
        %v4579 = vmul.f32 %v3427, %v3427
        %v4580 = vmul.f32 %v3428, %v3428
        %v4581 = vmul.f32 %v3429, %v3429
        %v4582 = vmul.f32 %v3430, %v3430
        %v4583 = vmul.f32 %v3431, %v3431
        %v4584 = vmul.f32 %v3432, %v3432
        %v4585 = vmul.f32 %v3433, %v3433
        %v4586 = vmul.f32 %v3434, %v3434
        %v4587 = vmul.f32 %v3435, %v3435
        %v4588 = vmul.f32 %v3436, %v3436
        %v4589 = vmul.f32 %v3437, %v3437
        %v4590 = vmul.f32 %v3438, %v3438
        %v4591 = vmul.f32 %v3439, %v3439
        %v4592 = vmul.f32 %v3440, %v3440
        %v4593 = vmul.f32 %v3441, %v3441
        %v4594 = vmul.f32 %v3442, %v3442
        %v4595 = vmul.f32 %v3443, %v3443
        %v4596 = vmul.f32 %v3444, %v3444
        %v4597 = vmul.f32 %v3445, %v3445
        %v4598 = vmul.f32 %v3446, %v3446
        %v4599 = vmul.f32 %v3447, %v3447
        %v4600 = vmul.f32 %v3448, %v3448
        %v4601 = vmul.f32 %v3449, %v3449
        %v4602 = vmul.f32 %v3450, %v3450
        %v4603 = vmul.f32 %v3451, %v3451
        %v4604 = vmul.f32 %v3452, %v3452
        %v4605 = vmul.f32 %v3453, %v3453
        %v4606 = vmul.f32 %v3454, %v3454
        %v4607 = vmul.f32 %v3455, %v3455
        %v4608 = vmul.f32 %v3456, %v3456
        %v4609 = vmul.f32 %v3457, %v3457
        %v4610 = vmul.f32 %v3458, %v3458
        %v4611 = vmul.f32 %v3459, %v3459
        %v4612 = vmul.f32 %v3460, %v3460
        %v4613 = vmul.f32 %v3461, %v3461
        %v4614 = vmul.f32 %v3462, %v3462
        %v4615 = vmul.f32 %v3463, %v3463
        %v4616 = vmul.f32 %v3464, %v3464
        %v4617 = vmul.f32 %v3465, %v3465
        %v4618 = vmul.f32 %v3466, %v3466
        %v4619 = vmul.f32 %v3467, %v3467
        %v4620 = vmul.f32 %v3468, %v3468
        %v4621 = vmul.f32 %v3469, %v3469
        %v4622 = vmul.f32 %v3470, %v3470
        %v4623 = vmul.f32 %v3471, %v3471
        %v4624 = vmul.f32 %v3472, %v3472
        %v4625 = vsub.f32 %v4497, %v4561
        %v4626 = vsub.f32 %v4498, %v4562
        %v4627 = vsub.f32 %v4499, %v4563
        %v4628 = vsub.f32 %v4500, %v4564
        %v4629 = vsub.f32 %v4501, %v4565
        %v4630 = vsub.f32 %v4502, %v4566
        %v4631 = vsub.f32 %v4503, %v4567
        %v4632 = vsub.f32 %v4504, %v4568
        %v4633 = vsub.f32 %v4505, %v4569
        %v4634 = vsub.f32 %v4506, %v4570
        %v4635 = vsub.f32 %v4507, %v4571
        %v4636 = vsub.f32 %v4508, %v4572
        %v4637 = vsub.f32 %v4509, %v4573
        %v4638 = vsub.f32 %v4510, %v4574
        %v4639 = vsub.f32 %v4511, %v4575
        %v4640 = vsub.f32 %v4512, %v4576
        %v4641 = vsub.f32 %v4513, %v4577
        %v4642 = vsub.f32 %v4514, %v4578
        %v4643 = vsub.f32 %v4515, %v4579
        %v4644 = vsub.f32 %v4516, %v4580
        %v4645 = vsub.f32 %v4517, %v4581
        %v4646 = vsub.f32 %v4518, %v4582
        %v4647 = vsub.f32 %v4519, %v4583
        %v4648 = vsub.f32 %v4520, %v4584
        %v4649 = vsub.f32 %v4521, %v4585
        %v4650 = vsub.f32 %v4522, %v4586
        %v4651 = vsub.f32 %v4523, %v4587
        %v4652 = vsub.f32 %v4524, %v4588
        %v4653 = vsub.f32 %v4525, %v4589
        %v4654 = vsub.f32 %v4526, %v4590
        %v4655 = vsub.f32 %v4527, %v4591
        %v4656 = vsub.f32 %v4528, %v4592
        %v4657 = vsub.f32 %v4529, %v4593
        %v4658 = vsub.f32 %v4530, %v4594
        %v4659 = vsub.f32 %v4531, %v4595
        %v4660 = vsub.f32 %v4532, %v4596
        %v4661 = vsub.f32 %v4533, %v4597
        %v4662 = vsub.f32 %v4534, %v4598
        %v4663 = vsub.f32 %v4535, %v4599
        %v4664 = vsub.f32 %v4536, %v4600
        %v4665 = vsub.f32 %v4537, %v4601
        %v4666 = vsub.f32 %v4538, %v4602
        %v4667 = vsub.f32 %v4539, %v4603
        %v4668 = vsub.f32 %v4540, %v4604
        %v4669 = vsub.f32 %v4541, %v4605
        %v4670 = vsub.f32 %v4542, %v4606
        %v4671 = vsub.f32 %v4543, %v4607
        %v4672 = vsub.f32 %v4544, %v4608
        %v4673 = vsub.f32 %v4545, %v4609
        %v4674 = vsub.f32 %v4546, %v4610
        %v4675 = vsub.f32 %v4547, %v4611
        %v4676 = vsub.f32 %v4548, %v4612
        %v4677 = vsub.f32 %v4549, %v4613
        %v4678 = vsub.f32 %v4550, %v4614
        %v4679 = vsub.f32 %v4551, %v4615
        %v4680 = vsub.f32 %v4552, %v4616
        %v4681 = vsub.f32 %v4553, %v4617
        %v4682 = vsub.f32 %v4554, %v4618
        %v4683 = vsub.f32 %v4555, %v4619
        %v4684 = vsub.f32 %v4556, %v4620
        %v4685 = vsub.f32 %v4557, %v4621
        %v4686 = vsub.f32 %v4558, %v4622
        %v4687 = vsub.f32 %v4559, %v4623
        %v4688 = vsub.f32 %v4560, %v4624
        %v4689 = vmax.f32 %v4625, 0.0
        %v4690 = vmax.f32 %v4626, 0.0
        %v4691 = vmax.f32 %v4627, 0.0
        %v4692 = vmax.f32 %v4628, 0.0
        %v4693 = vmax.f32 %v4629, 0.0
        %v4694 = vmax.f32 %v4630, 0.0
        %v4695 = vmax.f32 %v4631, 0.0
        %v4696 = vmax.f32 %v4632, 0.0
        %v4697 = vmax.f32 %v4633, 0.0
        %v4698 = vmax.f32 %v4634, 0.0
        %v4699 = vmax.f32 %v4635, 0.0
        %v4700 = vmax.f32 %v4636, 0.0
        %v4701 = vmax.f32 %v4637, 0.0
        %v4702 = vmax.f32 %v4638, 0.0
        %v4703 = vmax.f32 %v4639, 0.0
        %v4704 = vmax.f32 %v4640, 0.0
        %v4705 = vmax.f32 %v4641, 0.0
        %v4706 = vmax.f32 %v4642, 0.0
        %v4707 = vmax.f32 %v4643, 0.0
        %v4708 = vmax.f32 %v4644, 0.0
        %v4709 = vmax.f32 %v4645, 0.0
        %v4710 = vmax.f32 %v4646, 0.0
        %v4711 = vmax.f32 %v4647, 0.0
        %v4712 = vmax.f32 %v4648, 0.0
        %v4713 = vmax.f32 %v4649, 0.0
        %v4714 = vmax.f32 %v4650, 0.0
        %v4715 = vmax.f32 %v4651, 0.0
        %v4716 = vmax.f32 %v4652, 0.0
        %v4717 = vmax.f32 %v4653, 0.0
        %v4718 = vmax.f32 %v4654, 0.0
        %v4719 = vmax.f32 %v4655, 0.0
        %v4720 = vmax.f32 %v4656, 0.0
        %v4721 = vmax.f32 %v4657, 0.0
        %v4722 = vmax.f32 %v4658, 0.0
        %v4723 = vmax.f32 %v4659, 0.0
        %v4724 = vmax.f32 %v4660, 0.0
        %v4725 = vmax.f32 %v4661, 0.0
        %v4726 = vmax.f32 %v4662, 0.0
        %v4727 = vmax.f32 %v4663, 0.0
        %v4728 = vmax.f32 %v4664, 0.0
        %v4729 = vmax.f32 %v4665, 0.0
        %v4730 = vmax.f32 %v4666, 0.0
        %v4731 = vmax.f32 %v4667, 0.0
        %v4732 = vmax.f32 %v4668, 0.0
        %v4733 = vmax.f32 %v4669, 0.0
        %v4734 = vmax.f32 %v4670, 0.0
        %v4735 = vmax.f32 %v4671, 0.0
        %v4736 = vmax.f32 %v4672, 0.0
        %v4737 = vmax.f32 %v4673, 0.0
        %v4738 = vmax.f32 %v4674, 0.0
        %v4739 = vmax.f32 %v4675, 0.0
        %v4740 = vmax.f32 %v4676, 0.0
        %v4741 = vmax.f32 %v4677, 0.0
        %v4742 = vmax.f32 %v4678, 0.0
        %v4743 = vmax.f32 %v4679, 0.0
        %v4744 = vmax.f32 %v4680, 0.0
        %v4745 = vmax.f32 %v4681, 0.0
        %v4746 = vmax.f32 %v4682, 0.0
        %v4747 = vmax.f32 %v4683, 0.0
        %v4748 = vmax.f32 %v4684, 0.0
        %v4749 = vmax.f32 %v4685, 0.0
        %v4750 = vmax.f32 %v4686, 0.0
        %v4751 = vmax.f32 %v4687, 0.0
        %v4752 = vmax.f32 %v4688, 0.0
        %v4753 = vld [vmem:[%s252] sm:$0xff]
        %v4754 = vld [vmem:[%s252 + $0x8] sm:$0xff]
        %v4755 = vld [vmem:[%s252 + $0x10] sm:$0xff]
        %v4756 = vld [vmem:[%s252 + $0x18] sm:$0xff]
        %v4757 = vld [vmem:[%s252 + $0x20] sm:$0xff]
        %v4758 = vld [vmem:[%s252 + $0x28] sm:$0xff]
        %v4759 = vld [vmem:[%s252 + $0x30] sm:$0xff]
        %v4760 = vld [vmem:[%s252 + $0x38] sm:$0xff]
        %v4761 = vld [vmem:[%s252 + $0x40] sm:$0xff]
        %v4762 = vld [vmem:[%s252 + $0x48] sm:$0xff]
        %v4763 = vld [vmem:[%s252 + $0x50] sm:$0xff]
        %v4764 = vld [vmem:[%s252 + $0x58] sm:$0xff]
        %v4765 = vld [vmem:[%s252 + $0x60] sm:$0xff]
        %v4766 = vld [vmem:[%s252 + $0x68] sm:$0xff]
        %v4767 = vld [vmem:[%s252 + $0x70] sm:$0xff]
        %v4768 = vld [vmem:[%s252 + $0x78] sm:$0xff]
        %v4769 = vld [vmem:[%s252 + $0x80] sm:$0xff]
        %v4770 = vld [vmem:[%s252 + $0x88] sm:$0xff]
        %v4771 = vld [vmem:[%s252 + $0x90] sm:$0xff]
        %v4772 = vld [vmem:[%s252 + $0x98] sm:$0xff]
        %v4773 = vld [vmem:[%s252 + $0xa0] sm:$0xff]
        %v4774 = vld [vmem:[%s252 + $0xa8] sm:$0xff]
        %v4775 = vld [vmem:[%s252 + $0xb0] sm:$0xff]
        %v4776 = vld [vmem:[%s252 + $0xb8] sm:$0xff]
        %v4777 = vld [vmem:[%s252 + $0xc0] sm:$0xff]
        %v4778 = vld [vmem:[%s252 + $0xc8] sm:$0xff]
        %v4779 = vld [vmem:[%s252 + $0xd0] sm:$0xff]
        %v4780 = vld [vmem:[%s252 + $0xd8] sm:$0xff]
        %v4781 = vld [vmem:[%s252 + $0xe0] sm:$0xff]
        %v4782 = vld [vmem:[%s252 + $0xe8] sm:$0xff]
        %v4783 = vld [vmem:[%s252 + $0xf0] sm:$0xff]
        %v4784 = vld [vmem:[%s252 + $0xf8] sm:$0xff]
        %v4785 = vld [vmem:[%s252 + $0x100] sm:$0xff]
        %v4786 = vld [vmem:[%s252 + $0x108] sm:$0xff]
        %v4787 = vld [vmem:[%s252 + $0x110] sm:$0xff]
        %v4788 = vld [vmem:[%s252 + $0x118] sm:$0xff]
        %v4789 = vld [vmem:[%s252 + $0x120] sm:$0xff]
        %v4790 = vld [vmem:[%s252 + $0x128] sm:$0xff]
        %v4791 = vld [vmem:[%s252 + $0x130] sm:$0xff]
        %v4792 = vld [vmem:[%s252 + $0x138] sm:$0xff]
        %v4793 = vld [vmem:[%s252 + $0x140] sm:$0xff]
        %v4794 = vld [vmem:[%s252 + $0x148] sm:$0xff]
        %v4795 = vld [vmem:[%s252 + $0x150] sm:$0xff]
        %v4796 = vld [vmem:[%s252 + $0x158] sm:$0xff]
        %v4797 = vld [vmem:[%s252 + $0x160] sm:$0xff]
        %v4798 = vld [vmem:[%s252 + $0x168] sm:$0xff]
        %v4799 = vld [vmem:[%s252 + $0x170] sm:$0xff]
        %v4800 = vld [vmem:[%s252 + $0x178] sm:$0xff]
        %v4801 = vld [vmem:[%s252 + $0x180] sm:$0xff]
        %v4802 = vld [vmem:[%s252 + $0x188] sm:$0xff]
        %v4803 = vld [vmem:[%s252 + $0x190] sm:$0xff]
        %v4804 = vld [vmem:[%s252 + $0x198] sm:$0xff]
        %v4805 = vld [vmem:[%s252 + $0x1a0] sm:$0xff]
        %v4806 = vld [vmem:[%s252 + $0x1a8] sm:$0xff]
        %v4807 = vld [vmem:[%s252 + $0x1b0] sm:$0xff]
        %v4808 = vld [vmem:[%s252 + $0x1b8] sm:$0xff]
        %v4809 = vld [vmem:[%s252 + $0x1c0] sm:$0xff]
        %v4810 = vld [vmem:[%s252 + $0x1c8] sm:$0xff]
        %v4811 = vld [vmem:[%s252 + $0x1d0] sm:$0xff]
        %v4812 = vld [vmem:[%s252 + $0x1d8] sm:$0xff]
        %v4813 = vld [vmem:[%s252 + $0x1e0] sm:$0xff]
        %v4814 = vld [vmem:[%s252 + $0x1e8] sm:$0xff]
        %v4815 = vld [vmem:[%s252 + $0x1f0] sm:$0xff]
        %v4816 = vld [vmem:[%s252 + $0x1f8] sm:$0xff]
        %v4817 = vadd.f32 %v4689, 1e-05
        %v4818 = vadd.f32 %v4690, 1e-05
        %v4819 = vadd.f32 %v4691, 1e-05
        %v4820 = vadd.f32 %v4692, 1e-05
        %v4821 = vadd.f32 %v4693, 1e-05
        %v4822 = vadd.f32 %v4694, 1e-05
        %v4823 = vadd.f32 %v4695, 1e-05
        %v4824 = vadd.f32 %v4696, 1e-05
        %v4825 = vadd.f32 %v4697, 1e-05
        %v4826 = vadd.f32 %v4698, 1e-05
        %v4827 = vadd.f32 %v4699, 1e-05
        %v4828 = vadd.f32 %v4700, 1e-05
        %v4829 = vadd.f32 %v4701, 1e-05
        %v4830 = vadd.f32 %v4702, 1e-05
        %v4831 = vadd.f32 %v4703, 1e-05
        %v4832 = vadd.f32 %v4704, 1e-05
        %v4833 = vadd.f32 %v4705, 1e-05
        %v4834 = vadd.f32 %v4706, 1e-05
        %v4835 = vadd.f32 %v4707, 1e-05
        %v4836 = vadd.f32 %v4708, 1e-05
        %v4837 = vadd.f32 %v4709, 1e-05
        %v4838 = vadd.f32 %v4710, 1e-05
        %v4839 = vadd.f32 %v4711, 1e-05
        %v4840 = vadd.f32 %v4712, 1e-05
        %v4841 = vadd.f32 %v4713, 1e-05
        %v4842 = vadd.f32 %v4714, 1e-05
        %v4843 = vadd.f32 %v4715, 1e-05
        %v4844 = vadd.f32 %v4716, 1e-05
        %v4845 = vadd.f32 %v4717, 1e-05
        %v4846 = vadd.f32 %v4718, 1e-05
        %v4847 = vadd.f32 %v4719, 1e-05
        %v4848 = vadd.f32 %v4720, 1e-05
        %v4849 = vadd.f32 %v4721, 1e-05
        %v4850 = vadd.f32 %v4722, 1e-05
        %v4851 = vadd.f32 %v4723, 1e-05
        %v4852 = vadd.f32 %v4724, 1e-05
        %v4853 = vadd.f32 %v4725, 1e-05
        %v4854 = vadd.f32 %v4726, 1e-05
        %v4855 = vadd.f32 %v4727, 1e-05
        %v4856 = vadd.f32 %v4728, 1e-05
        %v4857 = vadd.f32 %v4729, 1e-05
        %v4858 = vadd.f32 %v4730, 1e-05
        %v4859 = vadd.f32 %v4731, 1e-05
        %v4860 = vadd.f32 %v4732, 1e-05
        %v4861 = vadd.f32 %v4733, 1e-05
        %v4862 = vadd.f32 %v4734, 1e-05
        %v4863 = vadd.f32 %v4735, 1e-05
        %v4864 = vadd.f32 %v4736, 1e-05
        %v4865 = vadd.f32 %v4737, 1e-05
        %v4866 = vadd.f32 %v4738, 1e-05
        %v4867 = vadd.f32 %v4739, 1e-05
        %v4868 = vadd.f32 %v4740, 1e-05
        %v4869 = vadd.f32 %v4741, 1e-05
        %v4870 = vadd.f32 %v4742, 1e-05
        %v4871 = vadd.f32 %v4743, 1e-05
        %v4872 = vadd.f32 %v4744, 1e-05
        %v4873 = vadd.f32 %v4745, 1e-05
        %v4874 = vadd.f32 %v4746, 1e-05
        %v4875 = vadd.f32 %v4747, 1e-05
        %v4876 = vadd.f32 %v4748, 1e-05
        %v4877 = vadd.f32 %v4749, 1e-05
        %v4878 = vadd.f32 %v4750, 1e-05
        %v4879 = vadd.f32 %v4751, 1e-05
        %v4880 = vadd.f32 %v4752, 1e-05
        %v4881 = vrsqrt.pop %v4817
        %v4882 = vrsqrt.pop %v4818
        %v4883 = vrsqrt.pop %v4819
        %v4884 = vrsqrt.pop %v4820
        %v4885 = vrsqrt.pop %v4821
        %v4886 = vrsqrt.pop %v4822
        %v4887 = vrsqrt.pop %v4823
        %v4888 = vrsqrt.pop %v4824
        %v4889 = vrsqrt.pop %v4825
        %v4890 = vrsqrt.pop %v4826
        %v4891 = vrsqrt.pop %v4827
        %v4892 = vrsqrt.pop %v4828
        %v4893 = vrsqrt.pop %v4829
        %v4894 = vrsqrt.pop %v4830
        %v4895 = vrsqrt.pop %v4831
        %v4896 = vrsqrt.pop %v4832
        %v4897 = vrsqrt.pop %v4833
        %v4898 = vrsqrt.pop %v4834
        %v4899 = vrsqrt.pop %v4835
        %v4900 = vrsqrt.pop %v4836
        %v4901 = vrsqrt.pop %v4837
        %v4902 = vrsqrt.pop %v4838
        %v4903 = vrsqrt.pop %v4839
        %v4904 = vrsqrt.pop %v4840
        %v4905 = vrsqrt.pop %v4841
        %v4906 = vrsqrt.pop %v4842
        %v4907 = vrsqrt.pop %v4843
        %v4908 = vrsqrt.pop %v4844
        %v4909 = vrsqrt.pop %v4845
        %v4910 = vrsqrt.pop %v4846
        %v4911 = vrsqrt.pop %v4847
        %v4912 = vrsqrt.pop %v4848
        %v4913 = vrsqrt.pop %v4849
        %v4914 = vrsqrt.pop %v4850
        %v4915 = vrsqrt.pop %v4851
        %v4916 = vrsqrt.pop %v4852
        %v4917 = vrsqrt.pop %v4853
        %v4918 = vrsqrt.pop %v4854
        %v4919 = vrsqrt.pop %v4855
        %v4920 = vrsqrt.pop %v4856
        %v4921 = vrsqrt.pop %v4857
        %v4922 = vrsqrt.pop %v4858
        %v4923 = vrsqrt.pop %v4859
        %v4924 = vrsqrt.pop %v4860
        %v4925 = vrsqrt.pop %v4861
        %v4926 = vrsqrt.pop %v4862
        %v4927 = vrsqrt.pop %v4863
        %v4928 = vrsqrt.pop %v4864
        %v4929 = vrsqrt.pop %v4865
        %v4930 = vrsqrt.pop %v4866
        %v4931 = vrsqrt.pop %v4867
        %v4932 = vrsqrt.pop %v4868
        %v4933 = vrsqrt.pop %v4869
        %v4934 = vrsqrt.pop %v4870
        %v4935 = vrsqrt.pop %v4871
        %v4936 = vrsqrt.pop %v4872
        %v4937 = vrsqrt.pop %v4873
        %v4938 = vrsqrt.pop %v4874
        %v4939 = vrsqrt.pop %v4875
        %v4940 = vrsqrt.pop %v4876
        %v4941 = vrsqrt.pop %v4877
        %v4942 = vrsqrt.pop %v4878
        %v4943 = vrsqrt.pop %v4879
        %v4944 = vrsqrt.pop %v4880
        %v4945 = vmul.f32 %v4753, %v4881
        %v4946 = vmul.f32 %v4754, %v4882
        %v4947 = vmul.f32 %v4755, %v4883
        %v4948 = vmul.f32 %v4756, %v4884
        %v4949 = vmul.f32 %v4757, %v4885
        %v4950 = vmul.f32 %v4758, %v4886
        %v4951 = vmul.f32 %v4759, %v4887
        %v4952 = vmul.f32 %v4760, %v4888
        %v4953 = vmul.f32 %v4761, %v4889
        %v4954 = vmul.f32 %v4762, %v4890
        %v4955 = vmul.f32 %v4763, %v4891
        %v4956 = vmul.f32 %v4764, %v4892
        %v4957 = vmul.f32 %v4765, %v4893
        %v4958 = vmul.f32 %v4766, %v4894
        %v4959 = vmul.f32 %v4767, %v4895
        %v4960 = vmul.f32 %v4768, %v4896
        %v4961 = vmul.f32 %v4769, %v4897
        %v4962 = vmul.f32 %v4770, %v4898
        %v4963 = vmul.f32 %v4771, %v4899
        %v4964 = vmul.f32 %v4772, %v4900
        %v4965 = vmul.f32 %v4773, %v4901
        %v4966 = vmul.f32 %v4774, %v4902
        %v4967 = vmul.f32 %v4775, %v4903
        %v4968 = vmul.f32 %v4776, %v4904
        %v4969 = vmul.f32 %v4777, %v4905
        %v4970 = vmul.f32 %v4778, %v4906
        %v4971 = vmul.f32 %v4779, %v4907
        %v4972 = vmul.f32 %v4780, %v4908
        %v4973 = vmul.f32 %v4781, %v4909
        %v4974 = vmul.f32 %v4782, %v4910
        %v4975 = vmul.f32 %v4783, %v4911
        %v4976 = vmul.f32 %v4784, %v4912
        %v4977 = vmul.f32 %v4785, %v4913
        %v4978 = vmul.f32 %v4786, %v4914
        %v4979 = vmul.f32 %v4787, %v4915
        %v4980 = vmul.f32 %v4788, %v4916
        %v4981 = vmul.f32 %v4789, %v4917
        %v4982 = vmul.f32 %v4790, %v4918
        %v4983 = vmul.f32 %v4791, %v4919
        %v4984 = vmul.f32 %v4792, %v4920
        %v4985 = vmul.f32 %v4793, %v4921
        %v4986 = vmul.f32 %v4794, %v4922
        %v4987 = vmul.f32 %v4795, %v4923
        %v4988 = vmul.f32 %v4796, %v4924
        %v4989 = vmul.f32 %v4797, %v4925
        %v4990 = vmul.f32 %v4798, %v4926
        %v4991 = vmul.f32 %v4799, %v4927
        %v4992 = vmul.f32 %v4800, %v4928
        %v4993 = vmul.f32 %v4801, %v4929
        %v4994 = vmul.f32 %v4802, %v4930
        %v4995 = vmul.f32 %v4803, %v4931
        %v4996 = vmul.f32 %v4804, %v4932
        %v4997 = vmul.f32 %v4805, %v4933
        %v4998 = vmul.f32 %v4806, %v4934
        %v4999 = vmul.f32 %v4807, %v4935
        %v5000 = vmul.f32 %v4808, %v4936
        %v5001 = vmul.f32 %v4809, %v4937
        %v5002 = vmul.f32 %v4810, %v4938
        %v5003 = vmul.f32 %v4811, %v4939
        %v5004 = vmul.f32 %v4812, %v4940
        %v5005 = vmul.f32 %v4813, %v4941
        %v5006 = vmul.f32 %v4814, %v4942
        %v5007 = vmul.f32 %v4815, %v4943
        %v5008 = vmul.f32 %v4816, %v4944
        %v5009 = vld [vmem:[%s258] sm:$0xff]
        %v5010 = vld [vmem:[%s258 + $0x8] sm:$0xff]
        %v5011 = vld [vmem:[%s258 + $0x10] sm:$0xff]
        %v5012 = vld [vmem:[%s258 + $0x18] sm:$0xff]
        %v5013 = vld [vmem:[%s258 + $0x20] sm:$0xff]
        %v5014 = vld [vmem:[%s258 + $0x28] sm:$0xff]
        %v5015 = vld [vmem:[%s258 + $0x30] sm:$0xff]
        %v5016 = vld [vmem:[%s258 + $0x38] sm:$0xff]
        %v5017 = vld [vmem:[%s258 + $0x40] sm:$0xff]
        %v5018 = vld [vmem:[%s258 + $0x48] sm:$0xff]
        %v5019 = vld [vmem:[%s258 + $0x50] sm:$0xff]
        %v5020 = vld [vmem:[%s258 + $0x58] sm:$0xff]
        %v5021 = vld [vmem:[%s258 + $0x60] sm:$0xff]
        %v5022 = vld [vmem:[%s258 + $0x68] sm:$0xff]
        %v5023 = vld [vmem:[%s258 + $0x70] sm:$0xff]
        %v5024 = vld [vmem:[%s258 + $0x78] sm:$0xff]
        %v5025 = vld [vmem:[%s258 + $0x80] sm:$0xff]
        %v5026 = vld [vmem:[%s258 + $0x88] sm:$0xff]
        %v5027 = vld [vmem:[%s258 + $0x90] sm:$0xff]
        %v5028 = vld [vmem:[%s258 + $0x98] sm:$0xff]
        %v5029 = vld [vmem:[%s258 + $0xa0] sm:$0xff]
        %v5030 = vld [vmem:[%s258 + $0xa8] sm:$0xff]
        %v5031 = vld [vmem:[%s258 + $0xb0] sm:$0xff]
        %v5032 = vld [vmem:[%s258 + $0xb8] sm:$0xff]
        %v5033 = vld [vmem:[%s258 + $0xc0] sm:$0xff]
        %v5034 = vld [vmem:[%s258 + $0xc8] sm:$0xff]
        %v5035 = vld [vmem:[%s258 + $0xd0] sm:$0xff]
        %v5036 = vld [vmem:[%s258 + $0xd8] sm:$0xff]
        %v5037 = vld [vmem:[%s258 + $0xe0] sm:$0xff]
        %v5038 = vld [vmem:[%s258 + $0xe8] sm:$0xff]
        %v5039 = vld [vmem:[%s258 + $0xf0] sm:$0xff]
        %v5040 = vld [vmem:[%s258 + $0xf8] sm:$0xff]
        %v5041 = vld [vmem:[%s258 + $0x100] sm:$0xff]
        %v5042 = vld [vmem:[%s258 + $0x108] sm:$0xff]
        %v5043 = vld [vmem:[%s258 + $0x110] sm:$0xff]
        %v5044 = vld [vmem:[%s258 + $0x118] sm:$0xff]
        %v5045 = vld [vmem:[%s258 + $0x120] sm:$0xff]
        %v5046 = vld [vmem:[%s258 + $0x128] sm:$0xff]
        %v5047 = vld [vmem:[%s258 + $0x130] sm:$0xff]
        %v5048 = vld [vmem:[%s258 + $0x138] sm:$0xff]
        %v5049 = vld [vmem:[%s258 + $0x140] sm:$0xff]
        %v5050 = vld [vmem:[%s258 + $0x148] sm:$0xff]
        %v5051 = vld [vmem:[%s258 + $0x150] sm:$0xff]
        %v5052 = vld [vmem:[%s258 + $0x158] sm:$0xff]
        %v5053 = vld [vmem:[%s258 + $0x160] sm:$0xff]
        %v5054 = vld [vmem:[%s258 + $0x168] sm:$0xff]
        %v5055 = vld [vmem:[%s258 + $0x170] sm:$0xff]
        %v5056 = vld [vmem:[%s258 + $0x178] sm:$0xff]
        %v5057 = vld [vmem:[%s258 + $0x180] sm:$0xff]
        %v5058 = vld [vmem:[%s258 + $0x188] sm:$0xff]
        %v5059 = vld [vmem:[%s258 + $0x190] sm:$0xff]
        %v5060 = vld [vmem:[%s258 + $0x198] sm:$0xff]
        %v5061 = vld [vmem:[%s258 + $0x1a0] sm:$0xff]
        %v5062 = vld [vmem:[%s258 + $0x1a8] sm:$0xff]
        %v5063 = vld [vmem:[%s258 + $0x1b0] sm:$0xff]
        %v5064 = vld [vmem:[%s258 + $0x1b8] sm:$0xff]
        %v5065 = vld [vmem:[%s258 + $0x1c0] sm:$0xff]
        %v5066 = vld [vmem:[%s258 + $0x1c8] sm:$0xff]
        %v5067 = vld [vmem:[%s258 + $0x1d0] sm:$0xff]
        %v5068 = vld [vmem:[%s258 + $0x1d8] sm:$0xff]
        %v5069 = vld [vmem:[%s258 + $0x1e0] sm:$0xff]
        %v5070 = vld [vmem:[%s258 + $0x1e8] sm:$0xff]
        %v5071 = vld [vmem:[%s258 + $0x1f0] sm:$0xff]
        %v5072 = vld [vmem:[%s258 + $0x1f8] sm:$0xff]
        %v5073 = vmul.f32 %v3409, %v4945
        %v5074 = vmul.f32 %v3410, %v4946
        %v5075 = vmul.f32 %v3411, %v4947
        %v5076 = vmul.f32 %v3412, %v4948
        %v5077 = vmul.f32 %v3413, %v4949
        %v5078 = vmul.f32 %v3414, %v4950
        %v5079 = vmul.f32 %v3415, %v4951
        %v5080 = vmul.f32 %v3416, %v4952
        %v5081 = vmul.f32 %v3417, %v4953
        %v5082 = vmul.f32 %v3418, %v4954
        %v5083 = vmul.f32 %v3419, %v4955
        %v5084 = vmul.f32 %v3420, %v4956
        %v5085 = vmul.f32 %v3421, %v4957
        %v5086 = vmul.f32 %v3422, %v4958
        %v5087 = vmul.f32 %v3423, %v4959
        %v5088 = vmul.f32 %v3424, %v4960
        %v5089 = vmul.f32 %v3425, %v4961
        %v5090 = vmul.f32 %v3426, %v4962
        %v5091 = vmul.f32 %v3427, %v4963
        %v5092 = vmul.f32 %v3428, %v4964
        %v5093 = vmul.f32 %v3429, %v4965
        %v5094 = vmul.f32 %v3430, %v4966
        %v5095 = vmul.f32 %v3431, %v4967
        %v5096 = vmul.f32 %v3432, %v4968
        %v5097 = vmul.f32 %v3433, %v4969
        %v5098 = vmul.f32 %v3434, %v4970
        %v5099 = vmul.f32 %v3435, %v4971
        %v5100 = vmul.f32 %v3436, %v4972
        %v5101 = vmul.f32 %v3437, %v4973
        %v5102 = vmul.f32 %v3438, %v4974
        %v5103 = vmul.f32 %v3439, %v4975
        %v5104 = vmul.f32 %v3440, %v4976
        %v5105 = vmul.f32 %v3441, %v4977
        %v5106 = vmul.f32 %v3442, %v4978
        %v5107 = vmul.f32 %v3443, %v4979
        %v5108 = vmul.f32 %v3444, %v4980
        %v5109 = vmul.f32 %v3445, %v4981
        %v5110 = vmul.f32 %v3446, %v4982
        %v5111 = vmul.f32 %v3447, %v4983
        %v5112 = vmul.f32 %v3448, %v4984
        %v5113 = vmul.f32 %v3449, %v4985
        %v5114 = vmul.f32 %v3450, %v4986
        %v5115 = vmul.f32 %v3451, %v4987
        %v5116 = vmul.f32 %v3452, %v4988
        %v5117 = vmul.f32 %v3453, %v4989
        %v5118 = vmul.f32 %v3454, %v4990
        %v5119 = vmul.f32 %v3455, %v4991
        %v5120 = vmul.f32 %v3456, %v4992
        %v5121 = vmul.f32 %v3457, %v4993
        %v5122 = vmul.f32 %v3458, %v4994
        %v5123 = vmul.f32 %v3459, %v4995
        %v5124 = vmul.f32 %v3460, %v4996
        %v5125 = vmul.f32 %v3461, %v4997
        %v5126 = vmul.f32 %v3462, %v4998
        %v5127 = vmul.f32 %v3463, %v4999
        %v5128 = vmul.f32 %v3464, %v5000
        %v5129 = vmul.f32 %v3465, %v5001
        %v5130 = vmul.f32 %v3466, %v5002
        %v5131 = vmul.f32 %v3467, %v5003
        %v5132 = vmul.f32 %v3468, %v5004
        %v5133 = vmul.f32 %v3469, %v5005
        %v5134 = vmul.f32 %v3470, %v5006
        %v5135 = vmul.f32 %v3471, %v5007
        %v5136 = vmul.f32 %v3472, %v5008
        %v5137 = vsub.f32 %v5009, %v5073
        %v5138 = vsub.f32 %v5010, %v5074
        %v5139 = vsub.f32 %v5011, %v5075
        %v5140 = vsub.f32 %v5012, %v5076
        %v5141 = vsub.f32 %v5013, %v5077
        %v5142 = vsub.f32 %v5014, %v5078
        %v5143 = vsub.f32 %v5015, %v5079
        %v5144 = vsub.f32 %v5016, %v5080
        %v5145 = vsub.f32 %v5017, %v5081
        %v5146 = vsub.f32 %v5018, %v5082
        %v5147 = vsub.f32 %v5019, %v5083
        %v5148 = vsub.f32 %v5020, %v5084
        %v5149 = vsub.f32 %v5021, %v5085
        %v5150 = vsub.f32 %v5022, %v5086
        %v5151 = vsub.f32 %v5023, %v5087
        %v5152 = vsub.f32 %v5024, %v5088
        %v5153 = vsub.f32 %v5025, %v5089
        %v5154 = vsub.f32 %v5026, %v5090
        %v5155 = vsub.f32 %v5027, %v5091
        %v5156 = vsub.f32 %v5028, %v5092
        %v5157 = vsub.f32 %v5029, %v5093
        %v5158 = vsub.f32 %v5030, %v5094
        %v5159 = vsub.f32 %v5031, %v5095
        %v5160 = vsub.f32 %v5032, %v5096
        %v5161 = vsub.f32 %v5033, %v5097
        %v5162 = vsub.f32 %v5034, %v5098
        %v5163 = vsub.f32 %v5035, %v5099
        %v5164 = vsub.f32 %v5036, %v5100
        %v5165 = vsub.f32 %v5037, %v5101
        %v5166 = vsub.f32 %v5038, %v5102
        %v5167 = vsub.f32 %v5039, %v5103
        %v5168 = vsub.f32 %v5040, %v5104
        %v5169 = vsub.f32 %v5041, %v5105
        %v5170 = vsub.f32 %v5042, %v5106
        %v5171 = vsub.f32 %v5043, %v5107
        %v5172 = vsub.f32 %v5044, %v5108
        %v5173 = vsub.f32 %v5045, %v5109
        %v5174 = vsub.f32 %v5046, %v5110
        %v5175 = vsub.f32 %v5047, %v5111
        %v5176 = vsub.f32 %v5048, %v5112
        %v5177 = vsub.f32 %v5049, %v5113
        %v5178 = vsub.f32 %v5050, %v5114
        %v5179 = vsub.f32 %v5051, %v5115
        %v5180 = vsub.f32 %v5052, %v5116
        %v5181 = vsub.f32 %v5053, %v5117
        %v5182 = vsub.f32 %v5054, %v5118
        %v5183 = vsub.f32 %v5055, %v5119
        %v5184 = vsub.f32 %v5056, %v5120
        %v5185 = vsub.f32 %v5057, %v5121
        %v5186 = vsub.f32 %v5058, %v5122
        %v5187 = vsub.f32 %v5059, %v5123
        %v5188 = vsub.f32 %v5060, %v5124
        %v5189 = vsub.f32 %v5061, %v5125
        %v5190 = vsub.f32 %v5062, %v5126
        %v5191 = vsub.f32 %v5063, %v5127
        %v5192 = vsub.f32 %v5064, %v5128
        %v5193 = vsub.f32 %v5065, %v5129
        %v5194 = vsub.f32 %v5066, %v5130
        %v5195 = vsub.f32 %v5067, %v5131
        %v5196 = vsub.f32 %v5068, %v5132
        %v5197 = vsub.f32 %v5069, %v5133
        %v5198 = vsub.f32 %v5070, %v5134
        %v5199 = vsub.f32 %v5071, %v5135
        %v5200 = vsub.f32 %v5072, %v5136
        %5202 = vset.pattern.permute.xlu0 0
        %5203 = vperm.xlu0 %5202, %v4945
        %v5204 = vpop.permute.xlu0 %5203
        %5207 = vset.pattern.permute.xlu0 0
        %5208 = vperm.xlu0 %5207, %v4946
        %v5209 = vpop.permute.xlu0 %5208
        %5212 = vset.pattern.permute.xlu0 0
        %5213 = vperm.xlu0 %5212, %v4947
        %v5214 = vpop.permute.xlu0 %5213
        %5217 = vset.pattern.permute.xlu0 0
        %5218 = vperm.xlu0 %5217, %v4948
        %v5219 = vpop.permute.xlu0 %5218
        %5222 = vset.pattern.permute.xlu0 0
        %5223 = vperm.xlu0 %5222, %v4949
        %v5224 = vpop.permute.xlu0 %5223
        %5227 = vset.pattern.permute.xlu0 0
        %5228 = vperm.xlu0 %5227, %v4950
        %v5229 = vpop.permute.xlu0 %5228
        %5232 = vset.pattern.permute.xlu0 0
        %5233 = vperm.xlu0 %5232, %v4951
        %v5234 = vpop.permute.xlu0 %5233
        %5237 = vset.pattern.permute.xlu0 0
        %5238 = vperm.xlu0 %5237, %v4952
        %v5239 = vpop.permute.xlu0 %5238
        %5242 = vset.pattern.permute.xlu0 0
        %5243 = vperm.xlu0 %5242, %v4953
        %v5244 = vpop.permute.xlu0 %5243
        %5247 = vset.pattern.permute.xlu0 0
        %5248 = vperm.xlu0 %5247, %v4954
        %v5249 = vpop.permute.xlu0 %5248
        %5252 = vset.pattern.permute.xlu0 0
        %5253 = vperm.xlu0 %5252, %v4955
        %v5254 = vpop.permute.xlu0 %5253
        %5257 = vset.pattern.permute.xlu0 0
        %5258 = vperm.xlu0 %5257, %v4956
        %v5259 = vpop.permute.xlu0 %5258
        %5262 = vset.pattern.permute.xlu0 0
        %5263 = vperm.xlu0 %5262, %v4957
        %v5264 = vpop.permute.xlu0 %5263
        %5267 = vset.pattern.permute.xlu0 0
        %5268 = vperm.xlu0 %5267, %v4958
        %v5269 = vpop.permute.xlu0 %5268
        %5272 = vset.pattern.permute.xlu0 0
        %5273 = vperm.xlu0 %5272, %v4959
        %v5274 = vpop.permute.xlu0 %5273
        %5277 = vset.pattern.permute.xlu0 0
        %5278 = vperm.xlu0 %5277, %v4960
        %v5279 = vpop.permute.xlu0 %5278
        %5282 = vset.pattern.permute.xlu0 0
        %5283 = vperm.xlu0 %5282, %v4961
        %v5284 = vpop.permute.xlu0 %5283
        %5287 = vset.pattern.permute.xlu0 0
        %5288 = vperm.xlu0 %5287, %v4962
        %v5289 = vpop.permute.xlu0 %5288
        %5292 = vset.pattern.permute.xlu0 0
        %5293 = vperm.xlu0 %5292, %v4963
        %v5294 = vpop.permute.xlu0 %5293
        %5297 = vset.pattern.permute.xlu0 0
        %5298 = vperm.xlu0 %5297, %v4964
        %v5299 = vpop.permute.xlu0 %5298
        %5302 = vset.pattern.permute.xlu0 0
        %5303 = vperm.xlu0 %5302, %v4965
        %v5304 = vpop.permute.xlu0 %5303
        %5307 = vset.pattern.permute.xlu0 0
        %5308 = vperm.xlu0 %5307, %v4966
        %v5309 = vpop.permute.xlu0 %5308
        %5312 = vset.pattern.permute.xlu0 0
        %5313 = vperm.xlu0 %5312, %v4967
        %v5314 = vpop.permute.xlu0 %5313
        %5317 = vset.pattern.permute.xlu0 0
        %5318 = vperm.xlu0 %5317, %v4968
        %v5319 = vpop.permute.xlu0 %5318
        %5322 = vset.pattern.permute.xlu0 0
        %5323 = vperm.xlu0 %5322, %v4969
        %v5324 = vpop.permute.xlu0 %5323
        %5327 = vset.pattern.permute.xlu0 0
        %5328 = vperm.xlu0 %5327, %v4970
        %v5329 = vpop.permute.xlu0 %5328
        %5332 = vset.pattern.permute.xlu0 0
        %5333 = vperm.xlu0 %5332, %v4971
        %v5334 = vpop.permute.xlu0 %5333
        %5337 = vset.pattern.permute.xlu0 0
        %5338 = vperm.xlu0 %5337, %v4972
        %v5339 = vpop.permute.xlu0 %5338
        %5342 = vset.pattern.permute.xlu0 0
        %5343 = vperm.xlu0 %5342, %v4973
        %v5344 = vpop.permute.xlu0 %5343
        %5347 = vset.pattern.permute.xlu0 0
        %5348 = vperm.xlu0 %5347, %v4974
        %v5349 = vpop.permute.xlu0 %5348
        %5352 = vset.pattern.permute.xlu0 0
        %5353 = vperm.xlu0 %5352, %v4975
        %v5354 = vpop.permute.xlu0 %5353
        %5357 = vset.pattern.permute.xlu0 0
        %5358 = vperm.xlu0 %5357, %v4976
        %v5359 = vpop.permute.xlu0 %5358
        %5362 = vset.pattern.permute.xlu0 0
        %5363 = vperm.xlu0 %5362, %v4977
        %v5364 = vpop.permute.xlu0 %5363
        %5367 = vset.pattern.permute.xlu0 0
        %5368 = vperm.xlu0 %5367, %v4978
        %v5369 = vpop.permute.xlu0 %5368
        %5372 = vset.pattern.permute.xlu0 0
        %5373 = vperm.xlu0 %5372, %v4979
        %v5374 = vpop.permute.xlu0 %5373
        %5377 = vset.pattern.permute.xlu0 0
        %5378 = vperm.xlu0 %5377, %v4980
        %v5379 = vpop.permute.xlu0 %5378
        %5382 = vset.pattern.permute.xlu0 0
        %5383 = vperm.xlu0 %5382, %v4981
        %v5384 = vpop.permute.xlu0 %5383
        %5387 = vset.pattern.permute.xlu0 0
        %5388 = vperm.xlu0 %5387, %v4982
        %v5389 = vpop.permute.xlu0 %5388
        %5392 = vset.pattern.permute.xlu0 0
        %5393 = vperm.xlu0 %5392, %v4983
        %v5394 = vpop.permute.xlu0 %5393
        %5397 = vset.pattern.permute.xlu0 0
        %5398 = vperm.xlu0 %5397, %v4984
        %v5399 = vpop.permute.xlu0 %5398
        %5402 = vset.pattern.permute.xlu0 0
        %5403 = vperm.xlu0 %5402, %v4985
        %v5404 = vpop.permute.xlu0 %5403
        %5407 = vset.pattern.permute.xlu0 0
        %5408 = vperm.xlu0 %5407, %v4986
        %v5409 = vpop.permute.xlu0 %5408
        %5412 = vset.pattern.permute.xlu0 0
        %5413 = vperm.xlu0 %5412, %v4987
        %v5414 = vpop.permute.xlu0 %5413
        %5417 = vset.pattern.permute.xlu0 0
        %5418 = vperm.xlu0 %5417, %v4988
        %v5419 = vpop.permute.xlu0 %5418
        %5422 = vset.pattern.permute.xlu0 0
        %5423 = vperm.xlu0 %5422, %v4989
        %v5424 = vpop.permute.xlu0 %5423
        %5427 = vset.pattern.permute.xlu0 0
        %5428 = vperm.xlu0 %5427, %v4990
        %v5429 = vpop.permute.xlu0 %5428
        %5432 = vset.pattern.permute.xlu0 0
        %5433 = vperm.xlu0 %5432, %v4991
        %v5434 = vpop.permute.xlu0 %5433
        %5437 = vset.pattern.permute.xlu0 0
        %5438 = vperm.xlu0 %5437, %v4992
        %v5439 = vpop.permute.xlu0 %5438
        %5442 = vset.pattern.permute.xlu0 0
        %5443 = vperm.xlu0 %5442, %v4993
        %v5444 = vpop.permute.xlu0 %5443
        %5447 = vset.pattern.permute.xlu0 0
        %5448 = vperm.xlu0 %5447, %v4994
        %v5449 = vpop.permute.xlu0 %5448
        %5452 = vset.pattern.permute.xlu0 0
        %5453 = vperm.xlu0 %5452, %v4995
        %v5454 = vpop.permute.xlu0 %5453
        %5457 = vset.pattern.permute.xlu0 0
        %5458 = vperm.xlu0 %5457, %v4996
        %v5459 = vpop.permute.xlu0 %5458
        %5462 = vset.pattern.permute.xlu0 0
        %5463 = vperm.xlu0 %5462, %v4997
        %v5464 = vpop.permute.xlu0 %5463
        %5467 = vset.pattern.permute.xlu0 0
        %5468 = vperm.xlu0 %5467, %v4998
        %v5469 = vpop.permute.xlu0 %5468
        %5472 = vset.pattern.permute.xlu0 0
        %5473 = vperm.xlu0 %5472, %v4999
        %v5474 = vpop.permute.xlu0 %5473
        %5477 = vset.pattern.permute.xlu0 0
        %5478 = vperm.xlu0 %5477, %v5000
        %v5479 = vpop.permute.xlu0 %5478
        %5482 = vset.pattern.permute.xlu0 0
        %5483 = vperm.xlu0 %5482, %v5001
        %v5484 = vpop.permute.xlu0 %5483
        %5487 = vset.pattern.permute.xlu0 0
        %5488 = vperm.xlu0 %5487, %v5002
        %v5489 = vpop.permute.xlu0 %5488
        %5492 = vset.pattern.permute.xlu0 0
        %5493 = vperm.xlu0 %5492, %v5003
        %v5494 = vpop.permute.xlu0 %5493
        %5497 = vset.pattern.permute.xlu0 0
        %5498 = vperm.xlu0 %5497, %v5004
        %v5499 = vpop.permute.xlu0 %5498
        %5502 = vset.pattern.permute.xlu0 0
        %5503 = vperm.xlu0 %5502, %v5005
        %v5504 = vpop.permute.xlu0 %5503
        %5507 = vset.pattern.permute.xlu0 0
        %5508 = vperm.xlu0 %5507, %v5006
        %v5509 = vpop.permute.xlu0 %5508
        %5512 = vset.pattern.permute.xlu0 0
        %5513 = vperm.xlu0 %5512, %v5007
        %v5514 = vpop.permute.xlu0 %5513
        %5517 = vset.pattern.permute.xlu0 0
        %5518 = vperm.xlu0 %5517, %v5008
        %v5519 = vpop.permute.xlu0 %5518
        %v5521 = vmul.f32 %v1519, %v5204
        %v5522 = vmul.f32 %v1521, %v5204
        %v5523 = vmul.f32 %v1872, %v5204
        %v5524 = vmul.f32 %v1874, %v5204
        %v5525 = vmul.f32 %v2225, %v5204
        %v5526 = vmul.f32 %v2227, %v5204
        %v5527 = vmul.f32 %v2578, %v5204
        %v5528 = vmul.f32 %v1523, %v5209
        %v5529 = vmul.f32 %v1525, %v5209
        %v5530 = vmul.f32 %v1876, %v5209
        %v5531 = vmul.f32 %v1878, %v5209
        %v5532 = vmul.f32 %v2229, %v5209
        %v5533 = vmul.f32 %v2231, %v5209
        %v5534 = vmul.f32 %v2581, %v5209
        %v5535 = vmul.f32 %v1529, %v5214
        %v5536 = vmul.f32 %v1531, %v5214
        %v5537 = vmul.f32 %v1882, %v5214
        %v5538 = vmul.f32 %v1884, %v5214
        %v5539 = vmul.f32 %v2235, %v5214
        %v5540 = vmul.f32 %v2237, %v5214
        %v5541 = vmul.f32 %v2586, %v5214
        %v5542 = vmul.f32 %v1533, %v5219
        %v5543 = vmul.f32 %v1535, %v5219
        %v5544 = vmul.f32 %v1886, %v5219
        %v5545 = vmul.f32 %v1888, %v5219
        %v5546 = vmul.f32 %v2239, %v5219
        %v5547 = vmul.f32 %v2241, %v5219
        %v5548 = vmul.f32 %v2589, %v5219
        %v5549 = vmul.f32 %v1539, %v5224
        %v5550 = vmul.f32 %v1541, %v5224
        %v5551 = vmul.f32 %v1892, %v5224
        %v5552 = vmul.f32 %v1894, %v5224
        %v5553 = vmul.f32 %v2245, %v5224
        %v5554 = vmul.f32 %v2247, %v5224
        %v5555 = vmul.f32 %v2594, %v5224
        %v5556 = vmul.f32 %v1543, %v5229
        %v5557 = vmul.f32 %v1545, %v5229
        %v5558 = vmul.f32 %v1896, %v5229
        %v5559 = vmul.f32 %v1898, %v5229
        %v5560 = vmul.f32 %v2249, %v5229
        %v5561 = vmul.f32 %v2251, %v5229
        %v5562 = vmul.f32 %v2597, %v5229
        %v5563 = vmul.f32 %v1549, %v5234
        %v5564 = vmul.f32 %v1551, %v5234
        %v5565 = vmul.f32 %v1902, %v5234
        %v5566 = vmul.f32 %v1904, %v5234
        %v5567 = vmul.f32 %v2255, %v5234
        %v5568 = vmul.f32 %v2257, %v5234
        %v5569 = vmul.f32 %v2602, %v5234
        %v5570 = vmul.f32 %v1553, %v5239
        %v5571 = vmul.f32 %v1555, %v5239
        %v5572 = vmul.f32 %v1906, %v5239
        %v5573 = vmul.f32 %v1908, %v5239
        %v5574 = vmul.f32 %v2259, %v5239
        %v5575 = vmul.f32 %v2261, %v5239
        %v5576 = vmul.f32 %v2605, %v5239
        %v5577 = vmul.f32 %v1559, %v5244
        %v5578 = vmul.f32 %v1561, %v5244
        %v5579 = vmul.f32 %v1912, %v5244
        %v5580 = vmul.f32 %v1914, %v5244
        %v5581 = vmul.f32 %v2265, %v5244
        %v5582 = vmul.f32 %v2267, %v5244
        %v5583 = vmul.f32 %v2610, %v5244
        %v5584 = vmul.f32 %v1563, %v5249
        %v5585 = vmul.f32 %v1565, %v5249
        %v5586 = vmul.f32 %v1916, %v5249
        %v5587 = vmul.f32 %v1918, %v5249
        %v5588 = vmul.f32 %v2269, %v5249
        %v5589 = vmul.f32 %v2271, %v5249
        %v5590 = vmul.f32 %v2613, %v5249
        %v5591 = vmul.f32 %v1569, %v5254
        %v5592 = vmul.f32 %v1571, %v5254
        %v5593 = vmul.f32 %v1922, %v5254
        %v5594 = vmul.f32 %v1924, %v5254
        %v5595 = vmul.f32 %v2275, %v5254
        %v5596 = vmul.f32 %v2277, %v5254
        %v5597 = vmul.f32 %v2618, %v5254
        %v5598 = vmul.f32 %v1573, %v5259
        %v5599 = vmul.f32 %v1575, %v5259
        %v5600 = vmul.f32 %v1926, %v5259
        %v5601 = vmul.f32 %v1928, %v5259
        %v5602 = vmul.f32 %v2279, %v5259
        %v5603 = vmul.f32 %v2281, %v5259
        %v5604 = vmul.f32 %v2621, %v5259
        %v5605 = vmul.f32 %v1579, %v5264
        %v5606 = vmul.f32 %v1581, %v5264
        %v5607 = vmul.f32 %v1932, %v5264
        %v5608 = vmul.f32 %v1934, %v5264
        %v5609 = vmul.f32 %v2285, %v5264
        %v5610 = vmul.f32 %v2287, %v5264
        %v5611 = vmul.f32 %v2626, %v5264
        %v5612 = vmul.f32 %v1583, %v5269
        %v5613 = vmul.f32 %v1585, %v5269
        %v5614 = vmul.f32 %v1936, %v5269
        %v5615 = vmul.f32 %v1938, %v5269
        %v5616 = vmul.f32 %v2289, %v5269
        %v5617 = vmul.f32 %v2291, %v5269
        %v5618 = vmul.f32 %v2629, %v5269
        %v5619 = vmul.f32 %v1589, %v5274
        %v5620 = vmul.f32 %v1591, %v5274
        %v5621 = vmul.f32 %v1942, %v5274
        %v5622 = vmul.f32 %v1944, %v5274
        %v5623 = vmul.f32 %v2295, %v5274
        %v5624 = vmul.f32 %v2297, %v5274
        %v5625 = vmul.f32 %v2634, %v5274
        %v5626 = vmul.f32 %v1593, %v5279
        %v5627 = vmul.f32 %v1595, %v5279
        %v5628 = vmul.f32 %v1946, %v5279
        %v5629 = vmul.f32 %v1948, %v5279
        %v5630 = vmul.f32 %v2299, %v5279
        %v5631 = vmul.f32 %v2301, %v5279
        %v5632 = vmul.f32 %v2637, %v5279
        %v5633 = vmul.f32 %v1599, %v5284
        %v5634 = vmul.f32 %v1601, %v5284
        %v5635 = vmul.f32 %v1952, %v5284
        %v5636 = vmul.f32 %v1954, %v5284
        %v5637 = vmul.f32 %v2305, %v5284
        %v5638 = vmul.f32 %v2307, %v5284
        %v5639 = vmul.f32 %v2642, %v5284
        %v5640 = vmul.f32 %v1603, %v5289
        %v5641 = vmul.f32 %v1605, %v5289
        %v5642 = vmul.f32 %v1956, %v5289
        %v5643 = vmul.f32 %v1958, %v5289
        %v5644 = vmul.f32 %v2309, %v5289
        %v5645 = vmul.f32 %v2311, %v5289
        %v5646 = vmul.f32 %v2645, %v5289
        %v5647 = vmul.f32 %v1609, %v5294
        %v5648 = vmul.f32 %v1611, %v5294
        %v5649 = vmul.f32 %v1962, %v5294
        %v5650 = vmul.f32 %v1964, %v5294
        %v5651 = vmul.f32 %v2315, %v5294
        %v5652 = vmul.f32 %v2317, %v5294
        %v5653 = vmul.f32 %v2650, %v5294
        %v5654 = vmul.f32 %v1613, %v5299
        %v5655 = vmul.f32 %v1615, %v5299
        %v5656 = vmul.f32 %v1966, %v5299
        %v5657 = vmul.f32 %v1968, %v5299
        %v5658 = vmul.f32 %v2319, %v5299
        %v5659 = vmul.f32 %v2321, %v5299
        %v5660 = vmul.f32 %v2653, %v5299
        %v5661 = vmul.f32 %v1619, %v5304
        %v5662 = vmul.f32 %v1621, %v5304
        %v5663 = vmul.f32 %v1972, %v5304
        %v5664 = vmul.f32 %v1974, %v5304
        %v5665 = vmul.f32 %v2325, %v5304
        %v5666 = vmul.f32 %v2327, %v5304
        %v5667 = vmul.f32 %v2658, %v5304
        %v5668 = vmul.f32 %v1623, %v5309
        %v5669 = vmul.f32 %v1625, %v5309
        %v5670 = vmul.f32 %v1976, %v5309
        %v5671 = vmul.f32 %v1978, %v5309
        %v5672 = vmul.f32 %v2329, %v5309
        %v5673 = vmul.f32 %v2331, %v5309
        %v5674 = vmul.f32 %v2661, %v5309
        %v5675 = vmul.f32 %v1629, %v5314
        %v5676 = vmul.f32 %v1631, %v5314
        %v5677 = vmul.f32 %v1982, %v5314
        %v5678 = vmul.f32 %v1984, %v5314
        %v5679 = vmul.f32 %v2335, %v5314
        %v5680 = vmul.f32 %v2337, %v5314
        %v5681 = vmul.f32 %v2666, %v5314
        %v5682 = vmul.f32 %v1633, %v5319
        %v5683 = vmul.f32 %v1635, %v5319
        %v5684 = vmul.f32 %v1986, %v5319
        %v5685 = vmul.f32 %v1988, %v5319
        %v5686 = vmul.f32 %v2339, %v5319
        %v5687 = vmul.f32 %v2341, %v5319
        %v5688 = vmul.f32 %v2669, %v5319
        %v5689 = vmul.f32 %v1639, %v5324
        %v5690 = vmul.f32 %v1641, %v5324
        %v5691 = vmul.f32 %v1992, %v5324
        %v5692 = vmul.f32 %v1994, %v5324
        %v5693 = vmul.f32 %v2345, %v5324
        %v5694 = vmul.f32 %v2347, %v5324
        %v5695 = vmul.f32 %v2674, %v5324
        %v5696 = vmul.f32 %v1643, %v5329
        %v5697 = vmul.f32 %v1645, %v5329
        %v5698 = vmul.f32 %v1996, %v5329
        %v5699 = vmul.f32 %v1998, %v5329
        %v5700 = vmul.f32 %v2349, %v5329
        %v5701 = vmul.f32 %v2351, %v5329
        %v5702 = vmul.f32 %v2677, %v5329
        %v5703 = vmul.f32 %v1649, %v5334
        %v5704 = vmul.f32 %v1651, %v5334
        %v5705 = vmul.f32 %v2002, %v5334
        %v5706 = vmul.f32 %v2004, %v5334
        %v5707 = vmul.f32 %v2355, %v5334
        %v5708 = vmul.f32 %v2357, %v5334
        %v5709 = vmul.f32 %v2682, %v5334
        %v5710 = vmul.f32 %v1653, %v5339
        %v5711 = vmul.f32 %v1655, %v5339
        %v5712 = vmul.f32 %v2006, %v5339
        %v5713 = vmul.f32 %v2008, %v5339
        %v5714 = vmul.f32 %v2359, %v5339
        %v5715 = vmul.f32 %v2361, %v5339
        %v5716 = vmul.f32 %v2685, %v5339
        %v5717 = vmul.f32 %v1659, %v5344
        %v5718 = vmul.f32 %v1661, %v5344
        %v5719 = vmul.f32 %v2012, %v5344
        %v5720 = vmul.f32 %v2014, %v5344
        %v5721 = vmul.f32 %v2365, %v5344
        %v5722 = vmul.f32 %v2367, %v5344
        %v5723 = vmul.f32 %v2690, %v5344
        %v5724 = vmul.f32 %v1663, %v5349
        %v5725 = vmul.f32 %v1665, %v5349
        %v5726 = vmul.f32 %v2016, %v5349
        %v5727 = vmul.f32 %v2018, %v5349
        %v5728 = vmul.f32 %v2369, %v5349
        %v5729 = vmul.f32 %v2371, %v5349
        %v5730 = vmul.f32 %v2693, %v5349
        %v5731 = vmul.f32 %v1669, %v5354
        %v5732 = vmul.f32 %v1671, %v5354
        %v5733 = vmul.f32 %v2022, %v5354
        %v5734 = vmul.f32 %v2024, %v5354
        %v5735 = vmul.f32 %v2375, %v5354
        %v5736 = vmul.f32 %v2377, %v5354
        %v5737 = vmul.f32 %v2698, %v5354
        %v5738 = vmul.f32 %v1673, %v5359
        %v5739 = vmul.f32 %v1675, %v5359
        %v5740 = vmul.f32 %v2026, %v5359
        %v5741 = vmul.f32 %v2028, %v5359
        %v5742 = vmul.f32 %v2379, %v5359
        %v5743 = vmul.f32 %v2381, %v5359
        %v5744 = vmul.f32 %v2701, %v5359
        %v5745 = vmul.f32 %v1679, %v5364
        %v5746 = vmul.f32 %v1681, %v5364
        %v5747 = vmul.f32 %v2032, %v5364
        %v5748 = vmul.f32 %v2034, %v5364
        %v5749 = vmul.f32 %v2385, %v5364
        %v5750 = vmul.f32 %v2387, %v5364
        %v5751 = vmul.f32 %v2706, %v5364
        %v5752 = vmul.f32 %v1683, %v5369
        %v5753 = vmul.f32 %v1685, %v5369
        %v5754 = vmul.f32 %v2036, %v5369
        %v5755 = vmul.f32 %v2038, %v5369
        %v5756 = vmul.f32 %v2389, %v5369
        %v5757 = vmul.f32 %v2391, %v5369
        %v5758 = vmul.f32 %v2709, %v5369
        %v5759 = vmul.f32 %v1689, %v5374
        %v5760 = vmul.f32 %v1691, %v5374
        %v5761 = vmul.f32 %v2042, %v5374
        %v5762 = vmul.f32 %v2044, %v5374
        %v5763 = vmul.f32 %v2395, %v5374
        %v5764 = vmul.f32 %v2397, %v5374
        %v5765 = vmul.f32 %v2714, %v5374
        %v5766 = vmul.f32 %v1693, %v5379
        %v5767 = vmul.f32 %v1695, %v5379
        %v5768 = vmul.f32 %v2046, %v5379
        %v5769 = vmul.f32 %v2048, %v5379
        %v5770 = vmul.f32 %v2399, %v5379
        %v5771 = vmul.f32 %v2401, %v5379
        %v5772 = vmul.f32 %v2717, %v5379
        %v5773 = vmul.f32 %v1699, %v5384
        %v5774 = vmul.f32 %v1701, %v5384
        %v5775 = vmul.f32 %v2052, %v5384
        %v5776 = vmul.f32 %v2054, %v5384
        %v5777 = vmul.f32 %v2405, %v5384
        %v5778 = vmul.f32 %v2407, %v5384
        %v5779 = vmul.f32 %v2722, %v5384
        %v5780 = vmul.f32 %v1703, %v5389
        %v5781 = vmul.f32 %v1705, %v5389
        %v5782 = vmul.f32 %v2056, %v5389
        %v5783 = vmul.f32 %v2058, %v5389
        %v5784 = vmul.f32 %v2409, %v5389
        %v5785 = vmul.f32 %v2411, %v5389
        %v5786 = vmul.f32 %v2725, %v5389
        %v5787 = vmul.f32 %v1709, %v5394
        %v5788 = vmul.f32 %v1711, %v5394
        %v5789 = vmul.f32 %v2062, %v5394
        %v5790 = vmul.f32 %v2064, %v5394
        %v5791 = vmul.f32 %v2415, %v5394
        %v5792 = vmul.f32 %v2417, %v5394
        %v5793 = vmul.f32 %v2730, %v5394
        %v5794 = vmul.f32 %v1713, %v5399
        %v5795 = vmul.f32 %v1715, %v5399
        %v5796 = vmul.f32 %v2066, %v5399
        %v5797 = vmul.f32 %v2068, %v5399
        %v5798 = vmul.f32 %v2419, %v5399
        %v5799 = vmul.f32 %v2421, %v5399
        %v5800 = vmul.f32 %v2733, %v5399
        %v5801 = vmul.f32 %v1719, %v5404
        %v5802 = vmul.f32 %v1721, %v5404
        %v5803 = vmul.f32 %v2072, %v5404
        %v5804 = vmul.f32 %v2074, %v5404
        %v5805 = vmul.f32 %v2425, %v5404
        %v5806 = vmul.f32 %v2427, %v5404
        %v5807 = vmul.f32 %v2738, %v5404
        %v5808 = vmul.f32 %v1723, %v5409
        %v5809 = vmul.f32 %v1725, %v5409
        %v5810 = vmul.f32 %v2076, %v5409
        %v5811 = vmul.f32 %v2078, %v5409
        %v5812 = vmul.f32 %v2429, %v5409
        %v5813 = vmul.f32 %v2431, %v5409
        %v5814 = vmul.f32 %v2741, %v5409
        %v5815 = vmul.f32 %v1729, %v5414
        %v5816 = vmul.f32 %v1731, %v5414
        %v5817 = vmul.f32 %v2082, %v5414
        %v5818 = vmul.f32 %v2084, %v5414
        %v5819 = vmul.f32 %v2435, %v5414
        %v5820 = vmul.f32 %v2437, %v5414
        %v5821 = vmul.f32 %v2746, %v5414
        %v5822 = vmul.f32 %v1733, %v5419
        %v5823 = vmul.f32 %v1735, %v5419
        %v5824 = vmul.f32 %v2086, %v5419
        %v5825 = vmul.f32 %v2088, %v5419
        %v5826 = vmul.f32 %v2439, %v5419
        %v5827 = vmul.f32 %v2441, %v5419
        %v5828 = vmul.f32 %v2749, %v5419
        %v5829 = vmul.f32 %v1739, %v5424
        %v5830 = vmul.f32 %v1741, %v5424
        %v5831 = vmul.f32 %v2092, %v5424
        %v5832 = vmul.f32 %v2094, %v5424
        %v5833 = vmul.f32 %v2445, %v5424
        %v5834 = vmul.f32 %v2447, %v5424
        %v5835 = vmul.f32 %v2754, %v5424
        %v5836 = vmul.f32 %v1743, %v5429
        %v5837 = vmul.f32 %v1745, %v5429
        %v5838 = vmul.f32 %v2096, %v5429
        %v5839 = vmul.f32 %v2098, %v5429
        %v5840 = vmul.f32 %v2449, %v5429
        %v5841 = vmul.f32 %v2451, %v5429
        %v5842 = vmul.f32 %v2757, %v5429
        %v5843 = vmul.f32 %v1749, %v5434
        %v5844 = vmul.f32 %v1751, %v5434
        %v5845 = vmul.f32 %v2102, %v5434
        %v5846 = vmul.f32 %v2104, %v5434
        %v5847 = vmul.f32 %v2455, %v5434
        %v5848 = vmul.f32 %v2457, %v5434
        %v5849 = vmul.f32 %v2762, %v5434
        %v5850 = vmul.f32 %v1753, %v5439
        %v5851 = vmul.f32 %v1755, %v5439
        %v5852 = vmul.f32 %v2106, %v5439
        %v5853 = vmul.f32 %v2108, %v5439
        %v5854 = vmul.f32 %v2459, %v5439
        %v5855 = vmul.f32 %v2461, %v5439
        %v5856 = vmul.f32 %v2765, %v5439
        %v5857 = vmul.f32 %v1759, %v5444
        %v5858 = vmul.f32 %v1761, %v5444
        %v5859 = vmul.f32 %v2112, %v5444
        %v5860 = vmul.f32 %v2114, %v5444
        %v5861 = vmul.f32 %v2465, %v5444
        %v5862 = vmul.f32 %v2467, %v5444
        %v5863 = vmul.f32 %v2770, %v5444
        %v5864 = vmul.f32 %v1763, %v5449
        %v5865 = vmul.f32 %v1765, %v5449
        %v5866 = vmul.f32 %v2116, %v5449
        %v5867 = vmul.f32 %v2118, %v5449
        %v5868 = vmul.f32 %v2469, %v5449
        %v5869 = vmul.f32 %v2471, %v5449
        %v5870 = vmul.f32 %v2773, %v5449
        %v5871 = vmul.f32 %v1769, %v5454
        %v5872 = vmul.f32 %v1771, %v5454
        %v5873 = vmul.f32 %v2122, %v5454
        %v5874 = vmul.f32 %v2124, %v5454
        %v5875 = vmul.f32 %v2475, %v5454
        %v5876 = vmul.f32 %v2477, %v5454
        %v5877 = vmul.f32 %v2778, %v5454
        %v5878 = vmul.f32 %v1773, %v5459
        %v5879 = vmul.f32 %v1775, %v5459
        %v5880 = vmul.f32 %v2126, %v5459
        %v5881 = vmul.f32 %v2128, %v5459
        %v5882 = vmul.f32 %v2479, %v5459
        %v5883 = vmul.f32 %v2481, %v5459
        %v5884 = vmul.f32 %v2781, %v5459
        %v5885 = vmul.f32 %v1779, %v5464
        %v5886 = vmul.f32 %v1781, %v5464
        %v5887 = vmul.f32 %v2132, %v5464
        %v5888 = vmul.f32 %v2134, %v5464
        %v5889 = vmul.f32 %v2485, %v5464
        %v5890 = vmul.f32 %v2487, %v5464
        %v5891 = vmul.f32 %v2786, %v5464
        %v5892 = vmul.f32 %v1783, %v5469
        %v5893 = vmul.f32 %v1785, %v5469
        %v5894 = vmul.f32 %v2136, %v5469
        %v5895 = vmul.f32 %v2138, %v5469
        %v5896 = vmul.f32 %v2489, %v5469
        %v5897 = vmul.f32 %v2491, %v5469
        %v5898 = vmul.f32 %v2789, %v5469
        %v5899 = vmul.f32 %v1789, %v5474
        %v5900 = vmul.f32 %v1791, %v5474
        %v5901 = vmul.f32 %v2142, %v5474
        %v5902 = vmul.f32 %v2144, %v5474
        %v5903 = vmul.f32 %v2495, %v5474
        %v5904 = vmul.f32 %v2497, %v5474
        %v5905 = vmul.f32 %v2794, %v5474
        %v5906 = vmul.f32 %v1793, %v5479
        %v5907 = vmul.f32 %v1795, %v5479
        %v5908 = vmul.f32 %v2146, %v5479
        %v5909 = vmul.f32 %v2148, %v5479
        %v5910 = vmul.f32 %v2499, %v5479
        %v5911 = vmul.f32 %v2501, %v5479
        %v5912 = vmul.f32 %v2797, %v5479
        %v5913 = vmul.f32 %v1799, %v5484
        %v5914 = vmul.f32 %v1801, %v5484
        %v5915 = vmul.f32 %v2152, %v5484
        %v5916 = vmul.f32 %v2154, %v5484
        %v5917 = vmul.f32 %v2505, %v5484
        %v5918 = vmul.f32 %v2507, %v5484
        %v5919 = vmul.f32 %v2802, %v5484
        %v5920 = vmul.f32 %v1803, %v5489
        %v5921 = vmul.f32 %v1805, %v5489
        %v5922 = vmul.f32 %v2156, %v5489
        %v5923 = vmul.f32 %v2158, %v5489
        %v5924 = vmul.f32 %v2509, %v5489
        %v5925 = vmul.f32 %v2511, %v5489
        %v5926 = vmul.f32 %v2805, %v5489
        %v5927 = vmul.f32 %v1809, %v5494
        %v5928 = vmul.f32 %v1811, %v5494
        %v5929 = vmul.f32 %v2162, %v5494
        %v5930 = vmul.f32 %v2164, %v5494
        %v5931 = vmul.f32 %v2515, %v5494
        %v5932 = vmul.f32 %v2517, %v5494
        %v5933 = vmul.f32 %v2810, %v5494
        %v5934 = vmul.f32 %v1813, %v5499
        %v5935 = vmul.f32 %v1815, %v5499
        %v5936 = vmul.f32 %v2166, %v5499
        %v5937 = vmul.f32 %v2168, %v5499
        %v5938 = vmul.f32 %v2519, %v5499
        %v5939 = vmul.f32 %v2521, %v5499
        %v5940 = vmul.f32 %v2813, %v5499
        %v5941 = vmul.f32 %v1819, %v5504
        %v5942 = vmul.f32 %v1821, %v5504
        %v5943 = vmul.f32 %v2172, %v5504
        %v5944 = vmul.f32 %v2174, %v5504
        %v5945 = vmul.f32 %v2525, %v5504
        %v5946 = vmul.f32 %v2527, %v5504
        %v5947 = vmul.f32 %v2818, %v5504
        %v5948 = vmul.f32 %v1823, %v5509
        %v5949 = vmul.f32 %v1825, %v5509
        %v5950 = vmul.f32 %v2176, %v5509
        %v5951 = vmul.f32 %v2178, %v5509
        %v5952 = vmul.f32 %v2529, %v5509
        %v5953 = vmul.f32 %v2531, %v5509
        %v5954 = vmul.f32 %v2821, %v5509
        %v5955 = vmul.f32 %v1829, %v5514
        %v5956 = vmul.f32 %v1831, %v5514
        %v5957 = vmul.f32 %v2182, %v5514
        %v5958 = vmul.f32 %v2184, %v5514
        %v5959 = vmul.f32 %v2535, %v5514
        %v5960 = vmul.f32 %v2537, %v5514
        %v5961 = vmul.f32 %v2826, %v5514
        %v5962 = vmul.f32 %v1833, %v5519
        %v5963 = vmul.f32 %v1835, %v5519
        %v5964 = vmul.f32 %v2186, %v5519
        %v5965 = vmul.f32 %v2188, %v5519
        %v5966 = vmul.f32 %v2539, %v5519
        %v5967 = vmul.f32 %v2541, %v5519
        %v5968 = vmul.f32 %v2829, %v5519
        %5970 = vset.pattern.permute.xlu0 0
        %5971 = vperm.xlu0 %5970, %v5137
        %v5972 = vpop.permute.xlu0 %5971
        %5975 = vset.pattern.permute.xlu0 0
        %5976 = vperm.xlu0 %5975, %v5138
        %v5977 = vpop.permute.xlu0 %5976
        %5980 = vset.pattern.permute.xlu0 0
        %5981 = vperm.xlu0 %5980, %v5139
        %v5982 = vpop.permute.xlu0 %5981
        %5985 = vset.pattern.permute.xlu0 0
        %5986 = vperm.xlu0 %5985, %v5140
        %v5987 = vpop.permute.xlu0 %5986
        %5990 = vset.pattern.permute.xlu0 0
        %5991 = vperm.xlu0 %5990, %v5141
        %v5992 = vpop.permute.xlu0 %5991
        %5995 = vset.pattern.permute.xlu0 0
        %5996 = vperm.xlu0 %5995, %v5142
        %v5997 = vpop.permute.xlu0 %5996
        %6000 = vset.pattern.permute.xlu0 0
        %6001 = vperm.xlu0 %6000, %v5143
        %v6002 = vpop.permute.xlu0 %6001
        %6005 = vset.pattern.permute.xlu0 0
        %6006 = vperm.xlu0 %6005, %v5144
        %v6007 = vpop.permute.xlu0 %6006
        %6010 = vset.pattern.permute.xlu0 0
        %6011 = vperm.xlu0 %6010, %v5145
        %v6012 = vpop.permute.xlu0 %6011
        %6015 = vset.pattern.permute.xlu0 0
        %6016 = vperm.xlu0 %6015, %v5146
        %v6017 = vpop.permute.xlu0 %6016
        %6020 = vset.pattern.permute.xlu0 0
        %6021 = vperm.xlu0 %6020, %v5147
        %v6022 = vpop.permute.xlu0 %6021
        %6025 = vset.pattern.permute.xlu0 0
        %6026 = vperm.xlu0 %6025, %v5148
        %v6027 = vpop.permute.xlu0 %6026
        %6030 = vset.pattern.permute.xlu0 0
        %6031 = vperm.xlu0 %6030, %v5149
        %v6032 = vpop.permute.xlu0 %6031
        %6035 = vset.pattern.permute.xlu0 0
        %6036 = vperm.xlu0 %6035, %v5150
        %v6037 = vpop.permute.xlu0 %6036
        %6040 = vset.pattern.permute.xlu0 0
        %6041 = vperm.xlu0 %6040, %v5151
        %v6042 = vpop.permute.xlu0 %6041
        %6045 = vset.pattern.permute.xlu0 0
        %6046 = vperm.xlu0 %6045, %v5152
        %v6047 = vpop.permute.xlu0 %6046
        %6050 = vset.pattern.permute.xlu0 0
        %6051 = vperm.xlu0 %6050, %v5153
        %v6052 = vpop.permute.xlu0 %6051
        %6055 = vset.pattern.permute.xlu0 0
        %6056 = vperm.xlu0 %6055, %v5154
        %v6057 = vpop.permute.xlu0 %6056
        %6060 = vset.pattern.permute.xlu0 0
        %6061 = vperm.xlu0 %6060, %v5155
        %v6062 = vpop.permute.xlu0 %6061
        %6065 = vset.pattern.permute.xlu0 0
        %6066 = vperm.xlu0 %6065, %v5156
        %v6067 = vpop.permute.xlu0 %6066
        %6070 = vset.pattern.permute.xlu0 0
        %6071 = vperm.xlu0 %6070, %v5157
        %v6072 = vpop.permute.xlu0 %6071
        %6075 = vset.pattern.permute.xlu0 0
        %6076 = vperm.xlu0 %6075, %v5158
        %v6077 = vpop.permute.xlu0 %6076
        %6080 = vset.pattern.permute.xlu0 0
        %6081 = vperm.xlu0 %6080, %v5159
        %v6082 = vpop.permute.xlu0 %6081
        %6085 = vset.pattern.permute.xlu0 0
        %6086 = vperm.xlu0 %6085, %v5160
        %v6087 = vpop.permute.xlu0 %6086
        %6090 = vset.pattern.permute.xlu0 0
        %6091 = vperm.xlu0 %6090, %v5161
        %v6092 = vpop.permute.xlu0 %6091
        %6095 = vset.pattern.permute.xlu0 0
        %6096 = vperm.xlu0 %6095, %v5162
        %v6097 = vpop.permute.xlu0 %6096
        %6100 = vset.pattern.permute.xlu0 0
        %6101 = vperm.xlu0 %6100, %v5163
        %v6102 = vpop.permute.xlu0 %6101
        %6105 = vset.pattern.permute.xlu0 0
        %6106 = vperm.xlu0 %6105, %v5164
        %v6107 = vpop.permute.xlu0 %6106
        %6110 = vset.pattern.permute.xlu0 0
        %6111 = vperm.xlu0 %6110, %v5165
        %v6112 = vpop.permute.xlu0 %6111
        %6115 = vset.pattern.permute.xlu0 0
        %6116 = vperm.xlu0 %6115, %v5166
        %v6117 = vpop.permute.xlu0 %6116
        %6120 = vset.pattern.permute.xlu0 0
        %6121 = vperm.xlu0 %6120, %v5167
        %v6122 = vpop.permute.xlu0 %6121
        %6125 = vset.pattern.permute.xlu0 0
        %6126 = vperm.xlu0 %6125, %v5168
        %v6127 = vpop.permute.xlu0 %6126
        %6130 = vset.pattern.permute.xlu0 0
        %6131 = vperm.xlu0 %6130, %v5169
        %v6132 = vpop.permute.xlu0 %6131
        %6135 = vset.pattern.permute.xlu0 0
        %6136 = vperm.xlu0 %6135, %v5170
        %v6137 = vpop.permute.xlu0 %6136
        %6140 = vset.pattern.permute.xlu0 0
        %6141 = vperm.xlu0 %6140, %v5171
        %v6142 = vpop.permute.xlu0 %6141
        %6145 = vset.pattern.permute.xlu0 0
        %6146 = vperm.xlu0 %6145, %v5172
        %v6147 = vpop.permute.xlu0 %6146
        %6150 = vset.pattern.permute.xlu0 0
        %6151 = vperm.xlu0 %6150, %v5173
        %v6152 = vpop.permute.xlu0 %6151
        %6155 = vset.pattern.permute.xlu0 0
        %6156 = vperm.xlu0 %6155, %v5174
        %v6157 = vpop.permute.xlu0 %6156
        %6160 = vset.pattern.permute.xlu0 0
        %6161 = vperm.xlu0 %6160, %v5175
        %v6162 = vpop.permute.xlu0 %6161
        %6165 = vset.pattern.permute.xlu0 0
        %6166 = vperm.xlu0 %6165, %v5176
        %v6167 = vpop.permute.xlu0 %6166
        %6170 = vset.pattern.permute.xlu0 0
        %6171 = vperm.xlu0 %6170, %v5177
        %v6172 = vpop.permute.xlu0 %6171
        %6175 = vset.pattern.permute.xlu0 0
        %6176 = vperm.xlu0 %6175, %v5178
        %v6177 = vpop.permute.xlu0 %6176
        %6180 = vset.pattern.permute.xlu0 0
        %6181 = vperm.xlu0 %6180, %v5179
        %v6182 = vpop.permute.xlu0 %6181
        %6185 = vset.pattern.permute.xlu0 0
        %6186 = vperm.xlu0 %6185, %v5180
        %v6187 = vpop.permute.xlu0 %6186
        %6190 = vset.pattern.permute.xlu0 0
        %6191 = vperm.xlu0 %6190, %v5181
        %v6192 = vpop.permute.xlu0 %6191
        %6195 = vset.pattern.permute.xlu0 0
        %6196 = vperm.xlu0 %6195, %v5182
        %v6197 = vpop.permute.xlu0 %6196
        %6200 = vset.pattern.permute.xlu0 0
        %6201 = vperm.xlu0 %6200, %v5183
        %v6202 = vpop.permute.xlu0 %6201
        %6205 = vset.pattern.permute.xlu0 0
        %6206 = vperm.xlu0 %6205, %v5184
        %v6207 = vpop.permute.xlu0 %6206
        %6210 = vset.pattern.permute.xlu0 0
        %6211 = vperm.xlu0 %6210, %v5185
        %v6212 = vpop.permute.xlu0 %6211
        %6215 = vset.pattern.permute.xlu0 0
        %6216 = vperm.xlu0 %6215, %v5186
        %v6217 = vpop.permute.xlu0 %6216
        %6220 = vset.pattern.permute.xlu0 0
        %6221 = vperm.xlu0 %6220, %v5187
        %v6222 = vpop.permute.xlu0 %6221
        %6225 = vset.pattern.permute.xlu0 0
        %6226 = vperm.xlu0 %6225, %v5188
        %v6227 = vpop.permute.xlu0 %6226
        %6230 = vset.pattern.permute.xlu0 0
        %6231 = vperm.xlu0 %6230, %v5189
        %v6232 = vpop.permute.xlu0 %6231
        %6235 = vset.pattern.permute.xlu0 0
        %6236 = vperm.xlu0 %6235, %v5190
        %v6237 = vpop.permute.xlu0 %6236
        %6240 = vset.pattern.permute.xlu0 0
        %6241 = vperm.xlu0 %6240, %v5191
        %v6242 = vpop.permute.xlu0 %6241
        %6245 = vset.pattern.permute.xlu0 0
        %6246 = vperm.xlu0 %6245, %v5192
        %v6247 = vpop.permute.xlu0 %6246
        %6250 = vset.pattern.permute.xlu0 0
        %6251 = vperm.xlu0 %6250, %v5193
        %v6252 = vpop.permute.xlu0 %6251
        %6255 = vset.pattern.permute.xlu0 0
        %6256 = vperm.xlu0 %6255, %v5194
        %v6257 = vpop.permute.xlu0 %6256
        %6260 = vset.pattern.permute.xlu0 0
        %6261 = vperm.xlu0 %6260, %v5195
        %v6262 = vpop.permute.xlu0 %6261
        %6265 = vset.pattern.permute.xlu0 0
        %6266 = vperm.xlu0 %6265, %v5196
        %v6267 = vpop.permute.xlu0 %6266
        %6270 = vset.pattern.permute.xlu0 0
        %6271 = vperm.xlu0 %6270, %v5197
        %v6272 = vpop.permute.xlu0 %6271
        %6275 = vset.pattern.permute.xlu0 0
        %6276 = vperm.xlu0 %6275, %v5198
        %v6277 = vpop.permute.xlu0 %6276
        %6280 = vset.pattern.permute.xlu0 0
        %6281 = vperm.xlu0 %6280, %v5199
        %v6282 = vpop.permute.xlu0 %6281
        %6285 = vset.pattern.permute.xlu0 0
        %6286 = vperm.xlu0 %6285, %v5200
        %v6287 = vpop.permute.xlu0 %6286
        %v6289 = vadd.f32 %v5521, %v5972
        %v6290 = vadd.f32 %v5522, %v5972
        %v6291 = vadd.f32 %v5523, %v5972
        %v6292 = vadd.f32 %v5524, %v5972
        %v6293 = vadd.f32 %v5525, %v5972
        %v6294 = vadd.f32 %v5526, %v5972
        %v6295 = vadd.f32 %v5527, %v5972
        %v6296 = vadd.f32 %v5528, %v5977
        %v6297 = vadd.f32 %v5529, %v5977
        %v6298 = vadd.f32 %v5530, %v5977
        %v6299 = vadd.f32 %v5531, %v5977
        %v6300 = vadd.f32 %v5532, %v5977
        %v6301 = vadd.f32 %v5533, %v5977
        %v6302 = vadd.f32 %v5534, %v5977
        %v6303 = vadd.f32 %v5535, %v5982
        %v6304 = vadd.f32 %v5536, %v5982
        %v6305 = vadd.f32 %v5537, %v5982
        %v6306 = vadd.f32 %v5538, %v5982
        %v6307 = vadd.f32 %v5539, %v5982
        %v6308 = vadd.f32 %v5540, %v5982
        %v6309 = vadd.f32 %v5541, %v5982
        %v6310 = vadd.f32 %v5542, %v5987
        %v6311 = vadd.f32 %v5543, %v5987
        %v6312 = vadd.f32 %v5544, %v5987
        %v6313 = vadd.f32 %v5545, %v5987
        %v6314 = vadd.f32 %v5546, %v5987
        %v6315 = vadd.f32 %v5547, %v5987
        %v6316 = vadd.f32 %v5548, %v5987
        %v6317 = vadd.f32 %v5549, %v5992
        %v6318 = vadd.f32 %v5550, %v5992
        %v6319 = vadd.f32 %v5551, %v5992
        %v6320 = vadd.f32 %v5552, %v5992
        %v6321 = vadd.f32 %v5553, %v5992
        %v6322 = vadd.f32 %v5554, %v5992
        %v6323 = vadd.f32 %v5555, %v5992
        %v6324 = vadd.f32 %v5556, %v5997
        %v6325 = vadd.f32 %v5557, %v5997
        %v6326 = vadd.f32 %v5558, %v5997
        %v6327 = vadd.f32 %v5559, %v5997
        %v6328 = vadd.f32 %v5560, %v5997
        %v6329 = vadd.f32 %v5561, %v5997
        %v6330 = vadd.f32 %v5562, %v5997
        %v6331 = vadd.f32 %v5563, %v6002
        %v6332 = vadd.f32 %v5564, %v6002
        %v6333 = vadd.f32 %v5565, %v6002
        %v6334 = vadd.f32 %v5566, %v6002
        %v6335 = vadd.f32 %v5567, %v6002
        %v6336 = vadd.f32 %v5568, %v6002
        %v6337 = vadd.f32 %v5569, %v6002
        %v6338 = vadd.f32 %v5570, %v6007
        %v6339 = vadd.f32 %v5571, %v6007
        %v6340 = vadd.f32 %v5572, %v6007
        %v6341 = vadd.f32 %v5573, %v6007
        %v6342 = vadd.f32 %v5574, %v6007
        %v6343 = vadd.f32 %v5575, %v6007
        %v6344 = vadd.f32 %v5576, %v6007
        %v6345 = vadd.f32 %v5577, %v6012
        %v6346 = vadd.f32 %v5578, %v6012
        %v6347 = vadd.f32 %v5579, %v6012
        %v6348 = vadd.f32 %v5580, %v6012
        %v6349 = vadd.f32 %v5581, %v6012
        %v6350 = vadd.f32 %v5582, %v6012
        %v6351 = vadd.f32 %v5583, %v6012
        %v6352 = vadd.f32 %v5584, %v6017
        %v6353 = vadd.f32 %v5585, %v6017
        %v6354 = vadd.f32 %v5586, %v6017
        %v6355 = vadd.f32 %v5587, %v6017
        %v6356 = vadd.f32 %v5588, %v6017
        %v6357 = vadd.f32 %v5589, %v6017
        %v6358 = vadd.f32 %v5590, %v6017
        %v6359 = vadd.f32 %v5591, %v6022
        %v6360 = vadd.f32 %v5592, %v6022
        %v6361 = vadd.f32 %v5593, %v6022
        %v6362 = vadd.f32 %v5594, %v6022
        %v6363 = vadd.f32 %v5595, %v6022
        %v6364 = vadd.f32 %v5596, %v6022
        %v6365 = vadd.f32 %v5597, %v6022
        %v6366 = vadd.f32 %v5598, %v6027
        %v6367 = vadd.f32 %v5599, %v6027
        %v6368 = vadd.f32 %v5600, %v6027
        %v6369 = vadd.f32 %v5601, %v6027
        %v6370 = vadd.f32 %v5602, %v6027
        %v6371 = vadd.f32 %v5603, %v6027
        %v6372 = vadd.f32 %v5604, %v6027
        %v6373 = vadd.f32 %v5605, %v6032
        %v6374 = vadd.f32 %v5606, %v6032
        %v6375 = vadd.f32 %v5607, %v6032
        %v6376 = vadd.f32 %v5608, %v6032
        %v6377 = vadd.f32 %v5609, %v6032
        %v6378 = vadd.f32 %v5610, %v6032
        %v6379 = vadd.f32 %v5611, %v6032
        %v6380 = vadd.f32 %v5612, %v6037
        %v6381 = vadd.f32 %v5613, %v6037
        %v6382 = vadd.f32 %v5614, %v6037
        %v6383 = vadd.f32 %v5615, %v6037
        %v6384 = vadd.f32 %v5616, %v6037
        %v6385 = vadd.f32 %v5617, %v6037
        %v6386 = vadd.f32 %v5618, %v6037
        %v6387 = vadd.f32 %v5619, %v6042
        %v6388 = vadd.f32 %v5620, %v6042
        %v6389 = vadd.f32 %v5621, %v6042
        %v6390 = vadd.f32 %v5622, %v6042
        %v6391 = vadd.f32 %v5623, %v6042
        %v6392 = vadd.f32 %v5624, %v6042
        %v6393 = vadd.f32 %v5625, %v6042
        %v6394 = vadd.f32 %v5626, %v6047
        %v6395 = vadd.f32 %v5627, %v6047
        %v6396 = vadd.f32 %v5628, %v6047
        %v6397 = vadd.f32 %v5629, %v6047
        %v6398 = vadd.f32 %v5630, %v6047
        %v6399 = vadd.f32 %v5631, %v6047
        %v6400 = vadd.f32 %v5632, %v6047
        %v6401 = vadd.f32 %v5633, %v6052
        %v6402 = vadd.f32 %v5634, %v6052
        %v6403 = vadd.f32 %v5635, %v6052
        %v6404 = vadd.f32 %v5636, %v6052
        %v6405 = vadd.f32 %v5637, %v6052
        %v6406 = vadd.f32 %v5638, %v6052
        %v6407 = vadd.f32 %v5639, %v6052
        %v6408 = vadd.f32 %v5640, %v6057
        %v6409 = vadd.f32 %v5641, %v6057
        %v6410 = vadd.f32 %v5642, %v6057
        %v6411 = vadd.f32 %v5643, %v6057
        %v6412 = vadd.f32 %v5644, %v6057
        %v6413 = vadd.f32 %v5645, %v6057
        %v6414 = vadd.f32 %v5646, %v6057
        %v6415 = vadd.f32 %v5647, %v6062
        %v6416 = vadd.f32 %v5648, %v6062
        %v6417 = vadd.f32 %v5649, %v6062
        %v6418 = vadd.f32 %v5650, %v6062
        %v6419 = vadd.f32 %v5651, %v6062
        %v6420 = vadd.f32 %v5652, %v6062
        %v6421 = vadd.f32 %v5653, %v6062
        %v6422 = vadd.f32 %v5654, %v6067
        %v6423 = vadd.f32 %v5655, %v6067
        %v6424 = vadd.f32 %v5656, %v6067
        %v6425 = vadd.f32 %v5657, %v6067
        %v6426 = vadd.f32 %v5658, %v6067
        %v6427 = vadd.f32 %v5659, %v6067
        %v6428 = vadd.f32 %v5660, %v6067
        %v6429 = vadd.f32 %v5661, %v6072
        %v6430 = vadd.f32 %v5662, %v6072
        %v6431 = vadd.f32 %v5663, %v6072
        %v6432 = vadd.f32 %v5664, %v6072
        %v6433 = vadd.f32 %v5665, %v6072
        %v6434 = vadd.f32 %v5666, %v6072
        %v6435 = vadd.f32 %v5667, %v6072
        %v6436 = vadd.f32 %v5668, %v6077
        %v6437 = vadd.f32 %v5669, %v6077
        %v6438 = vadd.f32 %v5670, %v6077
        %v6439 = vadd.f32 %v5671, %v6077
        %v6440 = vadd.f32 %v5672, %v6077
        %v6441 = vadd.f32 %v5673, %v6077
        %v6442 = vadd.f32 %v5674, %v6077
        %v6443 = vadd.f32 %v5675, %v6082
        %v6444 = vadd.f32 %v5676, %v6082
        %v6445 = vadd.f32 %v5677, %v6082
        %v6446 = vadd.f32 %v5678, %v6082
        %v6447 = vadd.f32 %v5679, %v6082
        %v6448 = vadd.f32 %v5680, %v6082
        %v6449 = vadd.f32 %v5681, %v6082
        %v6450 = vadd.f32 %v5682, %v6087
        %v6451 = vadd.f32 %v5683, %v6087
        %v6452 = vadd.f32 %v5684, %v6087
        %v6453 = vadd.f32 %v5685, %v6087
        %v6454 = vadd.f32 %v5686, %v6087
        %v6455 = vadd.f32 %v5687, %v6087
        %v6456 = vadd.f32 %v5688, %v6087
        %v6457 = vadd.f32 %v5689, %v6092
        %v6458 = vadd.f32 %v5690, %v6092
        %v6459 = vadd.f32 %v5691, %v6092
        %v6460 = vadd.f32 %v5692, %v6092
        %v6461 = vadd.f32 %v5693, %v6092
        %v6462 = vadd.f32 %v5694, %v6092
        %v6463 = vadd.f32 %v5695, %v6092
        %v6464 = vadd.f32 %v5696, %v6097
        %v6465 = vadd.f32 %v5697, %v6097
        %v6466 = vadd.f32 %v5698, %v6097
        %v6467 = vadd.f32 %v5699, %v6097
        %v6468 = vadd.f32 %v5700, %v6097
        %v6469 = vadd.f32 %v5701, %v6097
        %v6470 = vadd.f32 %v5702, %v6097
        %v6471 = vadd.f32 %v5703, %v6102
        %v6472 = vadd.f32 %v5704, %v6102
        %v6473 = vadd.f32 %v5705, %v6102
        %v6474 = vadd.f32 %v5706, %v6102
        %v6475 = vadd.f32 %v5707, %v6102
        %v6476 = vadd.f32 %v5708, %v6102
        %v6477 = vadd.f32 %v5709, %v6102
        %v6478 = vadd.f32 %v5710, %v6107
        %v6479 = vadd.f32 %v5711, %v6107
        %v6480 = vadd.f32 %v5712, %v6107
        %v6481 = vadd.f32 %v5713, %v6107
        %v6482 = vadd.f32 %v5714, %v6107
        %v6483 = vadd.f32 %v5715, %v6107
        %v6484 = vadd.f32 %v5716, %v6107
        %v6485 = vadd.f32 %v5717, %v6112
        %v6486 = vadd.f32 %v5718, %v6112
        %v6487 = vadd.f32 %v5719, %v6112
        %v6488 = vadd.f32 %v5720, %v6112
        %v6489 = vadd.f32 %v5721, %v6112
        %v6490 = vadd.f32 %v5722, %v6112
        %v6491 = vadd.f32 %v5723, %v6112
        %v6492 = vadd.f32 %v5724, %v6117
        %v6493 = vadd.f32 %v5725, %v6117
        %v6494 = vadd.f32 %v5726, %v6117
        %v6495 = vadd.f32 %v5727, %v6117
        %v6496 = vadd.f32 %v5728, %v6117
        %v6497 = vadd.f32 %v5729, %v6117
        %v6498 = vadd.f32 %v5730, %v6117
        %v6499 = vadd.f32 %v5731, %v6122
        %v6500 = vadd.f32 %v5732, %v6122
        %v6501 = vadd.f32 %v5733, %v6122
        %v6502 = vadd.f32 %v5734, %v6122
        %v6503 = vadd.f32 %v5735, %v6122
        %v6504 = vadd.f32 %v5736, %v6122
        %v6505 = vadd.f32 %v5737, %v6122
        %v6506 = vadd.f32 %v5738, %v6127
        %v6507 = vadd.f32 %v5739, %v6127
        %v6508 = vadd.f32 %v5740, %v6127
        %v6509 = vadd.f32 %v5741, %v6127
        %v6510 = vadd.f32 %v5742, %v6127
        %v6511 = vadd.f32 %v5743, %v6127
        %v6512 = vadd.f32 %v5744, %v6127
        %v6513 = vadd.f32 %v5745, %v6132
        %v6514 = vadd.f32 %v5746, %v6132
        %v6515 = vadd.f32 %v5747, %v6132
        %v6516 = vadd.f32 %v5748, %v6132
        %v6517 = vadd.f32 %v5749, %v6132
        %v6518 = vadd.f32 %v5750, %v6132
        %v6519 = vadd.f32 %v5751, %v6132
        %v6520 = vadd.f32 %v5752, %v6137
        %v6521 = vadd.f32 %v5753, %v6137
        %v6522 = vadd.f32 %v5754, %v6137
        %v6523 = vadd.f32 %v5755, %v6137
        %v6524 = vadd.f32 %v5756, %v6137
        %v6525 = vadd.f32 %v5757, %v6137
        %v6526 = vadd.f32 %v5758, %v6137
        %v6527 = vadd.f32 %v5759, %v6142
        %v6528 = vadd.f32 %v5760, %v6142
        %v6529 = vadd.f32 %v5761, %v6142
        %v6530 = vadd.f32 %v5762, %v6142
        %v6531 = vadd.f32 %v5763, %v6142
        %v6532 = vadd.f32 %v5764, %v6142
        %v6533 = vadd.f32 %v5765, %v6142
        %v6534 = vadd.f32 %v5766, %v6147
        %v6535 = vadd.f32 %v5767, %v6147
        %v6536 = vadd.f32 %v5768, %v6147
        %v6537 = vadd.f32 %v5769, %v6147
        %v6538 = vadd.f32 %v5770, %v6147
        %v6539 = vadd.f32 %v5771, %v6147
        %v6540 = vadd.f32 %v5772, %v6147
        %v6541 = vadd.f32 %v5773, %v6152
        %v6542 = vadd.f32 %v5774, %v6152
        %v6543 = vadd.f32 %v5775, %v6152
        %v6544 = vadd.f32 %v5776, %v6152
        %v6545 = vadd.f32 %v5777, %v6152
        %v6546 = vadd.f32 %v5778, %v6152
        %v6547 = vadd.f32 %v5779, %v6152
        %v6548 = vadd.f32 %v5780, %v6157
        %v6549 = vadd.f32 %v5781, %v6157
        %v6550 = vadd.f32 %v5782, %v6157
        %v6551 = vadd.f32 %v5783, %v6157
        %v6552 = vadd.f32 %v5784, %v6157
        %v6553 = vadd.f32 %v5785, %v6157
        %v6554 = vadd.f32 %v5786, %v6157
        %v6555 = vadd.f32 %v5787, %v6162
        %v6556 = vadd.f32 %v5788, %v6162
        %v6557 = vadd.f32 %v5789, %v6162
        %v6558 = vadd.f32 %v5790, %v6162
        %v6559 = vadd.f32 %v5791, %v6162
        %v6560 = vadd.f32 %v5792, %v6162
        %v6561 = vadd.f32 %v5793, %v6162
        %v6562 = vadd.f32 %v5794, %v6167
        %v6563 = vadd.f32 %v5795, %v6167
        %v6564 = vadd.f32 %v5796, %v6167
        %v6565 = vadd.f32 %v5797, %v6167
        %v6566 = vadd.f32 %v5798, %v6167
        %v6567 = vadd.f32 %v5799, %v6167
        %v6568 = vadd.f32 %v5800, %v6167
        %v6569 = vadd.f32 %v5801, %v6172
        %v6570 = vadd.f32 %v5802, %v6172
        %v6571 = vadd.f32 %v5803, %v6172
        %v6572 = vadd.f32 %v5804, %v6172
        %v6573 = vadd.f32 %v5805, %v6172
        %v6574 = vadd.f32 %v5806, %v6172
        %v6575 = vadd.f32 %v5807, %v6172
        %v6576 = vadd.f32 %v5808, %v6177
        %v6577 = vadd.f32 %v5809, %v6177
        %v6578 = vadd.f32 %v5810, %v6177
        %v6579 = vadd.f32 %v5811, %v6177
        %v6580 = vadd.f32 %v5812, %v6177
        %v6581 = vadd.f32 %v5813, %v6177
        %v6582 = vadd.f32 %v5814, %v6177
        %v6583 = vadd.f32 %v5815, %v6182
        %v6584 = vadd.f32 %v5816, %v6182
        %v6585 = vadd.f32 %v5817, %v6182
        %v6586 = vadd.f32 %v5818, %v6182
        %v6587 = vadd.f32 %v5819, %v6182
        %v6588 = vadd.f32 %v5820, %v6182
        %v6589 = vadd.f32 %v5821, %v6182
        %v6590 = vadd.f32 %v5822, %v6187
        %v6591 = vadd.f32 %v5823, %v6187
        %v6592 = vadd.f32 %v5824, %v6187
        %v6593 = vadd.f32 %v5825, %v6187
        %v6594 = vadd.f32 %v5826, %v6187
        %v6595 = vadd.f32 %v5827, %v6187
        %v6596 = vadd.f32 %v5828, %v6187
        %v6597 = vadd.f32 %v5829, %v6192
        %v6598 = vadd.f32 %v5830, %v6192
        %v6599 = vadd.f32 %v5831, %v6192
        %v6600 = vadd.f32 %v5832, %v6192
        %v6601 = vadd.f32 %v5833, %v6192
        %v6602 = vadd.f32 %v5834, %v6192
        %v6603 = vadd.f32 %v5835, %v6192
        %v6604 = vadd.f32 %v5836, %v6197
        %v6605 = vadd.f32 %v5837, %v6197
        %v6606 = vadd.f32 %v5838, %v6197
        %v6607 = vadd.f32 %v5839, %v6197
        %v6608 = vadd.f32 %v5840, %v6197
        %v6609 = vadd.f32 %v5841, %v6197
        %v6610 = vadd.f32 %v5842, %v6197
        %v6611 = vadd.f32 %v5843, %v6202
        %v6612 = vadd.f32 %v5844, %v6202
        %v6613 = vadd.f32 %v5845, %v6202
        %v6614 = vadd.f32 %v5846, %v6202
        %v6615 = vadd.f32 %v5847, %v6202
        %v6616 = vadd.f32 %v5848, %v6202
        %v6617 = vadd.f32 %v5849, %v6202
        %v6618 = vadd.f32 %v5850, %v6207
        %v6619 = vadd.f32 %v5851, %v6207
        %v6620 = vadd.f32 %v5852, %v6207
        %v6621 = vadd.f32 %v5853, %v6207
        %v6622 = vadd.f32 %v5854, %v6207
        %v6623 = vadd.f32 %v5855, %v6207
        %v6624 = vadd.f32 %v5856, %v6207
        %v6625 = vadd.f32 %v5857, %v6212
        %v6626 = vadd.f32 %v5858, %v6212
        %v6627 = vadd.f32 %v5859, %v6212
        %v6628 = vadd.f32 %v5860, %v6212
        %v6629 = vadd.f32 %v5861, %v6212
        %v6630 = vadd.f32 %v5862, %v6212
        %v6631 = vadd.f32 %v5863, %v6212
        %v6632 = vadd.f32 %v5864, %v6217
        %v6633 = vadd.f32 %v5865, %v6217
        %v6634 = vadd.f32 %v5866, %v6217
        %v6635 = vadd.f32 %v5867, %v6217
        %v6636 = vadd.f32 %v5868, %v6217
        %v6637 = vadd.f32 %v5869, %v6217
        %v6638 = vadd.f32 %v5870, %v6217
        %v6639 = vadd.f32 %v5871, %v6222
        %v6640 = vadd.f32 %v5872, %v6222
        %v6641 = vadd.f32 %v5873, %v6222
        %v6642 = vadd.f32 %v5874, %v6222
        %v6643 = vadd.f32 %v5875, %v6222
        %v6644 = vadd.f32 %v5876, %v6222
        %v6645 = vadd.f32 %v5877, %v6222
        %v6646 = vadd.f32 %v5878, %v6227
        %v6647 = vadd.f32 %v5879, %v6227
        %v6648 = vadd.f32 %v5880, %v6227
        %v6649 = vadd.f32 %v5881, %v6227
        %v6650 = vadd.f32 %v5882, %v6227
        %v6651 = vadd.f32 %v5883, %v6227
        %v6652 = vadd.f32 %v5884, %v6227
        %v6653 = vadd.f32 %v5885, %v6232
        %v6654 = vadd.f32 %v5886, %v6232
        %v6655 = vadd.f32 %v5887, %v6232
        %v6656 = vadd.f32 %v5888, %v6232
        %v6657 = vadd.f32 %v5889, %v6232
        %v6658 = vadd.f32 %v5890, %v6232
        %v6659 = vadd.f32 %v5891, %v6232
        %v6660 = vadd.f32 %v5892, %v6237
        %v6661 = vadd.f32 %v5893, %v6237
        %v6662 = vadd.f32 %v5894, %v6237
        %v6663 = vadd.f32 %v5895, %v6237
        %v6664 = vadd.f32 %v5896, %v6237
        %v6665 = vadd.f32 %v5897, %v6237
        %v6666 = vadd.f32 %v5898, %v6237
        %v6667 = vadd.f32 %v5899, %v6242
        %v6668 = vadd.f32 %v5900, %v6242
        %v6669 = vadd.f32 %v5901, %v6242
        %v6670 = vadd.f32 %v5902, %v6242
        %v6671 = vadd.f32 %v5903, %v6242
        %v6672 = vadd.f32 %v5904, %v6242
        %v6673 = vadd.f32 %v5905, %v6242
        %v6674 = vadd.f32 %v5906, %v6247
        %v6675 = vadd.f32 %v5907, %v6247
        %v6676 = vadd.f32 %v5908, %v6247
        %v6677 = vadd.f32 %v5909, %v6247
        %v6678 = vadd.f32 %v5910, %v6247
        %v6679 = vadd.f32 %v5911, %v6247
        %v6680 = vadd.f32 %v5912, %v6247
        %v6681 = vadd.f32 %v5913, %v6252
        %v6682 = vadd.f32 %v5914, %v6252
        %v6683 = vadd.f32 %v5915, %v6252
        %v6684 = vadd.f32 %v5916, %v6252
        %v6685 = vadd.f32 %v5917, %v6252
        %v6686 = vadd.f32 %v5918, %v6252
        %v6687 = vadd.f32 %v5919, %v6252
        %v6688 = vadd.f32 %v5920, %v6257
        %v6689 = vadd.f32 %v5921, %v6257
        %v6690 = vadd.f32 %v5922, %v6257
        %v6691 = vadd.f32 %v5923, %v6257
        %v6692 = vadd.f32 %v5924, %v6257
        %v6693 = vadd.f32 %v5925, %v6257
        %v6694 = vadd.f32 %v5926, %v6257
        %v6695 = vadd.f32 %v5927, %v6262
        %v6696 = vadd.f32 %v5928, %v6262
        %v6697 = vadd.f32 %v5929, %v6262
        %v6698 = vadd.f32 %v5930, %v6262
        %v6699 = vadd.f32 %v5931, %v6262
        %v6700 = vadd.f32 %v5932, %v6262
        %v6701 = vadd.f32 %v5933, %v6262
        %v6702 = vadd.f32 %v5934, %v6267
        %v6703 = vadd.f32 %v5935, %v6267
        %v6704 = vadd.f32 %v5936, %v6267
        %v6705 = vadd.f32 %v5937, %v6267
        %v6706 = vadd.f32 %v5938, %v6267
        %v6707 = vadd.f32 %v5939, %v6267
        %v6708 = vadd.f32 %v5940, %v6267
        %v6709 = vadd.f32 %v5941, %v6272
        %v6710 = vadd.f32 %v5942, %v6272
        %v6711 = vadd.f32 %v5943, %v6272
        %v6712 = vadd.f32 %v5944, %v6272
        %v6713 = vadd.f32 %v5945, %v6272
        %v6714 = vadd.f32 %v5946, %v6272
        %v6715 = vadd.f32 %v5947, %v6272
        %v6716 = vadd.f32 %v5948, %v6277
        %v6717 = vadd.f32 %v5949, %v6277
        %v6718 = vadd.f32 %v5950, %v6277
        %v6719 = vadd.f32 %v5951, %v6277
        %v6720 = vadd.f32 %v5952, %v6277
        %v6721 = vadd.f32 %v5953, %v6277
        %v6722 = vadd.f32 %v5954, %v6277
        %v6723 = vadd.f32 %v5955, %v6282
        %v6724 = vadd.f32 %v5956, %v6282
        %v6725 = vadd.f32 %v5957, %v6282
        %v6726 = vadd.f32 %v5958, %v6282
        %v6727 = vadd.f32 %v5959, %v6282
        %v6728 = vadd.f32 %v5960, %v6282
        %v6729 = vadd.f32 %v5961, %v6282
        %v6730 = vadd.f32 %v5962, %v6287
        %v6731 = vadd.f32 %v5963, %v6287
        %v6732 = vadd.f32 %v5964, %v6287
        %v6733 = vadd.f32 %v5965, %v6287
        %v6734 = vadd.f32 %v5966, %v6287
        %v6735 = vadd.f32 %v5967, %v6287
        %v6736 = vadd.f32 %v5968, %v6287
        %6737 = vst [vmem:[%s265] sm:$0xff] %v6289
        %6738 = vst [vmem:[%s265 + $0x8] sm:$0xff] %v6290
        %6739 = vst [vmem:[%s265 + $0x10] sm:$0xff] %v6291
        %6740 = vst [vmem:[%s265 + $0x18] sm:$0xff] %v6292
        %6741 = vst [vmem:[%s265 + $0x20] sm:$0xff] %v6293
        %6742 = vst [vmem:[%s265 + $0x28] sm:$0xff] %v6294
        %6743 = vst.msk [vmem:[%s265 + $0x30] sm:$0xff] %vm2837, %v6295
        %6744 = vst [vmem:[%s265 + $0x38] sm:$0xff] %v6296
        %6745 = vst [vmem:[%s265 + $0x40] sm:$0xff] %v6297
        %6746 = vst [vmem:[%s265 + $0x48] sm:$0xff] %v6298
        %6747 = vst [vmem:[%s265 + $0x50] sm:$0xff] %v6299
        %6748 = vst [vmem:[%s265 + $0x58] sm:$0xff] %v6300
        %6749 = vst [vmem:[%s265 + $0x60] sm:$0xff] %v6301
        %6750 = vst.msk [vmem:[%s265 + $0x68] sm:$0xff] %vm2837, %v6302
        %6751 = vst [vmem:[%s265 + $0x70] sm:$0xff] %v6303
        %6752 = vst [vmem:[%s265 + $0x78] sm:$0xff] %v6304
        %6753 = vst [vmem:[%s265 + $0x80] sm:$0xff] %v6305
        %6754 = vst [vmem:[%s265 + $0x88] sm:$0xff] %v6306
        %6755 = vst [vmem:[%s265 + $0x90] sm:$0xff] %v6307
        %6756 = vst [vmem:[%s265 + $0x98] sm:$0xff] %v6308
        %6757 = vst.msk [vmem:[%s265 + $0xa0] sm:$0xff] %vm2837, %v6309
        %6758 = vst [vmem:[%s265 + $0xa8] sm:$0xff] %v6310
        %6759 = vst [vmem:[%s265 + $0xb0] sm:$0xff] %v6311
        %6760 = vst [vmem:[%s265 + $0xb8] sm:$0xff] %v6312
        %6761 = vst [vmem:[%s265 + $0xc0] sm:$0xff] %v6313
        %6762 = vst [vmem:[%s265 + $0xc8] sm:$0xff] %v6314
        %6763 = vst [vmem:[%s265 + $0xd0] sm:$0xff] %v6315
        %6764 = vst.msk [vmem:[%s265 + $0xd8] sm:$0xff] %vm2837, %v6316
        %6765 = vst [vmem:[%s265 + $0xe0] sm:$0xff] %v6317
        %6766 = vst [vmem:[%s265 + $0xe8] sm:$0xff] %v6318
        %6767 = vst [vmem:[%s265 + $0xf0] sm:$0xff] %v6319
        %6768 = vst [vmem:[%s265 + $0xf8] sm:$0xff] %v6320
        %6769 = vst [vmem:[%s265 + $0x100] sm:$0xff] %v6321
        %6770 = vst [vmem:[%s265 + $0x108] sm:$0xff] %v6322
        %6771 = vst.msk [vmem:[%s265 + $0x110] sm:$0xff] %vm2837, %v6323
        %6772 = vst [vmem:[%s265 + $0x118] sm:$0xff] %v6324
        %6773 = vst [vmem:[%s265 + $0x120] sm:$0xff] %v6325
        %6774 = vst [vmem:[%s265 + $0x128] sm:$0xff] %v6326
        %6775 = vst [vmem:[%s265 + $0x130] sm:$0xff] %v6327
        %6776 = vst [vmem:[%s265 + $0x138] sm:$0xff] %v6328
        %6777 = vst [vmem:[%s265 + $0x140] sm:$0xff] %v6329
        %6778 = vst.msk [vmem:[%s265 + $0x148] sm:$0xff] %vm2837, %v6330
        %6779 = vst [vmem:[%s265 + $0x150] sm:$0xff] %v6331
        %6780 = vst [vmem:[%s265 + $0x158] sm:$0xff] %v6332
        %6781 = vst [vmem:[%s265 + $0x160] sm:$0xff] %v6333
        %6782 = vst [vmem:[%s265 + $0x168] sm:$0xff] %v6334
        %6783 = vst [vmem:[%s265 + $0x170] sm:$0xff] %v6335
        %6784 = vst [vmem:[%s265 + $0x178] sm:$0xff] %v6336
        %6785 = vst.msk [vmem:[%s265 + $0x180] sm:$0xff] %vm2837, %v6337
        %6786 = vst [vmem:[%s265 + $0x188] sm:$0xff] %v6338
        %6787 = vst [vmem:[%s265 + $0x190] sm:$0xff] %v6339
        %6788 = vst [vmem:[%s265 + $0x198] sm:$0xff] %v6340
        %6789 = vst [vmem:[%s265 + $0x1a0] sm:$0xff] %v6341
        %6790 = vst [vmem:[%s265 + $0x1a8] sm:$0xff] %v6342
        %6791 = vst [vmem:[%s265 + $0x1b0] sm:$0xff] %v6343
        %6792 = vst.msk [vmem:[%s265 + $0x1b8] sm:$0xff] %vm2837, %v6344
        %6793 = vst [vmem:[%s265 + $0x1c0] sm:$0xff] %v6345
        %6794 = vst [vmem:[%s265 + $0x1c8] sm:$0xff] %v6346
        %6795 = vst [vmem:[%s265 + $0x1d0] sm:$0xff] %v6347
        %6796 = vst [vmem:[%s265 + $0x1d8] sm:$0xff] %v6348
        %6797 = vst [vmem:[%s265 + $0x1e0] sm:$0xff] %v6349
        %6798 = vst [vmem:[%s265 + $0x1e8] sm:$0xff] %v6350
        %6799 = vst.msk [vmem:[%s265 + $0x1f0] sm:$0xff] %vm2837, %v6351
        %6800 = vst [vmem:[%s265 + $0x1f8] sm:$0xff] %v6352
        %6801 = vst [vmem:[%s265 + $0x200] sm:$0xff] %v6353
        %6802 = vst [vmem:[%s265 + $0x208] sm:$0xff] %v6354
        %6803 = vst [vmem:[%s265 + $0x210] sm:$0xff] %v6355
        %6804 = vst [vmem:[%s265 + $0x218] sm:$0xff] %v6356
        %6805 = vst [vmem:[%s265 + $0x220] sm:$0xff] %v6357
        %6806 = vst.msk [vmem:[%s265 + $0x228] sm:$0xff] %vm2837, %v6358
        %6807 = vst [vmem:[%s265 + $0x230] sm:$0xff] %v6359
        %6808 = vst [vmem:[%s265 + $0x238] sm:$0xff] %v6360
        %6809 = vst [vmem:[%s265 + $0x240] sm:$0xff] %v6361
        %6810 = vst [vmem:[%s265 + $0x248] sm:$0xff] %v6362
        %6811 = vst [vmem:[%s265 + $0x250] sm:$0xff] %v6363
        %6812 = vst [vmem:[%s265 + $0x258] sm:$0xff] %v6364
        %6813 = vst.msk [vmem:[%s265 + $0x260] sm:$0xff] %vm2837, %v6365
        %6814 = vst [vmem:[%s265 + $0x268] sm:$0xff] %v6366
        %6815 = vst [vmem:[%s265 + $0x270] sm:$0xff] %v6367
        %6816 = vst [vmem:[%s265 + $0x278] sm:$0xff] %v6368
        %6817 = vst [vmem:[%s265 + $0x280] sm:$0xff] %v6369
        %6818 = vst [vmem:[%s265 + $0x288] sm:$0xff] %v6370
        %6819 = vst [vmem:[%s265 + $0x290] sm:$0xff] %v6371
        %6820 = vst.msk [vmem:[%s265 + $0x298] sm:$0xff] %vm2837, %v6372
        %6821 = vst [vmem:[%s265 + $0x2a0] sm:$0xff] %v6373
        %6822 = vst [vmem:[%s265 + $0x2a8] sm:$0xff] %v6374
        %6823 = vst [vmem:[%s265 + $0x2b0] sm:$0xff] %v6375
        %6824 = vst [vmem:[%s265 + $0x2b8] sm:$0xff] %v6376
        %6825 = vst [vmem:[%s265 + $0x2c0] sm:$0xff] %v6377
        %6826 = vst [vmem:[%s265 + $0x2c8] sm:$0xff] %v6378
        %6827 = vst.msk [vmem:[%s265 + $0x2d0] sm:$0xff] %vm2837, %v6379
        %6828 = vst [vmem:[%s265 + $0x2d8] sm:$0xff] %v6380
        %6829 = vst [vmem:[%s265 + $0x2e0] sm:$0xff] %v6381
        %6830 = vst [vmem:[%s265 + $0x2e8] sm:$0xff] %v6382
        %6831 = vst [vmem:[%s265 + $0x2f0] sm:$0xff] %v6383
        %6832 = vst [vmem:[%s265 + $0x2f8] sm:$0xff] %v6384
        %6833 = vst [vmem:[%s265 + $0x300] sm:$0xff] %v6385
        %6834 = vst.msk [vmem:[%s265 + $0x308] sm:$0xff] %vm2837, %v6386
        %6835 = vst [vmem:[%s265 + $0x310] sm:$0xff] %v6387
        %6836 = vst [vmem:[%s265 + $0x318] sm:$0xff] %v6388
        %6837 = vst [vmem:[%s265 + $0x320] sm:$0xff] %v6389
        %6838 = vst [vmem:[%s265 + $0x328] sm:$0xff] %v6390
        %6839 = vst [vmem:[%s265 + $0x330] sm:$0xff] %v6391
        %6840 = vst [vmem:[%s265 + $0x338] sm:$0xff] %v6392
        %6841 = vst.msk [vmem:[%s265 + $0x340] sm:$0xff] %vm2837, %v6393
        %6842 = vst [vmem:[%s265 + $0x348] sm:$0xff] %v6394
        %6843 = vst [vmem:[%s265 + $0x350] sm:$0xff] %v6395
        %6844 = vst [vmem:[%s265 + $0x358] sm:$0xff] %v6396
        %6845 = vst [vmem:[%s265 + $0x360] sm:$0xff] %v6397
        %6846 = vst [vmem:[%s265 + $0x368] sm:$0xff] %v6398
        %6847 = vst [vmem:[%s265 + $0x370] sm:$0xff] %v6399
        %6848 = vst.msk [vmem:[%s265 + $0x378] sm:$0xff] %vm2837, %v6400
        %6849 = vst [vmem:[%s265 + $0x380] sm:$0xff] %v6401
        %6850 = vst [vmem:[%s265 + $0x388] sm:$0xff] %v6402
        %6851 = vst [vmem:[%s265 + $0x390] sm:$0xff] %v6403
        %6852 = vst [vmem:[%s265 + $0x398] sm:$0xff] %v6404
        %6853 = vst [vmem:[%s265 + $0x3a0] sm:$0xff] %v6405
        %6854 = vst [vmem:[%s265 + $0x3a8] sm:$0xff] %v6406
        %6855 = vst.msk [vmem:[%s265 + $0x3b0] sm:$0xff] %vm2837, %v6407
        %6856 = vst [vmem:[%s265 + $0x3b8] sm:$0xff] %v6408
        %6857 = vst [vmem:[%s265 + $0x3c0] sm:$0xff] %v6409
        %6858 = vst [vmem:[%s265 + $0x3c8] sm:$0xff] %v6410
        %6859 = vst [vmem:[%s265 + $0x3d0] sm:$0xff] %v6411
        %6860 = vst [vmem:[%s265 + $0x3d8] sm:$0xff] %v6412
        %6861 = vst [vmem:[%s265 + $0x3e0] sm:$0xff] %v6413
        %6862 = vst.msk [vmem:[%s265 + $0x3e8] sm:$0xff] %vm2837, %v6414
        %6863 = vst [vmem:[%s265 + $0x3f0] sm:$0xff] %v6415
        %6864 = vst [vmem:[%s265 + $0x3f8] sm:$0xff] %v6416
        %6865 = vst [vmem:[%s265 + $0x400] sm:$0xff] %v6417
        %6866 = vst [vmem:[%s265 + $0x408] sm:$0xff] %v6418
        %6867 = vst [vmem:[%s265 + $0x410] sm:$0xff] %v6419
        %6868 = vst [vmem:[%s265 + $0x418] sm:$0xff] %v6420
        %6869 = vst.msk [vmem:[%s265 + $0x420] sm:$0xff] %vm2837, %v6421
        %6870 = vst [vmem:[%s265 + $0x428] sm:$0xff] %v6422
        %6871 = vst [vmem:[%s265 + $0x430] sm:$0xff] %v6423
        %6872 = vst [vmem:[%s265 + $0x438] sm:$0xff] %v6424
        %6873 = vst [vmem:[%s265 + $0x440] sm:$0xff] %v6425
        %6874 = vst [vmem:[%s265 + $0x448] sm:$0xff] %v6426
        %6875 = vst [vmem:[%s265 + $0x450] sm:$0xff] %v6427
        %6876 = vst.msk [vmem:[%s265 + $0x458] sm:$0xff] %vm2837, %v6428
        %6877 = vst [vmem:[%s265 + $0x460] sm:$0xff] %v6429
        %6878 = vst [vmem:[%s265 + $0x468] sm:$0xff] %v6430
        %6879 = vst [vmem:[%s265 + $0x470] sm:$0xff] %v6431
        %6880 = vst [vmem:[%s265 + $0x478] sm:$0xff] %v6432
        %6881 = vst [vmem:[%s265 + $0x480] sm:$0xff] %v6433
        %6882 = vst [vmem:[%s265 + $0x488] sm:$0xff] %v6434
        %6883 = vst.msk [vmem:[%s265 + $0x490] sm:$0xff] %vm2837, %v6435
        %6884 = vst [vmem:[%s265 + $0x498] sm:$0xff] %v6436
        %6885 = vst [vmem:[%s265 + $0x4a0] sm:$0xff] %v6437
        %6886 = vst [vmem:[%s265 + $0x4a8] sm:$0xff] %v6438
        %6887 = vst [vmem:[%s265 + $0x4b0] sm:$0xff] %v6439
        %6888 = vst [vmem:[%s265 + $0x4b8] sm:$0xff] %v6440
        %6889 = vst [vmem:[%s265 + $0x4c0] sm:$0xff] %v6441
        %6890 = vst.msk [vmem:[%s265 + $0x4c8] sm:$0xff] %vm2837, %v6442
        %6891 = vst [vmem:[%s265 + $0x4d0] sm:$0xff] %v6443
        %6892 = vst [vmem:[%s265 + $0x4d8] sm:$0xff] %v6444
        %6893 = vst [vmem:[%s265 + $0x4e0] sm:$0xff] %v6445
        %6894 = vst [vmem:[%s265 + $0x4e8] sm:$0xff] %v6446
        %6895 = vst [vmem:[%s265 + $0x4f0] sm:$0xff] %v6447
        %6896 = vst [vmem:[%s265 + $0x4f8] sm:$0xff] %v6448
        %6897 = vst.msk [vmem:[%s265 + $0x500] sm:$0xff] %vm2837, %v6449
        %6898 = vst [vmem:[%s265 + $0x508] sm:$0xff] %v6450
        %6899 = vst [vmem:[%s265 + $0x510] sm:$0xff] %v6451
        %6900 = vst [vmem:[%s265 + $0x518] sm:$0xff] %v6452
        %6901 = vst [vmem:[%s265 + $0x520] sm:$0xff] %v6453
        %6902 = vst [vmem:[%s265 + $0x528] sm:$0xff] %v6454
        %6903 = vst [vmem:[%s265 + $0x530] sm:$0xff] %v6455
        %6904 = vst.msk [vmem:[%s265 + $0x538] sm:$0xff] %vm2837, %v6456
        %6905 = vst [vmem:[%s265 + $0x540] sm:$0xff] %v6457
        %6906 = vst [vmem:[%s265 + $0x548] sm:$0xff] %v6458
        %6907 = vst [vmem:[%s265 + $0x550] sm:$0xff] %v6459
        %6908 = vst [vmem:[%s265 + $0x558] sm:$0xff] %v6460
        %6909 = vst [vmem:[%s265 + $0x560] sm:$0xff] %v6461
        %6910 = vst [vmem:[%s265 + $0x568] sm:$0xff] %v6462
        %6911 = vst.msk [vmem:[%s265 + $0x570] sm:$0xff] %vm2837, %v6463
        %6912 = vst [vmem:[%s265 + $0x578] sm:$0xff] %v6464
        %6913 = vst [vmem:[%s265 + $0x580] sm:$0xff] %v6465
        %6914 = vst [vmem:[%s265 + $0x588] sm:$0xff] %v6466
        %6915 = vst [vmem:[%s265 + $0x590] sm:$0xff] %v6467
        %6916 = vst [vmem:[%s265 + $0x598] sm:$0xff] %v6468
        %6917 = vst [vmem:[%s265 + $0x5a0] sm:$0xff] %v6469
        %6918 = vst.msk [vmem:[%s265 + $0x5a8] sm:$0xff] %vm2837, %v6470
        %6919 = vst [vmem:[%s265 + $0x5b0] sm:$0xff] %v6471
        %6920 = vst [vmem:[%s265 + $0x5b8] sm:$0xff] %v6472
        %6921 = vst [vmem:[%s265 + $0x5c0] sm:$0xff] %v6473
        %6922 = vst [vmem:[%s265 + $0x5c8] sm:$0xff] %v6474
        %6923 = vst [vmem:[%s265 + $0x5d0] sm:$0xff] %v6475
        %6924 = vst [vmem:[%s265 + $0x5d8] sm:$0xff] %v6476
        %6925 = vst.msk [vmem:[%s265 + $0x5e0] sm:$0xff] %vm2837, %v6477
        %6926 = vst [vmem:[%s265 + $0x5e8] sm:$0xff] %v6478
        %6927 = vst [vmem:[%s265 + $0x5f0] sm:$0xff] %v6479
        %6928 = vst [vmem:[%s265 + $0x5f8] sm:$0xff] %v6480
        %6929 = vst [vmem:[%s265 + $0x600] sm:$0xff] %v6481
        %6930 = vst [vmem:[%s265 + $0x608] sm:$0xff] %v6482
        %6931 = vst [vmem:[%s265 + $0x610] sm:$0xff] %v6483
        %6932 = vst.msk [vmem:[%s265 + $0x618] sm:$0xff] %vm2837, %v6484
        %6933 = vst [vmem:[%s265 + $0x620] sm:$0xff] %v6485
        %6934 = vst [vmem:[%s265 + $0x628] sm:$0xff] %v6486
        %6935 = vst [vmem:[%s265 + $0x630] sm:$0xff] %v6487
        %6936 = vst [vmem:[%s265 + $0x638] sm:$0xff] %v6488
        %6937 = vst [vmem:[%s265 + $0x640] sm:$0xff] %v6489
        %6938 = vst [vmem:[%s265 + $0x648] sm:$0xff] %v6490
        %6939 = vst.msk [vmem:[%s265 + $0x650] sm:$0xff] %vm2837, %v6491
        %6940 = vst [vmem:[%s265 + $0x658] sm:$0xff] %v6492
        %6941 = vst [vmem:[%s265 + $0x660] sm:$0xff] %v6493
        %6942 = vst [vmem:[%s265 + $0x668] sm:$0xff] %v6494
        %6943 = vst [vmem:[%s265 + $0x670] sm:$0xff] %v6495
        %6944 = vst [vmem:[%s265 + $0x678] sm:$0xff] %v6496
        %6945 = vst [vmem:[%s265 + $0x680] sm:$0xff] %v6497
        %6946 = vst.msk [vmem:[%s265 + $0x688] sm:$0xff] %vm2837, %v6498
        %6947 = vst [vmem:[%s265 + $0x690] sm:$0xff] %v6499
        %6948 = vst [vmem:[%s265 + $0x698] sm:$0xff] %v6500
        %6949 = vst [vmem:[%s265 + $0x6a0] sm:$0xff] %v6501
        %6950 = vst [vmem:[%s265 + $0x6a8] sm:$0xff] %v6502
        %6951 = vst [vmem:[%s265 + $0x6b0] sm:$0xff] %v6503
        %6952 = vst [vmem:[%s265 + $0x6b8] sm:$0xff] %v6504
        %6953 = vst.msk [vmem:[%s265 + $0x6c0] sm:$0xff] %vm2837, %v6505
        %6954 = vst [vmem:[%s265 + $0x6c8] sm:$0xff] %v6506
        %6955 = vst [vmem:[%s265 + $0x6d0] sm:$0xff] %v6507
        %6956 = vst [vmem:[%s265 + $0x6d8] sm:$0xff] %v6508
        %6957 = vst [vmem:[%s265 + $0x6e0] sm:$0xff] %v6509
        %6958 = vst [vmem:[%s265 + $0x6e8] sm:$0xff] %v6510
        %6959 = vst [vmem:[%s265 + $0x6f0] sm:$0xff] %v6511
        %6960 = vst.msk [vmem:[%s265 + $0x6f8] sm:$0xff] %vm2837, %v6512
        %6961 = vst [vmem:[%s265 + $0x700] sm:$0xff] %v6513
        %6962 = vst [vmem:[%s265 + $0x708] sm:$0xff] %v6514
        %6963 = vst [vmem:[%s265 + $0x710] sm:$0xff] %v6515
        %6964 = vst [vmem:[%s265 + $0x718] sm:$0xff] %v6516
        %6965 = vst [vmem:[%s265 + $0x720] sm:$0xff] %v6517
        %6966 = vst [vmem:[%s265 + $0x728] sm:$0xff] %v6518
        %6967 = vst.msk [vmem:[%s265 + $0x730] sm:$0xff] %vm2837, %v6519
        %6968 = vst [vmem:[%s265 + $0x738] sm:$0xff] %v6520
        %6969 = vst [vmem:[%s265 + $0x740] sm:$0xff] %v6521
        %6970 = vst [vmem:[%s265 + $0x748] sm:$0xff] %v6522
        %6971 = vst [vmem:[%s265 + $0x750] sm:$0xff] %v6523
        %6972 = vst [vmem:[%s265 + $0x758] sm:$0xff] %v6524
        %6973 = vst [vmem:[%s265 + $0x760] sm:$0xff] %v6525
        %6974 = vst.msk [vmem:[%s265 + $0x768] sm:$0xff] %vm2837, %v6526
        %6975 = vst [vmem:[%s265 + $0x770] sm:$0xff] %v6527
        %6976 = vst [vmem:[%s265 + $0x778] sm:$0xff] %v6528
        %6977 = vst [vmem:[%s265 + $0x780] sm:$0xff] %v6529
        %6978 = vst [vmem:[%s265 + $0x788] sm:$0xff] %v6530
        %6979 = vst [vmem:[%s265 + $0x790] sm:$0xff] %v6531
        %6980 = vst [vmem:[%s265 + $0x798] sm:$0xff] %v6532
        %6981 = vst.msk [vmem:[%s265 + $0x7a0] sm:$0xff] %vm2837, %v6533
        %6982 = vst [vmem:[%s265 + $0x7a8] sm:$0xff] %v6534
        %6983 = vst [vmem:[%s265 + $0x7b0] sm:$0xff] %v6535
        %6984 = vst [vmem:[%s265 + $0x7b8] sm:$0xff] %v6536
        %6985 = vst [vmem:[%s265 + $0x7c0] sm:$0xff] %v6537
        %6986 = vst [vmem:[%s265 + $0x7c8] sm:$0xff] %v6538
        %6987 = vst [vmem:[%s265 + $0x7d0] sm:$0xff] %v6539
        %6988 = vst.msk [vmem:[%s265 + $0x7d8] sm:$0xff] %vm2837, %v6540
        %6989 = vst [vmem:[%s265 + $0x7e0] sm:$0xff] %v6541
        %6990 = vst [vmem:[%s265 + $0x7e8] sm:$0xff] %v6542
        %6991 = vst [vmem:[%s265 + $0x7f0] sm:$0xff] %v6543
        %6992 = vst [vmem:[%s265 + $0x7f8] sm:$0xff] %v6544
        %6993 = vst [vmem:[%s265 + $0x800] sm:$0xff] %v6545
        %6994 = vst [vmem:[%s265 + $0x808] sm:$0xff] %v6546
        %6995 = vst.msk [vmem:[%s265 + $0x810] sm:$0xff] %vm2837, %v6547
        %6996 = vst [vmem:[%s265 + $0x818] sm:$0xff] %v6548
        %6997 = vst [vmem:[%s265 + $0x820] sm:$0xff] %v6549
        %6998 = vst [vmem:[%s265 + $0x828] sm:$0xff] %v6550
        %6999 = vst [vmem:[%s265 + $0x830] sm:$0xff] %v6551
        %7000 = vst [vmem:[%s265 + $0x838] sm:$0xff] %v6552
        %7001 = vst [vmem:[%s265 + $0x840] sm:$0xff] %v6553
        %7002 = vst.msk [vmem:[%s265 + $0x848] sm:$0xff] %vm2837, %v6554
        %7003 = vst [vmem:[%s265 + $0x850] sm:$0xff] %v6555
        %7004 = vst [vmem:[%s265 + $0x858] sm:$0xff] %v6556
        %7005 = vst [vmem:[%s265 + $0x860] sm:$0xff] %v6557
        %7006 = vst [vmem:[%s265 + $0x868] sm:$0xff] %v6558
        %7007 = vst [vmem:[%s265 + $0x870] sm:$0xff] %v6559
        %7008 = vst [vmem:[%s265 + $0x878] sm:$0xff] %v6560
        %7009 = vst.msk [vmem:[%s265 + $0x880] sm:$0xff] %vm2837, %v6561
        %7010 = vst [vmem:[%s265 + $0x888] sm:$0xff] %v6562
        %7011 = vst [vmem:[%s265 + $0x890] sm:$0xff] %v6563
        %7012 = vst [vmem:[%s265 + $0x898] sm:$0xff] %v6564
        %7013 = vst [vmem:[%s265 + $0x8a0] sm:$0xff] %v6565
        %7014 = vst [vmem:[%s265 + $0x8a8] sm:$0xff] %v6566
        %7015 = vst [vmem:[%s265 + $0x8b0] sm:$0xff] %v6567
        %7016 = vst.msk [vmem:[%s265 + $0x8b8] sm:$0xff] %vm2837, %v6568
        %7017 = vst [vmem:[%s265 + $0x8c0] sm:$0xff] %v6569
        %7018 = vst [vmem:[%s265 + $0x8c8] sm:$0xff] %v6570
        %7019 = vst [vmem:[%s265 + $0x8d0] sm:$0xff] %v6571
        %7020 = vst [vmem:[%s265 + $0x8d8] sm:$0xff] %v6572
        %7021 = vst [vmem:[%s265 + $0x8e0] sm:$0xff] %v6573
        %7022 = vst [vmem:[%s265 + $0x8e8] sm:$0xff] %v6574
        %7023 = vst.msk [vmem:[%s265 + $0x8f0] sm:$0xff] %vm2837, %v6575
        %7024 = vst [vmem:[%s265 + $0x8f8] sm:$0xff] %v6576
        %7025 = vst [vmem:[%s265 + $0x900] sm:$0xff] %v6577
        %7026 = vst [vmem:[%s265 + $0x908] sm:$0xff] %v6578
        %7027 = vst [vmem:[%s265 + $0x910] sm:$0xff] %v6579
        %7028 = vst [vmem:[%s265 + $0x918] sm:$0xff] %v6580
        %7029 = vst [vmem:[%s265 + $0x920] sm:$0xff] %v6581
        %7030 = vst.msk [vmem:[%s265 + $0x928] sm:$0xff] %vm2837, %v6582
        %7031 = vst [vmem:[%s265 + $0x930] sm:$0xff] %v6583
        %7032 = vst [vmem:[%s265 + $0x938] sm:$0xff] %v6584
        %7033 = vst [vmem:[%s265 + $0x940] sm:$0xff] %v6585
        %7034 = vst [vmem:[%s265 + $0x948] sm:$0xff] %v6586
        %7035 = vst [vmem:[%s265 + $0x950] sm:$0xff] %v6587
        %7036 = vst [vmem:[%s265 + $0x958] sm:$0xff] %v6588
        %7037 = vst.msk [vmem:[%s265 + $0x960] sm:$0xff] %vm2837, %v6589
        %7038 = vst [vmem:[%s265 + $0x968] sm:$0xff] %v6590
        %7039 = vst [vmem:[%s265 + $0x970] sm:$0xff] %v6591
        %7040 = vst [vmem:[%s265 + $0x978] sm:$0xff] %v6592
        %7041 = vst [vmem:[%s265 + $0x980] sm:$0xff] %v6593
        %7042 = vst [vmem:[%s265 + $0x988] sm:$0xff] %v6594
        %7043 = vst [vmem:[%s265 + $0x990] sm:$0xff] %v6595
        %7044 = vst.msk [vmem:[%s265 + $0x998] sm:$0xff] %vm2837, %v6596
        %7045 = vst [vmem:[%s265 + $0x9a0] sm:$0xff] %v6597
        %7046 = vst [vmem:[%s265 + $0x9a8] sm:$0xff] %v6598
        %7047 = vst [vmem:[%s265 + $0x9b0] sm:$0xff] %v6599
        %7048 = vst [vmem:[%s265 + $0x9b8] sm:$0xff] %v6600
        %7049 = vst [vmem:[%s265 + $0x9c0] sm:$0xff] %v6601
        %7050 = vst [vmem:[%s265 + $0x9c8] sm:$0xff] %v6602
        %7051 = vst.msk [vmem:[%s265 + $0x9d0] sm:$0xff] %vm2837, %v6603
        %7052 = vst [vmem:[%s265 + $0x9d8] sm:$0xff] %v6604
        %7053 = vst [vmem:[%s265 + $0x9e0] sm:$0xff] %v6605
        %7054 = vst [vmem:[%s265 + $0x9e8] sm:$0xff] %v6606
        %7055 = vst [vmem:[%s265 + $0x9f0] sm:$0xff] %v6607
        %7056 = vst [vmem:[%s265 + $0x9f8] sm:$0xff] %v6608
        %7057 = vst [vmem:[%s265 + $0xa00] sm:$0xff] %v6609
        %7058 = vst.msk [vmem:[%s265 + $0xa08] sm:$0xff] %vm2837, %v6610
        %7059 = vst [vmem:[%s265 + $0xa10] sm:$0xff] %v6611
        %7060 = vst [vmem:[%s265 + $0xa18] sm:$0xff] %v6612
        %7061 = vst [vmem:[%s265 + $0xa20] sm:$0xff] %v6613
        %7062 = vst [vmem:[%s265 + $0xa28] sm:$0xff] %v6614
        %7063 = vst [vmem:[%s265 + $0xa30] sm:$0xff] %v6615
        %7064 = vst [vmem:[%s265 + $0xa38] sm:$0xff] %v6616
        %7065 = vst.msk [vmem:[%s265 + $0xa40] sm:$0xff] %vm2837, %v6617
        %7066 = vst [vmem:[%s265 + $0xa48] sm:$0xff] %v6618
        %7067 = vst [vmem:[%s265 + $0xa50] sm:$0xff] %v6619
        %7068 = vst [vmem:[%s265 + $0xa58] sm:$0xff] %v6620
        %7069 = vst [vmem:[%s265 + $0xa60] sm:$0xff] %v6621
        %7070 = vst [vmem:[%s265 + $0xa68] sm:$0xff] %v6622
        %7071 = vst [vmem:[%s265 + $0xa70] sm:$0xff] %v6623
        %7072 = vst.msk [vmem:[%s265 + $0xa78] sm:$0xff] %vm2837, %v6624
        %7073 = vst [vmem:[%s265 + $0xa80] sm:$0xff] %v6625
        %7074 = vst [vmem:[%s265 + $0xa88] sm:$0xff] %v6626
        %7075 = vst [vmem:[%s265 + $0xa90] sm:$0xff] %v6627
        %7076 = vst [vmem:[%s265 + $0xa98] sm:$0xff] %v6628
        %7077 = vst [vmem:[%s265 + $0xaa0] sm:$0xff] %v6629
        %7078 = vst [vmem:[%s265 + $0xaa8] sm:$0xff] %v6630
        %7079 = vst.msk [vmem:[%s265 + $0xab0] sm:$0xff] %vm2837, %v6631
        %7080 = vst [vmem:[%s265 + $0xab8] sm:$0xff] %v6632
        %7081 = vst [vmem:[%s265 + $0xac0] sm:$0xff] %v6633
        %7082 = vst [vmem:[%s265 + $0xac8] sm:$0xff] %v6634
        %7083 = vst [vmem:[%s265 + $0xad0] sm:$0xff] %v6635
        %7084 = vst [vmem:[%s265 + $0xad8] sm:$0xff] %v6636
        %7085 = vst [vmem:[%s265 + $0xae0] sm:$0xff] %v6637
        %7086 = vst.msk [vmem:[%s265 + $0xae8] sm:$0xff] %vm2837, %v6638
        %7087 = vst [vmem:[%s265 + $0xaf0] sm:$0xff] %v6639
        %7088 = vst [vmem:[%s265 + $0xaf8] sm:$0xff] %v6640
        %7089 = vst [vmem:[%s265 + $0xb00] sm:$0xff] %v6641
        %7090 = vst [vmem:[%s265 + $0xb08] sm:$0xff] %v6642
        %7091 = vst [vmem:[%s265 + $0xb10] sm:$0xff] %v6643
        %7092 = vst [vmem:[%s265 + $0xb18] sm:$0xff] %v6644
        %7093 = vst.msk [vmem:[%s265 + $0xb20] sm:$0xff] %vm2837, %v6645
        %7094 = vst [vmem:[%s265 + $0xb28] sm:$0xff] %v6646
        %7095 = vst [vmem:[%s265 + $0xb30] sm:$0xff] %v6647
        %7096 = vst [vmem:[%s265 + $0xb38] sm:$0xff] %v6648
        %7097 = vst [vmem:[%s265 + $0xb40] sm:$0xff] %v6649
        %7098 = vst [vmem:[%s265 + $0xb48] sm:$0xff] %v6650
        %7099 = vst [vmem:[%s265 + $0xb50] sm:$0xff] %v6651
        %7100 = vst.msk [vmem:[%s265 + $0xb58] sm:$0xff] %vm2837, %v6652
        %7101 = vst [vmem:[%s265 + $0xb60] sm:$0xff] %v6653
        %7102 = vst [vmem:[%s265 + $0xb68] sm:$0xff] %v6654
        %7103 = vst [vmem:[%s265 + $0xb70] sm:$0xff] %v6655
        %7104 = vst [vmem:[%s265 + $0xb78] sm:$0xff] %v6656
        %7105 = vst [vmem:[%s265 + $0xb80] sm:$0xff] %v6657
        %7106 = vst [vmem:[%s265 + $0xb88] sm:$0xff] %v6658
        %7107 = vst.msk [vmem:[%s265 + $0xb90] sm:$0xff] %vm2837, %v6659
        %7108 = vst [vmem:[%s265 + $0xb98] sm:$0xff] %v6660
        %7109 = vst [vmem:[%s265 + $0xba0] sm:$0xff] %v6661
        %7110 = vst [vmem:[%s265 + $0xba8] sm:$0xff] %v6662
        %7111 = vst [vmem:[%s265 + $0xbb0] sm:$0xff] %v6663
        %7112 = vst [vmem:[%s265 + $0xbb8] sm:$0xff] %v6664
        %7113 = vst [vmem:[%s265 + $0xbc0] sm:$0xff] %v6665
        %7114 = vst.msk [vmem:[%s265 + $0xbc8] sm:$0xff] %vm2837, %v6666
        %7115 = vst [vmem:[%s265 + $0xbd0] sm:$0xff] %v6667
        %7116 = vst [vmem:[%s265 + $0xbd8] sm:$0xff] %v6668
        %7117 = vst [vmem:[%s265 + $0xbe0] sm:$0xff] %v6669
        %7118 = vst [vmem:[%s265 + $0xbe8] sm:$0xff] %v6670
        %7119 = vst [vmem:[%s265 + $0xbf0] sm:$0xff] %v6671
        %7120 = vst [vmem:[%s265 + $0xbf8] sm:$0xff] %v6672
        %7121 = vst.msk [vmem:[%s265 + $0xc00] sm:$0xff] %vm2837, %v6673
        %7122 = vst [vmem:[%s265 + $0xc08] sm:$0xff] %v6674
        %7123 = vst [vmem:[%s265 + $0xc10] sm:$0xff] %v6675
        %7124 = vst [vmem:[%s265 + $0xc18] sm:$0xff] %v6676
        %7125 = vst [vmem:[%s265 + $0xc20] sm:$0xff] %v6677
        %7126 = vst [vmem:[%s265 + $0xc28] sm:$0xff] %v6678
        %7127 = vst [vmem:[%s265 + $0xc30] sm:$0xff] %v6679
        %7128 = vst.msk [vmem:[%s265 + $0xc38] sm:$0xff] %vm2837, %v6680
        %7129 = vst [vmem:[%s265 + $0xc40] sm:$0xff] %v6681
        %7130 = vst [vmem:[%s265 + $0xc48] sm:$0xff] %v6682
        %7131 = vst [vmem:[%s265 + $0xc50] sm:$0xff] %v6683
        %7132 = vst [vmem:[%s265 + $0xc58] sm:$0xff] %v6684
        %7133 = vst [vmem:[%s265 + $0xc60] sm:$0xff] %v6685
        %7134 = vst [vmem:[%s265 + $0xc68] sm:$0xff] %v6686
        %7135 = vst.msk [vmem:[%s265 + $0xc70] sm:$0xff] %vm2837, %v6687
        %7136 = vst [vmem:[%s265 + $0xc78] sm:$0xff] %v6688
        %7137 = vst [vmem:[%s265 + $0xc80] sm:$0xff] %v6689
        %7138 = vst [vmem:[%s265 + $0xc88] sm:$0xff] %v6690
        %7139 = vst [vmem:[%s265 + $0xc90] sm:$0xff] %v6691
        %7140 = vst [vmem:[%s265 + $0xc98] sm:$0xff] %v6692
        %7141 = vst [vmem:[%s265 + $0xca0] sm:$0xff] %v6693
        %7142 = vst.msk [vmem:[%s265 + $0xca8] sm:$0xff] %vm2837, %v6694
        %7143 = vst [vmem:[%s265 + $0xcb0] sm:$0xff] %v6695
        %7144 = vst [vmem:[%s265 + $0xcb8] sm:$0xff] %v6696
        %7145 = vst [vmem:[%s265 + $0xcc0] sm:$0xff] %v6697
        %7146 = vst [vmem:[%s265 + $0xcc8] sm:$0xff] %v6698
        %7147 = vst [vmem:[%s265 + $0xcd0] sm:$0xff] %v6699
        %7148 = vst [vmem:[%s265 + $0xcd8] sm:$0xff] %v6700
        %7149 = vst.msk [vmem:[%s265 + $0xce0] sm:$0xff] %vm2837, %v6701
        %7150 = vst [vmem:[%s265 + $0xce8] sm:$0xff] %v6702
        %7151 = vst [vmem:[%s265 + $0xcf0] sm:$0xff] %v6703
        %7152 = vst [vmem:[%s265 + $0xcf8] sm:$0xff] %v6704
        %7153 = vst [vmem:[%s265 + $0xd00] sm:$0xff] %v6705
        %7154 = vst [vmem:[%s265 + $0xd08] sm:$0xff] %v6706
        %7155 = vst [vmem:[%s265 + $0xd10] sm:$0xff] %v6707
        %7156 = vst.msk [vmem:[%s265 + $0xd18] sm:$0xff] %vm2837, %v6708
        %7157 = vst [vmem:[%s265 + $0xd20] sm:$0xff] %v6709
        %7158 = vst [vmem:[%s265 + $0xd28] sm:$0xff] %v6710
        %7159 = vst [vmem:[%s265 + $0xd30] sm:$0xff] %v6711
        %7160 = vst [vmem:[%s265 + $0xd38] sm:$0xff] %v6712
        %7161 = vst [vmem:[%s265 + $0xd40] sm:$0xff] %v6713
        %7162 = vst [vmem:[%s265 + $0xd48] sm:$0xff] %v6714
        %7163 = vst.msk [vmem:[%s265 + $0xd50] sm:$0xff] %vm2837, %v6715
        %7164 = vst [vmem:[%s265 + $0xd58] sm:$0xff] %v6716
        %7165 = vst [vmem:[%s265 + $0xd60] sm:$0xff] %v6717
        %7166 = vst [vmem:[%s265 + $0xd68] sm:$0xff] %v6718
        %7167 = vst [vmem:[%s265 + $0xd70] sm:$0xff] %v6719
        %7168 = vst [vmem:[%s265 + $0xd78] sm:$0xff] %v6720
        %7169 = vst [vmem:[%s265 + $0xd80] sm:$0xff] %v6721
        %7170 = vst.msk [vmem:[%s265 + $0xd88] sm:$0xff] %vm2837, %v6722
        %7171 = vst [vmem:[%s265 + $0xd90] sm:$0xff] %v6723
        %7172 = vst [vmem:[%s265 + $0xd98] sm:$0xff] %v6724
        %7173 = vst [vmem:[%s265 + $0xda0] sm:$0xff] %v6725
        %7174 = vst [vmem:[%s265 + $0xda8] sm:$0xff] %v6726
        %7175 = vst [vmem:[%s265 + $0xdb0] sm:$0xff] %v6727
        %7176 = vst [vmem:[%s265 + $0xdb8] sm:$0xff] %v6728
        %7177 = vst.msk [vmem:[%s265 + $0xdc0] sm:$0xff] %vm2837, %v6729
        %7178 = vst [vmem:[%s265 + $0xdc8] sm:$0xff] %v6730
        %7179 = vst [vmem:[%s265 + $0xdd0] sm:$0xff] %v6731
        %7180 = vst [vmem:[%s265 + $0xdd8] sm:$0xff] %v6732
        %7181 = vst [vmem:[%s265 + $0xde0] sm:$0xff] %v6733
        %7182 = vst [vmem:[%s265 + $0xde8] sm:$0xff] %v6734
        %7183 = vst [vmem:[%s265 + $0xdf0] sm:$0xff] %v6735
        %7184 = vst.msk [vmem:[%s265 + $0xdf8] sm:$0xff] %vm2837, %v6736
        %s7185 = smul.u32 64, %s18
        %p7186 = scmp.lt.s32.totalorder %s7185, 127
        %s7187 = scalar_select %p7186, %s7185, 127
        %s7188 = smul.addr %s7187, 7
        %s7189 = smul.addr %s7188, 8
        %s7190 = scalar_lea.vmem %s4, %s7189
        // Predicated region
        $region41: #{tpu_custom_call.1} parent=35 // pred_check
          %p7191 = pneg %p135
        $region42: #{tpu_custom_call.1} parent=35 // pred_check_branch
          %7193 = sbr.rel (%p7191) target = $region44
        $region43: #{tpu_custom_call.1} parent=35 // pred_region
          %s7194 = smul.u32 64, %s18
        $region44: #{tpu_custom_call.1} parent=35 // pred_fallthru
          _
      $region36: #{tpu_custom_call.1} parent=5 // pred_fallthru
        _
      %p7195 = scmp.le.s32.totalorder 2, %s13
      // Predicated region
      $region45: #{tpu_custom_call.1} parent=5 // pred_check
        %p7196 = pneg %p7195
      $region46: #{tpu_custom_call.1} parent=5 // pred_check_branch
        %7198 = sbr.rel (%p7196) target = $region48
      $region47: #{tpu_custom_call.1} parent=5 // pred_region
        %s7199 = ssub.s32 %s13, 2
        // Predicated region
        $region49: #{tpu_custom_call.1} parent=47 // pred_check
          %p7200 = pneg %p141
        $region50: #{tpu_custom_call.1} parent=47 // pred_check_branch
          %7202 = sbr.rel (%p7200) target = $region52
        $region51: #{tpu_custom_call.1} parent=47 // pred_region
          %s7203 = smul.u32 64, %s19
          %p7204 = scmp.lt.s32.totalorder %s7203, 127
          %s7205 = scalar_select %p7204, %s7203, 127
          %s7206 = smul.addr %s7205, 7
          %s7207 = smul.addr %s7206, 8
          %s7208 = scalar_lea.vmem %s4, %s7207
        $region52: #{tpu_custom_call.1} parent=47 // pred_fallthru
          _
      $region48: #{tpu_custom_call.1} parent=5 // pred_fallthru
        _
    $region6: #{tpu_custom_call.1} parent=1 // loop_footer
      %s17 = sadd.s32 1, %s13
    $region7: #{tpu_custom_call.1} parent=1 // loop_footer_branch
      %12 = sbr.rel target = $region3
    $region8: #{tpu_custom_call.1} parent=1 // loop_exit
      _
    %7209 = vsyncpa [#allocation3], 1
    %s7210 = scalar_lea.sflag [#allocation3], 1
    %7211 = vsyncpa %s7210, 1

</llo_original>
